<compile_context>
chip_gen: v6e
topology: v6e:2x2x1
jax: 0.10.0
libtpu: 0.0.40
codegen_flags: <defaults>
</compile_context>

<pallas_src>
import functools

import jax
import jax.numpy as jnp
from jax.experimental import pallas as pl
from jax.experimental.pallas import tpu as pltpu


# ----------------------------------------------------------------------------
# Pallas kernel: one frame x one block of output rows.
#   x_ref   : (1, 1, sh*sw*(tr+halo), wq, cp)  phase-split row block   (bf16)
#   w_ref   : (kh*kw*cp, hidden)               embedding weight        (bf16)
#   b_ref   : (1, hidden)                      embedding bias          (fp32)
#   o_ref   : (1, tr*wo, hidden)               tokens for tr rows      (out dtype)
#   col_ref : (tr, wo, kh*kw*cp)               im2col slab scratch     (bf16)
# ----------------------------------------------------------------------------
def _soft_split_kernel(x_ref, w_ref, b_ref, o_ref, col_ref, *,
                       kh, kw, sh, sw, rows_b, tr, wo, cp):
    # Pack all kh*kw taps into the im2col slab.  Every source slice is
    # contiguous (phase-split layout) and every destination slice is a
    # 128-lane-aligned column group (cp % 128 == 0) -> clean unmasked stores.
    for ky in range(kh):
        py, qy0 = ky % sh, ky // sh
        for kx in range(kw):
            px, qx0 = kx % sw, kx // sw
            p = py * sw + px                       # phase index
            tap = ky * kw + kx
            col_ref[:, :, pl.ds(tap * cp, cp)] = x_ref[
                0, 0, pl.ds(p * rows_b + qy0, tr), pl.ds(qx0, wo), :]

    # Single MXU matmul with K = kh*kw*cp (full systolic depth), fp32 accum.
    m = tr * wo
    acc = jnp.dot(col_ref[...].reshape(m, kh * kw * cp), w_ref[...],
                  preferred_element_type=jnp.float32)
    o_ref[0] = (acc + b_ref[...]).astype(o_ref.dtype)


# ----------------------------------------------------------------------------
# Wrapper: SoftSplit forward.  x_nchw: (b*t, C, H, W) -> (b, t*Ho*Wo, hidden)
# ----------------------------------------------------------------------------
def soft_split(x_nchw, weight, bias, b, *, kernel_size, stride, padding,
               row_budget=None, out_dtype=jnp.bfloat16):
    kh, kw = kernel_size
    sh, sw = stride
    ph, pw = padding
    bt, c, h, w = x_nchw.shape
    hidden = weight.shape[0]
    assert weight.shape[1] == c * kh * kw, (weight.shape, c, kh, kw)

    ho = (h + 2 * ph - kh) // sh + 1
    wo = (w + 2 * pw - kw) // sw + 1
    l = ho * wo
    khkw = kh * kw

    # Pad channels to a multiple of 128 so every im2col column group is
    # lane-aligned (zero channels are inert; FuseFormer uses C=128 -> no waste).
    cp = -(-max(c, 128) // 128) * 128
    hq = -(-(h + 2 * ph) // sh)                  # ceil((H + 2p) / s)
    wq = -(-(w + 2 * pw) // sw)
    halo_h = (kh - 1) // sh                      # extra phase rows per block

    # -- hardware query / budgets (generation-aware) --------------------------
    try:
        vmem_cap = getattr(pltpu.get_tpu_info(), "vmem_capacity_bytes",
                           64 * 2**20)
    except Exception:                            # pragma: no cover - be safe
        vmem_cap = 64 * 2**20
    if row_budget is None:
        # v5e/v6e (128 MiB VMEM) -> bigger row blocks; v7x (64 MiB/TC) -> smaller.
        row_budget = 1024 if vmem_cap >= 96 * 2**20 else 512

    # -- output-row tile: largest divisor of Ho within the budget whose token
    #    count stays 16-sublane aligned (or full extent) ----------------------
    candidates = [d for d in range(1, ho + 1)
                  if ho % d == 0 and (d == ho or (d * wo) % 16 == 0)]
    fitting = [d for d in candidates if d * wo <= row_budget]
    tr = max(fitting) if fitting else min(candidates)
    n_rb = ho // tr
    rows_b = tr + halo_h                         # phase rows per block (halo)

    # -- activations: bf16 cast -> pad -> overlapping row-block gather ->
    #    single fused phase-split transpose -----------------------------------
    x = x_nchw.astype(jnp.bfloat16)              # cast first: cheaper relayouts
    x = jnp.pad(x, ((0, 0),
                    (0, cp - c),
                    (ph, hq * sh - h - ph),
                    (pw, wq * sw - w - pw)))     # (bt, cp, hq*sh, wq*sw)
    # Row block r needs element rows [r*tr*sh, r*tr*sh + rows_b*sh).
    row_ids = (jnp.arange(n_rb)[:, None] * (tr * sh)
               + jnp.arange(rows_b * sh)[None, :]).reshape(-1)
    x = jnp.take(x, row_ids, axis=2)             # (bt, cp, n_rb*rows_b*sh, Wp)
    x = x.reshape(bt, cp, n_rb, rows_b, sh, wq, sw)
    x = jnp.transpose(x, (0, 2, 4, 6, 3, 5, 1))  # (bt, n_rb, sh, sw, rows_b, wq, cp)
    x = x.reshape(bt, n_rb, sh * sw * rows_b, wq, cp)

    # -- weight: (hidden, C*kh*kw) [unfold order c,ky,kx] -> (kh*kw*cp, hidden)
    wt = weight.reshape(hidden, c, kh, kw)
    wt = jnp.transpose(wt, (2, 3, 1, 0))                 # (kh, kw, C, hidden)
    wt = jnp.pad(wt, ((0, 0), (0, 0), (0, cp - c), (0, 0)))
    wt = wt.reshape(khkw * cp, hidden).astype(jnp.bfloat16)

    bias2 = bias.reshape(1, hidden).astype(jnp.float32)

    # -- VMEM budget: ~1.3x real block footprint, clamped to 0.8 * capacity ---
    out_isize = jnp.dtype(out_dtype).itemsize
    x_blk = sh * sw * rows_b * wq * cp * 2               # bf16 input block
    w_bytes = khkw * cp * hidden * 2                     # bf16 weight
    col_bytes = tr * wo * khkw * cp * 2                  # im2col scratch
    out_blk = tr * wo * hidden * out_isize
    block_bytes = (2 * x_blk + 2 * w_bytes + 2 * out_blk
                   + 2 * hidden * 4 + col_bytes)
    vmem_limit = int(min(0.8 * vmem_cap,
                         max(32 * 2**20, 1.3 * block_bytes)))

    out = pl.pallas_call(
        functools.partial(_soft_split_kernel,
                          kh=kh, kw=kw, sh=sh, sw=sw,
                          rows_b=rows_b, tr=tr, wo=wo, cp=cp),
        out_shape=jax.ShapeDtypeStruct((bt, l, hidden), out_dtype),
        grid=(bt, n_rb),
        in_specs=[
            pl.BlockSpec((1, 1, sh * sw * rows_b, wq, cp),
                         lambda n, r: (n, r, 0, 0, 0)),
            pl.BlockSpec((khkw * cp, hidden), lambda n, r: (0, 0)),
            pl.BlockSpec((1, hidden), lambda n, r: (0, 0)),
        ],
        out_specs=pl.BlockSpec((1, tr * wo, hidden), lambda n, r: (n, r, 0)),
        scratch_shapes=[pltpu.VMEM((tr, wo, khkw * cp), jnp.bfloat16)],
        compiler_params=pltpu.CompilerParams(
            dimension_semantics=("parallel", "parallel"),
            vmem_limit_bytes=vmem_limit),
    )(x, wt, bias2)

    out = out.reshape(b, -1, hidden)             # feat.view(b, -1, hidden)
    # TODO(synk): nn.Dropout(p=0.1) is identity in eval mode; training-mode
    # stochastic dropout (pltpu.prng_*) is intentionally not applied here.
    return out


# ----------------------------------------------------------------------------
if __name__ == "__main__":
    key = jax.random.PRNGKey(0)
    kx, kw_, kb = jax.random.split(key, 3)

    # small deterministic example (FuseFormer SoftSplit hyper-params, scaled down)
    b, t = 2, 2
    channel, hidden = 4, 32
    height = width = 24
    kernel_size, stride, padding = (7, 7), (3, 3), (3, 3)
    c_in = channel * kernel_size[0] * kernel_size[1]

    x = jax.random.normal(kx, (b * t, channel, height, width), jnp.float32)
    weight = jax.random.normal(kw_, (hidden, c_in), jnp.float32) * 0.05
    bias = jax.random.normal(kb, (hidden,), jnp.float32) * 0.05

    fwd = jax.jit(lambda xx, ww, bb: soft_split(
        xx, ww, bb, b, kernel_size=kernel_size, stride=stride, padding=padding,
        row_budget=32))                          # small budget -> exercises row tiling
    y = fwd(x, weight, bias)
    jax.block_until_ready(y)

    ho = (height + 2 * padding[0] - kernel_size[0]) // stride[0] + 1
    wo = (width + 2 * padding[1] - kernel_size[1]) // stride[1] + 1
    assert y.shape == (b, t * ho * wo, hidden), y.shape
    assert y.dtype == jnp.bfloat16, y.dtype
    yf = y.astype(jnp.float32)
    assert bool(jnp.all(jnp.isfinite(yf)))

    # reference: SoftSplit == strided conv2d + flatten (eval-mode dropout = id)
    filt = jnp.transpose(weight.reshape(hidden, channel, *kernel_size),
                         (2, 3, 1, 0))
    ref = jax.lax.conv_general_dilated(
        jnp.transpose(x, (0, 2, 3, 1)), filt,
        window_strides=stride,
        padding=[(padding[0], padding[0]), (padding[1], padding[1])],
        dimension_numbers=("NHWC", "HWIO", "NHWC"),
        precision=jax.lax.Precision.HIGHEST) + bias
    ref = ref.reshape(b, -1, hidden)
    err = float(jnp.max(jnp.abs(yf - ref)))
    assert err < 5e-2, err
    print("KERNEL_OK")
</pallas_src>

<mosaic_0001>
module attributes {stable_mosaic.version = 11 : i64} {
  func.func @_soft_split_kernel(%arg0: i32, %arg1: i32, %arg2: memref<1x1x54x10x128xbf16, #tpu.memory_space<vmem>>, %arg3: memref<6272x32xbf16, #tpu.memory_space<vmem>>, %arg4: memref<1x32xf32, #tpu.memory_space<vmem>>, %arg5: memref<1x32x32xbf16, #tpu.memory_space<vmem>>, %arg6: memref<4x8x6272xbf16, #tpu.memory_space<vmem>>) attributes {dimension_semantics = [#tpu.dimension_semantics<parallel>, #tpu.dimension_semantics<parallel>], iteration_bounds = array<i64: 4, 2>, scalar_prefetch = 0 : i64, scratch_operands = 1 : i64, tpu.core_type = #tpu.core_type<tc>, window_params = [{transform_indices = @transform_0, window_bounds = array<i64: 1, 1, 54, 10, 128>}, {pipeline_mode = #tpu.pipeline_mode<synchronous>, transform_indices = @transform_1, window_bounds = array<i64: 6272, 32>}, {pipeline_mode = #tpu.pipeline_mode<synchronous>, transform_indices = @transform_2, window_bounds = array<i64: 1, 32>}, {transform_indices = @transform_3, window_bounds = array<i64: 1, 32, 32>}]} {
    %c0 = arith.constant 0 : index
    %c0_0 = arith.constant 0 : index
    %c0_1 = arith.constant 0 : index
    %c0_2 = arith.constant 0 : index
    %c0_3 = arith.constant 0 : index
    %0 = vector.load %arg2[%c0, %c0_0, %c0_1, %c0_2, %c0_3] : memref<1x1x54x10x128xbf16, #tpu.memory_space<vmem>>, vector<1x1x4x8x128xbf16>
    %1 = vector.shape_cast %0 : vector<1x1x4x8x128xbf16> to vector<4x8x128xbf16>
    %c0_4 = arith.constant 0 : index
    %c0_5 = arith.constant 0 : index
    %c0_6 = arith.constant 0 : index
    %2 = vector.load %arg6[%c0_4, %c0_5, %c0_6] : memref<4x8x6272xbf16, #tpu.memory_space<vmem>>, vector<4x8x128xbf16>
    tpu.vector_store %arg6[%c0_4, %c0_5, %c0_6], %1 {strides = array<i32>} : memref<4x8x6272xbf16, #tpu.memory_space<vmem>>, vector<4x8x128xbf16>,
    %c0_7 = arith.constant 0 : index
    %c0_8 = arith.constant 0 : index
    %c6 = arith.constant 6 : index
    %c0_9 = arith.constant 0 : index
    %c0_10 = arith.constant 0 : index
    %3 = vector.load %arg2[%c0_7, %c0_8, %c6, %c0_9, %c0_10] : memref<1x1x54x10x128xbf16, #tpu.memory_space<vmem>>, vector<1x1x4x8x128xbf16>
    %4 = vector.shape_cast %3 : vector<1x1x4x8x128xbf16> to vector<4x8x128xbf16>
    %c0_11 = arith.constant 0 : index
    %c0_12 = arith.constant 0 : index
    %c128 = arith.constant 128 : index
    %5 = vector.load %arg6[%c0_11, %c0_12, %c128] : memref<4x8x6272xbf16, #tpu.memory_space<vmem>>, vector<4x8x128xbf16>
    tpu.vector_store %arg6[%c0_11, %c0_12, %c128], %4 {strides = array<i32>} : memref<4x8x6272xbf16, #tpu.memory_space<vmem>>, vector<4x8x128xbf16>,
    %c0_13 = arith.constant 0 : index
    %c0_14 = arith.constant 0 : index
    %c12 = arith.constant 12 : index
    %c0_15 = arith.constant 0 : index
    %c0_16 = arith.constant 0 : index
    %6 = vector.load %arg2[%c0_13, %c0_14, %c12, %c0_15, %c0_16] : memref<1x1x54x10x128xbf16, #tpu.memory_space<vmem>>, vector<1x1x4x8x128xbf16>
    %7 = vector.shape_cast %6 : vector<1x1x4x8x128xbf16> to vector<4x8x128xbf16>
    %c0_17 = arith.constant 0 : index
    %c0_18 = arith.constant 0 : index
    %c256 = arith.constant 256 : index
    %8 = vector.load %arg6[%c0_17, %c0_18, %c256] : memref<4x8x6272xbf16, #tpu.memory_space<vmem>>, vector<4x8x128xbf16>
    tpu.vector_store %arg6[%c0_17, %c0_18, %c256], %7 {strides = array<i32>} : memref<4x8x6272xbf16, #tpu.memory_space<vmem>>, vector<4x8x128xbf16>,
    %c0_19 = arith.constant 0 : index
    %c0_20 = arith.constant 0 : index
    %c0_21 = arith.constant 0 : index
    %c1 = arith.constant 1 : index
    %c0_22 = arith.constant 0 : index
    %9 = vector.load %arg2[%c0_19, %c0_20, %c0_21, %c1, %c0_22] : memref<1x1x54x10x128xbf16, #tpu.memory_space<vmem>>, vector<1x1x4x8x128xbf16>
    %10 = vector.shape_cast %9 : vector<1x1x4x8x128xbf16> to vector<4x8x128xbf16>
    %c0_23 = arith.constant 0 : index
    %c0_24 = arith.constant 0 : index
    %c384 = arith.constant 384 : index
    %11 = vector.load %arg6[%c0_23, %c0_24, %c384] : memref<4x8x6272xbf16, #tpu.memory_space<vmem>>, vector<4x8x128xbf16>
    tpu.vector_store %arg6[%c0_23, %c0_24, %c384], %10 {strides = array<i32>} : memref<4x8x6272xbf16, #tpu.memory_space<vmem>>, vector<4x8x128xbf16>,
    %c0_25 = arith.constant 0 : index
    %c0_26 = arith.constant 0 : index
    %c6_27 = arith.constant 6 : index
    %c1_28 = arith.constant 1 : index
    %c0_29 = arith.constant 0 : index
    %12 = vector.load %arg2[%c0_25, %c0_26, %c6_27, %c1_28, %c0_29] : memref<1x1x54x10x128xbf16, #tpu.memory_space<vmem>>, vector<1x1x4x8x128xbf16>
    %13 = vector.shape_cast %12 : vector<1x1x4x8x128xbf16> to vector<4x8x128xbf16>
    %c0_30 = arith.constant 0 : index
    %c0_31 = arith.constant 0 : index
    %c512 = arith.constant 512 : index
    %14 = vector.load %arg6[%c0_30, %c0_31, %c512] : memref<4x8x6272xbf16, #tpu.memory_space<vmem>>, vector<4x8x128xbf16>
    tpu.vector_store %arg6[%c0_30, %c0_31, %c512], %13 {strides = array<i32>} : memref<4x8x6272xbf16, #tpu.memory_space<vmem>>, vector<4x8x128xbf16>,
    %c0_32 = arith.constant 0 : index
    %c0_33 = arith.constant 0 : index
    %c12_34 = arith.constant 12 : index
    %c1_35 = arith.constant 1 : index
    %c0_36 = arith.constant 0 : index
    %15 = vector.load %arg2[%c0_32, %c0_33, %c12_34, %c1_35, %c0_36] : memref<1x1x54x10x128xbf16, #tpu.memory_space<vmem>>, vector<1x1x4x8x128xbf16>
    %16 = vector.shape_cast %15 : vector<1x1x4x8x128xbf16> to vector<4x8x128xbf16>
    %c0_37 = arith.constant 0 : index
    %c0_38 = arith.constant 0 : index
    %c640 = arith.constant 640 : index
    %17 = vector.load %arg6[%c0_37, %c0_38, %c640] : memref<4x8x6272xbf16, #tpu.memory_space<vmem>>, vector<4x8x128xbf16>
    tpu.vector_store %arg6[%c0_37, %c0_38, %c640], %16 {strides = array<i32>} : memref<4x8x6272xbf16, #tpu.memory_space<vmem>>, vector<4x8x128xbf16>,
    %c0_39 = arith.constant 0 : index
    %c0_40 = arith.constant 0 : index
    %c0_41 = arith.constant 0 : index
    %c2 = arith.constant 2 : index
    %c0_42 = arith.constant 0 : index
    %18 = vector.load %arg2[%c0_39, %c0_40, %c0_41, %c2, %c0_42] : memref<1x1x54x10x128xbf16, #tpu.memory_space<vmem>>, vector<1x1x4x8x128xbf16>
    %19 = vector.shape_cast %18 : vector<1x1x4x8x128xbf16> to vector<4x8x128xbf16>
    %c0_43 = arith.constant 0 : index
    %c0_44 = arith.constant 0 : index
    %c768 = arith.constant 768 : index
    %20 = vector.load %arg6[%c0_43, %c0_44, %c768] : memref<4x8x6272xbf16, #tpu.memory_space<vmem>>, vector<4x8x128xbf16>
    tpu.vector_store %arg6[%c0_43, %c0_44, %c768], %19 {strides = array<i32>} : memref<4x8x6272xbf16, #tpu.memory_space<vmem>>, vector<4x8x128xbf16>,
    %c0_45 = arith.constant 0 : index
    %c0_46 = arith.constant 0 : index
    %c18 = arith.constant 18 : index
    %c0_47 = arith.constant 0 : index
    %c0_48 = arith.constant 0 : index
    %21 = vector.load %arg2[%c0_45, %c0_46, %c18, %c0_47, %c0_48] : memref<1x1x54x10x128xbf16, #tpu.memory_space<vmem>>, vector<1x1x4x8x128xbf16>
    %22 = vector.shape_cast %21 : vector<1x1x4x8x128xbf16> to vector<4x8x128xbf16>
    %c0_49 = arith.constant 0 : index
    %c0_50 = arith.constant 0 : index
    %c896 = arith.constant 896 : index
    %23 = vector.load %arg6[%c0_49, %c0_50, %c896] : memref<4x8x6272xbf16, #tpu.memory_space<vmem>>, vector<4x8x128xbf16>
    tpu.vector_store %arg6[%c0_49, %c0_50, %c896], %22 {strides = array<i32>} : memref<4x8x6272xbf16, #tpu.memory_space<vmem>>, vector<4x8x128xbf16>,
    %c0_51 = arith.constant 0 : index
    %c0_52 = arith.constant 0 : index
    %c24 = arith.constant 24 : index
    %c0_53 = arith.constant 0 : index
    %c0_54 = arith.constant 0 : index
    %24 = vector.load %arg2[%c0_51, %c0_52, %c24, %c0_53, %c0_54] : memref<1x1x54x10x128xbf16, #tpu.memory_space<vmem>>, vector<1x1x4x8x128xbf16>
    %25 = vector.shape_cast %24 : vector<1x1x4x8x128xbf16> to vector<4x8x128xbf16>
    %c0_55 = arith.constant 0 : index
    %c0_56 = arith.constant 0 : index
    %c1024 = arith.constant 1024 : index
    %26 = vector.load %arg6[%c0_55, %c0_56, %c1024] : memref<4x8x6272xbf16, #tpu.memory_space<vmem>>, vector<4x8x128xbf16>
    tpu.vector_store %arg6[%c0_55, %c0_56, %c1024], %25 {strides = array<i32>} : memref<4x8x6272xbf16, #tpu.memory_space<vmem>>, vector<4x8x128xbf16>,
    %c0_57 = arith.constant 0 : index
    %c0_58 = arith.constant 0 : index
    %c30 = arith.constant 30 : index
    %c0_59 = arith.constant 0 : index
    %c0_60 = arith.constant 0 : index
    %27 = vector.load %arg2[%c0_57, %c0_58, %c30, %c0_59, %c0_60] : memref<1x1x54x10x128xbf16, #tpu.memory_space<vmem>>, vector<1x1x4x8x128xbf16>
    %28 = vector.shape_cast %27 : vector<1x1x4x8x128xbf16> to vector<4x8x128xbf16>
    %c0_61 = arith.constant 0 : index
    %c0_62 = arith.constant 0 : index
    %c1152 = arith.constant 1152 : index
    %29 = vector.load %arg6[%c0_61, %c0_62, %c1152] : memref<4x8x6272xbf16, #tpu.memory_space<vmem>>, vector<4x8x128xbf16>
    tpu.vector_store %arg6[%c0_61, %c0_62, %c1152], %28 {strides = array<i32>} : memref<4x8x6272xbf16, #tpu.memory_space<vmem>>, vector<4x8x128xbf16>,
    %c0_63 = arith.constant 0 : index
    %c0_64 = arith.constant 0 : index
    %c18_65 = arith.constant 18 : index
    %c1_66 = arith.constant 1 : index
    %c0_67 = arith.constant 0 : index
    %30 = vector.load %arg2[%c0_63, %c0_64, %c18_65, %c1_66, %c0_67] : memref<1x1x54x10x128xbf16, #tpu.memory_space<vmem>>, vector<1x1x4x8x128xbf16>
    %31 = vector.shape_cast %30 : vector<1x1x4x8x128xbf16> to vector<4x8x128xbf16>
    %c0_68 = arith.constant 0 : index
    %c0_69 = arith.constant 0 : index
    %c1280 = arith.constant 1280 : index
    %32 = vector.load %arg6[%c0_68, %c0_69, %c1280] : memref<4x8x6272xbf16, #tpu.memory_space<vmem>>, vector<4x8x128xbf16>
    tpu.vector_store %arg6[%c0_68, %c0_69, %c1280], %31 {strides = array<i32>} : memref<4x8x6272xbf16, #tpu.memory_space<vmem>>, vector<4x8x128xbf16>,
    %c0_70 = arith.constant 0 : index
    %c0_71 = arith.constant 0 : index
    %c24_72 = arith.constant 24 : index
    %c1_73 = arith.constant 1 : index
    %c0_74 = arith.constant 0 : index
    %33 = vector.load %arg2[%c0_70, %c0_71, %c24_72, %c1_73, %c0_74] : memref<1x1x54x10x128xbf16, #tpu.memory_space<vmem>>, vector<1x1x4x8x128xbf16>
    %34 = vector.shape_cast %33 : vector<1x1x4x8x128xbf16> to vector<4x8x128xbf16>
    %c0_75 = arith.constant 0 : index
    %c0_76 = arith.constant 0 : index
    %c1408 = arith.constant 1408 : index
    %35 = vector.load %arg6[%c0_75, %c0_76, %c1408] : memref<4x8x6272xbf16, #tpu.memory_space<vmem>>, vector<4x8x128xbf16>
    tpu.vector_store %arg6[%c0_75, %c0_76, %c1408], %34 {strides = array<i32>} : memref<4x8x6272xbf16, #tpu.memory_space<vmem>>, vector<4x8x128xbf16>,
    %c0_77 = arith.constant 0 : index
    %c0_78 = arith.constant 0 : index
    %c30_79 = arith.constant 30 : index
    %c1_80 = arith.constant 1 : index
    %c0_81 = arith.constant 0 : index
    %36 = vector.load %arg2[%c0_77, %c0_78, %c30_79, %c1_80, %c0_81] : memref<1x1x54x10x128xbf16, #tpu.memory_space<vmem>>, vector<1x1x4x8x128xbf16>
    %37 = vector.shape_cast %36 : vector<1x1x4x8x128xbf16> to vector<4x8x128xbf16>
    %c0_82 = arith.constant 0 : index
    %c0_83 = arith.constant 0 : index
    %c1536 = arith.constant 1536 : index
    %38 = vector.load %arg6[%c0_82, %c0_83, %c1536] : memref<4x8x6272xbf16, #tpu.memory_space<vmem>>, vector<4x8x128xbf16>
    tpu.vector_store %arg6[%c0_82, %c0_83, %c1536], %37 {strides = array<i32>} : memref<4x8x6272xbf16, #tpu.memory_space<vmem>>, vector<4x8x128xbf16>,
    %c0_84 = arith.constant 0 : index
    %c0_85 = arith.constant 0 : index
    %c18_86 = arith.constant 18 : index
    %c2_87 = arith.constant 2 : index
    %c0_88 = arith.constant 0 : index
    %39 = vector.load %arg2[%c0_84, %c0_85, %c18_86, %c2_87, %c0_88] : memref<1x1x54x10x128xbf16, #tpu.memory_space<vmem>>, vector<1x1x4x8x128xbf16>
    %40 = vector.shape_cast %39 : vector<1x1x4x8x128xbf16> to vector<4x8x128xbf16>
    %c0_89 = arith.constant 0 : index
    %c0_90 = arith.constant 0 : index
    %c1664 = arith.constant 1664 : index
    %41 = vector.load %arg6[%c0_89, %c0_90, %c1664] : memref<4x8x6272xbf16, #tpu.memory_space<vmem>>, vector<4x8x128xbf16>
    tpu.vector_store %arg6[%c0_89, %c0_90, %c1664], %40 {strides = array<i32>} : memref<4x8x6272xbf16, #tpu.memory_space<vmem>>, vector<4x8x128xbf16>,
    %c0_91 = arith.constant 0 : index
    %c0_92 = arith.constant 0 : index
    %c36 = arith.constant 36 : index
    %c0_93 = arith.constant 0 : index
    %c0_94 = arith.constant 0 : index
    %42 = vector.load %arg2[%c0_91, %c0_92, %c36, %c0_93, %c0_94] : memref<1x1x54x10x128xbf16, #tpu.memory_space<vmem>>, vector<1x1x4x8x128xbf16>
    %43 = vector.shape_cast %42 : vector<1x1x4x8x128xbf16> to vector<4x8x128xbf16>
    %c0_95 = arith.constant 0 : index
    %c0_96 = arith.constant 0 : index
    %c1792 = arith.constant 1792 : index
    %44 = vector.load %arg6[%c0_95, %c0_96, %c1792] : memref<4x8x6272xbf16, #tpu.memory_space<vmem>>, vector<4x8x128xbf16>
    tpu.vector_store %arg6[%c0_95, %c0_96, %c1792], %43 {strides = array<i32>} : memref<4x8x6272xbf16, #tpu.memory_space<vmem>>, vector<4x8x128xbf16>,
    %c0_97 = arith.constant 0 : index
    %c0_98 = arith.constant 0 : index
    %c42 = arith.constant 42 : index
    %c0_99 = arith.constant 0 : index
    %c0_100 = arith.constant 0 : index
    %45 = vector.load %arg2[%c0_97, %c0_98, %c42, %c0_99, %c0_100] : memref<1x1x54x10x128xbf16, #tpu.memory_space<vmem>>, vector<1x1x4x8x128xbf16>
    %46 = vector.shape_cast %45 : vector<1x1x4x8x128xbf16> to vector<4x8x128xbf16>
    %c0_101 = arith.constant 0 : index
    %c0_102 = arith.constant 0 : index
    %c1920 = arith.constant 1920 : index
    %47 = vector.load %arg6[%c0_101, %c0_102, %c1920] : memref<4x8x6272xbf16, #tpu.memory_space<vmem>>, vector<4x8x128xbf16>
    tpu.vector_store %arg6[%c0_101, %c0_102, %c1920], %46 {strides = array<i32>} : memref<4x8x6272xbf16, #tpu.memory_space<vmem>>, vector<4x8x128xbf16>,
    %c0_103 = arith.constant 0 : index
    %c0_104 = arith.constant 0 : index
    %c48 = arith.constant 48 : index
    %c0_105 = arith.constant 0 : index
    %c0_106 = arith.constant 0 : index
    %48 = vector.load %arg2[%c0_103, %c0_104, %c48, %c0_105, %c0_106] : memref<1x1x54x10x128xbf16, #tpu.memory_space<vmem>>, vector<1x1x4x8x128xbf16>
    %49 = vector.shape_cast %48 : vector<1x1x4x8x128xbf16> to vector<4x8x128xbf16>
    %c0_107 = arith.constant 0 : index
    %c0_108 = arith.constant 0 : index
    %c2048 = arith.constant 2048 : index
    %50 = vector.load %arg6[%c0_107, %c0_108, %c2048] : memref<4x8x6272xbf16, #tpu.memory_space<vmem>>, vector<4x8x128xbf16>
    tpu.vector_store %arg6[%c0_107, %c0_108, %c2048], %49 {strides = array<i32>} : memref<4x8x6272xbf16, #tpu.memory_space<vmem>>, vector<4x8x128xbf16>,
    %c0_109 = arith.constant 0 : index
    %c0_110 = arith.constant 0 : index
    %c36_111 = arith.constant 36 : index
    %c1_112 = arith.constant 1 : index
    %c0_113 = arith.constant 0 : index
    %51 = vector.load %arg2[%c0_109, %c0_110, %c36_111, %c1_112, %c0_113] : memref<1x1x54x10x128xbf16, #tpu.memory_space<vmem>>, vector<1x1x4x8x128xbf16>
    %52 = vector.shape_cast %51 : vector<1x1x4x8x128xbf16> to vector<4x8x128xbf16>
    %c0_114 = arith.constant 0 : index
    %c0_115 = arith.constant 0 : index
    %c2176 = arith.constant 2176 : index
    %53 = vector.load %arg6[%c0_114, %c0_115, %c2176] : memref<4x8x6272xbf16, #tpu.memory_space<vmem>>, vector<4x8x128xbf16>
    tpu.vector_store %arg6[%c0_114, %c0_115, %c2176], %52 {strides = array<i32>} : memref<4x8x6272xbf16, #tpu.memory_space<vmem>>, vector<4x8x128xbf16>,
    %c0_116 = arith.constant 0 : index
    %c0_117 = arith.constant 0 : index
    %c42_118 = arith.constant 42 : index
    %c1_119 = arith.constant 1 : index
    %c0_120 = arith.constant 0 : index
    %54 = vector.load %arg2[%c0_116, %c0_117, %c42_118, %c1_119, %c0_120] : memref<1x1x54x10x128xbf16, #tpu.memory_space<vmem>>, vector<1x1x4x8x128xbf16>
    %55 = vector.shape_cast %54 : vector<1x1x4x8x128xbf16> to vector<4x8x128xbf16>
    %c0_121 = arith.constant 0 : index
    %c0_122 = arith.constant 0 : index
    %c2304 = arith.constant 2304 : index
    %56 = vector.load %arg6[%c0_121, %c0_122, %c2304] : memref<4x8x6272xbf16, #tpu.memory_space<vmem>>, vector<4x8x128xbf16>
    tpu.vector_store %arg6[%c0_121, %c0_122, %c2304], %55 {strides = array<i32>} : memref<4x8x6272xbf16, #tpu.memory_space<vmem>>, vector<4x8x128xbf16>,
    %c0_123 = arith.constant 0 : index
    %c0_124 = arith.constant 0 : index
    %c48_125 = arith.constant 48 : index
    %c1_126 = arith.constant 1 : index
    %c0_127 = arith.constant 0 : index
    %57 = vector.load %arg2[%c0_123, %c0_124, %c48_125, %c1_126, %c0_127] : memref<1x1x54x10x128xbf16, #tpu.memory_space<vmem>>, vector<1x1x4x8x128xbf16>
    %58 = vector.shape_cast %57 : vector<1x1x4x8x128xbf16> to vector<4x8x128xbf16>
    %c0_128 = arith.constant 0 : index
    %c0_129 = arith.constant 0 : index
    %c2432 = arith.constant 2432 : index
    %59 = vector.load %arg6[%c0_128, %c0_129, %c2432] : memref<4x8x6272xbf16, #tpu.memory_space<vmem>>, vector<4x8x128xbf16>
    tpu.vector_store %arg6[%c0_128, %c0_129, %c2432], %58 {strides = array<i32>} : memref<4x8x6272xbf16, #tpu.memory_space<vmem>>, vector<4x8x128xbf16>,
    %c0_130 = arith.constant 0 : index
    %c0_131 = arith.constant 0 : index
    %c36_132 = arith.constant 36 : index
    %c2_133 = arith.constant 2 : index
    %c0_134 = arith.constant 0 : index
    %60 = vector.load %arg2[%c0_130, %c0_131, %c36_132, %c2_133, %c0_134] : memref<1x1x54x10x128xbf16, #tpu.memory_space<vmem>>, vector<1x1x4x8x128xbf16>
    %61 = vector.shape_cast %60 : vector<1x1x4x8x128xbf16> to vector<4x8x128xbf16>
    %c0_135 = arith.constant 0 : index
    %c0_136 = arith.constant 0 : index
    %c2560 = arith.constant 2560 : index
    %62 = vector.load %arg6[%c0_135, %c0_136, %c2560] : memref<4x8x6272xbf16, #tpu.memory_space<vmem>>, vector<4x8x128xbf16>
    tpu.vector_store %arg6[%c0_135, %c0_136, %c2560], %61 {strides = array<i32>} : memref<4x8x6272xbf16, #tpu.memory_space<vmem>>, vector<4x8x128xbf16>,
    %c0_137 = arith.constant 0 : index
    %c0_138 = arith.constant 0 : index
    %c1_139 = arith.constant 1 : index
    %c0_140 = arith.constant 0 : index
    %c0_141 = arith.constant 0 : index
    %63 = vector.load %arg2[%c0_137, %c0_138, %c1_139, %c0_140, %c0_141] : memref<1x1x54x10x128xbf16, #tpu.memory_space<vmem>>, vector<1x1x4x8x128xbf16>
    %64 = vector.shape_cast %63 : vector<1x1x4x8x128xbf16> to vector<4x8x128xbf16>
    %c0_142 = arith.constant 0 : index
    %c0_143 = arith.constant 0 : index
    %c2688 = arith.constant 2688 : index
    %65 = vector.load %arg6[%c0_142, %c0_143, %c2688] : memref<4x8x6272xbf16, #tpu.memory_space<vmem>>, vector<4x8x128xbf16>
    tpu.vector_store %arg6[%c0_142, %c0_143, %c2688], %64 {strides = array<i32>} : memref<4x8x6272xbf16, #tpu.memory_space<vmem>>, vector<4x8x128xbf16>,
    %c0_144 = arith.constant 0 : index
    %c0_145 = arith.constant 0 : index
    %c7 = arith.constant 7 : index
    %c0_146 = arith.constant 0 : index
    %c0_147 = arith.constant 0 : index
    %66 = vector.load %arg2[%c0_144, %c0_145, %c7, %c0_146, %c0_147] : memref<1x1x54x10x128xbf16, #tpu.memory_space<vmem>>, vector<1x1x4x8x128xbf16>
    %67 = vector.shape_cast %66 : vector<1x1x4x8x128xbf16> to vector<4x8x128xbf16>
    %c0_148 = arith.constant 0 : index
    %c0_149 = arith.constant 0 : index
    %c2816 = arith.constant 2816 : index
    %68 = vector.load %arg6[%c0_148, %c0_149, %c2816] : memref<4x8x6272xbf16, #tpu.memory_space<vmem>>, vector<4x8x128xbf16>
    tpu.vector_store %arg6[%c0_148, %c0_149, %c2816], %67 {strides = array<i32>} : memref<4x8x6272xbf16, #tpu.memory_space<vmem>>, vector<4x8x128xbf16>,
    %c0_150 = arith.constant 0 : index
    %c0_151 = arith.constant 0 : index
    %c13 = arith.constant 13 : index
    %c0_152 = arith.constant 0 : index
    %c0_153 = arith.constant 0 : index
    %69 = vector.load %arg2[%c0_150, %c0_151, %c13, %c0_152, %c0_153] : memref<1x1x54x10x128xbf16, #tpu.memory_space<vmem>>, vector<1x1x4x8x128xbf16>
    %70 = vector.shape_cast %69 : vector<1x1x4x8x128xbf16> to vector<4x8x128xbf16>
    %c0_154 = arith.constant 0 : index
    %c0_155 = arith.constant 0 : index
    %c2944 = arith.constant 2944 : index
    %71 = vector.load %arg6[%c0_154, %c0_155, %c2944] : memref<4x8x6272xbf16, #tpu.memory_space<vmem>>, vector<4x8x128xbf16>
    tpu.vector_store %arg6[%c0_154, %c0_155, %c2944], %70 {strides = array<i32>} : memref<4x8x6272xbf16, #tpu.memory_space<vmem>>, vector<4x8x128xbf16>,
    %c0_156 = arith.constant 0 : index
    %c0_157 = arith.constant 0 : index
    %c1_158 = arith.constant 1 : index
    %c1_159 = arith.constant 1 : index
    %c0_160 = arith.constant 0 : index
    %72 = vector.load %arg2[%c0_156, %c0_157, %c1_158, %c1_159, %c0_160] : memref<1x1x54x10x128xbf16, #tpu.memory_space<vmem>>, vector<1x1x4x8x128xbf16>
    %73 = vector.shape_cast %72 : vector<1x1x4x8x128xbf16> to vector<4x8x128xbf16>
    %c0_161 = arith.constant 0 : index
    %c0_162 = arith.constant 0 : index
    %c3072 = arith.constant 3072 : index
    %74 = vector.load %arg6[%c0_161, %c0_162, %c3072] : memref<4x8x6272xbf16, #tpu.memory_space<vmem>>, vector<4x8x128xbf16>
    tpu.vector_store %arg6[%c0_161, %c0_162, %c3072], %73 {strides = array<i32>} : memref<4x8x6272xbf16, #tpu.memory_space<vmem>>, vector<4x8x128xbf16>,
    %c0_163 = arith.constant 0 : index
    %c0_164 = arith.constant 0 : index
    %c7_165 = arith.constant 7 : index
    %c1_166 = arith.constant 1 : index
    %c0_167 = arith.constant 0 : index
    %75 = vector.load %arg2[%c0_163, %c0_164, %c7_165, %c1_166, %c0_167] : memref<1x1x54x10x128xbf16, #tpu.memory_space<vmem>>, vector<1x1x4x8x128xbf16>
    %76 = vector.shape_cast %75 : vector<1x1x4x8x128xbf16> to vector<4x8x128xbf16>
    %c0_168 = arith.constant 0 : index
    %c0_169 = arith.constant 0 : index
    %c3200 = arith.constant 3200 : index
    %77 = vector.load %arg6[%c0_168, %c0_169, %c3200] : memref<4x8x6272xbf16, #tpu.memory_space<vmem>>, vector<4x8x128xbf16>
    tpu.vector_store %arg6[%c0_168, %c0_169, %c3200], %76 {strides = array<i32>} : memref<4x8x6272xbf16, #tpu.memory_space<vmem>>, vector<4x8x128xbf16>,
    %c0_170 = arith.constant 0 : index
    %c0_171 = arith.constant 0 : index
    %c13_172 = arith.constant 13 : index
    %c1_173 = arith.constant 1 : index
    %c0_174 = arith.constant 0 : index
    %78 = vector.load %arg2[%c0_170, %c0_171, %c13_172, %c1_173, %c0_174] : memref<1x1x54x10x128xbf16, #tpu.memory_space<vmem>>, vector<1x1x4x8x128xbf16>
    %79 = vector.shape_cast %78 : vector<1x1x4x8x128xbf16> to vector<4x8x128xbf16>
    %c0_175 = arith.constant 0 : index
    %c0_176 = arith.constant 0 : index
    %c3328 = arith.constant 3328 : index
    %80 = vector.load %arg6[%c0_175, %c0_176, %c3328] : memref<4x8x6272xbf16, #tpu.memory_space<vmem>>, vector<4x8x128xbf16>
    tpu.vector_store %arg6[%c0_175, %c0_176, %c3328], %79 {strides = array<i32>} : memref<4x8x6272xbf16, #tpu.memory_space<vmem>>, vector<4x8x128xbf16>,
    %c0_177 = arith.constant 0 : index
    %c0_178 = arith.constant 0 : index
    %c1_179 = arith.constant 1 : index
    %c2_180 = arith.constant 2 : index
    %c0_181 = arith.constant 0 : index
    %81 = vector.load %arg2[%c0_177, %c0_178, %c1_179, %c2_180, %c0_181] : memref<1x1x54x10x128xbf16, #tpu.memory_space<vmem>>, vector<1x1x4x8x128xbf16>
    %82 = vector.shape_cast %81 : vector<1x1x4x8x128xbf16> to vector<4x8x128xbf16>
    %c0_182 = arith.constant 0 : index
    %c0_183 = arith.constant 0 : index
    %c3456 = arith.constant 3456 : index
    %83 = vector.load %arg6[%c0_182, %c0_183, %c3456] : memref<4x8x6272xbf16, #tpu.memory_space<vmem>>, vector<4x8x128xbf16>
    tpu.vector_store %arg6[%c0_182, %c0_183, %c3456], %82 {strides = array<i32>} : memref<4x8x6272xbf16, #tpu.memory_space<vmem>>, vector<4x8x128xbf16>,
    %c0_184 = arith.constant 0 : index
    %c0_185 = arith.constant 0 : index
    %c19 = arith.constant 19 : index
    %c0_186 = arith.constant 0 : index
    %c0_187 = arith.constant 0 : index
    %84 = vector.load %arg2[%c0_184, %c0_185, %c19, %c0_186, %c0_187] : memref<1x1x54x10x128xbf16, #tpu.memory_space<vmem>>, vector<1x1x4x8x128xbf16>
    %85 = vector.shape_cast %84 : vector<1x1x4x8x128xbf16> to vector<4x8x128xbf16>
    %c0_188 = arith.constant 0 : index
    %c0_189 = arith.constant 0 : index
    %c3584 = arith.constant 3584 : index
    %86 = vector.load %arg6[%c0_188, %c0_189, %c3584] : memref<4x8x6272xbf16, #tpu.memory_space<vmem>>, vector<4x8x128xbf16>
    tpu.vector_store %arg6[%c0_188, %c0_189, %c3584], %85 {strides = array<i32>} : memref<4x8x6272xbf16, #tpu.memory_space<vmem>>, vector<4x8x128xbf16>,
    %c0_190 = arith.constant 0 : index
    %c0_191 = arith.constant 0 : index
    %c25 = arith.constant 25 : index
    %c0_192 = arith.constant 0 : index
    %c0_193 = arith.constant 0 : index
    %87 = vector.load %arg2[%c0_190, %c0_191, %c25, %c0_192, %c0_193] : memref<1x1x54x10x128xbf16, #tpu.memory_space<vmem>>, vector<1x1x4x8x128xbf16>
    %88 = vector.shape_cast %87 : vector<1x1x4x8x128xbf16> to vector<4x8x128xbf16>
    %c0_194 = arith.constant 0 : index
    %c0_195 = arith.constant 0 : index
    %c3712 = arith.constant 3712 : index
    %89 = vector.load %arg6[%c0_194, %c0_195, %c3712] : memref<4x8x6272xbf16, #tpu.memory_space<vmem>>, vector<4x8x128xbf16>
    tpu.vector_store %arg6[%c0_194, %c0_195, %c3712], %88 {strides = array<i32>} : memref<4x8x6272xbf16, #tpu.memory_space<vmem>>, vector<4x8x128xbf16>,
    %c0_196 = arith.constant 0 : index
    %c0_197 = arith.constant 0 : index
    %c31 = arith.constant 31 : index
    %c0_198 = arith.constant 0 : index
    %c0_199 = arith.constant 0 : index
    %90 = vector.load %arg2[%c0_196, %c0_197, %c31, %c0_198, %c0_199] : memref<1x1x54x10x128xbf16, #tpu.memory_space<vmem>>, vector<1x1x4x8x128xbf16>
    %91 = vector.shape_cast %90 : vector<1x1x4x8x128xbf16> to vector<4x8x128xbf16>
    %c0_200 = arith.constant 0 : index
    %c0_201 = arith.constant 0 : index
    %c3840 = arith.constant 3840 : index
    %92 = vector.load %arg6[%c0_200, %c0_201, %c3840] : memref<4x8x6272xbf16, #tpu.memory_space<vmem>>, vector<4x8x128xbf16>
    tpu.vector_store %arg6[%c0_200, %c0_201, %c3840], %91 {strides = array<i32>} : memref<4x8x6272xbf16, #tpu.memory_space<vmem>>, vector<4x8x128xbf16>,
    %c0_202 = arith.constant 0 : index
    %c0_203 = arith.constant 0 : index
    %c19_204 = arith.constant 19 : index
    %c1_205 = arith.constant 1 : index
    %c0_206 = arith.constant 0 : index
    %93 = vector.load %arg2[%c0_202, %c0_203, %c19_204, %c1_205, %c0_206] : memref<1x1x54x10x128xbf16, #tpu.memory_space<vmem>>, vector<1x1x4x8x128xbf16>
    %94 = vector.shape_cast %93 : vector<1x1x4x8x128xbf16> to vector<4x8x128xbf16>
    %c0_207 = arith.constant 0 : index
    %c0_208 = arith.constant 0 : index
    %c3968 = arith.constant 3968 : index
    %95 = vector.load %arg6[%c0_207, %c0_208, %c3968] : memref<4x8x6272xbf16, #tpu.memory_space<vmem>>, vector<4x8x128xbf16>
    tpu.vector_store %arg6[%c0_207, %c0_208, %c3968], %94 {strides = array<i32>} : memref<4x8x6272xbf16, #tpu.memory_space<vmem>>, vector<4x8x128xbf16>,
    %c0_209 = arith.constant 0 : index
    %c0_210 = arith.constant 0 : index
    %c25_211 = arith.constant 25 : index
    %c1_212 = arith.constant 1 : index
    %c0_213 = arith.constant 0 : index
    %96 = vector.load %arg2[%c0_209, %c0_210, %c25_211, %c1_212, %c0_213] : memref<1x1x54x10x128xbf16, #tpu.memory_space<vmem>>, vector<1x1x4x8x128xbf16>
    %97 = vector.shape_cast %96 : vector<1x1x4x8x128xbf16> to vector<4x8x128xbf16>
    %c0_214 = arith.constant 0 : index
    %c0_215 = arith.constant 0 : index
    %c4096 = arith.constant 4096 : index
    %98 = vector.load %arg6[%c0_214, %c0_215, %c4096] : memref<4x8x6272xbf16, #tpu.memory_space<vmem>>, vector<4x8x128xbf16>
    tpu.vector_store %arg6[%c0_214, %c0_215, %c4096], %97 {strides = array<i32>} : memref<4x8x6272xbf16, #tpu.memory_space<vmem>>, vector<4x8x128xbf16>,
    %c0_216 = arith.constant 0 : index
    %c0_217 = arith.constant 0 : index
    %c31_218 = arith.constant 31 : index
    %c1_219 = arith.constant 1 : index
    %c0_220 = arith.constant 0 : index
    %99 = vector.load %arg2[%c0_216, %c0_217, %c31_218, %c1_219, %c0_220] : memref<1x1x54x10x128xbf16, #tpu.memory_space<vmem>>, vector<1x1x4x8x128xbf16>
    %100 = vector.shape_cast %99 : vector<1x1x4x8x128xbf16> to vector<4x8x128xbf16>
    %c0_221 = arith.constant 0 : index
    %c0_222 = arith.constant 0 : index
    %c4224 = arith.constant 4224 : index
    %101 = vector.load %arg6[%c0_221, %c0_222, %c4224] : memref<4x8x6272xbf16, #tpu.memory_space<vmem>>, vector<4x8x128xbf16>
    tpu.vector_store %arg6[%c0_221, %c0_222, %c4224], %100 {strides = array<i32>} : memref<4x8x6272xbf16, #tpu.memory_space<vmem>>, vector<4x8x128xbf16>,
    %c0_223 = arith.constant 0 : index
    %c0_224 = arith.constant 0 : index
    %c19_225 = arith.constant 19 : index
    %c2_226 = arith.constant 2 : index
    %c0_227 = arith.constant 0 : index
    %102 = vector.load %arg2[%c0_223, %c0_224, %c19_225, %c2_226, %c0_227] : memref<1x1x54x10x128xbf16, #tpu.memory_space<vmem>>, vector<1x1x4x8x128xbf16>
    %103 = vector.shape_cast %102 : vector<1x1x4x8x128xbf16> to vector<4x8x128xbf16>
    %c0_228 = arith.constant 0 : index
    %c0_229 = arith.constant 0 : index
    %c4352 = arith.constant 4352 : index
    %104 = vector.load %arg6[%c0_228, %c0_229, %c4352] : memref<4x8x6272xbf16, #tpu.memory_space<vmem>>, vector<4x8x128xbf16>
    tpu.vector_store %arg6[%c0_228, %c0_229, %c4352], %103 {strides = array<i32>} : memref<4x8x6272xbf16, #tpu.memory_space<vmem>>, vector<4x8x128xbf16>,
    %c0_230 = arith.constant 0 : index
    %c0_231 = arith.constant 0 : index
    %c37 = arith.constant 37 : index
    %c0_232 = arith.constant 0 : index
    %c0_233 = arith.constant 0 : index
    %105 = vector.load %arg2[%c0_230, %c0_231, %c37, %c0_232, %c0_233] : memref<1x1x54x10x128xbf16, #tpu.memory_space<vmem>>, vector<1x1x4x8x128xbf16>
    %106 = vector.shape_cast %105 : vector<1x1x4x8x128xbf16> to vector<4x8x128xbf16>
    %c0_234 = arith.constant 0 : index
    %c0_235 = arith.constant 0 : index
    %c4480 = arith.constant 4480 : index
    %107 = vector.load %arg6[%c0_234, %c0_235, %c4480] : memref<4x8x6272xbf16, #tpu.memory_space<vmem>>, vector<4x8x128xbf16>
    tpu.vector_store %arg6[%c0_234, %c0_235, %c4480], %106 {strides = array<i32>} : memref<4x8x6272xbf16, #tpu.memory_space<vmem>>, vector<4x8x128xbf16>,
    %c0_236 = arith.constant 0 : index
    %c0_237 = arith.constant 0 : index
    %c43 = arith.constant 43 : index
    %c0_238 = arith.constant 0 : index
    %c0_239 = arith.constant 0 : index
    %108 = vector.load %arg2[%c0_236, %c0_237, %c43, %c0_238, %c0_239] : memref<1x1x54x10x128xbf16, #tpu.memory_space<vmem>>, vector<1x1x4x8x128xbf16>
    %109 = vector.shape_cast %108 : vector<1x1x4x8x128xbf16> to vector<4x8x128xbf16>
    %c0_240 = arith.constant 0 : index
    %c0_241 = arith.constant 0 : index
    %c4608 = arith.constant 4608 : index
    %110 = vector.load %arg6[%c0_240, %c0_241, %c4608] : memref<4x8x6272xbf16, #tpu.memory_space<vmem>>, vector<4x8x128xbf16>
    tpu.vector_store %arg6[%c0_240, %c0_241, %c4608], %109 {strides = array<i32>} : memref<4x8x6272xbf16, #tpu.memory_space<vmem>>, vector<4x8x128xbf16>,
    %c0_242 = arith.constant 0 : index
    %c0_243 = arith.constant 0 : index
    %c49 = arith.constant 49 : index
    %c0_244 = arith.constant 0 : index
    %c0_245 = arith.constant 0 : index
    %111 = vector.load %arg2[%c0_242, %c0_243, %c49, %c0_244, %c0_245] : memref<1x1x54x10x128xbf16, #tpu.memory_space<vmem>>, vector<1x1x4x8x128xbf16>
    %112 = vector.shape_cast %111 : vector<1x1x4x8x128xbf16> to vector<4x8x128xbf16>
    %c0_246 = arith.constant 0 : index
    %c0_247 = arith.constant 0 : index
    %c4736 = arith.constant 4736 : index
    %113 = vector.load %arg6[%c0_246, %c0_247, %c4736] : memref<4x8x6272xbf16, #tpu.memory_space<vmem>>, vector<4x8x128xbf16>
    tpu.vector_store %arg6[%c0_246, %c0_247, %c4736], %112 {strides = array<i32>} : memref<4x8x6272xbf16, #tpu.memory_space<vmem>>, vector<4x8x128xbf16>,
    %c0_248 = arith.constant 0 : index
    %c0_249 = arith.constant 0 : index
    %c37_250 = arith.constant 37 : index
    %c1_251 = arith.constant 1 : index
    %c0_252 = arith.constant 0 : index
    %114 = vector.load %arg2[%c0_248, %c0_249, %c37_250, %c1_251, %c0_252] : memref<1x1x54x10x128xbf16, #tpu.memory_space<vmem>>, vector<1x1x4x8x128xbf16>
    %115 = vector.shape_cast %114 : vector<1x1x4x8x128xbf16> to vector<4x8x128xbf16>
    %c0_253 = arith.constant 0 : index
    %c0_254 = arith.constant 0 : index
    %c4864 = arith.constant 4864 : index
    %116 = vector.load %arg6[%c0_253, %c0_254, %c4864] : memref<4x8x6272xbf16, #tpu.memory_space<vmem>>, vector<4x8x128xbf16>
    tpu.vector_store %arg6[%c0_253, %c0_254, %c4864], %115 {strides = array<i32>} : memref<4x8x6272xbf16, #tpu.memory_space<vmem>>, vector<4x8x128xbf16>,
    %c0_255 = arith.constant 0 : index
    %c0_256 = arith.constant 0 : index
    %c43_257 = arith.constant 43 : index
    %c1_258 = arith.constant 1 : index
    %c0_259 = arith.constant 0 : index
    %117 = vector.load %arg2[%c0_255, %c0_256, %c43_257, %c1_258, %c0_259] : memref<1x1x54x10x128xbf16, #tpu.memory_space<vmem>>, vector<1x1x4x8x128xbf16>
    %118 = vector.shape_cast %117 : vector<1x1x4x8x128xbf16> to vector<4x8x128xbf16>
    %c0_260 = arith.constant 0 : index
    %c0_261 = arith.constant 0 : index
    %c4992 = arith.constant 4992 : index
    %119 = vector.load %arg6[%c0_260, %c0_261, %c4992] : memref<4x8x6272xbf16, #tpu.memory_space<vmem>>, vector<4x8x128xbf16>
    tpu.vector_store %arg6[%c0_260, %c0_261, %c4992], %118 {strides = array<i32>} : memref<4x8x6272xbf16, #tpu.memory_space<vmem>>, vector<4x8x128xbf16>,
    %c0_262 = arith.constant 0 : index
    %c0_263 = arith.constant 0 : index
    %c49_264 = arith.constant 49 : index
    %c1_265 = arith.constant 1 : index
    %c0_266 = arith.constant 0 : index
    %120 = vector.load %arg2[%c0_262, %c0_263, %c49_264, %c1_265, %c0_266] : memref<1x1x54x10x128xbf16, #tpu.memory_space<vmem>>, vector<1x1x4x8x128xbf16>
    %121 = vector.shape_cast %120 : vector<1x1x4x8x128xbf16> to vector<4x8x128xbf16>
    %c0_267 = arith.constant 0 : index
    %c0_268 = arith.constant 0 : index
    %c5120 = arith.constant 5120 : index
    %122 = vector.load %arg6[%c0_267, %c0_268, %c5120] : memref<4x8x6272xbf16, #tpu.memory_space<vmem>>, vector<4x8x128xbf16>
    tpu.vector_store %arg6[%c0_267, %c0_268, %c5120], %121 {strides = array<i32>} : memref<4x8x6272xbf16, #tpu.memory_space<vmem>>, vector<4x8x128xbf16>,
    %c0_269 = arith.constant 0 : index
    %c0_270 = arith.constant 0 : index
    %c37_271 = arith.constant 37 : index
    %c2_272 = arith.constant 2 : index
    %c0_273 = arith.constant 0 : index
    %123 = vector.load %arg2[%c0_269, %c0_270, %c37_271, %c2_272, %c0_273] : memref<1x1x54x10x128xbf16, #tpu.memory_space<vmem>>, vector<1x1x4x8x128xbf16>
    %124 = vector.shape_cast %123 : vector<1x1x4x8x128xbf16> to vector<4x8x128xbf16>
    %c0_274 = arith.constant 0 : index
    %c0_275 = arith.constant 0 : index
    %c5248 = arith.constant 5248 : index
    %125 = vector.load %arg6[%c0_274, %c0_275, %c5248] : memref<4x8x6272xbf16, #tpu.memory_space<vmem>>, vector<4x8x128xbf16>
    tpu.vector_store %arg6[%c0_274, %c0_275, %c5248], %124 {strides = array<i32>} : memref<4x8x6272xbf16, #tpu.memory_space<vmem>>, vector<4x8x128xbf16>,
    %c0_276 = arith.constant 0 : index
    %c0_277 = arith.constant 0 : index
    %c2_278 = arith.constant 2 : index
    %c0_279 = arith.constant 0 : index
    %c0_280 = arith.constant 0 : index
    %126 = vector.load %arg2[%c0_276, %c0_277, %c2_278, %c0_279, %c0_280] : memref<1x1x54x10x128xbf16, #tpu.memory_space<vmem>>, vector<1x1x4x8x128xbf16>
    %127 = vector.shape_cast %126 : vector<1x1x4x8x128xbf16> to vector<4x8x128xbf16>
    %c0_281 = arith.constant 0 : index
    %c0_282 = arith.constant 0 : index
    %c5376 = arith.constant 5376 : index
    %128 = vector.load %arg6[%c0_281, %c0_282, %c5376] : memref<4x8x6272xbf16, #tpu.memory_space<vmem>>, vector<4x8x128xbf16>
    tpu.vector_store %arg6[%c0_281, %c0_282, %c5376], %127 {strides = array<i32>} : memref<4x8x6272xbf16, #tpu.memory_space<vmem>>, vector<4x8x128xbf16>,
    %c0_283 = arith.constant 0 : index
    %c0_284 = arith.constant 0 : index
    %c8 = arith.constant 8 : index
    %c0_285 = arith.constant 0 : index
    %c0_286 = arith.constant 0 : index
    %129 = vector.load %arg2[%c0_283, %c0_284, %c8, %c0_285, %c0_286] : memref<1x1x54x10x128xbf16, #tpu.memory_space<vmem>>, vector<1x1x4x8x128xbf16>
    %130 = vector.shape_cast %129 : vector<1x1x4x8x128xbf16> to vector<4x8x128xbf16>
    %c0_287 = arith.constant 0 : index
    %c0_288 = arith.constant 0 : index
    %c5504 = arith.constant 5504 : index
    %131 = vector.load %arg6[%c0_287, %c0_288, %c5504] : memref<4x8x6272xbf16, #tpu.memory_space<vmem>>, vector<4x8x128xbf16>
    tpu.vector_store %arg6[%c0_287, %c0_288, %c5504], %130 {strides = array<i32>} : memref<4x8x6272xbf16, #tpu.memory_space<vmem>>, vector<4x8x128xbf16>,
    %c0_289 = arith.constant 0 : index
    %c0_290 = arith.constant 0 : index
    %c14 = arith.constant 14 : index
    %c0_291 = arith.constant 0 : index
    %c0_292 = arith.constant 0 : index
    %132 = vector.load %arg2[%c0_289, %c0_290, %c14, %c0_291, %c0_292] : memref<1x1x54x10x128xbf16, #tpu.memory_space<vmem>>, vector<1x1x4x8x128xbf16>
    %133 = vector.shape_cast %132 : vector<1x1x4x8x128xbf16> to vector<4x8x128xbf16>
    %c0_293 = arith.constant 0 : index
    %c0_294 = arith.constant 0 : index
    %c5632 = arith.constant 5632 : index
    %134 = vector.load %arg6[%c0_293, %c0_294, %c5632] : memref<4x8x6272xbf16, #tpu.memory_space<vmem>>, vector<4x8x128xbf16>
    tpu.vector_store %arg6[%c0_293, %c0_294, %c5632], %133 {strides = array<i32>} : memref<4x8x6272xbf16, #tpu.memory_space<vmem>>, vector<4x8x128xbf16>,
    %c0_295 = arith.constant 0 : index
    %c0_296 = arith.constant 0 : index
    %c2_297 = arith.constant 2 : index
    %c1_298 = arith.constant 1 : index
    %c0_299 = arith.constant 0 : index
    %135 = vector.load %arg2[%c0_295, %c0_296, %c2_297, %c1_298, %c0_299] : memref<1x1x54x10x128xbf16, #tpu.memory_space<vmem>>, vector<1x1x4x8x128xbf16>
    %136 = vector.shape_cast %135 : vector<1x1x4x8x128xbf16> to vector<4x8x128xbf16>
    %c0_300 = arith.constant 0 : index
    %c0_301 = arith.constant 0 : index
    %c5760 = arith.constant 5760 : index
    %137 = vector.load %arg6[%c0_300, %c0_301, %c5760] : memref<4x8x6272xbf16, #tpu.memory_space<vmem>>, vector<4x8x128xbf16>
    tpu.vector_store %arg6[%c0_300, %c0_301, %c5760], %136 {strides = array<i32>} : memref<4x8x6272xbf16, #tpu.memory_space<vmem>>, vector<4x8x128xbf16>,
    %c0_302 = arith.constant 0 : index
    %c0_303 = arith.constant 0 : index
    %c8_304 = arith.constant 8 : index
    %c1_305 = arith.constant 1 : index
    %c0_306 = arith.constant 0 : index
    %138 = vector.load %arg2[%c0_302, %c0_303, %c8_304, %c1_305, %c0_306] : memref<1x1x54x10x128xbf16, #tpu.memory_space<vmem>>, vector<1x1x4x8x128xbf16>
    %139 = vector.shape_cast %138 : vector<1x1x4x8x128xbf16> to vector<4x8x128xbf16>
    %c0_307 = arith.constant 0 : index
    %c0_308 = arith.constant 0 : index
    %c5888 = arith.constant 5888 : index
    %140 = vector.load %arg6[%c0_307, %c0_308, %c5888] : memref<4x8x6272xbf16, #tpu.memory_space<vmem>>, vector<4x8x128xbf16>
    tpu.vector_store %arg6[%c0_307, %c0_308, %c5888], %139 {strides = array<i32>} : memref<4x8x6272xbf16, #tpu.memory_space<vmem>>, vector<4x8x128xbf16>,
    %c0_309 = arith.constant 0 : index
    %c0_310 = arith.constant 0 : index
    %c14_311 = arith.constant 14 : index
    %c1_312 = arith.constant 1 : index
    %c0_313 = arith.constant 0 : index
    %141 = vector.load %arg2[%c0_309, %c0_310, %c14_311, %c1_312, %c0_313] : memref<1x1x54x10x128xbf16, #tpu.memory_space<vmem>>, vector<1x1x4x8x128xbf16>
    %142 = vector.shape_cast %141 : vector<1x1x4x8x128xbf16> to vector<4x8x128xbf16>
    %c0_314 = arith.constant 0 : index
    %c0_315 = arith.constant 0 : index
    %c6016 = arith.constant 6016 : index
    %143 = vector.load %arg6[%c0_314, %c0_315, %c6016] : memref<4x8x6272xbf16, #tpu.memory_space<vmem>>, vector<4x8x128xbf16>
    tpu.vector_store %arg6[%c0_314, %c0_315, %c6016], %142 {strides = array<i32>} : memref<4x8x6272xbf16, #tpu.memory_space<vmem>>, vector<4x8x128xbf16>,
    %c0_316 = arith.constant 0 : index
    %c0_317 = arith.constant 0 : index
    %c2_318 = arith.constant 2 : index
    %c2_319 = arith.constant 2 : index
    %c0_320 = arith.constant 0 : index
    %144 = vector.load %arg2[%c0_316, %c0_317, %c2_318, %c2_319, %c0_320] : memref<1x1x54x10x128xbf16, #tpu.memory_space<vmem>>, vector<1x1x4x8x128xbf16>
    %145 = vector.shape_cast %144 : vector<1x1x4x8x128xbf16> to vector<4x8x128xbf16>
    %c0_321 = arith.constant 0 : index
    %c0_322 = arith.constant 0 : index
    %c6144 = arith.constant 6144 : index
    %146 = vector.load %arg6[%c0_321, %c0_322, %c6144] : memref<4x8x6272xbf16, #tpu.memory_space<vmem>>, vector<4x8x128xbf16>
    tpu.vector_store %arg6[%c0_321, %c0_322, %c6144], %145 {strides = array<i32>} : memref<4x8x6272xbf16, #tpu.memory_space<vmem>>, vector<4x8x128xbf16>,
    %c0_323 = arith.constant 0 : index
    %c0_324 = arith.constant 0 : index
    %c0_325 = arith.constant 0 : index
    %147 = vector.load %arg6[%c0_323, %c0_324, %c0_325] : memref<4x8x6272xbf16, #tpu.memory_space<vmem>>, vector<4x8x6272xbf16>
    %148 = vector.shape_cast %147 : vector<4x8x6272xbf16> to vector<32x6272xbf16>
    %c0_326 = arith.constant 0 : index
    %c0_327 = arith.constant 0 : index
    %149 = vector.load %arg3[%c0_326, %c0_327] : memref<6272x32xbf16, #tpu.memory_space<vmem>>, vector<6272x32xbf16>
    %cst = arith.constant dense<0.000000e+00> : vector<32x32xf32>
    %150 = tpu.matmul %148, %149, %cst {dimension_numbers = #tpu.dot_dimension_numbers<[1], [0], [0], [1], [0, 0, 1, 1], [], []>} : vector<32x6272xbf16>, vector<6272x32xbf16>, vector<32x32xf32> -> vector<32x32xf32>
    %c0_328 = arith.constant 0 : index
    %c0_329 = arith.constant 0 : index
    %151 = vector.load %arg4[%c0_328, %c0_329] : memref<1x32xf32, #tpu.memory_space<vmem>>, vector<1x32xf32>
    %152 = vector.broadcast %151 : vector<1x32xf32> to vector<32x32xf32>
    %153 = arith.addf %150, %152 : vector<32x32xf32>
    %154 = arith.truncf %153 : vector<32x32xf32> to vector<32x32xbf16>
    %c0_330 = arith.constant 0 : index
    %c0_331 = arith.constant 0 : index
    %c0_332 = arith.constant 0 : index
    %155 = vector.load %arg5[%c0_330, %c0_331, %c0_332] : memref<1x32x32xbf16, #tpu.memory_space<vmem>>, vector<1x32x32xbf16>
    %156 = vector.shape_cast %155 : vector<1x32x32xbf16> to vector<32x32xbf16>
    %157 = vector.shape_cast %154 : vector<32x32xbf16> to vector<1x32x32xbf16>
    tpu.vector_store %arg5[%c0_330, %c0_331, %c0_332], %157 {strides = array<i32>} : memref<1x32x32xbf16, #tpu.memory_space<vmem>>, vector<1x32x32xbf16>,
    return
  }
  func.func @transform_0(%arg0: i32, %arg1: i32) -> (i32, i32, i32, i32, i32) {
    %c0_i32 = arith.constant 0 : i32
    %c0_i32_0 = arith.constant 0 : i32
    %c0_i32_1 = arith.constant 0 : i32
    %c0_i32_2 = arith.constant 0 : i32
    return %arg0, %arg1, %c0_i32, %c0_i32_0, %c0_i32_1 : i32, i32, i32, i32, i32
  }
  func.func @transform_1(%arg0: i32, %arg1: i32) -> (i32, i32) {
    %c0_i32 = arith.constant 0 : i32
    %c0_i32_0 = arith.constant 0 : i32
    %c0_i32_1 = arith.constant 0 : i32
    return %c0_i32, %c0_i32_0 : i32, i32
  }
  func.func @transform_2(%arg0: i32, %arg1: i32) -> (i32, i32) {
    %c0_i32 = arith.constant 0 : i32
    %c0_i32_0 = arith.constant 0 : i32
    %c0_i32_1 = arith.constant 0 : i32
    return %c0_i32, %c0_i32_0 : i32, i32
  }
  func.func @transform_3(%arg0: i32, %arg1: i32) -> (i32, i32, i32) {
    %c0_i32 = arith.constant 0 : i32
    %c0_i32_0 = arith.constant 0 : i32
    return %arg0, %arg1, %c0_i32 : i32, i32, i32
  }
}

</mosaic_0001>

<llo_original>
// kernel: _lambda_.1
$region0: #{_lambda_.1}
  #allocation0 [shape = 'u32[]', space=smem, size = 0x4, offset = 0x4, fixed_abs, tag = 'smem constant byte address 0x4 - core index']
  #allocation1 [shape = 'u32[144,128]{1,0:T(1,128)}', space=vmem, size = 0x12000, scoped, tag = 'internal scratch']
  #allocation2 [shape = 'bf16[4,8,6272]{2,1,0:T(8,128)(2,1)}', space=vmem, size = 0x62000, scoped, tag = 'scratch operand']
  %s0 = inlined_call_operand.vmem [shape: bf16[4,2,54,10,128], index: 0, kind: input, shape index: {}]
  %s1 = inlined_call_operand.vmem [shape: bf16[6272,32], index: 1, kind: input, shape index: {}]
  %s2 = inlined_call_operand.vmem [shape: f32[1,32], index: 2, kind: input, shape index: {}]
  %s3 = inlined_call_operand.vmem [shape: bf16[4,64,32], index: 3, kind: output, shape index: {}]
  %s4 = sld [smem:[#allocation0]]
  $region45: #{_lambda_.1} parent=0
    _
  %s6 = ssub.s32 1, %s4
  %s7 = scalar_select 0, %s6, %s4
  loop: start=0, step=1, limit=10
  $region2: #{_lambda_.1} parent=0 // loop_pre_header
    _
  $region3: #{_lambda_.1} parent=0 // loop_header
    %s9 = sphi 0, %s13
    %p10 = scmp.ge.s32.totalorder %s9, 10
    %s16 = sphi 0, %s28
    %s17 = sphi 0, %s24
    %s18 = sphi 0, %s16
    %s19 = sphi 0, %s17
    %s20 = sphi 0, %s18
    %s21 = sphi 0, %s19
    %s33 = sphi 0, %s35
    %s36 = sphi 0, %s33
    %s37 = sphi 0, %s36
    %s53 = sphi 0, %s37
    %s57 = sphi 0, %s57
    %s59 = sphi 0, %s57
    %s60 = sphi 0, %s59
    %s74 = sphi 0, %s60
    %s78 = sphi 0, %s78
    %s80 = sphi 0, %s78
    %s81 = sphi 0, %s80
    %s95 = sphi 0, %s81
    %s103 = sphi 0, %s105
    %s106 = sphi 0, %s103
    %s107 = sphi 0, %s106
    %s123 = sphi 0, %s107
  $region4: #{_lambda_.1} parent=0 // loop_header_branch
    %12 = sbr.rel (%p10) target = $region8
  $region5: #{_lambda_.1} parent=0 // loop_body
    %s14 = ssub.s32 %s9, 1
    %s15 = ssub.s32 %s9, 2
    %s22 = sadd.s32 1, %s17
    %p23 = scmp.ge.s32.totalorder %s22, 2
    %s24 = scalar_select %p23, 0, %s22
    %s25 = sadd.s32 1, %s16
    %s26 = scalar_select %p23, %s25, %s16
    %p27 = scmp.ge.s32.totalorder %s26, 4
    %s28 = scalar_select %p27, 0, %s26
    %s29 = ssub.s32 %s16, %s28
    %s30 = ssub.s32 %s17, %s24
    %s31 = sor.u32 %s29, %s30
    %p32 = scmp.eq.s32.totalorder %s31, 0
    %s34 = sadd.s32 %s33, 1
    %s35 = scalar_select %p32, %s33, %s34
    %p38 = pneg %p32
    %p39 = scmp.eq.s32.totalorder %s9, 7
    %p40 = por %p38, %p39
    %p41 = scmp.ne.s32.totalorder %s33, %s36
    %p42 = scmp.eq.s32.totalorder %s9, 0
    %p43 = por %p41, %p42
    %p44 = scmp.ne.s32.totalorder %s33, %s36
    %p45 = scmp.eq.s32.totalorder %s14, 7
    %p46 = por %p44, %p45
    %p47 = scmp.ne.s32.totalorder %s36, %s37
    %p48 = scmp.eq.s32.totalorder %s14, 0
    %p49 = por %p47, %p48
    %p50 = scmp.ne.s32.totalorder %s36, %s37
    %p51 = scmp.eq.s32.totalorder %s15, 7
    %p52 = por %p50, %p51
    %p54 = scmp.ne.s32.totalorder %s37, %s53
    %p55 = scmp.eq.s32.totalorder %s15, 0
    %p56 = por %p54, %p55
    %s58 = sadd.s32 %s57, 1
    %p61 = scmp.eq.s32.totalorder %s9, 7
    %p62 = scmp.ne.s32.totalorder %s57, %s59
    %p63 = scmp.eq.s32.totalorder %s9, 0
    %p64 = por %p62, %p63
    %p65 = scmp.ne.s32.totalorder %s57, %s59
    %p66 = scmp.eq.s32.totalorder %s14, 7
    %p67 = por %p65, %p66
    %p68 = scmp.ne.s32.totalorder %s59, %s60
    %p69 = scmp.eq.s32.totalorder %s14, 0
    %p70 = por %p68, %p69
    %p71 = scmp.ne.s32.totalorder %s59, %s60
    %p72 = scmp.eq.s32.totalorder %s15, 7
    %p73 = por %p71, %p72
    %p75 = scmp.ne.s32.totalorder %s60, %s74
    %p76 = scmp.eq.s32.totalorder %s15, 0
    %p77 = por %p75, %p76
    %s79 = sadd.s32 %s78, 1
    %p82 = scmp.eq.s32.totalorder %s9, 7
    %p83 = scmp.ne.s32.totalorder %s78, %s80
    %p84 = scmp.eq.s32.totalorder %s9, 0
    %p85 = por %p83, %p84
    %p86 = scmp.ne.s32.totalorder %s78, %s80
    %p87 = scmp.eq.s32.totalorder %s14, 7
    %p88 = por %p86, %p87
    %p89 = scmp.ne.s32.totalorder %s80, %s81
    %p90 = scmp.eq.s32.totalorder %s14, 0
    %p91 = por %p89, %p90
    %p92 = scmp.ne.s32.totalorder %s80, %s81
    %p93 = scmp.eq.s32.totalorder %s15, 7
    %p94 = por %p92, %p93
    %p96 = scmp.ne.s32.totalorder %s81, %s95
    %p97 = scmp.eq.s32.totalorder %s15, 0
    %p98 = por %p96, %p97
    %s99 = ssub.s32 %s16, %s28
    %s100 = ssub.s32 %s17, %s24
    %s101 = sor.u32 %s99, %s100
    %p102 = scmp.eq.s32.totalorder %s101, 0
    %s104 = sadd.s32 %s103, 1
    %s105 = scalar_select %p102, %s103, %s104
    %p108 = pneg %p102
    %p109 = scmp.eq.s32.totalorder %s9, 7
    %p110 = por %p108, %p109
    %p111 = scmp.ne.s32.totalorder %s103, %s106
    %p112 = scmp.eq.s32.totalorder %s9, 0
    %p113 = por %p111, %p112
    %p114 = scmp.ne.s32.totalorder %s103, %s106
    %p115 = scmp.eq.s32.totalorder %s14, 7
    %p116 = por %p114, %p115
    %p117 = scmp.ne.s32.totalorder %s106, %s107
    %p118 = scmp.eq.s32.totalorder %s14, 0
    %p119 = por %p117, %p118
    %p120 = scmp.ne.s32.totalorder %s106, %s107
    %p121 = scmp.eq.s32.totalorder %s15, 7
    %p122 = por %p120, %p121
    %p124 = scmp.ne.s32.totalorder %s107, %s123
    %p125 = scmp.eq.s32.totalorder %s15, 0
    %p126 = por %p124, %p125
    %p127 = scmp.le.s32.totalorder 1, %s9
    %p128 = scmp.lt.s32.totalorder %s9, 9
    %p129 = pnand %p127, %p128
    %p130 = pneg %p129
    // Predicated region
    $region9: #{_lambda_.1} parent=5 // pred_check
      _
    $region10: #{_lambda_.1} parent=5 // pred_check_branch
      %132 = sbr.rel (%p129) target = $region12
    $region11: #{_lambda_.1} parent=5 // pred_region
      %s133 = ssub.s32 %s9, 1
      // Predicated region
      $region13: #{_lambda_.1} parent=11 // pred_check
        %p134 = pneg %p70
      $region14: #{_lambda_.1} parent=11 // pred_check_branch
        %136 = sbr.rel (%p134) target = $region16
      $region15: #{_lambda_.1} parent=11 // pred_region
        _
      $region16: #{_lambda_.1} parent=11 // pred_fallthru
        _
      // Predicated region
      $region17: #{_lambda_.1} parent=11 // pred_check
        %p137 = pneg %p91
      $region18: #{_lambda_.1} parent=11 // pred_check_branch
        %139 = sbr.rel (%p137) target = $region20
      $region19: #{_lambda_.1} parent=11 // pred_region
        _
      $region20: #{_lambda_.1} parent=11 // pred_fallthru
        _
    $region12: #{_lambda_.1} parent=5 // pred_fallthru
      _
    %p140 = scmp.lt.s32.totalorder %s9, 8
    // Predicated region
    $region21: #{_lambda_.1} parent=5 // pred_check
      %p141 = pneg %p140
    $region22: #{_lambda_.1} parent=5 // pred_check_branch
      %143 = sbr.rel (%p141) target = $region24
    $region23: #{_lambda_.1} parent=5 // pred_region
      // Predicated region
      $region25: #{_lambda_.1} parent=23 // pred_check
        %p144 = pneg %p43
      $region26: #{_lambda_.1} parent=23 // pred_check_branch
        %146 = sbr.rel (%p144) target = $region28
      $region27: #{_lambda_.1} parent=23 // pred_region
        %p147 = scmp.lt.s32.totalorder %s16, 3
        %s148 = scalar_select %p147, %s16, 3
        %p149 = scmp.lt.s32.totalorder %s17, 1
        %s150 = scalar_select %p149, %s17, 1
        %s151 = smul.addr %s150, 108
        %s152 = smul.addr %s148, 216
        %s153 = sadd.s32 %s151, %s152
        %s154 = smul.addr %s153, 4
        %s155 = scalar_lea.vmem %s0, %s154
      $region28: #{_lambda_.1} parent=23 // pred_fallthru
        _
    $region24: #{_lambda_.1} parent=5 // pred_fallthru
      _
    %p156 = scmp.le.s32.totalorder 1, %s9
    %p157 = scmp.lt.s32.totalorder %s9, 9
    %p158 = pnand %p156, %p157
    %p159 = pneg %p158
    // Predicated region
    $region29: #{_lambda_.1} parent=5 // pred_check
      _
    $region30: #{_lambda_.1} parent=5 // pred_check_branch
      %161 = sbr.rel (%p158) target = $region32
    $region31: #{_lambda_.1} parent=5 // pred_region
      %s162 = ssub.s32 %s9, 1
      %p163 = scmp.lt.s32.totalorder %s18, 3
      %s164 = scalar_select %p163, %s18, 3
      %p165 = scmp.lt.s32.totalorder %s19, 1
      %s166 = scalar_select %p165, %s19, 1
      %s167 = smul.addr %s166, 108
      %s168 = smul.addr %s164, 216
      %s169 = sadd.s32 %s167, %s168
      %s170 = smul.addr %s169, 4
      %s171 = scalar_lea.vmem %s0, %s170
      %p172 = pneg %p49
      %p173 = pneg %p46
      %p174 = pneg %p70
      %p175 = pneg %p67
      %p176 = pneg %p91
      %p177 = pneg %p88
      %p178 = pneg %p119
      %p179 = pneg %p116
      %s180 = smul.u32 4, %s19
      %p181 = scmp.lt.s32.totalorder %s18, 3
      %s182 = scalar_select %p181, %s18, 3
      %p183 = scmp.lt.s32.totalorder %s180, 7
      %s184 = scalar_select %p183, %s180, 7
      %s185 = smul.addr %s182, 8
      %s186 = sadd.s32 %s184, %s185
      %s187 = smul.addr %s186, 4
      %s188 = scalar_lea.vmem %s3, %s187
      %p189 = scmp.lt.s32.totalorder %s18, 3
      %s190 = scalar_select %p189, %s18, 3
      %p191 = scmp.lt.s32.totalorder %s19, 1
      %s192 = scalar_select %p191, %s19, 1
      %s193 = smul.addr %s192, 108
      %s194 = smul.addr %s190, 216
      %s195 = sadd.s32 %s193, %s194
      %s196 = smul.addr %s195, 4
      %s197 = scalar_lea.vmem %s0, %s196
      %s198 = smul.u32 4, %s19
      %p199 = scmp.lt.s32.totalorder %s18, 3
      %s200 = scalar_select %p199, %s18, 3
      %p201 = scmp.lt.s32.totalorder %s198, 7
      %s202 = scalar_select %p201, %s198, 7
      %s203 = smul.addr %s200, 8
      %s204 = sadd.s32 %s202, %s203
      %s205 = smul.addr %s204, 4
      %s206 = scalar_lea.vmem %s3, %s205
      %s207 = smul.u32 4, %s19
      %v209 = vld [vmem:[%s197] sm:$0xf]
      %v210 = vld [vmem:[%s197 + $0x8] sm:$0xf]
      %v211 = vld [vmem:[%s197 + $0x10] sm:$0xf]
      %v212 = vld [vmem:[%s197 + $0x18] sm:$0xf]
      %213 = vst [vmem:[#allocation2] sm:$0xf] %v209
      %214 = vst [vmem:[#allocation2 + $0xc4] sm:$0xf] %v210
      %215 = vst [vmem:[#allocation2 + $0x188] sm:$0xf] %v211
      %216 = vst [vmem:[#allocation2 + $0x24c] sm:$0xf] %v212
      %s217 = scalar_lea.vmem %s197, 48
      %v218 = vld [vmem:[%s217] sm:$0xf]
      %v219 = vld [vmem:[%s217 + $0x8] sm:$0xf]
      %v220 = vld [vmem:[%s217 + $0x10] sm:$0xf]
      %v221 = vld [vmem:[%s217 + $0x18] sm:$0xf]
      %222 = vst [vmem:[#allocation2 + $0x4] sm:$0xf] %v218
      %223 = vst [vmem:[#allocation2 + $0xc8] sm:$0xf] %v219
      %224 = vst [vmem:[#allocation2 + $0x18c] sm:$0xf] %v220
      %225 = vst [vmem:[#allocation2 + $0x250] sm:$0xf] %v221
      %s226 = scalar_lea.vmem %s197, 96
      %v227 = vld [vmem:[%s226] sm:$0xf]
      %v228 = vld [vmem:[%s226 + $0x8] sm:$0xf]
      %v229 = vld [vmem:[%s226 + $0x10] sm:$0xf]
      %v230 = vld [vmem:[%s226 + $0x18] sm:$0xf]
      %231 = vst [vmem:[#allocation2 + $0x8] sm:$0xf] %v227
      %232 = vst [vmem:[#allocation2 + $0xcc] sm:$0xf] %v228
      %233 = vst [vmem:[#allocation2 + $0x190] sm:$0xf] %v229
      %234 = vst [vmem:[#allocation2 + $0x254] sm:$0xf] %v230
      %v235 = vld [vmem:[%s197] sm:$0xf]
      %v236 = vld [vmem:[%s197 + $0x4] sm:$0x1]
      %v237 = vld [vmem:[%s197 + $0x8] sm:$0xf]
      %v238 = vld [vmem:[%s197 + $0xc] sm:$0x1]
      %v239 = vld [vmem:[%s197 + $0x10] sm:$0xf]
      %v240 = vld [vmem:[%s197 + $0x14] sm:$0x1]
      %v241 = vld [vmem:[%s197 + $0x18] sm:$0xf]
      %v242 = vld [vmem:[%s197 + $0x1c] sm:$0x1]
      %vm243 = vsmask.f32 3328
      %vm244 = vsmask.f32 7440
      %vm245 = vmor %vm243, %vm244
      %v247 = vshrl.u32 %v235, 16
      %v249 = vrot.slane %v247, 4
      %v250 = vshll.u32 %v235, 16
      %v252 = vrot.slane %v250, 5
      %v253 = vor.u32 %v249, %v252
      %v254 = vrot.slane %v253, 4
      %v256 = vshll.u32 %v236, 16
      %v258 = vrot.slane %v256, 5
      %v259 = vsel %vm245, %v254, %v258
      %v261 = vshrl.u32 %v237, 16
      %v263 = vrot.slane %v261, 4
      %v264 = vshll.u32 %v237, 16
      %v266 = vrot.slane %v264, 5
      %v267 = vor.u32 %v263, %v266
      %v268 = vrot.slane %v267, 4
      %v270 = vshll.u32 %v238, 16
      %v272 = vrot.slane %v270, 5
      %v273 = vsel %vm245, %v268, %v272
      %v275 = vshrl.u32 %v239, 16
      %v277 = vrot.slane %v275, 4
      %v278 = vshll.u32 %v239, 16
      %v280 = vrot.slane %v278, 5
      %v281 = vor.u32 %v277, %v280
      %v282 = vrot.slane %v281, 4
      %v284 = vshll.u32 %v240, 16
      %v286 = vrot.slane %v284, 5
      %v287 = vsel %vm245, %v282, %v286
      %v289 = vshrl.u32 %v241, 16
      %v291 = vrot.slane %v289, 4
      %v292 = vshll.u32 %v241, 16
      %v294 = vrot.slane %v292, 5
      %v295 = vor.u32 %v291, %v294
      %v296 = vrot.slane %v295, 4
      %v298 = vshll.u32 %v242, 16
      %v300 = vrot.slane %v298, 5
      %v301 = vsel %vm245, %v296, %v300
      %306 = vst [vmem:[#allocation2 + $0xc] sm:$0xf] %v259
      %307 = vst [vmem:[#allocation2 + $0xd0] sm:$0xf] %v273
      %308 = vst [vmem:[#allocation2 + $0x194] sm:$0xf] %v287
      %309 = vst [vmem:[#allocation2 + $0x258] sm:$0xf] %v301
      %v310 = vld [vmem:[%s217] sm:$0xf]
      %v311 = vld [vmem:[%s217 + $0x4] sm:$0x1]
      %v312 = vld [vmem:[%s217 + $0x8] sm:$0xf]
      %v313 = vld [vmem:[%s217 + $0xc] sm:$0x1]
      %v314 = vld [vmem:[%s217 + $0x10] sm:$0xf]
      %v315 = vld [vmem:[%s217 + $0x14] sm:$0x1]
      %v316 = vld [vmem:[%s217 + $0x18] sm:$0xf]
      %v317 = vld [vmem:[%s217 + $0x1c] sm:$0x1]
      %v319 = vshrl.u32 %v310, 16
      %v321 = vrot.slane %v319, 4
      %v322 = vshll.u32 %v310, 16
      %v324 = vrot.slane %v322, 5
      %v325 = vor.u32 %v321, %v324
      %v326 = vrot.slane %v325, 4
      %v328 = vshll.u32 %v311, 16
      %v330 = vrot.slane %v328, 5
      %v331 = vsel %vm245, %v326, %v330
      %v333 = vshrl.u32 %v312, 16
      %v335 = vrot.slane %v333, 4
      %v336 = vshll.u32 %v312, 16
      %v338 = vrot.slane %v336, 5
      %v339 = vor.u32 %v335, %v338
      %v340 = vrot.slane %v339, 4
      %v342 = vshll.u32 %v313, 16
      %v344 = vrot.slane %v342, 5
      %v345 = vsel %vm245, %v340, %v344
      %v347 = vshrl.u32 %v314, 16
      %v349 = vrot.slane %v347, 4
      %v350 = vshll.u32 %v314, 16
      %v352 = vrot.slane %v350, 5
      %v353 = vor.u32 %v349, %v352
      %v354 = vrot.slane %v353, 4
      %v356 = vshll.u32 %v315, 16
      %v358 = vrot.slane %v356, 5
      %v359 = vsel %vm245, %v354, %v358
      %v361 = vshrl.u32 %v316, 16
      %v363 = vrot.slane %v361, 4
      %v364 = vshll.u32 %v316, 16
      %v366 = vrot.slane %v364, 5
      %v367 = vor.u32 %v363, %v366
      %v368 = vrot.slane %v367, 4
      %v370 = vshll.u32 %v317, 16
      %v372 = vrot.slane %v370, 5
      %v373 = vsel %vm245, %v368, %v372
      %378 = vst [vmem:[#allocation2 + $0x10] sm:$0xf] %v331
      %379 = vst [vmem:[#allocation2 + $0xd4] sm:$0xf] %v345
      %380 = vst [vmem:[#allocation2 + $0x198] sm:$0xf] %v359
      %381 = vst [vmem:[#allocation2 + $0x25c] sm:$0xf] %v373
      %v382 = vld [vmem:[%s226] sm:$0xf]
      %v383 = vld [vmem:[%s226 + $0x4] sm:$0x1]
      %v384 = vld [vmem:[%s226 + $0x8] sm:$0xf]
      %v385 = vld [vmem:[%s226 + $0xc] sm:$0x1]
      %v386 = vld [vmem:[%s226 + $0x10] sm:$0xf]
      %v387 = vld [vmem:[%s226 + $0x14] sm:$0x1]
      %v388 = vld [vmem:[%s226 + $0x18] sm:$0xf]
      %v389 = vld [vmem:[%s226 + $0x1c] sm:$0x1]
      %v391 = vshrl.u32 %v382, 16
      %v393 = vrot.slane %v391, 4
      %v394 = vshll.u32 %v382, 16
      %v396 = vrot.slane %v394, 5
      %v397 = vor.u32 %v393, %v396
      %v398 = vrot.slane %v397, 4
      %v400 = vshll.u32 %v383, 16
      %v402 = vrot.slane %v400, 5
      %v403 = vsel %vm245, %v398, %v402
      %v405 = vshrl.u32 %v384, 16
      %v407 = vrot.slane %v405, 4
      %v408 = vshll.u32 %v384, 16
      %v410 = vrot.slane %v408, 5
      %v411 = vor.u32 %v407, %v410
      %v412 = vrot.slane %v411, 4
      %v414 = vshll.u32 %v385, 16
      %v416 = vrot.slane %v414, 5
      %v417 = vsel %vm245, %v412, %v416
      %v419 = vshrl.u32 %v386, 16
      %v421 = vrot.slane %v419, 4
      %v422 = vshll.u32 %v386, 16
      %v424 = vrot.slane %v422, 5
      %v425 = vor.u32 %v421, %v424
      %v426 = vrot.slane %v425, 4
      %v428 = vshll.u32 %v387, 16
      %v430 = vrot.slane %v428, 5
      %v431 = vsel %vm245, %v426, %v430
      %v433 = vshrl.u32 %v388, 16
      %v435 = vrot.slane %v433, 4
      %v436 = vshll.u32 %v388, 16
      %v438 = vrot.slane %v436, 5
      %v439 = vor.u32 %v435, %v438
      %v440 = vrot.slane %v439, 4
      %v442 = vshll.u32 %v389, 16
      %v444 = vrot.slane %v442, 5
      %v445 = vsel %vm245, %v440, %v444
      %450 = vst [vmem:[#allocation2 + $0x14] sm:$0xf] %v403
      %451 = vst [vmem:[#allocation2 + $0xd8] sm:$0xf] %v417
      %452 = vst [vmem:[#allocation2 + $0x19c] sm:$0xf] %v431
      %453 = vst [vmem:[#allocation2 + $0x260] sm:$0xf] %v445
      %v454 = vld [vmem:[%s197] sm:$0xe]
      %v455 = vld [vmem:[%s197 + $0x4] sm:$0x1]
      %v456 = vld [vmem:[%s197 + $0x8] sm:$0xe]
      %v457 = vld [vmem:[%s197 + $0xc] sm:$0x1]
      %v458 = vld [vmem:[%s197 + $0x10] sm:$0xe]
      %v459 = vld [vmem:[%s197 + $0x14] sm:$0x1]
      %v460 = vld [vmem:[%s197 + $0x18] sm:$0xe]
      %v461 = vld [vmem:[%s197 + $0x1c] sm:$0x1]
      %vm470 = vcmask 1042432
      %vm471 = vcmask 1046532
      %vm472 = vmor %vm470, %vm471
      %v473 = vrot.slane %v454, 5
      %v474 = vrot.slane %v473, 4
      %v475 = vrot.slane %v455, 5
      %v476 = vsel %vm472, %v474, %v475
      %v477 = vrot.slane %v456, 5
      %v478 = vrot.slane %v477, 4
      %v479 = vrot.slane %v457, 5
      %v480 = vsel %vm472, %v478, %v479
      %v481 = vrot.slane %v458, 5
      %v482 = vrot.slane %v481, 4
      %v483 = vrot.slane %v459, 5
      %v484 = vsel %vm472, %v482, %v483
      %v485 = vrot.slane %v460, 5
      %v486 = vrot.slane %v485, 4
      %v487 = vrot.slane %v461, 5
      %v488 = vsel %vm472, %v486, %v487
      %493 = vst [vmem:[#allocation2 + $0x18] sm:$0xf] %v476
      %494 = vst [vmem:[#allocation2 + $0xdc] sm:$0xf] %v480
      %495 = vst [vmem:[#allocation2 + $0x1a0] sm:$0xf] %v484
      %496 = vst [vmem:[#allocation2 + $0x264] sm:$0xf] %v488
      %s497 = scalar_lea.vmem %s197, 144
      %v498 = vld [vmem:[%s497] sm:$0xf]
      %v499 = vld [vmem:[%s497 + $0x8] sm:$0xf]
      %v500 = vld [vmem:[%s497 + $0x10] sm:$0xf]
      %v501 = vld [vmem:[%s497 + $0x18] sm:$0xf]
      %502 = vst [vmem:[#allocation2 + $0x1c] sm:$0xf] %v498
      %503 = vst [vmem:[#allocation2 + $0xe0] sm:$0xf] %v499
      %504 = vst [vmem:[#allocation2 + $0x1a4] sm:$0xf] %v500
      %505 = vst [vmem:[#allocation2 + $0x268] sm:$0xf] %v501
      %s506 = scalar_lea.vmem %s197, 192
      %v507 = vld [vmem:[%s506] sm:$0xf]
      %v508 = vld [vmem:[%s506 + $0x8] sm:$0xf]
      %v509 = vld [vmem:[%s506 + $0x10] sm:$0xf]
      %v510 = vld [vmem:[%s506 + $0x18] sm:$0xf]
      %511 = vst [vmem:[#allocation2 + $0x20] sm:$0xf] %v507
      %512 = vst [vmem:[#allocation2 + $0xe4] sm:$0xf] %v508
      %513 = vst [vmem:[#allocation2 + $0x1a8] sm:$0xf] %v509
      %514 = vst [vmem:[#allocation2 + $0x26c] sm:$0xf] %v510
      %s515 = scalar_lea.vmem %s197, 240
      %v516 = vld [vmem:[%s515] sm:$0xf]
      %v517 = vld [vmem:[%s515 + $0x8] sm:$0xf]
      %v518 = vld [vmem:[%s515 + $0x10] sm:$0xf]
      %v519 = vld [vmem:[%s515 + $0x18] sm:$0xf]
      %520 = vst [vmem:[#allocation2 + $0x24] sm:$0xf] %v516
      %521 = vst [vmem:[#allocation2 + $0xe8] sm:$0xf] %v517
      %522 = vst [vmem:[#allocation2 + $0x1ac] sm:$0xf] %v518
      %523 = vst [vmem:[#allocation2 + $0x270] sm:$0xf] %v519
      %v524 = vld [vmem:[%s497] sm:$0xf]
      %v525 = vld [vmem:[%s497 + $0x4] sm:$0x1]
      %v526 = vld [vmem:[%s497 + $0x8] sm:$0xf]
      %v527 = vld [vmem:[%s497 + $0xc] sm:$0x1]
      %v528 = vld [vmem:[%s497 + $0x10] sm:$0xf]
      %v529 = vld [vmem:[%s497 + $0x14] sm:$0x1]
      %v530 = vld [vmem:[%s497 + $0x18] sm:$0xf]
      %v531 = vld [vmem:[%s497 + $0x1c] sm:$0x1]
      %v533 = vshrl.u32 %v524, 16
      %v535 = vrot.slane %v533, 4
      %v536 = vshll.u32 %v524, 16
      %v538 = vrot.slane %v536, 5
      %v539 = vor.u32 %v535, %v538
      %v540 = vrot.slane %v539, 4
      %v542 = vshll.u32 %v525, 16
      %v544 = vrot.slane %v542, 5
      %v545 = vsel %vm245, %v540, %v544
      %v547 = vshrl.u32 %v526, 16
      %v549 = vrot.slane %v547, 4
      %v550 = vshll.u32 %v526, 16
      %v552 = vrot.slane %v550, 5
      %v553 = vor.u32 %v549, %v552
      %v554 = vrot.slane %v553, 4
      %v556 = vshll.u32 %v527, 16
      %v558 = vrot.slane %v556, 5
      %v559 = vsel %vm245, %v554, %v558
      %v561 = vshrl.u32 %v528, 16
      %v563 = vrot.slane %v561, 4
      %v564 = vshll.u32 %v528, 16
      %v566 = vrot.slane %v564, 5
      %v567 = vor.u32 %v563, %v566
      %v568 = vrot.slane %v567, 4
      %v570 = vshll.u32 %v529, 16
      %v572 = vrot.slane %v570, 5
      %v573 = vsel %vm245, %v568, %v572
      %v575 = vshrl.u32 %v530, 16
      %v577 = vrot.slane %v575, 4
      %v578 = vshll.u32 %v530, 16
      %v580 = vrot.slane %v578, 5
      %v581 = vor.u32 %v577, %v580
      %v582 = vrot.slane %v581, 4
      %v584 = vshll.u32 %v531, 16
      %v586 = vrot.slane %v584, 5
      %v587 = vsel %vm245, %v582, %v586
      %592 = vst [vmem:[#allocation2 + $0x28] sm:$0xf] %v545
      %593 = vst [vmem:[#allocation2 + $0xec] sm:$0xf] %v559
      %594 = vst [vmem:[#allocation2 + $0x1b0] sm:$0xf] %v573
      %595 = vst [vmem:[#allocation2 + $0x274] sm:$0xf] %v587
      %v596 = vld [vmem:[%s506] sm:$0xf]
      %v597 = vld [vmem:[%s506 + $0x4] sm:$0x1]
      %v598 = vld [vmem:[%s506 + $0x8] sm:$0xf]
      %v599 = vld [vmem:[%s506 + $0xc] sm:$0x1]
      %v600 = vld [vmem:[%s506 + $0x10] sm:$0xf]
      %v601 = vld [vmem:[%s506 + $0x14] sm:$0x1]
      %v602 = vld [vmem:[%s506 + $0x18] sm:$0xf]
      %v603 = vld [vmem:[%s506 + $0x1c] sm:$0x1]
      %v605 = vshrl.u32 %v596, 16
      %v607 = vrot.slane %v605, 4
      %v608 = vshll.u32 %v596, 16
      %v610 = vrot.slane %v608, 5
      %v611 = vor.u32 %v607, %v610
      %v612 = vrot.slane %v611, 4
      %v614 = vshll.u32 %v597, 16
      %v616 = vrot.slane %v614, 5
      %v617 = vsel %vm245, %v612, %v616
      %v619 = vshrl.u32 %v598, 16
      %v621 = vrot.slane %v619, 4
      %v622 = vshll.u32 %v598, 16
      %v624 = vrot.slane %v622, 5
      %v625 = vor.u32 %v621, %v624
      %v626 = vrot.slane %v625, 4
      %v628 = vshll.u32 %v599, 16
      %v630 = vrot.slane %v628, 5
      %v631 = vsel %vm245, %v626, %v630
      %v633 = vshrl.u32 %v600, 16
      %v635 = vrot.slane %v633, 4
      %v636 = vshll.u32 %v600, 16
      %v638 = vrot.slane %v636, 5
      %v639 = vor.u32 %v635, %v638
      %v640 = vrot.slane %v639, 4
      %v642 = vshll.u32 %v601, 16
      %v644 = vrot.slane %v642, 5
      %v645 = vsel %vm245, %v640, %v644
      %v647 = vshrl.u32 %v602, 16
      %v649 = vrot.slane %v647, 4
      %v650 = vshll.u32 %v602, 16
      %v652 = vrot.slane %v650, 5
      %v653 = vor.u32 %v649, %v652
      %v654 = vrot.slane %v653, 4
      %v656 = vshll.u32 %v603, 16
      %v658 = vrot.slane %v656, 5
      %v659 = vsel %vm245, %v654, %v658
      %664 = vst [vmem:[#allocation2 + $0x2c] sm:$0xf] %v617
      %665 = vst [vmem:[#allocation2 + $0xf0] sm:$0xf] %v631
      %666 = vst [vmem:[#allocation2 + $0x1b4] sm:$0xf] %v645
      %667 = vst [vmem:[#allocation2 + $0x278] sm:$0xf] %v659
      %v668 = vld [vmem:[%s515] sm:$0xf]
      %v669 = vld [vmem:[%s515 + $0x4] sm:$0x1]
      %v670 = vld [vmem:[%s515 + $0x8] sm:$0xf]
      %v671 = vld [vmem:[%s515 + $0xc] sm:$0x1]
      %v672 = vld [vmem:[%s515 + $0x10] sm:$0xf]
      %v673 = vld [vmem:[%s515 + $0x14] sm:$0x1]
      %v674 = vld [vmem:[%s515 + $0x18] sm:$0xf]
      %v675 = vld [vmem:[%s515 + $0x1c] sm:$0x1]
      %v677 = vshrl.u32 %v668, 16
      %v679 = vrot.slane %v677, 4
      %v680 = vshll.u32 %v668, 16
      %v682 = vrot.slane %v680, 5
      %v683 = vor.u32 %v679, %v682
      %v684 = vrot.slane %v683, 4
      %v686 = vshll.u32 %v669, 16
      %v688 = vrot.slane %v686, 5
      %v689 = vsel %vm245, %v684, %v688
      %v691 = vshrl.u32 %v670, 16
      %v693 = vrot.slane %v691, 4
      %v694 = vshll.u32 %v670, 16
      %v696 = vrot.slane %v694, 5
      %v697 = vor.u32 %v693, %v696
      %v698 = vrot.slane %v697, 4
      %v700 = vshll.u32 %v671, 16
      %v702 = vrot.slane %v700, 5
      %v703 = vsel %vm245, %v698, %v702
      %v705 = vshrl.u32 %v672, 16
      %v707 = vrot.slane %v705, 4
      %v708 = vshll.u32 %v672, 16
      %v710 = vrot.slane %v708, 5
      %v711 = vor.u32 %v707, %v710
      %v712 = vrot.slane %v711, 4
      %v714 = vshll.u32 %v673, 16
      %v716 = vrot.slane %v714, 5
      %v717 = vsel %vm245, %v712, %v716
      %v719 = vshrl.u32 %v674, 16
      %v721 = vrot.slane %v719, 4
      %v722 = vshll.u32 %v674, 16
      %v724 = vrot.slane %v722, 5
      %v725 = vor.u32 %v721, %v724
      %v726 = vrot.slane %v725, 4
      %v728 = vshll.u32 %v675, 16
      %v730 = vrot.slane %v728, 5
      %v731 = vsel %vm245, %v726, %v730
      %736 = vst [vmem:[#allocation2 + $0x30] sm:$0xf] %v689
      %737 = vst [vmem:[#allocation2 + $0xf4] sm:$0xf] %v703
      %738 = vst [vmem:[#allocation2 + $0x1b8] sm:$0xf] %v717
      %739 = vst [vmem:[#allocation2 + $0x27c] sm:$0xf] %v731
      %v740 = vld [vmem:[%s497] sm:$0xe]
      %v741 = vld [vmem:[%s497 + $0x4] sm:$0x1]
      %v742 = vld [vmem:[%s497 + $0x8] sm:$0xe]
      %v743 = vld [vmem:[%s497 + $0xc] sm:$0x1]
      %v744 = vld [vmem:[%s497 + $0x10] sm:$0xe]
      %v745 = vld [vmem:[%s497 + $0x14] sm:$0x1]
      %v746 = vld [vmem:[%s497 + $0x18] sm:$0xe]
      %v747 = vld [vmem:[%s497 + $0x1c] sm:$0x1]
      %v756 = vrot.slane %v740, 5
      %v757 = vrot.slane %v756, 4
      %v758 = vrot.slane %v741, 5
      %v759 = vsel %vm472, %v757, %v758
      %v760 = vrot.slane %v742, 5
      %v761 = vrot.slane %v760, 4
      %v762 = vrot.slane %v743, 5
      %v763 = vsel %vm472, %v761, %v762
      %v764 = vrot.slane %v744, 5
      %v765 = vrot.slane %v764, 4
      %v766 = vrot.slane %v745, 5
      %v767 = vsel %vm472, %v765, %v766
      %v768 = vrot.slane %v746, 5
      %v769 = vrot.slane %v768, 4
      %v770 = vrot.slane %v747, 5
      %v771 = vsel %vm472, %v769, %v770
      %776 = vst [vmem:[#allocation2 + $0x34] sm:$0xf] %v759
      %777 = vst [vmem:[#allocation2 + $0xf8] sm:$0xf] %v763
      %778 = vst [vmem:[#allocation2 + $0x1bc] sm:$0xf] %v767
      %779 = vst [vmem:[#allocation2 + $0x280] sm:$0xf] %v771
      %s780 = scalar_lea.vmem %s197, 288
      %v781 = vld [vmem:[%s780] sm:$0xf]
      %v782 = vld [vmem:[%s780 + $0x8] sm:$0xf]
      %v783 = vld [vmem:[%s780 + $0x10] sm:$0xf]
      %v784 = vld [vmem:[%s780 + $0x18] sm:$0xf]
      %785 = vst [vmem:[#allocation2 + $0x38] sm:$0xf] %v781
      %786 = vst [vmem:[#allocation2 + $0xfc] sm:$0xf] %v782
      %787 = vst [vmem:[#allocation2 + $0x1c0] sm:$0xf] %v783
      %788 = vst [vmem:[#allocation2 + $0x284] sm:$0xf] %v784
      %s789 = scalar_lea.vmem %s197, 336
      %v790 = vld [vmem:[%s789] sm:$0xf]
      %v791 = vld [vmem:[%s789 + $0x8] sm:$0xf]
      %v792 = vld [vmem:[%s789 + $0x10] sm:$0xf]
      %v793 = vld [vmem:[%s789 + $0x18] sm:$0xf]
      %794 = vst [vmem:[#allocation2 + $0x3c] sm:$0xf] %v790
      %795 = vst [vmem:[#allocation2 + $0x100] sm:$0xf] %v791
      %796 = vst [vmem:[#allocation2 + $0x1c4] sm:$0xf] %v792
      %797 = vst [vmem:[#allocation2 + $0x288] sm:$0xf] %v793
      %s798 = scalar_lea.vmem %s197, 384
      %v799 = vld [vmem:[%s798] sm:$0xf]
      %v800 = vld [vmem:[%s798 + $0x8] sm:$0xf]
      %v801 = vld [vmem:[%s798 + $0x10] sm:$0xf]
      %v802 = vld [vmem:[%s798 + $0x18] sm:$0xf]
      %803 = vst [vmem:[#allocation2 + $0x40] sm:$0xf] %v799
      %804 = vst [vmem:[#allocation2 + $0x104] sm:$0xf] %v800
      %805 = vst [vmem:[#allocation2 + $0x1c8] sm:$0xf] %v801
      %806 = vst [vmem:[#allocation2 + $0x28c] sm:$0xf] %v802
      %v807 = vld [vmem:[%s780] sm:$0xf]
      %v808 = vld [vmem:[%s780 + $0x4] sm:$0x1]
      %v809 = vld [vmem:[%s780 + $0x8] sm:$0xf]
      %v810 = vld [vmem:[%s780 + $0xc] sm:$0x1]
      %v811 = vld [vmem:[%s780 + $0x10] sm:$0xf]
      %v812 = vld [vmem:[%s780 + $0x14] sm:$0x1]
      %v813 = vld [vmem:[%s780 + $0x18] sm:$0xf]
      %v814 = vld [vmem:[%s780 + $0x1c] sm:$0x1]
      %v816 = vshrl.u32 %v807, 16
      %v818 = vrot.slane %v816, 4
      %v819 = vshll.u32 %v807, 16
      %v821 = vrot.slane %v819, 5
      %v822 = vor.u32 %v818, %v821
      %v823 = vrot.slane %v822, 4
      %v825 = vshll.u32 %v808, 16
      %v827 = vrot.slane %v825, 5
      %v828 = vsel %vm245, %v823, %v827
      %v830 = vshrl.u32 %v809, 16
      %v832 = vrot.slane %v830, 4
      %v833 = vshll.u32 %v809, 16
      %v835 = vrot.slane %v833, 5
      %v836 = vor.u32 %v832, %v835
      %v837 = vrot.slane %v836, 4
      %v839 = vshll.u32 %v810, 16
      %v841 = vrot.slane %v839, 5
      %v842 = vsel %vm245, %v837, %v841
      %v844 = vshrl.u32 %v811, 16
      %v846 = vrot.slane %v844, 4
      %v847 = vshll.u32 %v811, 16
      %v849 = vrot.slane %v847, 5
      %v850 = vor.u32 %v846, %v849
      %v851 = vrot.slane %v850, 4
      %v853 = vshll.u32 %v812, 16
      %v855 = vrot.slane %v853, 5
      %v856 = vsel %vm245, %v851, %v855
      %v858 = vshrl.u32 %v813, 16
      %v860 = vrot.slane %v858, 4
      %v861 = vshll.u32 %v813, 16
      %v863 = vrot.slane %v861, 5
      %v864 = vor.u32 %v860, %v863
      %v865 = vrot.slane %v864, 4
      %v867 = vshll.u32 %v814, 16
      %v869 = vrot.slane %v867, 5
      %v870 = vsel %vm245, %v865, %v869
      %875 = vst [vmem:[#allocation2 + $0x44] sm:$0xf] %v828
      %876 = vst [vmem:[#allocation2 + $0x108] sm:$0xf] %v842
      %877 = vst [vmem:[#allocation2 + $0x1cc] sm:$0xf] %v856
      %878 = vst [vmem:[#allocation2 + $0x290] sm:$0xf] %v870
      %v879 = vld [vmem:[%s789] sm:$0xf]
      %v880 = vld [vmem:[%s789 + $0x4] sm:$0x1]
      %v881 = vld [vmem:[%s789 + $0x8] sm:$0xf]
      %v882 = vld [vmem:[%s789 + $0xc] sm:$0x1]
      %v883 = vld [vmem:[%s789 + $0x10] sm:$0xf]
      %v884 = vld [vmem:[%s789 + $0x14] sm:$0x1]
      %v885 = vld [vmem:[%s789 + $0x18] sm:$0xf]
      %v886 = vld [vmem:[%s789 + $0x1c] sm:$0x1]
      %v888 = vshrl.u32 %v879, 16
      %v890 = vrot.slane %v888, 4
      %v891 = vshll.u32 %v879, 16
      %v893 = vrot.slane %v891, 5
      %v894 = vor.u32 %v890, %v893
      %v895 = vrot.slane %v894, 4
      %v897 = vshll.u32 %v880, 16
      %v899 = vrot.slane %v897, 5
      %v900 = vsel %vm245, %v895, %v899
      %v902 = vshrl.u32 %v881, 16
      %v904 = vrot.slane %v902, 4
      %v905 = vshll.u32 %v881, 16
      %v907 = vrot.slane %v905, 5
      %v908 = vor.u32 %v904, %v907
      %v909 = vrot.slane %v908, 4
      %v911 = vshll.u32 %v882, 16
      %v913 = vrot.slane %v911, 5
      %v914 = vsel %vm245, %v909, %v913
      %v916 = vshrl.u32 %v883, 16
      %v918 = vrot.slane %v916, 4
      %v919 = vshll.u32 %v883, 16
      %v921 = vrot.slane %v919, 5
      %v922 = vor.u32 %v918, %v921
      %v923 = vrot.slane %v922, 4
      %v925 = vshll.u32 %v884, 16
      %v927 = vrot.slane %v925, 5
      %v928 = vsel %vm245, %v923, %v927
      %v930 = vshrl.u32 %v885, 16
      %v932 = vrot.slane %v930, 4
      %v933 = vshll.u32 %v885, 16
      %v935 = vrot.slane %v933, 5
      %v936 = vor.u32 %v932, %v935
      %v937 = vrot.slane %v936, 4
      %v939 = vshll.u32 %v886, 16
      %v941 = vrot.slane %v939, 5
      %v942 = vsel %vm245, %v937, %v941
      %947 = vst [vmem:[#allocation2 + $0x48] sm:$0xf] %v900
      %948 = vst [vmem:[#allocation2 + $0x10c] sm:$0xf] %v914
      %949 = vst [vmem:[#allocation2 + $0x1d0] sm:$0xf] %v928
      %950 = vst [vmem:[#allocation2 + $0x294] sm:$0xf] %v942
      %v951 = vld [vmem:[%s798] sm:$0xf]
      %v952 = vld [vmem:[%s798 + $0x4] sm:$0x1]
      %v953 = vld [vmem:[%s798 + $0x8] sm:$0xf]
      %v954 = vld [vmem:[%s798 + $0xc] sm:$0x1]
      %v955 = vld [vmem:[%s798 + $0x10] sm:$0xf]
      %v956 = vld [vmem:[%s798 + $0x14] sm:$0x1]
      %v957 = vld [vmem:[%s798 + $0x18] sm:$0xf]
      %v958 = vld [vmem:[%s798 + $0x1c] sm:$0x1]
      %v960 = vshrl.u32 %v951, 16
      %v962 = vrot.slane %v960, 4
      %v963 = vshll.u32 %v951, 16
      %v965 = vrot.slane %v963, 5
      %v966 = vor.u32 %v962, %v965
      %v967 = vrot.slane %v966, 4
      %v969 = vshll.u32 %v952, 16
      %v971 = vrot.slane %v969, 5
      %v972 = vsel %vm245, %v967, %v971
      %v974 = vshrl.u32 %v953, 16
      %v976 = vrot.slane %v974, 4
      %v977 = vshll.u32 %v953, 16
      %v979 = vrot.slane %v977, 5
      %v980 = vor.u32 %v976, %v979
      %v981 = vrot.slane %v980, 4
      %v983 = vshll.u32 %v954, 16
      %v985 = vrot.slane %v983, 5
      %v986 = vsel %vm245, %v981, %v985
      %v988 = vshrl.u32 %v955, 16
      %v990 = vrot.slane %v988, 4
      %v991 = vshll.u32 %v955, 16
      %v993 = vrot.slane %v991, 5
      %v994 = vor.u32 %v990, %v993
      %v995 = vrot.slane %v994, 4
      %v997 = vshll.u32 %v956, 16
      %v999 = vrot.slane %v997, 5
      %v1000 = vsel %vm245, %v995, %v999
      %v1002 = vshrl.u32 %v957, 16
      %v1004 = vrot.slane %v1002, 4
      %v1005 = vshll.u32 %v957, 16
      %v1007 = vrot.slane %v1005, 5
      %v1008 = vor.u32 %v1004, %v1007
      %v1009 = vrot.slane %v1008, 4
      %v1011 = vshll.u32 %v958, 16
      %v1013 = vrot.slane %v1011, 5
      %v1014 = vsel %vm245, %v1009, %v1013
      %1019 = vst [vmem:[#allocation2 + $0x4c] sm:$0xf] %v972
      %1020 = vst [vmem:[#allocation2 + $0x110] sm:$0xf] %v986
      %1021 = vst [vmem:[#allocation2 + $0x1d4] sm:$0xf] %v1000
      %1022 = vst [vmem:[#allocation2 + $0x298] sm:$0xf] %v1014
      %v1023 = vld [vmem:[%s780] sm:$0xe]
      %v1024 = vld [vmem:[%s780 + $0x4] sm:$0x1]
      %v1025 = vld [vmem:[%s780 + $0x8] sm:$0xe]
      %v1026 = vld [vmem:[%s780 + $0xc] sm:$0x1]
      %v1027 = vld [vmem:[%s780 + $0x10] sm:$0xe]
      %v1028 = vld [vmem:[%s780 + $0x14] sm:$0x1]
      %v1029 = vld [vmem:[%s780 + $0x18] sm:$0xe]
      %v1030 = vld [vmem:[%s780 + $0x1c] sm:$0x1]
      %v1039 = vrot.slane %v1023, 5
      %v1040 = vrot.slane %v1039, 4
      %v1041 = vrot.slane %v1024, 5
      %v1042 = vsel %vm472, %v1040, %v1041
      %v1043 = vrot.slane %v1025, 5
      %v1044 = vrot.slane %v1043, 4
      %v1045 = vrot.slane %v1026, 5
      %v1046 = vsel %vm472, %v1044, %v1045
      %v1047 = vrot.slane %v1027, 5
      %v1048 = vrot.slane %v1047, 4
      %v1049 = vrot.slane %v1028, 5
      %v1050 = vsel %vm472, %v1048, %v1049
      %v1051 = vrot.slane %v1029, 5
      %v1052 = vrot.slane %v1051, 4
      %v1053 = vrot.slane %v1030, 5
      %v1054 = vsel %vm472, %v1052, %v1053
      %1059 = vst [vmem:[#allocation2 + $0x50] sm:$0xf] %v1042
      %1060 = vst [vmem:[#allocation2 + $0x114] sm:$0xf] %v1046
      %1061 = vst [vmem:[#allocation2 + $0x1d8] sm:$0xf] %v1050
      %1062 = vst [vmem:[#allocation2 + $0x29c] sm:$0xf] %v1054
      %s1063 = scalar_lea.vmem %s197, 8
      %v1064 = vld [vmem:[%s1063] sm:$0xf]
      %v1065 = vld [vmem:[%s1063 + $0x8] sm:$0xf]
      %v1066 = vld [vmem:[%s1063 + $0x10] sm:$0xf]
      %v1067 = vld [vmem:[%s1063 + $0x18] sm:$0xf]
      %1068 = vst [vmem:[#allocation2 + $0x54] sm:$0xf] %v1064
      %1069 = vst [vmem:[#allocation2 + $0x118] sm:$0xf] %v1065
      %1070 = vst [vmem:[#allocation2 + $0x1dc] sm:$0xf] %v1066
      %1071 = vst [vmem:[#allocation2 + $0x2a0] sm:$0xf] %v1067
      %s1072 = scalar_lea.vmem %s197, 56
      %v1073 = vld [vmem:[%s1072] sm:$0xf]
      %v1074 = vld [vmem:[%s1072 + $0x8] sm:$0xf]
      %v1075 = vld [vmem:[%s1072 + $0x10] sm:$0xf]
      %v1076 = vld [vmem:[%s1072 + $0x18] sm:$0xf]
      %1077 = vst [vmem:[#allocation2 + $0x58] sm:$0xf] %v1073
      %1078 = vst [vmem:[#allocation2 + $0x11c] sm:$0xf] %v1074
      %1079 = vst [vmem:[#allocation2 + $0x1e0] sm:$0xf] %v1075
      %1080 = vst [vmem:[#allocation2 + $0x2a4] sm:$0xf] %v1076
      %s1081 = scalar_lea.vmem %s197, 104
      %v1082 = vld [vmem:[%s1081] sm:$0xf]
      %v1083 = vld [vmem:[%s1081 + $0x8] sm:$0xf]
      %v1084 = vld [vmem:[%s1081 + $0x10] sm:$0xf]
      %v1085 = vld [vmem:[%s1081 + $0x18] sm:$0xf]
      %1086 = vst [vmem:[#allocation2 + $0x5c] sm:$0xf] %v1082
      %1087 = vst [vmem:[#allocation2 + $0x120] sm:$0xf] %v1083
      %1088 = vst [vmem:[#allocation2 + $0x1e4] sm:$0xf] %v1084
      %1089 = vst [vmem:[#allocation2 + $0x2a8] sm:$0xf] %v1085
      %v1090 = vld [vmem:[%s1063] sm:$0xf]
      %v1091 = vld [vmem:[%s1063 + $0x4] sm:$0x1]
      %v1092 = vld [vmem:[%s1063 + $0x8] sm:$0xf]
      %v1093 = vld [vmem:[%s1063 + $0xc] sm:$0x1]
      %v1094 = vld [vmem:[%s1063 + $0x10] sm:$0xf]
      %v1095 = vld [vmem:[%s1063 + $0x14] sm:$0x1]
      %v1096 = vld [vmem:[%s1063 + $0x18] sm:$0xf]
      %v1097 = vld [vmem:[%s1063 + $0x1c] sm:$0x1]
      %v1099 = vshrl.u32 %v1090, 16
      %v1101 = vrot.slane %v1099, 4
      %v1102 = vshll.u32 %v1090, 16
      %v1104 = vrot.slane %v1102, 5
      %v1105 = vor.u32 %v1101, %v1104
      %v1106 = vrot.slane %v1105, 4
      %v1108 = vshll.u32 %v1091, 16
      %v1110 = vrot.slane %v1108, 5
      %v1111 = vsel %vm245, %v1106, %v1110
      %v1113 = vshrl.u32 %v1092, 16
      %v1115 = vrot.slane %v1113, 4
      %v1116 = vshll.u32 %v1092, 16
      %v1118 = vrot.slane %v1116, 5
      %v1119 = vor.u32 %v1115, %v1118
      %v1120 = vrot.slane %v1119, 4
      %v1122 = vshll.u32 %v1093, 16
      %v1124 = vrot.slane %v1122, 5
      %v1125 = vsel %vm245, %v1120, %v1124
      %v1127 = vshrl.u32 %v1094, 16
      %v1129 = vrot.slane %v1127, 4
      %v1130 = vshll.u32 %v1094, 16
      %v1132 = vrot.slane %v1130, 5
      %v1133 = vor.u32 %v1129, %v1132
      %v1134 = vrot.slane %v1133, 4
      %v1136 = vshll.u32 %v1095, 16
      %v1138 = vrot.slane %v1136, 5
      %v1139 = vsel %vm245, %v1134, %v1138
      %v1141 = vshrl.u32 %v1096, 16
      %v1143 = vrot.slane %v1141, 4
      %v1144 = vshll.u32 %v1096, 16
      %v1146 = vrot.slane %v1144, 5
      %v1147 = vor.u32 %v1143, %v1146
      %v1148 = vrot.slane %v1147, 4
      %v1150 = vshll.u32 %v1097, 16
      %v1152 = vrot.slane %v1150, 5
      %v1153 = vsel %vm245, %v1148, %v1152
      %1158 = vst [vmem:[#allocation2 + $0x60] sm:$0xf] %v1111
      %1159 = vst [vmem:[#allocation2 + $0x124] sm:$0xf] %v1125
      %1160 = vst [vmem:[#allocation2 + $0x1e8] sm:$0xf] %v1139
      %1161 = vst [vmem:[#allocation2 + $0x2ac] sm:$0xf] %v1153
      %v1162 = vld [vmem:[%s1072] sm:$0xf]
      %v1163 = vld [vmem:[%s1072 + $0x4] sm:$0x1]
      %v1164 = vld [vmem:[%s1072 + $0x8] sm:$0xf]
      %v1165 = vld [vmem:[%s1072 + $0xc] sm:$0x1]
      %v1166 = vld [vmem:[%s1072 + $0x10] sm:$0xf]
      %v1167 = vld [vmem:[%s1072 + $0x14] sm:$0x1]
      %v1168 = vld [vmem:[%s1072 + $0x18] sm:$0xf]
      %v1169 = vld [vmem:[%s1072 + $0x1c] sm:$0x1]
      %v1171 = vshrl.u32 %v1162, 16
      %v1173 = vrot.slane %v1171, 4
      %v1174 = vshll.u32 %v1162, 16
      %v1176 = vrot.slane %v1174, 5
      %v1177 = vor.u32 %v1173, %v1176
      %v1178 = vrot.slane %v1177, 4
      %v1180 = vshll.u32 %v1163, 16
      %v1182 = vrot.slane %v1180, 5
      %v1183 = vsel %vm245, %v1178, %v1182
      %v1185 = vshrl.u32 %v1164, 16
      %v1187 = vrot.slane %v1185, 4
      %v1188 = vshll.u32 %v1164, 16
      %v1190 = vrot.slane %v1188, 5
      %v1191 = vor.u32 %v1187, %v1190
      %v1192 = vrot.slane %v1191, 4
      %v1194 = vshll.u32 %v1165, 16
      %v1196 = vrot.slane %v1194, 5
      %v1197 = vsel %vm245, %v1192, %v1196
      %v1199 = vshrl.u32 %v1166, 16
      %v1201 = vrot.slane %v1199, 4
      %v1202 = vshll.u32 %v1166, 16
      %v1204 = vrot.slane %v1202, 5
      %v1205 = vor.u32 %v1201, %v1204
      %v1206 = vrot.slane %v1205, 4
      %v1208 = vshll.u32 %v1167, 16
      %v1210 = vrot.slane %v1208, 5
      %v1211 = vsel %vm245, %v1206, %v1210
      %v1213 = vshrl.u32 %v1168, 16
      %v1215 = vrot.slane %v1213, 4
      %v1216 = vshll.u32 %v1168, 16
      %v1218 = vrot.slane %v1216, 5
      %v1219 = vor.u32 %v1215, %v1218
      %v1220 = vrot.slane %v1219, 4
      %v1222 = vshll.u32 %v1169, 16
      %v1224 = vrot.slane %v1222, 5
      %v1225 = vsel %vm245, %v1220, %v1224
      %1230 = vst [vmem:[#allocation2 + $0x64] sm:$0xf] %v1183
      %1231 = vst [vmem:[#allocation2 + $0x128] sm:$0xf] %v1197
      %1232 = vst [vmem:[#allocation2 + $0x1ec] sm:$0xf] %v1211
      %1233 = vst [vmem:[#allocation2 + $0x2b0] sm:$0xf] %v1225
      %v1234 = vld [vmem:[%s1081] sm:$0xf]
      %v1235 = vld [vmem:[%s1081 + $0x4] sm:$0x1]
      %v1236 = vld [vmem:[%s1081 + $0x8] sm:$0xf]
      %v1237 = vld [vmem:[%s1081 + $0xc] sm:$0x1]
      %v1238 = vld [vmem:[%s1081 + $0x10] sm:$0xf]
      %v1239 = vld [vmem:[%s1081 + $0x14] sm:$0x1]
      %v1240 = vld [vmem:[%s1081 + $0x18] sm:$0xf]
      %v1241 = vld [vmem:[%s1081 + $0x1c] sm:$0x1]
      %v1243 = vshrl.u32 %v1234, 16
      %v1245 = vrot.slane %v1243, 4
      %v1246 = vshll.u32 %v1234, 16
      %v1248 = vrot.slane %v1246, 5
      %v1249 = vor.u32 %v1245, %v1248
      %v1250 = vrot.slane %v1249, 4
      %v1252 = vshll.u32 %v1235, 16
      %v1254 = vrot.slane %v1252, 5
      %v1255 = vsel %vm245, %v1250, %v1254
      %v1257 = vshrl.u32 %v1236, 16
      %v1259 = vrot.slane %v1257, 4
      %v1260 = vshll.u32 %v1236, 16
      %v1262 = vrot.slane %v1260, 5
      %v1263 = vor.u32 %v1259, %v1262
      %v1264 = vrot.slane %v1263, 4
      %v1266 = vshll.u32 %v1237, 16
      %v1268 = vrot.slane %v1266, 5
      %v1269 = vsel %vm245, %v1264, %v1268
      %v1271 = vshrl.u32 %v1238, 16
      %v1273 = vrot.slane %v1271, 4
      %v1274 = vshll.u32 %v1238, 16
      %v1276 = vrot.slane %v1274, 5
      %v1277 = vor.u32 %v1273, %v1276
      %v1278 = vrot.slane %v1277, 4
      %v1280 = vshll.u32 %v1239, 16
      %v1282 = vrot.slane %v1280, 5
      %v1283 = vsel %vm245, %v1278, %v1282
      %v1285 = vshrl.u32 %v1240, 16
      %v1287 = vrot.slane %v1285, 4
      %v1288 = vshll.u32 %v1240, 16
      %v1290 = vrot.slane %v1288, 5
      %v1291 = vor.u32 %v1287, %v1290
      %v1292 = vrot.slane %v1291, 4
      %v1294 = vshll.u32 %v1241, 16
      %v1296 = vrot.slane %v1294, 5
      %v1297 = vsel %vm245, %v1292, %v1296
      %1302 = vst [vmem:[#allocation2 + $0x68] sm:$0xf] %v1255
      %1303 = vst [vmem:[#allocation2 + $0x12c] sm:$0xf] %v1269
      %1304 = vst [vmem:[#allocation2 + $0x1f0] sm:$0xf] %v1283
      %1305 = vst [vmem:[#allocation2 + $0x2b4] sm:$0xf] %v1297
      %v1306 = vld [vmem:[%s1063] sm:$0xe]
      %v1307 = vld [vmem:[%s1063 + $0x4] sm:$0x1]
      %v1308 = vld [vmem:[%s1063 + $0x8] sm:$0xe]
      %v1309 = vld [vmem:[%s1063 + $0xc] sm:$0x1]
      %v1310 = vld [vmem:[%s1063 + $0x10] sm:$0xe]
      %v1311 = vld [vmem:[%s1063 + $0x14] sm:$0x1]
      %v1312 = vld [vmem:[%s1063 + $0x18] sm:$0xe]
      %v1313 = vld [vmem:[%s1063 + $0x1c] sm:$0x1]
      %v1322 = vrot.slane %v1306, 5
      %v1323 = vrot.slane %v1322, 4
      %v1324 = vrot.slane %v1307, 5
      %v1325 = vsel %vm472, %v1323, %v1324
      %v1326 = vrot.slane %v1308, 5
      %v1327 = vrot.slane %v1326, 4
      %v1328 = vrot.slane %v1309, 5
      %v1329 = vsel %vm472, %v1327, %v1328
      %v1330 = vrot.slane %v1310, 5
      %v1331 = vrot.slane %v1330, 4
      %v1332 = vrot.slane %v1311, 5
      %v1333 = vsel %vm472, %v1331, %v1332
      %v1334 = vrot.slane %v1312, 5
      %v1335 = vrot.slane %v1334, 4
      %v1336 = vrot.slane %v1313, 5
      %v1337 = vsel %vm472, %v1335, %v1336
      %1342 = vst [vmem:[#allocation2 + $0x6c] sm:$0xf] %v1325
      %1343 = vst [vmem:[#allocation2 + $0x130] sm:$0xf] %v1329
      %1344 = vst [vmem:[#allocation2 + $0x1f4] sm:$0xf] %v1333
      %1345 = vst [vmem:[#allocation2 + $0x2b8] sm:$0xf] %v1337
      %s1346 = scalar_lea.vmem %s197, 152
      %v1347 = vld [vmem:[%s1346] sm:$0xf]
      %v1348 = vld [vmem:[%s1346 + $0x8] sm:$0xf]
      %v1349 = vld [vmem:[%s1346 + $0x10] sm:$0xf]
      %v1350 = vld [vmem:[%s1346 + $0x18] sm:$0xf]
      %1351 = vst [vmem:[#allocation2 + $0x70] sm:$0xf] %v1347
      %1352 = vst [vmem:[#allocation2 + $0x134] sm:$0xf] %v1348
      %1353 = vst [vmem:[#allocation2 + $0x1f8] sm:$0xf] %v1349
      %1354 = vst [vmem:[#allocation2 + $0x2bc] sm:$0xf] %v1350
      %s1355 = scalar_lea.vmem %s197, 200
      %v1356 = vld [vmem:[%s1355] sm:$0xf]
      %v1357 = vld [vmem:[%s1355 + $0x8] sm:$0xf]
      %v1358 = vld [vmem:[%s1355 + $0x10] sm:$0xf]
      %v1359 = vld [vmem:[%s1355 + $0x18] sm:$0xf]
      %1360 = vst [vmem:[#allocation2 + $0x74] sm:$0xf] %v1356
      %1361 = vst [vmem:[#allocation2 + $0x138] sm:$0xf] %v1357
      %1362 = vst [vmem:[#allocation2 + $0x1fc] sm:$0xf] %v1358
      %1363 = vst [vmem:[#allocation2 + $0x2c0] sm:$0xf] %v1359
      %s1364 = scalar_lea.vmem %s197, 248
      %v1365 = vld [vmem:[%s1364] sm:$0xf]
      %v1366 = vld [vmem:[%s1364 + $0x8] sm:$0xf]
      %v1367 = vld [vmem:[%s1364 + $0x10] sm:$0xf]
      %v1368 = vld [vmem:[%s1364 + $0x18] sm:$0xf]
      %1369 = vst [vmem:[#allocation2 + $0x78] sm:$0xf] %v1365
      %1370 = vst [vmem:[#allocation2 + $0x13c] sm:$0xf] %v1366
      %1371 = vst [vmem:[#allocation2 + $0x200] sm:$0xf] %v1367
      %1372 = vst [vmem:[#allocation2 + $0x2c4] sm:$0xf] %v1368
      %v1373 = vld [vmem:[%s1346] sm:$0xf]
      %v1374 = vld [vmem:[%s1346 + $0x4] sm:$0x1]
      %v1375 = vld [vmem:[%s1346 + $0x8] sm:$0xf]
      %v1376 = vld [vmem:[%s1346 + $0xc] sm:$0x1]
      %v1377 = vld [vmem:[%s1346 + $0x10] sm:$0xf]
      %v1378 = vld [vmem:[%s1346 + $0x14] sm:$0x1]
      %v1379 = vld [vmem:[%s1346 + $0x18] sm:$0xf]
      %v1380 = vld [vmem:[%s1346 + $0x1c] sm:$0x1]
      %v1382 = vshrl.u32 %v1373, 16
      %v1384 = vrot.slane %v1382, 4
      %v1385 = vshll.u32 %v1373, 16
      %v1387 = vrot.slane %v1385, 5
      %v1388 = vor.u32 %v1384, %v1387
      %v1389 = vrot.slane %v1388, 4
      %v1391 = vshll.u32 %v1374, 16
      %v1393 = vrot.slane %v1391, 5
      %v1394 = vsel %vm245, %v1389, %v1393
      %v1396 = vshrl.u32 %v1375, 16
      %v1398 = vrot.slane %v1396, 4
      %v1399 = vshll.u32 %v1375, 16
      %v1401 = vrot.slane %v1399, 5
      %v1402 = vor.u32 %v1398, %v1401
      %v1403 = vrot.slane %v1402, 4
      %v1405 = vshll.u32 %v1376, 16
      %v1407 = vrot.slane %v1405, 5
      %v1408 = vsel %vm245, %v1403, %v1407
      %v1410 = vshrl.u32 %v1377, 16
      %v1412 = vrot.slane %v1410, 4
      %v1413 = vshll.u32 %v1377, 16
      %v1415 = vrot.slane %v1413, 5
      %v1416 = vor.u32 %v1412, %v1415
      %v1417 = vrot.slane %v1416, 4
      %v1419 = vshll.u32 %v1378, 16
      %v1421 = vrot.slane %v1419, 5
      %v1422 = vsel %vm245, %v1417, %v1421
      %v1424 = vshrl.u32 %v1379, 16
      %v1426 = vrot.slane %v1424, 4
      %v1427 = vshll.u32 %v1379, 16
      %v1429 = vrot.slane %v1427, 5
      %v1430 = vor.u32 %v1426, %v1429
      %v1431 = vrot.slane %v1430, 4
      %v1433 = vshll.u32 %v1380, 16
      %v1435 = vrot.slane %v1433, 5
      %v1436 = vsel %vm245, %v1431, %v1435
      %1441 = vst [vmem:[#allocation2 + $0x7c] sm:$0xf] %v1394
      %1442 = vst [vmem:[#allocation2 + $0x140] sm:$0xf] %v1408
      %1443 = vst [vmem:[#allocation2 + $0x204] sm:$0xf] %v1422
      %1444 = vst [vmem:[#allocation2 + $0x2c8] sm:$0xf] %v1436
      %v1445 = vld [vmem:[%s1355] sm:$0xf]
      %v1446 = vld [vmem:[%s1355 + $0x4] sm:$0x1]
      %v1447 = vld [vmem:[%s1355 + $0x8] sm:$0xf]
      %v1448 = vld [vmem:[%s1355 + $0xc] sm:$0x1]
      %v1449 = vld [vmem:[%s1355 + $0x10] sm:$0xf]
      %v1450 = vld [vmem:[%s1355 + $0x14] sm:$0x1]
      %v1451 = vld [vmem:[%s1355 + $0x18] sm:$0xf]
      %v1452 = vld [vmem:[%s1355 + $0x1c] sm:$0x1]
      %v1454 = vshrl.u32 %v1445, 16
      %v1456 = vrot.slane %v1454, 4
      %v1457 = vshll.u32 %v1445, 16
      %v1459 = vrot.slane %v1457, 5
      %v1460 = vor.u32 %v1456, %v1459
      %v1461 = vrot.slane %v1460, 4
      %v1463 = vshll.u32 %v1446, 16
      %v1465 = vrot.slane %v1463, 5
      %v1466 = vsel %vm245, %v1461, %v1465
      %v1468 = vshrl.u32 %v1447, 16
      %v1470 = vrot.slane %v1468, 4
      %v1471 = vshll.u32 %v1447, 16
      %v1473 = vrot.slane %v1471, 5
      %v1474 = vor.u32 %v1470, %v1473
      %v1475 = vrot.slane %v1474, 4
      %v1477 = vshll.u32 %v1448, 16
      %v1479 = vrot.slane %v1477, 5
      %v1480 = vsel %vm245, %v1475, %v1479
      %v1482 = vshrl.u32 %v1449, 16
      %v1484 = vrot.slane %v1482, 4
      %v1485 = vshll.u32 %v1449, 16
      %v1487 = vrot.slane %v1485, 5
      %v1488 = vor.u32 %v1484, %v1487
      %v1489 = vrot.slane %v1488, 4
      %v1491 = vshll.u32 %v1450, 16
      %v1493 = vrot.slane %v1491, 5
      %v1494 = vsel %vm245, %v1489, %v1493
      %v1496 = vshrl.u32 %v1451, 16
      %v1498 = vrot.slane %v1496, 4
      %v1499 = vshll.u32 %v1451, 16
      %v1501 = vrot.slane %v1499, 5
      %v1502 = vor.u32 %v1498, %v1501
      %v1503 = vrot.slane %v1502, 4
      %v1505 = vshll.u32 %v1452, 16
      %v1507 = vrot.slane %v1505, 5
      %v1508 = vsel %vm245, %v1503, %v1507
      %1513 = vst [vmem:[#allocation2 + $0x80] sm:$0xf] %v1466
      %1514 = vst [vmem:[#allocation2 + $0x144] sm:$0xf] %v1480
      %1515 = vst [vmem:[#allocation2 + $0x208] sm:$0xf] %v1494
      %1516 = vst [vmem:[#allocation2 + $0x2cc] sm:$0xf] %v1508
      %v1517 = vld [vmem:[%s1364] sm:$0xf]
      %v1518 = vld [vmem:[%s1364 + $0x4] sm:$0x1]
      %v1519 = vld [vmem:[%s1364 + $0x8] sm:$0xf]
      %v1520 = vld [vmem:[%s1364 + $0xc] sm:$0x1]
      %v1521 = vld [vmem:[%s1364 + $0x10] sm:$0xf]
      %v1522 = vld [vmem:[%s1364 + $0x14] sm:$0x1]
      %v1523 = vld [vmem:[%s1364 + $0x18] sm:$0xf]
      %v1524 = vld [vmem:[%s1364 + $0x1c] sm:$0x1]
      %v1526 = vshrl.u32 %v1517, 16
      %v1528 = vrot.slane %v1526, 4
      %v1529 = vshll.u32 %v1517, 16
      %v1531 = vrot.slane %v1529, 5
      %v1532 = vor.u32 %v1528, %v1531
      %v1533 = vrot.slane %v1532, 4
      %v1535 = vshll.u32 %v1518, 16
      %v1537 = vrot.slane %v1535, 5
      %v1538 = vsel %vm245, %v1533, %v1537
      %v1540 = vshrl.u32 %v1519, 16
      %v1542 = vrot.slane %v1540, 4
      %v1543 = vshll.u32 %v1519, 16
      %v1545 = vrot.slane %v1543, 5
      %v1546 = vor.u32 %v1542, %v1545
      %v1547 = vrot.slane %v1546, 4
      %v1549 = vshll.u32 %v1520, 16
      %v1551 = vrot.slane %v1549, 5
      %v1552 = vsel %vm245, %v1547, %v1551
      %v1554 = vshrl.u32 %v1521, 16
      %v1556 = vrot.slane %v1554, 4
      %v1557 = vshll.u32 %v1521, 16
      %v1559 = vrot.slane %v1557, 5
      %v1560 = vor.u32 %v1556, %v1559
      %v1561 = vrot.slane %v1560, 4
      %v1563 = vshll.u32 %v1522, 16
      %v1565 = vrot.slane %v1563, 5
      %v1566 = vsel %vm245, %v1561, %v1565
      %v1568 = vshrl.u32 %v1523, 16
      %v1570 = vrot.slane %v1568, 4
      %v1571 = vshll.u32 %v1523, 16
      %v1573 = vrot.slane %v1571, 5
      %v1574 = vor.u32 %v1570, %v1573
      %v1575 = vrot.slane %v1574, 4
      %v1577 = vshll.u32 %v1524, 16
      %v1579 = vrot.slane %v1577, 5
      %v1580 = vsel %vm245, %v1575, %v1579
      %1585 = vst [vmem:[#allocation2 + $0x84] sm:$0xf] %v1538
      %1586 = vst [vmem:[#allocation2 + $0x148] sm:$0xf] %v1552
      %1587 = vst [vmem:[#allocation2 + $0x20c] sm:$0xf] %v1566
      %1588 = vst [vmem:[#allocation2 + $0x2d0] sm:$0xf] %v1580
      %v1589 = vld [vmem:[%s1346] sm:$0xe]
      %v1590 = vld [vmem:[%s1346 + $0x4] sm:$0x1]
      %v1591 = vld [vmem:[%s1346 + $0x8] sm:$0xe]
      %v1592 = vld [vmem:[%s1346 + $0xc] sm:$0x1]
      %v1593 = vld [vmem:[%s1346 + $0x10] sm:$0xe]
      %v1594 = vld [vmem:[%s1346 + $0x14] sm:$0x1]
      %v1595 = vld [vmem:[%s1346 + $0x18] sm:$0xe]
      %v1596 = vld [vmem:[%s1346 + $0x1c] sm:$0x1]
      %v1605 = vrot.slane %v1589, 5
      %v1606 = vrot.slane %v1605, 4
      %v1607 = vrot.slane %v1590, 5
      %v1608 = vsel %vm472, %v1606, %v1607
      %v1609 = vrot.slane %v1591, 5
      %v1610 = vrot.slane %v1609, 4
      %v1611 = vrot.slane %v1592, 5
      %v1612 = vsel %vm472, %v1610, %v1611
      %v1613 = vrot.slane %v1593, 5
      %v1614 = vrot.slane %v1613, 4
      %v1615 = vrot.slane %v1594, 5
      %v1616 = vsel %vm472, %v1614, %v1615
      %v1617 = vrot.slane %v1595, 5
      %v1618 = vrot.slane %v1617, 4
      %v1619 = vrot.slane %v1596, 5
      %v1620 = vsel %vm472, %v1618, %v1619
      %1625 = vst [vmem:[#allocation2 + $0x88] sm:$0xf] %v1608
      %1626 = vst [vmem:[#allocation2 + $0x14c] sm:$0xf] %v1612
      %1627 = vst [vmem:[#allocation2 + $0x210] sm:$0xf] %v1616
      %1628 = vst [vmem:[#allocation2 + $0x2d4] sm:$0xf] %v1620
      %s1629 = scalar_lea.vmem %s197, 296
      %v1630 = vld [vmem:[%s1629] sm:$0xf]
      %v1631 = vld [vmem:[%s1629 + $0x8] sm:$0xf]
      %v1632 = vld [vmem:[%s1629 + $0x10] sm:$0xf]
      %v1633 = vld [vmem:[%s1629 + $0x18] sm:$0xf]
      %1634 = vst [vmem:[#allocation2 + $0x8c] sm:$0xf] %v1630
      %1635 = vst [vmem:[#allocation2 + $0x150] sm:$0xf] %v1631
      %1636 = vst [vmem:[#allocation2 + $0x214] sm:$0xf] %v1632
      %1637 = vst [vmem:[#allocation2 + $0x2d8] sm:$0xf] %v1633
      %s1638 = scalar_lea.vmem %s197, 344
      %v1639 = vld [vmem:[%s1638] sm:$0xf]
      %v1640 = vld [vmem:[%s1638 + $0x8] sm:$0xf]
      %v1641 = vld [vmem:[%s1638 + $0x10] sm:$0xf]
      %v1642 = vld [vmem:[%s1638 + $0x18] sm:$0xf]
      %1643 = vst [vmem:[#allocation2 + $0x90] sm:$0xf] %v1639
      %1644 = vst [vmem:[#allocation2 + $0x154] sm:$0xf] %v1640
      %1645 = vst [vmem:[#allocation2 + $0x218] sm:$0xf] %v1641
      %1646 = vst [vmem:[#allocation2 + $0x2dc] sm:$0xf] %v1642
      %s1647 = scalar_lea.vmem %s197, 392
      %v1648 = vld [vmem:[%s1647] sm:$0xf]
      %v1649 = vld [vmem:[%s1647 + $0x8] sm:$0xf]
      %v1650 = vld [vmem:[%s1647 + $0x10] sm:$0xf]
      %v1651 = vld [vmem:[%s1647 + $0x18] sm:$0xf]
      %1652 = vst [vmem:[#allocation2 + $0x94] sm:$0xf] %v1648
      %1653 = vst [vmem:[#allocation2 + $0x158] sm:$0xf] %v1649
      %1654 = vst [vmem:[#allocation2 + $0x21c] sm:$0xf] %v1650
      %1655 = vst [vmem:[#allocation2 + $0x2e0] sm:$0xf] %v1651
      %v1656 = vld [vmem:[%s1629] sm:$0xf]
      %v1657 = vld [vmem:[%s1629 + $0x4] sm:$0x1]
      %v1658 = vld [vmem:[%s1629 + $0x8] sm:$0xf]
      %v1659 = vld [vmem:[%s1629 + $0xc] sm:$0x1]
      %v1660 = vld [vmem:[%s1629 + $0x10] sm:$0xf]
      %v1661 = vld [vmem:[%s1629 + $0x14] sm:$0x1]
      %v1662 = vld [vmem:[%s1629 + $0x18] sm:$0xf]
      %v1663 = vld [vmem:[%s1629 + $0x1c] sm:$0x1]
      %v1665 = vshrl.u32 %v1656, 16
      %v1667 = vrot.slane %v1665, 4
      %v1668 = vshll.u32 %v1656, 16
      %v1670 = vrot.slane %v1668, 5
      %v1671 = vor.u32 %v1667, %v1670
      %v1672 = vrot.slane %v1671, 4
      %v1674 = vshll.u32 %v1657, 16
      %v1676 = vrot.slane %v1674, 5
      %v1677 = vsel %vm245, %v1672, %v1676
      %v1679 = vshrl.u32 %v1658, 16
      %v1681 = vrot.slane %v1679, 4
      %v1682 = vshll.u32 %v1658, 16
      %v1684 = vrot.slane %v1682, 5
      %v1685 = vor.u32 %v1681, %v1684
      %v1686 = vrot.slane %v1685, 4
      %v1688 = vshll.u32 %v1659, 16
      %v1690 = vrot.slane %v1688, 5
      %v1691 = vsel %vm245, %v1686, %v1690
      %v1693 = vshrl.u32 %v1660, 16
      %v1695 = vrot.slane %v1693, 4
      %v1696 = vshll.u32 %v1660, 16
      %v1698 = vrot.slane %v1696, 5
      %v1699 = vor.u32 %v1695, %v1698
      %v1700 = vrot.slane %v1699, 4
      %v1702 = vshll.u32 %v1661, 16
      %v1704 = vrot.slane %v1702, 5
      %v1705 = vsel %vm245, %v1700, %v1704
      %v1707 = vshrl.u32 %v1662, 16
      %v1709 = vrot.slane %v1707, 4
      %v1710 = vshll.u32 %v1662, 16
      %v1712 = vrot.slane %v1710, 5
      %v1713 = vor.u32 %v1709, %v1712
      %v1714 = vrot.slane %v1713, 4
      %v1716 = vshll.u32 %v1663, 16
      %v1718 = vrot.slane %v1716, 5
      %v1719 = vsel %vm245, %v1714, %v1718
      %1724 = vst [vmem:[#allocation2 + $0x98] sm:$0xf] %v1677
      %1725 = vst [vmem:[#allocation2 + $0x15c] sm:$0xf] %v1691
      %1726 = vst [vmem:[#allocation2 + $0x220] sm:$0xf] %v1705
      %1727 = vst [vmem:[#allocation2 + $0x2e4] sm:$0xf] %v1719
      %v1728 = vld [vmem:[%s1638] sm:$0xf]
      %v1729 = vld [vmem:[%s1638 + $0x4] sm:$0x1]
      %v1730 = vld [vmem:[%s1638 + $0x8] sm:$0xf]
      %v1731 = vld [vmem:[%s1638 + $0xc] sm:$0x1]
      %v1732 = vld [vmem:[%s1638 + $0x10] sm:$0xf]
      %v1733 = vld [vmem:[%s1638 + $0x14] sm:$0x1]
      %v1734 = vld [vmem:[%s1638 + $0x18] sm:$0xf]
      %v1735 = vld [vmem:[%s1638 + $0x1c] sm:$0x1]
      %v1737 = vshrl.u32 %v1728, 16
      %v1739 = vrot.slane %v1737, 4
      %v1740 = vshll.u32 %v1728, 16
      %v1742 = vrot.slane %v1740, 5
      %v1743 = vor.u32 %v1739, %v1742
      %v1744 = vrot.slane %v1743, 4
      %v1746 = vshll.u32 %v1729, 16
      %v1748 = vrot.slane %v1746, 5
      %v1749 = vsel %vm245, %v1744, %v1748
      %v1751 = vshrl.u32 %v1730, 16
      %v1753 = vrot.slane %v1751, 4
      %v1754 = vshll.u32 %v1730, 16
      %v1756 = vrot.slane %v1754, 5
      %v1757 = vor.u32 %v1753, %v1756
      %v1758 = vrot.slane %v1757, 4
      %v1760 = vshll.u32 %v1731, 16
      %v1762 = vrot.slane %v1760, 5
      %v1763 = vsel %vm245, %v1758, %v1762
      %v1765 = vshrl.u32 %v1732, 16
      %v1767 = vrot.slane %v1765, 4
      %v1768 = vshll.u32 %v1732, 16
      %v1770 = vrot.slane %v1768, 5
      %v1771 = vor.u32 %v1767, %v1770
      %v1772 = vrot.slane %v1771, 4
      %v1774 = vshll.u32 %v1733, 16
      %v1776 = vrot.slane %v1774, 5
      %v1777 = vsel %vm245, %v1772, %v1776
      %v1779 = vshrl.u32 %v1734, 16
      %v1781 = vrot.slane %v1779, 4
      %v1782 = vshll.u32 %v1734, 16
      %v1784 = vrot.slane %v1782, 5
      %v1785 = vor.u32 %v1781, %v1784
      %v1786 = vrot.slane %v1785, 4
      %v1788 = vshll.u32 %v1735, 16
      %v1790 = vrot.slane %v1788, 5
      %v1791 = vsel %vm245, %v1786, %v1790
      %1796 = vst [vmem:[#allocation2 + $0x9c] sm:$0xf] %v1749
      %1797 = vst [vmem:[#allocation2 + $0x160] sm:$0xf] %v1763
      %1798 = vst [vmem:[#allocation2 + $0x224] sm:$0xf] %v1777
      %1799 = vst [vmem:[#allocation2 + $0x2e8] sm:$0xf] %v1791
      %v1800 = vld [vmem:[%s1647] sm:$0xf]
      %v1801 = vld [vmem:[%s1647 + $0x4] sm:$0x1]
      %v1802 = vld [vmem:[%s1647 + $0x8] sm:$0xf]
      %v1803 = vld [vmem:[%s1647 + $0xc] sm:$0x1]
      %v1804 = vld [vmem:[%s1647 + $0x10] sm:$0xf]
      %v1805 = vld [vmem:[%s1647 + $0x14] sm:$0x1]
      %v1806 = vld [vmem:[%s1647 + $0x18] sm:$0xf]
      %v1807 = vld [vmem:[%s1647 + $0x1c] sm:$0x1]
      %v1809 = vshrl.u32 %v1800, 16
      %v1811 = vrot.slane %v1809, 4
      %v1812 = vshll.u32 %v1800, 16
      %v1814 = vrot.slane %v1812, 5
      %v1815 = vor.u32 %v1811, %v1814
      %v1816 = vrot.slane %v1815, 4
      %v1818 = vshll.u32 %v1801, 16
      %v1820 = vrot.slane %v1818, 5
      %v1821 = vsel %vm245, %v1816, %v1820
      %v1823 = vshrl.u32 %v1802, 16
      %v1825 = vrot.slane %v1823, 4
      %v1826 = vshll.u32 %v1802, 16
      %v1828 = vrot.slane %v1826, 5
      %v1829 = vor.u32 %v1825, %v1828
      %v1830 = vrot.slane %v1829, 4
      %v1832 = vshll.u32 %v1803, 16
      %v1834 = vrot.slane %v1832, 5
      %v1835 = vsel %vm245, %v1830, %v1834
      %v1837 = vshrl.u32 %v1804, 16
      %v1839 = vrot.slane %v1837, 4
      %v1840 = vshll.u32 %v1804, 16
      %v1842 = vrot.slane %v1840, 5
      %v1843 = vor.u32 %v1839, %v1842
      %v1844 = vrot.slane %v1843, 4
      %v1846 = vshll.u32 %v1805, 16
      %v1848 = vrot.slane %v1846, 5
      %v1849 = vsel %vm245, %v1844, %v1848
      %v1851 = vshrl.u32 %v1806, 16
      %v1853 = vrot.slane %v1851, 4
      %v1854 = vshll.u32 %v1806, 16
      %v1856 = vrot.slane %v1854, 5
      %v1857 = vor.u32 %v1853, %v1856
      %v1858 = vrot.slane %v1857, 4
      %v1860 = vshll.u32 %v1807, 16
      %v1862 = vrot.slane %v1860, 5
      %v1863 = vsel %vm245, %v1858, %v1862
      %1868 = vst [vmem:[#allocation2 + $0xa0] sm:$0xf] %v1821
      %1869 = vst [vmem:[#allocation2 + $0x164] sm:$0xf] %v1835
      %1870 = vst [vmem:[#allocation2 + $0x228] sm:$0xf] %v1849
      %1871 = vst [vmem:[#allocation2 + $0x2ec] sm:$0xf] %v1863
      %v1872 = vld [vmem:[%s1629] sm:$0xe]
      %v1873 = vld [vmem:[%s1629 + $0x4] sm:$0x1]
      %v1874 = vld [vmem:[%s1629 + $0x8] sm:$0xe]
      %v1875 = vld [vmem:[%s1629 + $0xc] sm:$0x1]
      %v1876 = vld [vmem:[%s1629 + $0x10] sm:$0xe]
      %v1877 = vld [vmem:[%s1629 + $0x14] sm:$0x1]
      %v1878 = vld [vmem:[%s1629 + $0x18] sm:$0xe]
      %v1879 = vld [vmem:[%s1629 + $0x1c] sm:$0x1]
      %v1888 = vrot.slane %v1872, 5
      %v1889 = vrot.slane %v1888, 4
      %v1890 = vrot.slane %v1873, 5
      %v1891 = vsel %vm472, %v1889, %v1890
      %v1892 = vrot.slane %v1874, 5
      %v1893 = vrot.slane %v1892, 4
      %v1894 = vrot.slane %v1875, 5
      %v1895 = vsel %vm472, %v1893, %v1894
      %v1896 = vrot.slane %v1876, 5
      %v1897 = vrot.slane %v1896, 4
      %v1898 = vrot.slane %v1877, 5
      %v1899 = vsel %vm472, %v1897, %v1898
      %v1900 = vrot.slane %v1878, 5
      %v1901 = vrot.slane %v1900, 4
      %v1902 = vrot.slane %v1879, 5
      %v1903 = vsel %vm472, %v1901, %v1902
      %1908 = vst [vmem:[#allocation2 + $0xa4] sm:$0xf] %v1891
      %1909 = vst [vmem:[#allocation2 + $0x168] sm:$0xf] %v1895
      %1910 = vst [vmem:[#allocation2 + $0x22c] sm:$0xf] %v1899
      %1911 = vst [vmem:[#allocation2 + $0x2f0] sm:$0xf] %v1903
      %s1912 = scalar_lea.vmem %s197, 16
      %v1913 = vld [vmem:[%s1912] sm:$0xf]
      %v1914 = vld [vmem:[%s1912 + $0x8] sm:$0xf]
      %v1915 = vld [vmem:[%s1912 + $0x10] sm:$0xf]
      %v1916 = vld [vmem:[%s1912 + $0x18] sm:$0xf]
      %1917 = vst [vmem:[#allocation2 + $0xa8] sm:$0xf] %v1913
      %1918 = vst [vmem:[#allocation2 + $0x16c] sm:$0xf] %v1914
      %1919 = vst [vmem:[#allocation2 + $0x230] sm:$0xf] %v1915
      %1920 = vst [vmem:[#allocation2 + $0x2f4] sm:$0xf] %v1916
      %s1921 = scalar_lea.vmem %s197, 64
      %v1922 = vld [vmem:[%s1921] sm:$0xf]
      %v1923 = vld [vmem:[%s1921 + $0x8] sm:$0xf]
      %v1924 = vld [vmem:[%s1921 + $0x10] sm:$0xf]
      %v1925 = vld [vmem:[%s1921 + $0x18] sm:$0xf]
      %1926 = vst [vmem:[#allocation2 + $0xac] sm:$0xf] %v1922
      %1927 = vst [vmem:[#allocation2 + $0x170] sm:$0xf] %v1923
      %1928 = vst [vmem:[#allocation2 + $0x234] sm:$0xf] %v1924
      %1929 = vst [vmem:[#allocation2 + $0x2f8] sm:$0xf] %v1925
      %s1930 = scalar_lea.vmem %s197, 112
      %v1931 = vld [vmem:[%s1930] sm:$0xf]
      %v1932 = vld [vmem:[%s1930 + $0x8] sm:$0xf]
      %v1933 = vld [vmem:[%s1930 + $0x10] sm:$0xf]
      %v1934 = vld [vmem:[%s1930 + $0x18] sm:$0xf]
      %1935 = vst [vmem:[#allocation2 + $0xb0] sm:$0xf] %v1931
      %1936 = vst [vmem:[#allocation2 + $0x174] sm:$0xf] %v1932
      %1937 = vst [vmem:[#allocation2 + $0x238] sm:$0xf] %v1933
      %1938 = vst [vmem:[#allocation2 + $0x2fc] sm:$0xf] %v1934
      %v1939 = vld [vmem:[%s1912] sm:$0xf]
      %v1940 = vld [vmem:[%s1912 + $0x4] sm:$0x1]
      %v1941 = vld [vmem:[%s1912 + $0x8] sm:$0xf]
      %v1942 = vld [vmem:[%s1912 + $0xc] sm:$0x1]
      %v1943 = vld [vmem:[%s1912 + $0x10] sm:$0xf]
      %v1944 = vld [vmem:[%s1912 + $0x14] sm:$0x1]
      %v1945 = vld [vmem:[%s1912 + $0x18] sm:$0xf]
      %v1946 = vld [vmem:[%s1912 + $0x1c] sm:$0x1]
      %v1948 = vshrl.u32 %v1939, 16
      %v1950 = vrot.slane %v1948, 4
      %v1951 = vshll.u32 %v1939, 16
      %v1953 = vrot.slane %v1951, 5
      %v1954 = vor.u32 %v1950, %v1953
      %v1955 = vrot.slane %v1954, 4
      %v1957 = vshll.u32 %v1940, 16
      %v1959 = vrot.slane %v1957, 5
      %v1960 = vsel %vm245, %v1955, %v1959
      %v1962 = vshrl.u32 %v1941, 16
      %v1964 = vrot.slane %v1962, 4
      %v1965 = vshll.u32 %v1941, 16
      %v1967 = vrot.slane %v1965, 5
      %v1968 = vor.u32 %v1964, %v1967
      %v1969 = vrot.slane %v1968, 4
      %v1971 = vshll.u32 %v1942, 16
      %v1973 = vrot.slane %v1971, 5
      %v1974 = vsel %vm245, %v1969, %v1973
      %v1976 = vshrl.u32 %v1943, 16
      %v1978 = vrot.slane %v1976, 4
      %v1979 = vshll.u32 %v1943, 16
      %v1981 = vrot.slane %v1979, 5
      %v1982 = vor.u32 %v1978, %v1981
      %v1983 = vrot.slane %v1982, 4
      %v1985 = vshll.u32 %v1944, 16
      %v1987 = vrot.slane %v1985, 5
      %v1988 = vsel %vm245, %v1983, %v1987
      %v1990 = vshrl.u32 %v1945, 16
      %v1992 = vrot.slane %v1990, 4
      %v1993 = vshll.u32 %v1945, 16
      %v1995 = vrot.slane %v1993, 5
      %v1996 = vor.u32 %v1992, %v1995
      %v1997 = vrot.slane %v1996, 4
      %v1999 = vshll.u32 %v1946, 16
      %v2001 = vrot.slane %v1999, 5
      %v2002 = vsel %vm245, %v1997, %v2001
      %2007 = vst [vmem:[#allocation2 + $0xb4] sm:$0xf] %v1960
      %2008 = vst [vmem:[#allocation2 + $0x178] sm:$0xf] %v1974
      %2009 = vst [vmem:[#allocation2 + $0x23c] sm:$0xf] %v1988
      %2010 = vst [vmem:[#allocation2 + $0x300] sm:$0xf] %v2002
      %v2011 = vld [vmem:[%s1921] sm:$0xf]
      %v2012 = vld [vmem:[%s1921 + $0x4] sm:$0x1]
      %v2013 = vld [vmem:[%s1921 + $0x8] sm:$0xf]
      %v2014 = vld [vmem:[%s1921 + $0xc] sm:$0x1]
      %v2015 = vld [vmem:[%s1921 + $0x10] sm:$0xf]
      %v2016 = vld [vmem:[%s1921 + $0x14] sm:$0x1]
      %v2017 = vld [vmem:[%s1921 + $0x18] sm:$0xf]
      %v2018 = vld [vmem:[%s1921 + $0x1c] sm:$0x1]
      %v2020 = vshrl.u32 %v2011, 16
      %v2022 = vrot.slane %v2020, 4
      %v2023 = vshll.u32 %v2011, 16
      %v2025 = vrot.slane %v2023, 5
      %v2026 = vor.u32 %v2022, %v2025
      %v2027 = vrot.slane %v2026, 4
      %v2029 = vshll.u32 %v2012, 16
      %v2031 = vrot.slane %v2029, 5
      %v2032 = vsel %vm245, %v2027, %v2031
      %v2034 = vshrl.u32 %v2013, 16
      %v2036 = vrot.slane %v2034, 4
      %v2037 = vshll.u32 %v2013, 16
      %v2039 = vrot.slane %v2037, 5
      %v2040 = vor.u32 %v2036, %v2039
      %v2041 = vrot.slane %v2040, 4
      %v2043 = vshll.u32 %v2014, 16
      %v2045 = vrot.slane %v2043, 5
      %v2046 = vsel %vm245, %v2041, %v2045
      %v2048 = vshrl.u32 %v2015, 16
      %v2050 = vrot.slane %v2048, 4
      %v2051 = vshll.u32 %v2015, 16
      %v2053 = vrot.slane %v2051, 5
      %v2054 = vor.u32 %v2050, %v2053
      %v2055 = vrot.slane %v2054, 4
      %v2057 = vshll.u32 %v2016, 16
      %v2059 = vrot.slane %v2057, 5
      %v2060 = vsel %vm245, %v2055, %v2059
      %v2062 = vshrl.u32 %v2017, 16
      %v2064 = vrot.slane %v2062, 4
      %v2065 = vshll.u32 %v2017, 16
      %v2067 = vrot.slane %v2065, 5
      %v2068 = vor.u32 %v2064, %v2067
      %v2069 = vrot.slane %v2068, 4
      %v2071 = vshll.u32 %v2018, 16
      %v2073 = vrot.slane %v2071, 5
      %v2074 = vsel %vm245, %v2069, %v2073
      %2079 = vst [vmem:[#allocation2 + $0xb8] sm:$0xf] %v2032
      %2080 = vst [vmem:[#allocation2 + $0x17c] sm:$0xf] %v2046
      %2081 = vst [vmem:[#allocation2 + $0x240] sm:$0xf] %v2060
      %2082 = vst [vmem:[#allocation2 + $0x304] sm:$0xf] %v2074
      %v2083 = vld [vmem:[%s1930] sm:$0xf]
      %v2084 = vld [vmem:[%s1930 + $0x4] sm:$0x1]
      %v2085 = vld [vmem:[%s1930 + $0x8] sm:$0xf]
      %v2086 = vld [vmem:[%s1930 + $0xc] sm:$0x1]
      %v2087 = vld [vmem:[%s1930 + $0x10] sm:$0xf]
      %v2088 = vld [vmem:[%s1930 + $0x14] sm:$0x1]
      %v2089 = vld [vmem:[%s1930 + $0x18] sm:$0xf]
      %v2090 = vld [vmem:[%s1930 + $0x1c] sm:$0x1]
      %v2092 = vshrl.u32 %v2083, 16
      %v2094 = vrot.slane %v2092, 4
      %v2095 = vshll.u32 %v2083, 16
      %v2097 = vrot.slane %v2095, 5
      %v2098 = vor.u32 %v2094, %v2097
      %v2099 = vrot.slane %v2098, 4
      %v2101 = vshll.u32 %v2084, 16
      %v2103 = vrot.slane %v2101, 5
      %v2104 = vsel %vm245, %v2099, %v2103
      %v2106 = vshrl.u32 %v2085, 16
      %v2108 = vrot.slane %v2106, 4
      %v2109 = vshll.u32 %v2085, 16
      %v2111 = vrot.slane %v2109, 5
      %v2112 = vor.u32 %v2108, %v2111
      %v2113 = vrot.slane %v2112, 4
      %v2115 = vshll.u32 %v2086, 16
      %v2117 = vrot.slane %v2115, 5
      %v2118 = vsel %vm245, %v2113, %v2117
      %v2120 = vshrl.u32 %v2087, 16
      %v2122 = vrot.slane %v2120, 4
      %v2123 = vshll.u32 %v2087, 16
      %v2125 = vrot.slane %v2123, 5
      %v2126 = vor.u32 %v2122, %v2125
      %v2127 = vrot.slane %v2126, 4
      %v2129 = vshll.u32 %v2088, 16
      %v2131 = vrot.slane %v2129, 5
      %v2132 = vsel %vm245, %v2127, %v2131
      %v2134 = vshrl.u32 %v2089, 16
      %v2136 = vrot.slane %v2134, 4
      %v2137 = vshll.u32 %v2089, 16
      %v2139 = vrot.slane %v2137, 5
      %v2140 = vor.u32 %v2136, %v2139
      %v2141 = vrot.slane %v2140, 4
      %v2143 = vshll.u32 %v2090, 16
      %v2145 = vrot.slane %v2143, 5
      %v2146 = vsel %vm245, %v2141, %v2145
      %2151 = vst [vmem:[#allocation2 + $0xbc] sm:$0xf] %v2104
      %2152 = vst [vmem:[#allocation2 + $0x180] sm:$0xf] %v2118
      %2153 = vst [vmem:[#allocation2 + $0x244] sm:$0xf] %v2132
      %2154 = vst [vmem:[#allocation2 + $0x308] sm:$0xf] %v2146
      %v2155 = vld [vmem:[%s1912] sm:$0xe]
      %v2156 = vld [vmem:[%s1912 + $0x4] sm:$0x1]
      %v2157 = vld [vmem:[%s1912 + $0x8] sm:$0xe]
      %v2158 = vld [vmem:[%s1912 + $0xc] sm:$0x1]
      %v2159 = vld [vmem:[%s1912 + $0x10] sm:$0xe]
      %v2160 = vld [vmem:[%s1912 + $0x14] sm:$0x1]
      %v2161 = vld [vmem:[%s1912 + $0x18] sm:$0xe]
      %v2162 = vld [vmem:[%s1912 + $0x1c] sm:$0x1]
      %v2171 = vrot.slane %v2155, 5
      %v2172 = vrot.slane %v2171, 4
      %v2173 = vrot.slane %v2156, 5
      %v2174 = vsel %vm472, %v2172, %v2173
      %v2175 = vrot.slane %v2157, 5
      %v2176 = vrot.slane %v2175, 4
      %v2177 = vrot.slane %v2158, 5
      %v2178 = vsel %vm472, %v2176, %v2177
      %v2179 = vrot.slane %v2159, 5
      %v2180 = vrot.slane %v2179, 4
      %v2181 = vrot.slane %v2160, 5
      %v2182 = vsel %vm472, %v2180, %v2181
      %v2183 = vrot.slane %v2161, 5
      %v2184 = vrot.slane %v2183, 4
      %v2185 = vrot.slane %v2162, 5
      %v2186 = vsel %vm472, %v2184, %v2185
      %2191 = vst [vmem:[#allocation2 + $0xc0] sm:$0xf] %v2174
      %2192 = vst [vmem:[#allocation2 + $0x184] sm:$0xf] %v2178
      %2193 = vst [vmem:[#allocation2 + $0x248] sm:$0xf] %v2182
      %2194 = vst [vmem:[#allocation2 + $0x30c] sm:$0xf] %v2186
      %v2195 = vld [vmem:[#allocation2] sm:$0xff]
      %v2196 = vld [vmem:[#allocation2 + $0x8] sm:$0xff]
      %v2197 = vld [vmem:[#allocation2 + $0x10] sm:$0xff]
      %v2198 = vld [vmem:[#allocation2 + $0x18] sm:$0xff]
      %v2199 = vld [vmem:[#allocation2 + $0x20] sm:$0xff]
      %v2200 = vld [vmem:[#allocation2 + $0x28] sm:$0xff]
      %v2201 = vld [vmem:[#allocation2 + $0x30] sm:$0xff]
      %v2202 = vld [vmem:[#allocation2 + $0x38] sm:$0xff]
      %v2203 = vld [vmem:[#allocation2 + $0x40] sm:$0xff]
      %v2204 = vld [vmem:[#allocation2 + $0x48] sm:$0xff]
      %v2205 = vld [vmem:[#allocation2 + $0x50] sm:$0xff]
      %v2206 = vld [vmem:[#allocation2 + $0x58] sm:$0xff]
      %v2207 = vld [vmem:[#allocation2 + $0x60] sm:$0xff]
      %v2208 = vld [vmem:[#allocation2 + $0x68] sm:$0xff]
      %v2209 = vld [vmem:[#allocation2 + $0x70] sm:$0xff]
      %v2210 = vld [vmem:[#allocation2 + $0x78] sm:$0xff]
      %v2211 = vld [vmem:[#allocation2 + $0x80] sm:$0xff]
      %v2212 = vld [vmem:[#allocation2 + $0x88] sm:$0xff]
      %v2213 = vld [vmem:[#allocation2 + $0x90] sm:$0xff]
      %v2214 = vld [vmem:[#allocation2 + $0x98] sm:$0xff]
      %v2215 = vld [vmem:[#allocation2 + $0xa0] sm:$0xff]
      %v2216 = vld [vmem:[#allocation2 + $0xa8] sm:$0xff]
      %v2217 = vld [vmem:[#allocation2 + $0xb0] sm:$0xff]
      %v2218 = vld [vmem:[#allocation2 + $0xb8] sm:$0xff]
      %v2219 = vld [vmem:[#allocation2 + $0xc0] sm:$0xf]
      %v2220 = vld [vmem:[#allocation2 + $0xc4] sm:$0xff]
      %v2221 = vld [vmem:[#allocation2 + $0xcc] sm:$0xff]
      %v2222 = vld [vmem:[#allocation2 + $0xd4] sm:$0xff]
      %v2223 = vld [vmem:[#allocation2 + $0xdc] sm:$0xff]
      %v2224 = vld [vmem:[#allocation2 + $0xe4] sm:$0xff]
      %v2225 = vld [vmem:[#allocation2 + $0xec] sm:$0xff]
      %v2226 = vld [vmem:[#allocation2 + $0xf4] sm:$0xff]
      %v2227 = vld [vmem:[#allocation2 + $0xfc] sm:$0xff]
      %v2228 = vld [vmem:[#allocation2 + $0x104] sm:$0xff]
      %v2229 = vld [vmem:[#allocation2 + $0x10c] sm:$0xff]
      %v2230 = vld [vmem:[#allocation2 + $0x114] sm:$0xff]
      %v2231 = vld [vmem:[#allocation2 + $0x11c] sm:$0xff]
      %v2232 = vld [vmem:[#allocation2 + $0x124] sm:$0xff]
      %v2233 = vld [vmem:[#allocation2 + $0x12c] sm:$0xff]
      %v2234 = vld [vmem:[#allocation2 + $0x134] sm:$0xff]
      %v2235 = vld [vmem:[#allocation2 + $0x13c] sm:$0xff]
      %v2236 = vld [vmem:[#allocation2 + $0x144] sm:$0xff]
      %v2237 = vld [vmem:[#allocation2 + $0x14c] sm:$0xff]
      %v2238 = vld [vmem:[#allocation2 + $0x154] sm:$0xff]
      %v2239 = vld [vmem:[#allocation2 + $0x15c] sm:$0xff]
      %v2240 = vld [vmem:[#allocation2 + $0x164] sm:$0xff]
      %v2241 = vld [vmem:[#allocation2 + $0x16c] sm:$0xff]
      %v2242 = vld [vmem:[#allocation2 + $0x174] sm:$0xff]
      %v2243 = vld [vmem:[#allocation2 + $0x17c] sm:$0xff]
      %v2244 = vld [vmem:[#allocation2 + $0x184] sm:$0xf]
      %v2245 = vld [vmem:[#allocation2 + $0x188] sm:$0xff]
      %v2246 = vld [vmem:[#allocation2 + $0x190] sm:$0xff]
      %v2247 = vld [vmem:[#allocation2 + $0x198] sm:$0xff]
      %v2248 = vld [vmem:[#allocation2 + $0x1a0] sm:$0xff]
      %v2249 = vld [vmem:[#allocation2 + $0x1a8] sm:$0xff]
      %v2250 = vld [vmem:[#allocation2 + $0x1b0] sm:$0xff]
      %v2251 = vld [vmem:[#allocation2 + $0x1b8] sm:$0xff]
      %v2252 = vld [vmem:[#allocation2 + $0x1c0] sm:$0xff]
      %v2253 = vld [vmem:[#allocation2 + $0x1c8] sm:$0xff]
      %v2254 = vld [vmem:[#allocation2 + $0x1d0] sm:$0xff]
      %v2255 = vld [vmem:[#allocation2 + $0x1d8] sm:$0xff]
      %v2256 = vld [vmem:[#allocation2 + $0x1e0] sm:$0xff]
      %v2257 = vld [vmem:[#allocation2 + $0x1e8] sm:$0xff]
      %v2258 = vld [vmem:[#allocation2 + $0x1f0] sm:$0xff]
      %v2259 = vld [vmem:[#allocation2 + $0x1f8] sm:$0xff]
      %v2260 = vld [vmem:[#allocation2 + $0x200] sm:$0xff]
      %v2261 = vld [vmem:[#allocation2 + $0x208] sm:$0xff]
      %v2262 = vld [vmem:[#allocation2 + $0x210] sm:$0xff]
      %v2263 = vld [vmem:[#allocation2 + $0x218] sm:$0xff]
      %v2264 = vld [vmem:[#allocation2 + $0x220] sm:$0xff]
      %v2265 = vld [vmem:[#allocation2 + $0x228] sm:$0xff]
      %v2266 = vld [vmem:[#allocation2 + $0x230] sm:$0xff]
      %v2267 = vld [vmem:[#allocation2 + $0x238] sm:$0xff]
      %v2268 = vld [vmem:[#allocation2 + $0x240] sm:$0xff]
      %v2269 = vld [vmem:[#allocation2 + $0x248] sm:$0xf]
      %v2270 = vld [vmem:[#allocation2 + $0x24c] sm:$0xff]
      %v2271 = vld [vmem:[#allocation2 + $0x254] sm:$0xff]
      %v2272 = vld [vmem:[#allocation2 + $0x25c] sm:$0xff]
      %v2273 = vld [vmem:[#allocation2 + $0x264] sm:$0xff]
      %v2274 = vld [vmem:[#allocation2 + $0x26c] sm:$0xff]
      %v2275 = vld [vmem:[#allocation2 + $0x274] sm:$0xff]
      %v2276 = vld [vmem:[#allocation2 + $0x27c] sm:$0xff]
      %v2277 = vld [vmem:[#allocation2 + $0x284] sm:$0xff]
      %v2278 = vld [vmem:[#allocation2 + $0x28c] sm:$0xff]
      %v2279 = vld [vmem:[#allocation2 + $0x294] sm:$0xff]
      %v2280 = vld [vmem:[#allocation2 + $0x29c] sm:$0xff]
      %v2281 = vld [vmem:[#allocation2 + $0x2a4] sm:$0xff]
      %v2282 = vld [vmem:[#allocation2 + $0x2ac] sm:$0xff]
      %v2283 = vld [vmem:[#allocation2 + $0x2b4] sm:$0xff]
      %v2284 = vld [vmem:[#allocation2 + $0x2bc] sm:$0xff]
      %v2285 = vld [vmem:[#allocation2 + $0x2c4] sm:$0xff]
      %v2286 = vld [vmem:[#allocation2 + $0x2cc] sm:$0xff]
      %v2287 = vld [vmem:[#allocation2 + $0x2d4] sm:$0xff]
      %v2288 = vld [vmem:[#allocation2 + $0x2dc] sm:$0xff]
      %v2289 = vld [vmem:[#allocation2 + $0x2e4] sm:$0xff]
      %v2290 = vld [vmem:[#allocation2 + $0x2ec] sm:$0xff]
      %v2291 = vld [vmem:[#allocation2 + $0x2f4] sm:$0xff]
      %v2292 = vld [vmem:[#allocation2 + $0x2fc] sm:$0xff]
      %v2293 = vld [vmem:[#allocation2 + $0x304] sm:$0xff]
      %v2294 = vld [vmem:[#allocation2 + $0x30c] sm:$0xf]
      %v2295 = vld [vmem:[%s1] sm:$0xf]
      %v2296 = vld [vmem:[%s1 + $0x4] sm:$0xf]
      %v2297 = vld [vmem:[%s1 + $0x8] sm:$0xf]
      %v2298 = vld [vmem:[%s1 + $0xc] sm:$0xf]
      %v2299 = vld [vmem:[%s1 + $0x10] sm:$0xf]
      %v2300 = vld [vmem:[%s1 + $0x14] sm:$0xf]
      %v2301 = vld [vmem:[%s1 + $0x18] sm:$0xf]
      %v2302 = vld [vmem:[%s1 + $0x1c] sm:$0xf]
      %v2303 = vld [vmem:[%s1 + $0x20] sm:$0xf]
      %v2304 = vld [vmem:[%s1 + $0x24] sm:$0xf]
      %v2305 = vld [vmem:[%s1 + $0x28] sm:$0xf]
      %v2306 = vld [vmem:[%s1 + $0x2c] sm:$0xf]
      %v2307 = vld [vmem:[%s1 + $0x30] sm:$0xf]
      %v2308 = vld [vmem:[%s1 + $0x34] sm:$0xf]
      %v2309 = vld [vmem:[%s1 + $0x38] sm:$0xf]
      %v2310 = vld [vmem:[%s1 + $0x3c] sm:$0xf]
      %v2311 = vld [vmem:[%s1 + $0x40] sm:$0xf]
      %v2312 = vld [vmem:[%s1 + $0x44] sm:$0xf]
      %v2313 = vld [vmem:[%s1 + $0x48] sm:$0xf]
      %v2314 = vld [vmem:[%s1 + $0x4c] sm:$0xf]
      %v2315 = vld [vmem:[%s1 + $0x50] sm:$0xf]
      %v2316 = vld [vmem:[%s1 + $0x54] sm:$0xf]
      %v2317 = vld [vmem:[%s1 + $0x58] sm:$0xf]
      %v2318 = vld [vmem:[%s1 + $0x5c] sm:$0xf]
      %v2319 = vld [vmem:[%s1 + $0x60] sm:$0xf]
      %v2320 = vld [vmem:[%s1 + $0x64] sm:$0xf]
      %v2321 = vld [vmem:[%s1 + $0x68] sm:$0xf]
      %v2322 = vld [vmem:[%s1 + $0x6c] sm:$0xf]
      %v2323 = vld [vmem:[%s1 + $0x70] sm:$0xf]
      %v2324 = vld [vmem:[%s1 + $0x74] sm:$0xf]
      %v2325 = vld [vmem:[%s1 + $0x78] sm:$0xf]
      %v2326 = vld [vmem:[%s1 + $0x7c] sm:$0xf]
      %v2327 = vld [vmem:[%s1 + $0x80] sm:$0xf]
      %v2328 = vld [vmem:[%s1 + $0x84] sm:$0xf]
      %v2329 = vld [vmem:[%s1 + $0x88] sm:$0xf]
      %v2330 = vld [vmem:[%s1 + $0x8c] sm:$0xf]
      %v2331 = vld [vmem:[%s1 + $0x90] sm:$0xf]
      %v2332 = vld [vmem:[%s1 + $0x94] sm:$0xf]
      %v2333 = vld [vmem:[%s1 + $0x98] sm:$0xf]
      %v2334 = vld [vmem:[%s1 + $0x9c] sm:$0xf]
      %v2335 = vld [vmem:[%s1 + $0xa0] sm:$0xf]
      %v2336 = vld [vmem:[%s1 + $0xa4] sm:$0xf]
      %v2337 = vld [vmem:[%s1 + $0xa8] sm:$0xf]
      %v2338 = vld [vmem:[%s1 + $0xac] sm:$0xf]
      %v2339 = vld [vmem:[%s1 + $0xb0] sm:$0xf]
      %v2340 = vld [vmem:[%s1 + $0xb4] sm:$0xf]
      %v2341 = vld [vmem:[%s1 + $0xb8] sm:$0xf]
      %v2342 = vld [vmem:[%s1 + $0xbc] sm:$0xf]
      %v2343 = vld [vmem:[%s1 + $0xc0] sm:$0xf]
      %v2344 = vld [vmem:[%s1 + $0xc4] sm:$0xf]
      %v2345 = vld [vmem:[%s1 + $0xc8] sm:$0xf]
      %v2346 = vld [vmem:[%s1 + $0xcc] sm:$0xf]
      %v2347 = vld [vmem:[%s1 + $0xd0] sm:$0xf]
      %v2348 = vld [vmem:[%s1 + $0xd4] sm:$0xf]
      %v2349 = vld [vmem:[%s1 + $0xd8] sm:$0xf]
      %v2350 = vld [vmem:[%s1 + $0xdc] sm:$0xf]
      %v2351 = vld [vmem:[%s1 + $0xe0] sm:$0xf]
      %v2352 = vld [vmem:[%s1 + $0xe4] sm:$0xf]
      %v2353 = vld [vmem:[%s1 + $0xe8] sm:$0xf]
      %v2354 = vld [vmem:[%s1 + $0xec] sm:$0xf]
      %v2355 = vld [vmem:[%s1 + $0xf0] sm:$0xf]
      %v2356 = vld [vmem:[%s1 + $0xf4] sm:$0xf]
      %v2357 = vld [vmem:[%s1 + $0xf8] sm:$0xf]
      %v2358 = vld [vmem:[%s1 + $0xfc] sm:$0xf]
      %v2359 = vld [vmem:[%s1 + $0x100] sm:$0xf]
      %v2360 = vld [vmem:[%s1 + $0x104] sm:$0xf]
      %v2361 = vld [vmem:[%s1 + $0x108] sm:$0xf]
      %v2362 = vld [vmem:[%s1 + $0x10c] sm:$0xf]
      %v2363 = vld [vmem:[%s1 + $0x110] sm:$0xf]
      %v2364 = vld [vmem:[%s1 + $0x114] sm:$0xf]
      %v2365 = vld [vmem:[%s1 + $0x118] sm:$0xf]
      %v2366 = vld [vmem:[%s1 + $0x11c] sm:$0xf]
      %v2367 = vld [vmem:[%s1 + $0x120] sm:$0xf]
      %v2368 = vld [vmem:[%s1 + $0x124] sm:$0xf]
      %v2369 = vld [vmem:[%s1 + $0x128] sm:$0xf]
      %v2370 = vld [vmem:[%s1 + $0x12c] sm:$0xf]
      %v2371 = vld [vmem:[%s1 + $0x130] sm:$0xf]
      %v2372 = vld [vmem:[%s1 + $0x134] sm:$0xf]
      %v2373 = vld [vmem:[%s1 + $0x138] sm:$0xf]
      %v2374 = vld [vmem:[%s1 + $0x13c] sm:$0xf]
      %v2375 = vld [vmem:[%s1 + $0x140] sm:$0xf]
      %v2376 = vld [vmem:[%s1 + $0x144] sm:$0xf]
      %v2377 = vld [vmem:[%s1 + $0x148] sm:$0xf]
      %v2378 = vld [vmem:[%s1 + $0x14c] sm:$0xf]
      %v2379 = vld [vmem:[%s1 + $0x150] sm:$0xf]
      %v2380 = vld [vmem:[%s1 + $0x154] sm:$0xf]
      %v2381 = vld [vmem:[%s1 + $0x158] sm:$0xf]
      %v2382 = vld [vmem:[%s1 + $0x15c] sm:$0xf]
      %v2383 = vld [vmem:[%s1 + $0x160] sm:$0xf]
      %v2384 = vld [vmem:[%s1 + $0x164] sm:$0xf]
      %v2385 = vld [vmem:[%s1 + $0x168] sm:$0xf]
      %v2386 = vld [vmem:[%s1 + $0x16c] sm:$0xf]
      %v2387 = vld [vmem:[%s1 + $0x170] sm:$0xf]
      %v2388 = vld [vmem:[%s1 + $0x174] sm:$0xf]
      %v2389 = vld [vmem:[%s1 + $0x178] sm:$0xf]
      %v2390 = vld [vmem:[%s1 + $0x17c] sm:$0xf]
      %v2391 = vld [vmem:[%s1 + $0x180] sm:$0xf]
      %v2392 = vld [vmem:[%s1 + $0x184] sm:$0xf]
      %v2393 = vld [vmem:[%s1 + $0x188] sm:$0xf]
      %v2394 = vld [vmem:[%s1 + $0x18c] sm:$0xf]
      %v2395 = vld [vmem:[%s1 + $0x190] sm:$0xf]
      %v2396 = vld [vmem:[%s1 + $0x194] sm:$0xf]
      %v2397 = vld [vmem:[%s1 + $0x198] sm:$0xf]
      %v2398 = vld [vmem:[%s1 + $0x19c] sm:$0xf]
      %v2399 = vld [vmem:[%s1 + $0x1a0] sm:$0xf]
      %v2400 = vld [vmem:[%s1 + $0x1a4] sm:$0xf]
      %v2401 = vld [vmem:[%s1 + $0x1a8] sm:$0xf]
      %v2402 = vld [vmem:[%s1 + $0x1ac] sm:$0xf]
      %v2403 = vld [vmem:[%s1 + $0x1b0] sm:$0xf]
      %v2404 = vld [vmem:[%s1 + $0x1b4] sm:$0xf]
      %v2405 = vld [vmem:[%s1 + $0x1b8] sm:$0xf]
      %v2406 = vld [vmem:[%s1 + $0x1bc] sm:$0xf]
      %v2407 = vld [vmem:[%s1 + $0x1c0] sm:$0xf]
      %v2408 = vld [vmem:[%s1 + $0x1c4] sm:$0xf]
      %v2409 = vld [vmem:[%s1 + $0x1c8] sm:$0xf]
      %v2410 = vld [vmem:[%s1 + $0x1cc] sm:$0xf]
      %v2411 = vld [vmem:[%s1 + $0x1d0] sm:$0xf]
      %v2412 = vld [vmem:[%s1 + $0x1d4] sm:$0xf]
      %v2413 = vld [vmem:[%s1 + $0x1d8] sm:$0xf]
      %v2414 = vld [vmem:[%s1 + $0x1dc] sm:$0xf]
      %v2415 = vld [vmem:[%s1 + $0x1e0] sm:$0xf]
      %v2416 = vld [vmem:[%s1 + $0x1e4] sm:$0xf]
      %v2417 = vld [vmem:[%s1 + $0x1e8] sm:$0xf]
      %v2418 = vld [vmem:[%s1 + $0x1ec] sm:$0xf]
      %v2419 = vld [vmem:[%s1 + $0x1f0] sm:$0xf]
      %v2420 = vld [vmem:[%s1 + $0x1f4] sm:$0xf]
      %v2421 = vld [vmem:[%s1 + $0x1f8] sm:$0xf]
      %v2422 = vld [vmem:[%s1 + $0x1fc] sm:$0xf]
      %v2423 = vld [vmem:[%s1 + $0x200] sm:$0xf]
      %v2424 = vld [vmem:[%s1 + $0x204] sm:$0xf]
      %v2425 = vld [vmem:[%s1 + $0x208] sm:$0xf]
      %v2426 = vld [vmem:[%s1 + $0x20c] sm:$0xf]
      %v2427 = vld [vmem:[%s1 + $0x210] sm:$0xf]
      %v2428 = vld [vmem:[%s1 + $0x214] sm:$0xf]
      %v2429 = vld [vmem:[%s1 + $0x218] sm:$0xf]
      %v2430 = vld [vmem:[%s1 + $0x21c] sm:$0xf]
      %v2431 = vld [vmem:[%s1 + $0x220] sm:$0xf]
      %v2432 = vld [vmem:[%s1 + $0x224] sm:$0xf]
      %v2433 = vld [vmem:[%s1 + $0x228] sm:$0xf]
      %v2434 = vld [vmem:[%s1 + $0x22c] sm:$0xf]
      %v2435 = vld [vmem:[%s1 + $0x230] sm:$0xf]
      %v2436 = vld [vmem:[%s1 + $0x234] sm:$0xf]
      %v2437 = vld [vmem:[%s1 + $0x238] sm:$0xf]
      %v2438 = vld [vmem:[%s1 + $0x23c] sm:$0xf]
      %v2439 = vld [vmem:[%s1 + $0x240] sm:$0xf]
      %v2440 = vld [vmem:[%s1 + $0x244] sm:$0xf]
      %v2441 = vld [vmem:[%s1 + $0x248] sm:$0xf]
      %v2442 = vld [vmem:[%s1 + $0x24c] sm:$0xf]
      %v2443 = vld [vmem:[%s1 + $0x250] sm:$0xf]
      %v2444 = vld [vmem:[%s1 + $0x254] sm:$0xf]
      %v2445 = vld [vmem:[%s1 + $0x258] sm:$0xf]
      %v2446 = vld [vmem:[%s1 + $0x25c] sm:$0xf]
      %v2447 = vld [vmem:[%s1 + $0x260] sm:$0xf]
      %v2448 = vld [vmem:[%s1 + $0x264] sm:$0xf]
      %v2449 = vld [vmem:[%s1 + $0x268] sm:$0xf]
      %v2450 = vld [vmem:[%s1 + $0x26c] sm:$0xf]
      %v2451 = vld [vmem:[%s1 + $0x270] sm:$0xf]
      %v2452 = vld [vmem:[%s1 + $0x274] sm:$0xf]
      %v2453 = vld [vmem:[%s1 + $0x278] sm:$0xf]
      %v2454 = vld [vmem:[%s1 + $0x27c] sm:$0xf]
      %v2455 = vld [vmem:[%s1 + $0x280] sm:$0xf]
      %v2456 = vld [vmem:[%s1 + $0x284] sm:$0xf]
      %v2457 = vld [vmem:[%s1 + $0x288] sm:$0xf]
      %v2458 = vld [vmem:[%s1 + $0x28c] sm:$0xf]
      %v2459 = vld [vmem:[%s1 + $0x290] sm:$0xf]
      %v2460 = vld [vmem:[%s1 + $0x294] sm:$0xf]
      %v2461 = vld [vmem:[%s1 + $0x298] sm:$0xf]
      %v2462 = vld [vmem:[%s1 + $0x29c] sm:$0xf]
      %v2463 = vld [vmem:[%s1 + $0x2a0] sm:$0xf]
      %v2464 = vld [vmem:[%s1 + $0x2a4] sm:$0xf]
      %v2465 = vld [vmem:[%s1 + $0x2a8] sm:$0xf]
      %v2466 = vld [vmem:[%s1 + $0x2ac] sm:$0xf]
      %v2467 = vld [vmem:[%s1 + $0x2b0] sm:$0xf]
      %v2468 = vld [vmem:[%s1 + $0x2b4] sm:$0xf]
      %v2469 = vld [vmem:[%s1 + $0x2b8] sm:$0xf]
      %v2470 = vld [vmem:[%s1 + $0x2bc] sm:$0xf]
      %v2471 = vld [vmem:[%s1 + $0x2c0] sm:$0xf]
      %v2472 = vld [vmem:[%s1 + $0x2c4] sm:$0xf]
      %v2473 = vld [vmem:[%s1 + $0x2c8] sm:$0xf]
      %v2474 = vld [vmem:[%s1 + $0x2cc] sm:$0xf]
      %v2475 = vld [vmem:[%s1 + $0x2d0] sm:$0xf]
      %v2476 = vld [vmem:[%s1 + $0x2d4] sm:$0xf]
      %v2477 = vld [vmem:[%s1 + $0x2d8] sm:$0xf]
      %v2478 = vld [vmem:[%s1 + $0x2dc] sm:$0xf]
      %v2479 = vld [vmem:[%s1 + $0x2e0] sm:$0xf]
      %v2480 = vld [vmem:[%s1 + $0x2e4] sm:$0xf]
      %v2481 = vld [vmem:[%s1 + $0x2e8] sm:$0xf]
      %v2482 = vld [vmem:[%s1 + $0x2ec] sm:$0xf]
      %v2483 = vld [vmem:[%s1 + $0x2f0] sm:$0xf]
      %v2484 = vld [vmem:[%s1 + $0x2f4] sm:$0xf]
      %v2485 = vld [vmem:[%s1 + $0x2f8] sm:$0xf]
      %v2486 = vld [vmem:[%s1 + $0x2fc] sm:$0xf]
      %v2487 = vld [vmem:[%s1 + $0x300] sm:$0xf]
      %v2488 = vld [vmem:[%s1 + $0x304] sm:$0xf]
      %v2489 = vld [vmem:[%s1 + $0x308] sm:$0xf]
      %v2490 = vld [vmem:[%s1 + $0x30c] sm:$0xf]
      %v2491 = vld [vmem:[%s1 + $0x310] sm:$0xf]
      %v2492 = vld [vmem:[%s1 + $0x314] sm:$0xf]
      %v2493 = vld [vmem:[%s1 + $0x318] sm:$0xf]
      %v2494 = vld [vmem:[%s1 + $0x31c] sm:$0xf]
      %v2495 = vld [vmem:[%s1 + $0x320] sm:$0xf]
      %v2496 = vld [vmem:[%s1 + $0x324] sm:$0xf]
      %v2497 = vld [vmem:[%s1 + $0x328] sm:$0xf]
      %v2498 = vld [vmem:[%s1 + $0x32c] sm:$0xf]
      %v2499 = vld [vmem:[%s1 + $0x330] sm:$0xf]
      %v2500 = vld [vmem:[%s1 + $0x334] sm:$0xf]
      %v2501 = vld [vmem:[%s1 + $0x338] sm:$0xf]
      %v2502 = vld [vmem:[%s1 + $0x33c] sm:$0xf]
      %v2503 = vld [vmem:[%s1 + $0x340] sm:$0xf]
      %v2504 = vld [vmem:[%s1 + $0x344] sm:$0xf]
      %v2505 = vld [vmem:[%s1 + $0x348] sm:$0xf]
      %v2506 = vld [vmem:[%s1 + $0x34c] sm:$0xf]
      %v2507 = vld [vmem:[%s1 + $0x350] sm:$0xf]
      %v2508 = vld [vmem:[%s1 + $0x354] sm:$0xf]
      %v2509 = vld [vmem:[%s1 + $0x358] sm:$0xf]
      %v2510 = vld [vmem:[%s1 + $0x35c] sm:$0xf]
      %v2511 = vld [vmem:[%s1 + $0x360] sm:$0xf]
      %v2512 = vld [vmem:[%s1 + $0x364] sm:$0xf]
      %v2513 = vld [vmem:[%s1 + $0x368] sm:$0xf]
      %v2514 = vld [vmem:[%s1 + $0x36c] sm:$0xf]
      %v2515 = vld [vmem:[%s1 + $0x370] sm:$0xf]
      %v2516 = vld [vmem:[%s1 + $0x374] sm:$0xf]
      %v2517 = vld [vmem:[%s1 + $0x378] sm:$0xf]
      %v2518 = vld [vmem:[%s1 + $0x37c] sm:$0xf]
      %v2519 = vld [vmem:[%s1 + $0x380] sm:$0xf]
      %v2520 = vld [vmem:[%s1 + $0x384] sm:$0xf]
      %v2521 = vld [vmem:[%s1 + $0x388] sm:$0xf]
      %v2522 = vld [vmem:[%s1 + $0x38c] sm:$0xf]
      %v2523 = vld [vmem:[%s1 + $0x390] sm:$0xf]
      %v2524 = vld [vmem:[%s1 + $0x394] sm:$0xf]
      %v2525 = vld [vmem:[%s1 + $0x398] sm:$0xf]
      %v2526 = vld [vmem:[%s1 + $0x39c] sm:$0xf]
      %v2527 = vld [vmem:[%s1 + $0x3a0] sm:$0xf]
      %v2528 = vld [vmem:[%s1 + $0x3a4] sm:$0xf]
      %v2529 = vld [vmem:[%s1 + $0x3a8] sm:$0xf]
      %v2530 = vld [vmem:[%s1 + $0x3ac] sm:$0xf]
      %v2531 = vld [vmem:[%s1 + $0x3b0] sm:$0xf]
      %v2532 = vld [vmem:[%s1 + $0x3b4] sm:$0xf]
      %v2533 = vld [vmem:[%s1 + $0x3b8] sm:$0xf]
      %v2534 = vld [vmem:[%s1 + $0x3bc] sm:$0xf]
      %v2535 = vld [vmem:[%s1 + $0x3c0] sm:$0xf]
      %v2536 = vld [vmem:[%s1 + $0x3c4] sm:$0xf]
      %v2537 = vld [vmem:[%s1 + $0x3c8] sm:$0xf]
      %v2538 = vld [vmem:[%s1 + $0x3cc] sm:$0xf]
      %v2539 = vld [vmem:[%s1 + $0x3d0] sm:$0xf]
      %v2540 = vld [vmem:[%s1 + $0x3d4] sm:$0xf]
      %v2541 = vld [vmem:[%s1 + $0x3d8] sm:$0xf]
      %v2542 = vld [vmem:[%s1 + $0x3dc] sm:$0xf]
      %v2543 = vld [vmem:[%s1 + $0x3e0] sm:$0xf]
      %v2544 = vld [vmem:[%s1 + $0x3e4] sm:$0xf]
      %v2545 = vld [vmem:[%s1 + $0x3e8] sm:$0xf]
      %v2546 = vld [vmem:[%s1 + $0x3ec] sm:$0xf]
      %v2547 = vld [vmem:[%s1 + $0x3f0] sm:$0xf]
      %v2548 = vld [vmem:[%s1 + $0x3f4] sm:$0xf]
      %v2549 = vld [vmem:[%s1 + $0x3f8] sm:$0xf]
      %v2550 = vld [vmem:[%s1 + $0x3fc] sm:$0xf]
      %v2551 = vld [vmem:[%s1 + $0x400] sm:$0xf]
      %v2552 = vld [vmem:[%s1 + $0x404] sm:$0xf]
      %v2553 = vld [vmem:[%s1 + $0x408] sm:$0xf]
      %v2554 = vld [vmem:[%s1 + $0x40c] sm:$0xf]
      %v2555 = vld [vmem:[%s1 + $0x410] sm:$0xf]
      %v2556 = vld [vmem:[%s1 + $0x414] sm:$0xf]
      %v2557 = vld [vmem:[%s1 + $0x418] sm:$0xf]
      %v2558 = vld [vmem:[%s1 + $0x41c] sm:$0xf]
      %v2559 = vld [vmem:[%s1 + $0x420] sm:$0xf]
      %v2560 = vld [vmem:[%s1 + $0x424] sm:$0xf]
      %v2561 = vld [vmem:[%s1 + $0x428] sm:$0xf]
      %v2562 = vld [vmem:[%s1 + $0x42c] sm:$0xf]
      %v2563 = vld [vmem:[%s1 + $0x430] sm:$0xf]
      %v2564 = vld [vmem:[%s1 + $0x434] sm:$0xf]
      %v2565 = vld [vmem:[%s1 + $0x438] sm:$0xf]
      %v2566 = vld [vmem:[%s1 + $0x43c] sm:$0xf]
      %v2567 = vld [vmem:[%s1 + $0x440] sm:$0xf]
      %v2568 = vld [vmem:[%s1 + $0x444] sm:$0xf]
      %v2569 = vld [vmem:[%s1 + $0x448] sm:$0xf]
      %v2570 = vld [vmem:[%s1 + $0x44c] sm:$0xf]
      %v2571 = vld [vmem:[%s1 + $0x450] sm:$0xf]
      %v2572 = vld [vmem:[%s1 + $0x454] sm:$0xf]
      %v2573 = vld [vmem:[%s1 + $0x458] sm:$0xf]
      %v2574 = vld [vmem:[%s1 + $0x45c] sm:$0xf]
      %v2575 = vld [vmem:[%s1 + $0x460] sm:$0xf]
      %v2576 = vld [vmem:[%s1 + $0x464] sm:$0xf]
      %v2577 = vld [vmem:[%s1 + $0x468] sm:$0xf]
      %v2578 = vld [vmem:[%s1 + $0x46c] sm:$0xf]
      %v2579 = vld [vmem:[%s1 + $0x470] sm:$0xf]
      %v2580 = vld [vmem:[%s1 + $0x474] sm:$0xf]
      %v2581 = vld [vmem:[%s1 + $0x478] sm:$0xf]
      %v2582 = vld [vmem:[%s1 + $0x47c] sm:$0xf]
      %v2583 = vld [vmem:[%s1 + $0x480] sm:$0xf]
      %v2584 = vld [vmem:[%s1 + $0x484] sm:$0xf]
      %v2585 = vld [vmem:[%s1 + $0x488] sm:$0xf]
      %v2586 = vld [vmem:[%s1 + $0x48c] sm:$0xf]
      %v2587 = vld [vmem:[%s1 + $0x490] sm:$0xf]
      %v2588 = vld [vmem:[%s1 + $0x494] sm:$0xf]
      %v2589 = vld [vmem:[%s1 + $0x498] sm:$0xf]
      %v2590 = vld [vmem:[%s1 + $0x49c] sm:$0xf]
      %v2591 = vld [vmem:[%s1 + $0x4a0] sm:$0xf]
      %v2592 = vld [vmem:[%s1 + $0x4a4] sm:$0xf]
      %v2593 = vld [vmem:[%s1 + $0x4a8] sm:$0xf]
      %v2594 = vld [vmem:[%s1 + $0x4ac] sm:$0xf]
      %v2595 = vld [vmem:[%s1 + $0x4b0] sm:$0xf]
      %v2596 = vld [vmem:[%s1 + $0x4b4] sm:$0xf]
      %v2597 = vld [vmem:[%s1 + $0x4b8] sm:$0xf]
      %v2598 = vld [vmem:[%s1 + $0x4bc] sm:$0xf]
      %v2599 = vld [vmem:[%s1 + $0x4c0] sm:$0xf]
      %v2600 = vld [vmem:[%s1 + $0x4c4] sm:$0xf]
      %v2601 = vld [vmem:[%s1 + $0x4c8] sm:$0xf]
      %v2602 = vld [vmem:[%s1 + $0x4cc] sm:$0xf]
      %v2603 = vld [vmem:[%s1 + $0x4d0] sm:$0xf]
      %v2604 = vld [vmem:[%s1 + $0x4d4] sm:$0xf]
      %v2605 = vld [vmem:[%s1 + $0x4d8] sm:$0xf]
      %v2606 = vld [vmem:[%s1 + $0x4dc] sm:$0xf]
      %v2607 = vld [vmem:[%s1 + $0x4e0] sm:$0xf]
      %v2608 = vld [vmem:[%s1 + $0x4e4] sm:$0xf]
      %v2609 = vld [vmem:[%s1 + $0x4e8] sm:$0xf]
      %v2610 = vld [vmem:[%s1 + $0x4ec] sm:$0xf]
      %v2611 = vld [vmem:[%s1 + $0x4f0] sm:$0xf]
      %v2612 = vld [vmem:[%s1 + $0x4f4] sm:$0xf]
      %v2613 = vld [vmem:[%s1 + $0x4f8] sm:$0xf]
      %v2614 = vld [vmem:[%s1 + $0x4fc] sm:$0xf]
      %v2615 = vld [vmem:[%s1 + $0x500] sm:$0xf]
      %v2616 = vld [vmem:[%s1 + $0x504] sm:$0xf]
      %v2617 = vld [vmem:[%s1 + $0x508] sm:$0xf]
      %v2618 = vld [vmem:[%s1 + $0x50c] sm:$0xf]
      %v2619 = vld [vmem:[%s1 + $0x510] sm:$0xf]
      %v2620 = vld [vmem:[%s1 + $0x514] sm:$0xf]
      %v2621 = vld [vmem:[%s1 + $0x518] sm:$0xf]
      %v2622 = vld [vmem:[%s1 + $0x51c] sm:$0xf]
      %v2623 = vld [vmem:[%s1 + $0x520] sm:$0xf]
      %v2624 = vld [vmem:[%s1 + $0x524] sm:$0xf]
      %v2625 = vld [vmem:[%s1 + $0x528] sm:$0xf]
      %v2626 = vld [vmem:[%s1 + $0x52c] sm:$0xf]
      %v2627 = vld [vmem:[%s1 + $0x530] sm:$0xf]
      %v2628 = vld [vmem:[%s1 + $0x534] sm:$0xf]
      %v2629 = vld [vmem:[%s1 + $0x538] sm:$0xf]
      %v2630 = vld [vmem:[%s1 + $0x53c] sm:$0xf]
      %v2631 = vld [vmem:[%s1 + $0x540] sm:$0xf]
      %v2632 = vld [vmem:[%s1 + $0x544] sm:$0xf]
      %v2633 = vld [vmem:[%s1 + $0x548] sm:$0xf]
      %v2634 = vld [vmem:[%s1 + $0x54c] sm:$0xf]
      %v2635 = vld [vmem:[%s1 + $0x550] sm:$0xf]
      %v2636 = vld [vmem:[%s1 + $0x554] sm:$0xf]
      %v2637 = vld [vmem:[%s1 + $0x558] sm:$0xf]
      %v2638 = vld [vmem:[%s1 + $0x55c] sm:$0xf]
      %v2639 = vld [vmem:[%s1 + $0x560] sm:$0xf]
      %v2640 = vld [vmem:[%s1 + $0x564] sm:$0xf]
      %v2641 = vld [vmem:[%s1 + $0x568] sm:$0xf]
      %v2642 = vld [vmem:[%s1 + $0x56c] sm:$0xf]
      %v2643 = vld [vmem:[%s1 + $0x570] sm:$0xf]
      %v2644 = vld [vmem:[%s1 + $0x574] sm:$0xf]
      %v2645 = vld [vmem:[%s1 + $0x578] sm:$0xf]
      %v2646 = vld [vmem:[%s1 + $0x57c] sm:$0xf]
      %v2647 = vld [vmem:[%s1 + $0x580] sm:$0xf]
      %v2648 = vld [vmem:[%s1 + $0x584] sm:$0xf]
      %v2649 = vld [vmem:[%s1 + $0x588] sm:$0xf]
      %v2650 = vld [vmem:[%s1 + $0x58c] sm:$0xf]
      %v2651 = vld [vmem:[%s1 + $0x590] sm:$0xf]
      %v2652 = vld [vmem:[%s1 + $0x594] sm:$0xf]
      %v2653 = vld [vmem:[%s1 + $0x598] sm:$0xf]
      %v2654 = vld [vmem:[%s1 + $0x59c] sm:$0xf]
      %v2655 = vld [vmem:[%s1 + $0x5a0] sm:$0xf]
      %v2656 = vld [vmem:[%s1 + $0x5a4] sm:$0xf]
      %v2657 = vld [vmem:[%s1 + $0x5a8] sm:$0xf]
      %v2658 = vld [vmem:[%s1 + $0x5ac] sm:$0xf]
      %v2659 = vld [vmem:[%s1 + $0x5b0] sm:$0xf]
      %v2660 = vld [vmem:[%s1 + $0x5b4] sm:$0xf]
      %v2661 = vld [vmem:[%s1 + $0x5b8] sm:$0xf]
      %v2662 = vld [vmem:[%s1 + $0x5bc] sm:$0xf]
      %v2663 = vld [vmem:[%s1 + $0x5c0] sm:$0xf]
      %v2664 = vld [vmem:[%s1 + $0x5c4] sm:$0xf]
      %v2665 = vld [vmem:[%s1 + $0x5c8] sm:$0xf]
      %v2666 = vld [vmem:[%s1 + $0x5cc] sm:$0xf]
      %v2667 = vld [vmem:[%s1 + $0x5d0] sm:$0xf]
      %v2668 = vld [vmem:[%s1 + $0x5d4] sm:$0xf]
      %v2669 = vld [vmem:[%s1 + $0x5d8] sm:$0xf]
      %v2670 = vld [vmem:[%s1 + $0x5dc] sm:$0xf]
      %v2671 = vld [vmem:[%s1 + $0x5e0] sm:$0xf]
      %v2672 = vld [vmem:[%s1 + $0x5e4] sm:$0xf]
      %v2673 = vld [vmem:[%s1 + $0x5e8] sm:$0xf]
      %v2674 = vld [vmem:[%s1 + $0x5ec] sm:$0xf]
      %v2675 = vld [vmem:[%s1 + $0x5f0] sm:$0xf]
      %v2676 = vld [vmem:[%s1 + $0x5f4] sm:$0xf]
      %v2677 = vld [vmem:[%s1 + $0x5f8] sm:$0xf]
      %v2678 = vld [vmem:[%s1 + $0x5fc] sm:$0xf]
      %v2679 = vld [vmem:[%s1 + $0x600] sm:$0xf]
      %v2680 = vld [vmem:[%s1 + $0x604] sm:$0xf]
      %v2681 = vld [vmem:[%s1 + $0x608] sm:$0xf]
      %v2682 = vld [vmem:[%s1 + $0x60c] sm:$0xf]
      %v2683 = vld [vmem:[%s1 + $0x610] sm:$0xf]
      %v2684 = vld [vmem:[%s1 + $0x614] sm:$0xf]
      %v2685 = vld [vmem:[%s1 + $0x618] sm:$0xf]
      %v2686 = vld [vmem:[%s1 + $0x61c] sm:$0xf]
      %v2687 = vld [vmem:[%s1 + $0x620] sm:$0xf]
      %v2688 = vld [vmem:[%s1 + $0x624] sm:$0xf]
      %v2689 = vld [vmem:[%s1 + $0x628] sm:$0xf]
      %v2690 = vld [vmem:[%s1 + $0x62c] sm:$0xf]
      %v2691 = vld [vmem:[%s1 + $0x630] sm:$0xf]
      %v2692 = vld [vmem:[%s1 + $0x634] sm:$0xf]
      %v2693 = vld [vmem:[%s1 + $0x638] sm:$0xf]
      %v2694 = vld [vmem:[%s1 + $0x63c] sm:$0xf]
      %v2695 = vld [vmem:[%s1 + $0x640] sm:$0xf]
      %v2696 = vld [vmem:[%s1 + $0x644] sm:$0xf]
      %v2697 = vld [vmem:[%s1 + $0x648] sm:$0xf]
      %v2698 = vld [vmem:[%s1 + $0x64c] sm:$0xf]
      %v2699 = vld [vmem:[%s1 + $0x650] sm:$0xf]
      %v2700 = vld [vmem:[%s1 + $0x654] sm:$0xf]
      %v2701 = vld [vmem:[%s1 + $0x658] sm:$0xf]
      %v2702 = vld [vmem:[%s1 + $0x65c] sm:$0xf]
      %v2703 = vld [vmem:[%s1 + $0x660] sm:$0xf]
      %v2704 = vld [vmem:[%s1 + $0x664] sm:$0xf]
      %v2705 = vld [vmem:[%s1 + $0x668] sm:$0xf]
      %v2706 = vld [vmem:[%s1 + $0x66c] sm:$0xf]
      %v2707 = vld [vmem:[%s1 + $0x670] sm:$0xf]
      %v2708 = vld [vmem:[%s1 + $0x674] sm:$0xf]
      %v2709 = vld [vmem:[%s1 + $0x678] sm:$0xf]
      %v2710 = vld [vmem:[%s1 + $0x67c] sm:$0xf]
      %v2711 = vld [vmem:[%s1 + $0x680] sm:$0xf]
      %v2712 = vld [vmem:[%s1 + $0x684] sm:$0xf]
      %v2713 = vld [vmem:[%s1 + $0x688] sm:$0xf]
      %v2714 = vld [vmem:[%s1 + $0x68c] sm:$0xf]
      %v2715 = vld [vmem:[%s1 + $0x690] sm:$0xf]
      %v2716 = vld [vmem:[%s1 + $0x694] sm:$0xf]
      %v2717 = vld [vmem:[%s1 + $0x698] sm:$0xf]
      %v2718 = vld [vmem:[%s1 + $0x69c] sm:$0xf]
      %v2719 = vld [vmem:[%s1 + $0x6a0] sm:$0xf]
      %v2720 = vld [vmem:[%s1 + $0x6a4] sm:$0xf]
      %v2721 = vld [vmem:[%s1 + $0x6a8] sm:$0xf]
      %v2722 = vld [vmem:[%s1 + $0x6ac] sm:$0xf]
      %v2723 = vld [vmem:[%s1 + $0x6b0] sm:$0xf]
      %v2724 = vld [vmem:[%s1 + $0x6b4] sm:$0xf]
      %v2725 = vld [vmem:[%s1 + $0x6b8] sm:$0xf]
      %v2726 = vld [vmem:[%s1 + $0x6bc] sm:$0xf]
      %v2727 = vld [vmem:[%s1 + $0x6c0] sm:$0xf]
      %v2728 = vld [vmem:[%s1 + $0x6c4] sm:$0xf]
      %v2729 = vld [vmem:[%s1 + $0x6c8] sm:$0xf]
      %v2730 = vld [vmem:[%s1 + $0x6cc] sm:$0xf]
      %v2731 = vld [vmem:[%s1 + $0x6d0] sm:$0xf]
      %v2732 = vld [vmem:[%s1 + $0x6d4] sm:$0xf]
      %v2733 = vld [vmem:[%s1 + $0x6d8] sm:$0xf]
      %v2734 = vld [vmem:[%s1 + $0x6dc] sm:$0xf]
      %v2735 = vld [vmem:[%s1 + $0x6e0] sm:$0xf]
      %v2736 = vld [vmem:[%s1 + $0x6e4] sm:$0xf]
      %v2737 = vld [vmem:[%s1 + $0x6e8] sm:$0xf]
      %v2738 = vld [vmem:[%s1 + $0x6ec] sm:$0xf]
      %v2739 = vld [vmem:[%s1 + $0x6f0] sm:$0xf]
      %v2740 = vld [vmem:[%s1 + $0x6f4] sm:$0xf]
      %v2741 = vld [vmem:[%s1 + $0x6f8] sm:$0xf]
      %v2742 = vld [vmem:[%s1 + $0x6fc] sm:$0xf]
      %v2743 = vld [vmem:[%s1 + $0x700] sm:$0xf]
      %v2744 = vld [vmem:[%s1 + $0x704] sm:$0xf]
      %v2745 = vld [vmem:[%s1 + $0x708] sm:$0xf]
      %v2746 = vld [vmem:[%s1 + $0x70c] sm:$0xf]
      %v2747 = vld [vmem:[%s1 + $0x710] sm:$0xf]
      %v2748 = vld [vmem:[%s1 + $0x714] sm:$0xf]
      %v2749 = vld [vmem:[%s1 + $0x718] sm:$0xf]
      %v2750 = vld [vmem:[%s1 + $0x71c] sm:$0xf]
      %v2751 = vld [vmem:[%s1 + $0x720] sm:$0xf]
      %v2752 = vld [vmem:[%s1 + $0x724] sm:$0xf]
      %v2753 = vld [vmem:[%s1 + $0x728] sm:$0xf]
      %v2754 = vld [vmem:[%s1 + $0x72c] sm:$0xf]
      %v2755 = vld [vmem:[%s1 + $0x730] sm:$0xf]
      %v2756 = vld [vmem:[%s1 + $0x734] sm:$0xf]
      %v2757 = vld [vmem:[%s1 + $0x738] sm:$0xf]
      %v2758 = vld [vmem:[%s1 + $0x73c] sm:$0xf]
      %v2759 = vld [vmem:[%s1 + $0x740] sm:$0xf]
      %v2760 = vld [vmem:[%s1 + $0x744] sm:$0xf]
      %v2761 = vld [vmem:[%s1 + $0x748] sm:$0xf]
      %v2762 = vld [vmem:[%s1 + $0x74c] sm:$0xf]
      %v2763 = vld [vmem:[%s1 + $0x750] sm:$0xf]
      %v2764 = vld [vmem:[%s1 + $0x754] sm:$0xf]
      %v2765 = vld [vmem:[%s1 + $0x758] sm:$0xf]
      %v2766 = vld [vmem:[%s1 + $0x75c] sm:$0xf]
      %v2767 = vld [vmem:[%s1 + $0x760] sm:$0xf]
      %v2768 = vld [vmem:[%s1 + $0x764] sm:$0xf]
      %v2769 = vld [vmem:[%s1 + $0x768] sm:$0xf]
      %v2770 = vld [vmem:[%s1 + $0x76c] sm:$0xf]
      %v2771 = vld [vmem:[%s1 + $0x770] sm:$0xf]
      %v2772 = vld [vmem:[%s1 + $0x774] sm:$0xf]
      %v2773 = vld [vmem:[%s1 + $0x778] sm:$0xf]
      %v2774 = vld [vmem:[%s1 + $0x77c] sm:$0xf]
      %v2775 = vld [vmem:[%s1 + $0x780] sm:$0xf]
      %v2776 = vld [vmem:[%s1 + $0x784] sm:$0xf]
      %v2777 = vld [vmem:[%s1 + $0x788] sm:$0xf]
      %v2778 = vld [vmem:[%s1 + $0x78c] sm:$0xf]
      %v2779 = vld [vmem:[%s1 + $0x790] sm:$0xf]
      %v2780 = vld [vmem:[%s1 + $0x794] sm:$0xf]
      %v2781 = vld [vmem:[%s1 + $0x798] sm:$0xf]
      %v2782 = vld [vmem:[%s1 + $0x79c] sm:$0xf]
      %v2783 = vld [vmem:[%s1 + $0x7a0] sm:$0xf]
      %v2784 = vld [vmem:[%s1 + $0x7a4] sm:$0xf]
      %v2785 = vld [vmem:[%s1 + $0x7a8] sm:$0xf]
      %v2786 = vld [vmem:[%s1 + $0x7ac] sm:$0xf]
      %v2787 = vld [vmem:[%s1 + $0x7b0] sm:$0xf]
      %v2788 = vld [vmem:[%s1 + $0x7b4] sm:$0xf]
      %v2789 = vld [vmem:[%s1 + $0x7b8] sm:$0xf]
      %v2790 = vld [vmem:[%s1 + $0x7bc] sm:$0xf]
      %v2791 = vld [vmem:[%s1 + $0x7c0] sm:$0xf]
      %v2792 = vld [vmem:[%s1 + $0x7c4] sm:$0xf]
      %v2793 = vld [vmem:[%s1 + $0x7c8] sm:$0xf]
      %v2794 = vld [vmem:[%s1 + $0x7cc] sm:$0xf]
      %v2795 = vld [vmem:[%s1 + $0x7d0] sm:$0xf]
      %v2796 = vld [vmem:[%s1 + $0x7d4] sm:$0xf]
      %v2797 = vld [vmem:[%s1 + $0x7d8] sm:$0xf]
      %v2798 = vld [vmem:[%s1 + $0x7dc] sm:$0xf]
      %v2799 = vld [vmem:[%s1 + $0x7e0] sm:$0xf]
      %v2800 = vld [vmem:[%s1 + $0x7e4] sm:$0xf]
      %v2801 = vld [vmem:[%s1 + $0x7e8] sm:$0xf]
      %v2802 = vld [vmem:[%s1 + $0x7ec] sm:$0xf]
      %v2803 = vld [vmem:[%s1 + $0x7f0] sm:$0xf]
      %v2804 = vld [vmem:[%s1 + $0x7f4] sm:$0xf]
      %v2805 = vld [vmem:[%s1 + $0x7f8] sm:$0xf]
      %v2806 = vld [vmem:[%s1 + $0x7fc] sm:$0xf]
      %v2807 = vld [vmem:[%s1 + $0x800] sm:$0xf]
      %v2808 = vld [vmem:[%s1 + $0x804] sm:$0xf]
      %v2809 = vld [vmem:[%s1 + $0x808] sm:$0xf]
      %v2810 = vld [vmem:[%s1 + $0x80c] sm:$0xf]
      %v2811 = vld [vmem:[%s1 + $0x810] sm:$0xf]
      %v2812 = vld [vmem:[%s1 + $0x814] sm:$0xf]
      %v2813 = vld [vmem:[%s1 + $0x818] sm:$0xf]
      %v2814 = vld [vmem:[%s1 + $0x81c] sm:$0xf]
      %v2815 = vld [vmem:[%s1 + $0x820] sm:$0xf]
      %v2816 = vld [vmem:[%s1 + $0x824] sm:$0xf]
      %v2817 = vld [vmem:[%s1 + $0x828] sm:$0xf]
      %v2818 = vld [vmem:[%s1 + $0x82c] sm:$0xf]
      %v2819 = vld [vmem:[%s1 + $0x830] sm:$0xf]
      %v2820 = vld [vmem:[%s1 + $0x834] sm:$0xf]
      %v2821 = vld [vmem:[%s1 + $0x838] sm:$0xf]
      %v2822 = vld [vmem:[%s1 + $0x83c] sm:$0xf]
      %v2823 = vld [vmem:[%s1 + $0x840] sm:$0xf]
      %v2824 = vld [vmem:[%s1 + $0x844] sm:$0xf]
      %v2825 = vld [vmem:[%s1 + $0x848] sm:$0xf]
      %v2826 = vld [vmem:[%s1 + $0x84c] sm:$0xf]
      %v2827 = vld [vmem:[%s1 + $0x850] sm:$0xf]
      %v2828 = vld [vmem:[%s1 + $0x854] sm:$0xf]
      %v2829 = vld [vmem:[%s1 + $0x858] sm:$0xf]
      %v2830 = vld [vmem:[%s1 + $0x85c] sm:$0xf]
      %v2831 = vld [vmem:[%s1 + $0x860] sm:$0xf]
      %v2832 = vld [vmem:[%s1 + $0x864] sm:$0xf]
      %v2833 = vld [vmem:[%s1 + $0x868] sm:$0xf]
      %v2834 = vld [vmem:[%s1 + $0x86c] sm:$0xf]
      %v2835 = vld [vmem:[%s1 + $0x870] sm:$0xf]
      %v2836 = vld [vmem:[%s1 + $0x874] sm:$0xf]
      %v2837 = vld [vmem:[%s1 + $0x878] sm:$0xf]
      %v2838 = vld [vmem:[%s1 + $0x87c] sm:$0xf]
      %v2839 = vld [vmem:[%s1 + $0x880] sm:$0xf]
      %v2840 = vld [vmem:[%s1 + $0x884] sm:$0xf]
      %v2841 = vld [vmem:[%s1 + $0x888] sm:$0xf]
      %v2842 = vld [vmem:[%s1 + $0x88c] sm:$0xf]
      %v2843 = vld [vmem:[%s1 + $0x890] sm:$0xf]
      %v2844 = vld [vmem:[%s1 + $0x894] sm:$0xf]
      %v2845 = vld [vmem:[%s1 + $0x898] sm:$0xf]
      %v2846 = vld [vmem:[%s1 + $0x89c] sm:$0xf]
      %v2847 = vld [vmem:[%s1 + $0x8a0] sm:$0xf]
      %v2848 = vld [vmem:[%s1 + $0x8a4] sm:$0xf]
      %v2849 = vld [vmem:[%s1 + $0x8a8] sm:$0xf]
      %v2850 = vld [vmem:[%s1 + $0x8ac] sm:$0xf]
      %v2851 = vld [vmem:[%s1 + $0x8b0] sm:$0xf]
      %v2852 = vld [vmem:[%s1 + $0x8b4] sm:$0xf]
      %v2853 = vld [vmem:[%s1 + $0x8b8] sm:$0xf]
      %v2854 = vld [vmem:[%s1 + $0x8bc] sm:$0xf]
      %v2855 = vld [vmem:[%s1 + $0x8c0] sm:$0xf]
      %v2856 = vld [vmem:[%s1 + $0x8c4] sm:$0xf]
      %v2857 = vld [vmem:[%s1 + $0x8c8] sm:$0xf]
      %v2858 = vld [vmem:[%s1 + $0x8cc] sm:$0xf]
      %v2859 = vld [vmem:[%s1 + $0x8d0] sm:$0xf]
      %v2860 = vld [vmem:[%s1 + $0x8d4] sm:$0xf]
      %v2861 = vld [vmem:[%s1 + $0x8d8] sm:$0xf]
      %v2862 = vld [vmem:[%s1 + $0x8dc] sm:$0xf]
      %v2863 = vld [vmem:[%s1 + $0x8e0] sm:$0xf]
      %v2864 = vld [vmem:[%s1 + $0x8e4] sm:$0xf]
      %v2865 = vld [vmem:[%s1 + $0x8e8] sm:$0xf]
      %v2866 = vld [vmem:[%s1 + $0x8ec] sm:$0xf]
      %v2867 = vld [vmem:[%s1 + $0x8f0] sm:$0xf]
      %v2868 = vld [vmem:[%s1 + $0x8f4] sm:$0xf]
      %v2869 = vld [vmem:[%s1 + $0x8f8] sm:$0xf]
      %v2870 = vld [vmem:[%s1 + $0x8fc] sm:$0xf]
      %v2871 = vld [vmem:[%s1 + $0x900] sm:$0xf]
      %v2872 = vld [vmem:[%s1 + $0x904] sm:$0xf]
      %v2873 = vld [vmem:[%s1 + $0x908] sm:$0xf]
      %v2874 = vld [vmem:[%s1 + $0x90c] sm:$0xf]
      %v2875 = vld [vmem:[%s1 + $0x910] sm:$0xf]
      %v2876 = vld [vmem:[%s1 + $0x914] sm:$0xf]
      %v2877 = vld [vmem:[%s1 + $0x918] sm:$0xf]
      %v2878 = vld [vmem:[%s1 + $0x91c] sm:$0xf]
      %v2879 = vld [vmem:[%s1 + $0x920] sm:$0xf]
      %v2880 = vld [vmem:[%s1 + $0x924] sm:$0xf]
      %v2881 = vld [vmem:[%s1 + $0x928] sm:$0xf]
      %v2882 = vld [vmem:[%s1 + $0x92c] sm:$0xf]
      %v2883 = vld [vmem:[%s1 + $0x930] sm:$0xf]
      %v2884 = vld [vmem:[%s1 + $0x934] sm:$0xf]
      %v2885 = vld [vmem:[%s1 + $0x938] sm:$0xf]
      %v2886 = vld [vmem:[%s1 + $0x93c] sm:$0xf]
      %v2887 = vld [vmem:[%s1 + $0x940] sm:$0xf]
      %v2888 = vld [vmem:[%s1 + $0x944] sm:$0xf]
      %v2889 = vld [vmem:[%s1 + $0x948] sm:$0xf]
      %v2890 = vld [vmem:[%s1 + $0x94c] sm:$0xf]
      %v2891 = vld [vmem:[%s1 + $0x950] sm:$0xf]
      %v2892 = vld [vmem:[%s1 + $0x954] sm:$0xf]
      %v2893 = vld [vmem:[%s1 + $0x958] sm:$0xf]
      %v2894 = vld [vmem:[%s1 + $0x95c] sm:$0xf]
      %v2895 = vld [vmem:[%s1 + $0x960] sm:$0xf]
      %v2896 = vld [vmem:[%s1 + $0x964] sm:$0xf]
      %v2897 = vld [vmem:[%s1 + $0x968] sm:$0xf]
      %v2898 = vld [vmem:[%s1 + $0x96c] sm:$0xf]
      %v2899 = vld [vmem:[%s1 + $0x970] sm:$0xf]
      %v2900 = vld [vmem:[%s1 + $0x974] sm:$0xf]
      %v2901 = vld [vmem:[%s1 + $0x978] sm:$0xf]
      %v2902 = vld [vmem:[%s1 + $0x97c] sm:$0xf]
      %v2903 = vld [vmem:[%s1 + $0x980] sm:$0xf]
      %v2904 = vld [vmem:[%s1 + $0x984] sm:$0xf]
      %v2905 = vld [vmem:[%s1 + $0x988] sm:$0xf]
      %v2906 = vld [vmem:[%s1 + $0x98c] sm:$0xf]
      %v2907 = vld [vmem:[%s1 + $0x990] sm:$0xf]
      %v2908 = vld [vmem:[%s1 + $0x994] sm:$0xf]
      %v2909 = vld [vmem:[%s1 + $0x998] sm:$0xf]
      %v2910 = vld [vmem:[%s1 + $0x99c] sm:$0xf]
      %v2911 = vld [vmem:[%s1 + $0x9a0] sm:$0xf]
      %v2912 = vld [vmem:[%s1 + $0x9a4] sm:$0xf]
      %v2913 = vld [vmem:[%s1 + $0x9a8] sm:$0xf]
      %v2914 = vld [vmem:[%s1 + $0x9ac] sm:$0xf]
      %v2915 = vld [vmem:[%s1 + $0x9b0] sm:$0xf]
      %v2916 = vld [vmem:[%s1 + $0x9b4] sm:$0xf]
      %v2917 = vld [vmem:[%s1 + $0x9b8] sm:$0xf]
      %v2918 = vld [vmem:[%s1 + $0x9bc] sm:$0xf]
      %v2919 = vld [vmem:[%s1 + $0x9c0] sm:$0xf]
      %v2920 = vld [vmem:[%s1 + $0x9c4] sm:$0xf]
      %v2921 = vld [vmem:[%s1 + $0x9c8] sm:$0xf]
      %v2922 = vld [vmem:[%s1 + $0x9cc] sm:$0xf]
      %v2923 = vld [vmem:[%s1 + $0x9d0] sm:$0xf]
      %v2924 = vld [vmem:[%s1 + $0x9d4] sm:$0xf]
      %v2925 = vld [vmem:[%s1 + $0x9d8] sm:$0xf]
      %v2926 = vld [vmem:[%s1 + $0x9dc] sm:$0xf]
      %v2927 = vld [vmem:[%s1 + $0x9e0] sm:$0xf]
      %v2928 = vld [vmem:[%s1 + $0x9e4] sm:$0xf]
      %v2929 = vld [vmem:[%s1 + $0x9e8] sm:$0xf]
      %v2930 = vld [vmem:[%s1 + $0x9ec] sm:$0xf]
      %v2931 = vld [vmem:[%s1 + $0x9f0] sm:$0xf]
      %v2932 = vld [vmem:[%s1 + $0x9f4] sm:$0xf]
      %v2933 = vld [vmem:[%s1 + $0x9f8] sm:$0xf]
      %v2934 = vld [vmem:[%s1 + $0x9fc] sm:$0xf]
      %v2935 = vld [vmem:[%s1 + $0xa00] sm:$0xf]
      %v2936 = vld [vmem:[%s1 + $0xa04] sm:$0xf]
      %v2937 = vld [vmem:[%s1 + $0xa08] sm:$0xf]
      %v2938 = vld [vmem:[%s1 + $0xa0c] sm:$0xf]
      %v2939 = vld [vmem:[%s1 + $0xa10] sm:$0xf]
      %v2940 = vld [vmem:[%s1 + $0xa14] sm:$0xf]
      %v2941 = vld [vmem:[%s1 + $0xa18] sm:$0xf]
      %v2942 = vld [vmem:[%s1 + $0xa1c] sm:$0xf]
      %v2943 = vld [vmem:[%s1 + $0xa20] sm:$0xf]
      %v2944 = vld [vmem:[%s1 + $0xa24] sm:$0xf]
      %v2945 = vld [vmem:[%s1 + $0xa28] sm:$0xf]
      %v2946 = vld [vmem:[%s1 + $0xa2c] sm:$0xf]
      %v2947 = vld [vmem:[%s1 + $0xa30] sm:$0xf]
      %v2948 = vld [vmem:[%s1 + $0xa34] sm:$0xf]
      %v2949 = vld [vmem:[%s1 + $0xa38] sm:$0xf]
      %v2950 = vld [vmem:[%s1 + $0xa3c] sm:$0xf]
      %v2951 = vld [vmem:[%s1 + $0xa40] sm:$0xf]
      %v2952 = vld [vmem:[%s1 + $0xa44] sm:$0xf]
      %v2953 = vld [vmem:[%s1 + $0xa48] sm:$0xf]
      %v2954 = vld [vmem:[%s1 + $0xa4c] sm:$0xf]
      %v2955 = vld [vmem:[%s1 + $0xa50] sm:$0xf]
      %v2956 = vld [vmem:[%s1 + $0xa54] sm:$0xf]
      %v2957 = vld [vmem:[%s1 + $0xa58] sm:$0xf]
      %v2958 = vld [vmem:[%s1 + $0xa5c] sm:$0xf]
      %v2959 = vld [vmem:[%s1 + $0xa60] sm:$0xf]
      %v2960 = vld [vmem:[%s1 + $0xa64] sm:$0xf]
      %v2961 = vld [vmem:[%s1 + $0xa68] sm:$0xf]
      %v2962 = vld [vmem:[%s1 + $0xa6c] sm:$0xf]
      %v2963 = vld [vmem:[%s1 + $0xa70] sm:$0xf]
      %v2964 = vld [vmem:[%s1 + $0xa74] sm:$0xf]
      %v2965 = vld [vmem:[%s1 + $0xa78] sm:$0xf]
      %v2966 = vld [vmem:[%s1 + $0xa7c] sm:$0xf]
      %v2967 = vld [vmem:[%s1 + $0xa80] sm:$0xf]
      %v2968 = vld [vmem:[%s1 + $0xa84] sm:$0xf]
      %v2969 = vld [vmem:[%s1 + $0xa88] sm:$0xf]
      %v2970 = vld [vmem:[%s1 + $0xa8c] sm:$0xf]
      %v2971 = vld [vmem:[%s1 + $0xa90] sm:$0xf]
      %v2972 = vld [vmem:[%s1 + $0xa94] sm:$0xf]
      %v2973 = vld [vmem:[%s1 + $0xa98] sm:$0xf]
      %v2974 = vld [vmem:[%s1 + $0xa9c] sm:$0xf]
      %v2975 = vld [vmem:[%s1 + $0xaa0] sm:$0xf]
      %v2976 = vld [vmem:[%s1 + $0xaa4] sm:$0xf]
      %v2977 = vld [vmem:[%s1 + $0xaa8] sm:$0xf]
      %v2978 = vld [vmem:[%s1 + $0xaac] sm:$0xf]
      %v2979 = vld [vmem:[%s1 + $0xab0] sm:$0xf]
      %v2980 = vld [vmem:[%s1 + $0xab4] sm:$0xf]
      %v2981 = vld [vmem:[%s1 + $0xab8] sm:$0xf]
      %v2982 = vld [vmem:[%s1 + $0xabc] sm:$0xf]
      %v2983 = vld [vmem:[%s1 + $0xac0] sm:$0xf]
      %v2984 = vld [vmem:[%s1 + $0xac4] sm:$0xf]
      %v2985 = vld [vmem:[%s1 + $0xac8] sm:$0xf]
      %v2986 = vld [vmem:[%s1 + $0xacc] sm:$0xf]
      %v2987 = vld [vmem:[%s1 + $0xad0] sm:$0xf]
      %v2988 = vld [vmem:[%s1 + $0xad4] sm:$0xf]
      %v2989 = vld [vmem:[%s1 + $0xad8] sm:$0xf]
      %v2990 = vld [vmem:[%s1 + $0xadc] sm:$0xf]
      %v2991 = vld [vmem:[%s1 + $0xae0] sm:$0xf]
      %v2992 = vld [vmem:[%s1 + $0xae4] sm:$0xf]
      %v2993 = vld [vmem:[%s1 + $0xae8] sm:$0xf]
      %v2994 = vld [vmem:[%s1 + $0xaec] sm:$0xf]
      %v2995 = vld [vmem:[%s1 + $0xaf0] sm:$0xf]
      %v2996 = vld [vmem:[%s1 + $0xaf4] sm:$0xf]
      %v2997 = vld [vmem:[%s1 + $0xaf8] sm:$0xf]
      %v2998 = vld [vmem:[%s1 + $0xafc] sm:$0xf]
      %v2999 = vld [vmem:[%s1 + $0xb00] sm:$0xf]
      %v3000 = vld [vmem:[%s1 + $0xb04] sm:$0xf]
      %v3001 = vld [vmem:[%s1 + $0xb08] sm:$0xf]
      %v3002 = vld [vmem:[%s1 + $0xb0c] sm:$0xf]
      %v3003 = vld [vmem:[%s1 + $0xb10] sm:$0xf]
      %v3004 = vld [vmem:[%s1 + $0xb14] sm:$0xf]
      %v3005 = vld [vmem:[%s1 + $0xb18] sm:$0xf]
      %v3006 = vld [vmem:[%s1 + $0xb1c] sm:$0xf]
      %v3007 = vld [vmem:[%s1 + $0xb20] sm:$0xf]
      %v3008 = vld [vmem:[%s1 + $0xb24] sm:$0xf]
      %v3009 = vld [vmem:[%s1 + $0xb28] sm:$0xf]
      %v3010 = vld [vmem:[%s1 + $0xb2c] sm:$0xf]
      %v3011 = vld [vmem:[%s1 + $0xb30] sm:$0xf]
      %v3012 = vld [vmem:[%s1 + $0xb34] sm:$0xf]
      %v3013 = vld [vmem:[%s1 + $0xb38] sm:$0xf]
      %v3014 = vld [vmem:[%s1 + $0xb3c] sm:$0xf]
      %v3015 = vld [vmem:[%s1 + $0xb40] sm:$0xf]
      %v3016 = vld [vmem:[%s1 + $0xb44] sm:$0xf]
      %v3017 = vld [vmem:[%s1 + $0xb48] sm:$0xf]
      %v3018 = vld [vmem:[%s1 + $0xb4c] sm:$0xf]
      %v3019 = vld [vmem:[%s1 + $0xb50] sm:$0xf]
      %v3020 = vld [vmem:[%s1 + $0xb54] sm:$0xf]
      %v3021 = vld [vmem:[%s1 + $0xb58] sm:$0xf]
      %v3022 = vld [vmem:[%s1 + $0xb5c] sm:$0xf]
      %v3023 = vld [vmem:[%s1 + $0xb60] sm:$0xf]
      %v3024 = vld [vmem:[%s1 + $0xb64] sm:$0xf]
      %v3025 = vld [vmem:[%s1 + $0xb68] sm:$0xf]
      %v3026 = vld [vmem:[%s1 + $0xb6c] sm:$0xf]
      %v3027 = vld [vmem:[%s1 + $0xb70] sm:$0xf]
      %v3028 = vld [vmem:[%s1 + $0xb74] sm:$0xf]
      %v3029 = vld [vmem:[%s1 + $0xb78] sm:$0xf]
      %v3030 = vld [vmem:[%s1 + $0xb7c] sm:$0xf]
      %v3031 = vld [vmem:[%s1 + $0xb80] sm:$0xf]
      %v3032 = vld [vmem:[%s1 + $0xb84] sm:$0xf]
      %v3033 = vld [vmem:[%s1 + $0xb88] sm:$0xf]
      %v3034 = vld [vmem:[%s1 + $0xb8c] sm:$0xf]
      %v3035 = vld [vmem:[%s1 + $0xb90] sm:$0xf]
      %v3036 = vld [vmem:[%s1 + $0xb94] sm:$0xf]
      %v3037 = vld [vmem:[%s1 + $0xb98] sm:$0xf]
      %v3038 = vld [vmem:[%s1 + $0xb9c] sm:$0xf]
      %v3039 = vld [vmem:[%s1 + $0xba0] sm:$0xf]
      %v3040 = vld [vmem:[%s1 + $0xba4] sm:$0xf]
      %v3041 = vld [vmem:[%s1 + $0xba8] sm:$0xf]
      %v3042 = vld [vmem:[%s1 + $0xbac] sm:$0xf]
      %v3043 = vld [vmem:[%s1 + $0xbb0] sm:$0xf]
      %v3044 = vld [vmem:[%s1 + $0xbb4] sm:$0xf]
      %v3045 = vld [vmem:[%s1 + $0xbb8] sm:$0xf]
      %v3046 = vld [vmem:[%s1 + $0xbbc] sm:$0xf]
      %v3047 = vld [vmem:[%s1 + $0xbc0] sm:$0xf]
      %v3048 = vld [vmem:[%s1 + $0xbc4] sm:$0xf]
      %v3049 = vld [vmem:[%s1 + $0xbc8] sm:$0xf]
      %v3050 = vld [vmem:[%s1 + $0xbcc] sm:$0xf]
      %v3051 = vld [vmem:[%s1 + $0xbd0] sm:$0xf]
      %v3052 = vld [vmem:[%s1 + $0xbd4] sm:$0xf]
      %v3053 = vld [vmem:[%s1 + $0xbd8] sm:$0xf]
      %v3054 = vld [vmem:[%s1 + $0xbdc] sm:$0xf]
      %v3055 = vld [vmem:[%s1 + $0xbe0] sm:$0xf]
      %v3056 = vld [vmem:[%s1 + $0xbe4] sm:$0xf]
      %v3057 = vld [vmem:[%s1 + $0xbe8] sm:$0xf]
      %v3058 = vld [vmem:[%s1 + $0xbec] sm:$0xf]
      %v3059 = vld [vmem:[%s1 + $0xbf0] sm:$0xf]
      %v3060 = vld [vmem:[%s1 + $0xbf4] sm:$0xf]
      %v3061 = vld [vmem:[%s1 + $0xbf8] sm:$0xf]
      %v3062 = vld [vmem:[%s1 + $0xbfc] sm:$0xf]
      %v3063 = vld [vmem:[%s1 + $0xc00] sm:$0xf]
      %v3064 = vld [vmem:[%s1 + $0xc04] sm:$0xf]
      %v3065 = vld [vmem:[%s1 + $0xc08] sm:$0xf]
      %v3066 = vld [vmem:[%s1 + $0xc0c] sm:$0xf]
      %v3067 = vld [vmem:[%s1 + $0xc10] sm:$0xf]
      %v3068 = vld [vmem:[%s1 + $0xc14] sm:$0xf]
      %v3069 = vld [vmem:[%s1 + $0xc18] sm:$0xf]
      %v3070 = vld [vmem:[%s1 + $0xc1c] sm:$0xf]
      %v3071 = vld [vmem:[%s1 + $0xc20] sm:$0xf]
      %v3072 = vld [vmem:[%s1 + $0xc24] sm:$0xf]
      %v3073 = vld [vmem:[%s1 + $0xc28] sm:$0xf]
      %v3074 = vld [vmem:[%s1 + $0xc2c] sm:$0xf]
      %v3075 = vld [vmem:[%s1 + $0xc30] sm:$0xf]
      %v3076 = vld [vmem:[%s1 + $0xc34] sm:$0xf]
      %v3077 = vld [vmem:[%s1 + $0xc38] sm:$0xf]
      %v3078 = vld [vmem:[%s1 + $0xc3c] sm:$0xf]
      %v3079 = vld [vmem:[%s2] sm:$0x1]
      %v3081 = vlaneseq
      %v3082 = vshrl.u32 %v3081, 7
      %v3083 = vsub.s32 0, %v3082
      %v3084 = vrot.slane %v3079, %v3083
      %v3186 = vunpack.c.l.b16 %v2195
      %v3187 = vunpack.c.h.b16 %v2195
      %v3188 = vunpack.c.l.b16 %v2196
      %v3189 = vunpack.c.h.b16 %v2196
      %v3190 = vunpack.c.l.b16 %v2197
      %v3191 = vunpack.c.h.b16 %v2197
      %v3192 = vunpack.c.l.b16 %v2198
      %v3193 = vunpack.c.h.b16 %v2198
      %v3194 = vunpack.c.l.b16 %v2199
      %v3195 = vunpack.c.h.b16 %v2199
      %v3196 = vunpack.c.l.b16 %v2200
      %v3197 = vunpack.c.h.b16 %v2200
      %v3198 = vunpack.c.l.b16 %v2201
      %v3199 = vunpack.c.h.b16 %v2201
      %v3200 = vunpack.c.l.b16 %v2202
      %v3201 = vunpack.c.h.b16 %v2202
      %v3202 = vunpack.c.l.b16 %v2203
      %v3203 = vunpack.c.h.b16 %v2203
      %v3204 = vunpack.c.l.b16 %v2204
      %v3205 = vunpack.c.h.b16 %v2204
      %v3206 = vunpack.c.l.b16 %v2205
      %v3207 = vunpack.c.h.b16 %v2205
      %v3208 = vunpack.c.l.b16 %v2206
      %v3209 = vunpack.c.h.b16 %v2206
      %v3210 = vunpack.c.l.b16 %v2207
      %v3211 = vunpack.c.h.b16 %v2207
      %v3212 = vunpack.c.l.b16 %v2208
      %v3213 = vunpack.c.h.b16 %v2208
      %v3214 = vunpack.c.l.b16 %v2209
      %v3215 = vunpack.c.h.b16 %v2209
      %v3216 = vunpack.c.l.b16 %v2210
      %v3217 = vunpack.c.h.b16 %v2210
      %v3218 = vunpack.c.l.b16 %v2211
      %v3219 = vunpack.c.h.b16 %v2211
      %v3220 = vunpack.c.l.b16 %v2212
      %v3221 = vunpack.c.h.b16 %v2212
      %v3222 = vunpack.c.l.b16 %v2213
      %v3223 = vunpack.c.h.b16 %v2213
      %v3224 = vunpack.c.l.b16 %v2214
      %v3225 = vunpack.c.h.b16 %v2214
      %v3226 = vunpack.c.l.b16 %v2215
      %v3227 = vunpack.c.h.b16 %v2215
      %v3228 = vunpack.c.l.b16 %v2216
      %v3229 = vunpack.c.h.b16 %v2216
      %v3230 = vunpack.c.l.b16 %v2217
      %v3231 = vunpack.c.h.b16 %v2217
      %v3232 = vunpack.c.l.b16 %v2218
      %v3233 = vunpack.c.h.b16 %v2218
      %v3234 = vunpack.c.l.b16 %v2219
      %v3235 = vunpack.c.l.b16 %v2220
      %v3236 = vunpack.c.h.b16 %v2220
      %v3237 = vunpack.c.l.b16 %v2221
      %v3238 = vunpack.c.h.b16 %v2221
      %v3239 = vunpack.c.l.b16 %v2222
      %v3240 = vunpack.c.h.b16 %v2222
      %v3241 = vunpack.c.l.b16 %v2223
      %v3242 = vunpack.c.h.b16 %v2223
      %v3243 = vunpack.c.l.b16 %v2224
      %v3244 = vunpack.c.h.b16 %v2224
      %v3245 = vunpack.c.l.b16 %v2225
      %v3246 = vunpack.c.h.b16 %v2225
      %v3247 = vunpack.c.l.b16 %v2226
      %v3248 = vunpack.c.h.b16 %v2226
      %v3249 = vunpack.c.l.b16 %v2227
      %v3250 = vunpack.c.h.b16 %v2227
      %v3251 = vunpack.c.l.b16 %v2228
      %v3252 = vunpack.c.h.b16 %v2228
      %v3253 = vunpack.c.l.b16 %v2229
      %v3254 = vunpack.c.h.b16 %v2229
      %v3255 = vunpack.c.l.b16 %v2230
      %v3256 = vunpack.c.h.b16 %v2230
      %v3257 = vunpack.c.l.b16 %v2231
      %v3258 = vunpack.c.h.b16 %v2231
      %v3259 = vunpack.c.l.b16 %v2232
      %v3260 = vunpack.c.h.b16 %v2232
      %v3261 = vunpack.c.l.b16 %v2233
      %v3262 = vunpack.c.h.b16 %v2233
      %v3263 = vunpack.c.l.b16 %v2234
      %v3264 = vunpack.c.h.b16 %v2234
      %v3265 = vunpack.c.l.b16 %v2235
      %v3266 = vunpack.c.h.b16 %v2235
      %v3267 = vunpack.c.l.b16 %v2236
      %v3268 = vunpack.c.h.b16 %v2236
      %v3269 = vunpack.c.l.b16 %v2237
      %v3270 = vunpack.c.h.b16 %v2237
      %v3271 = vunpack.c.l.b16 %v2238
      %v3272 = vunpack.c.h.b16 %v2238
      %v3273 = vunpack.c.l.b16 %v2239
      %v3274 = vunpack.c.h.b16 %v2239
      %v3275 = vunpack.c.l.b16 %v2240
      %v3276 = vunpack.c.h.b16 %v2240
      %v3277 = vunpack.c.l.b16 %v2241
      %v3278 = vunpack.c.h.b16 %v2241
      %v3279 = vunpack.c.l.b16 %v2242
      %v3280 = vunpack.c.h.b16 %v2242
      %v3281 = vunpack.c.l.b16 %v2243
      %v3282 = vunpack.c.h.b16 %v2243
      %v3283 = vunpack.c.l.b16 %v2244
      %v3284 = vunpack.c.l.b16 %v2245
      %v3285 = vunpack.c.h.b16 %v2245
      %v3286 = vunpack.c.l.b16 %v2246
      %v3287 = vunpack.c.h.b16 %v2246
      %v3288 = vunpack.c.l.b16 %v2247
      %v3289 = vunpack.c.h.b16 %v2247
      %v3290 = vunpack.c.l.b16 %v2248
      %v3291 = vunpack.c.h.b16 %v2248
      %v3292 = vunpack.c.l.b16 %v2249
      %v3293 = vunpack.c.h.b16 %v2249
      %v3294 = vunpack.c.l.b16 %v2250
      %v3295 = vunpack.c.h.b16 %v2250
      %v3296 = vunpack.c.l.b16 %v2251
      %v3297 = vunpack.c.h.b16 %v2251
      %v3298 = vunpack.c.l.b16 %v2252
      %v3299 = vunpack.c.h.b16 %v2252
      %v3300 = vunpack.c.l.b16 %v2253
      %v3301 = vunpack.c.h.b16 %v2253
      %v3302 = vunpack.c.l.b16 %v2254
      %v3303 = vunpack.c.h.b16 %v2254
      %v3304 = vunpack.c.l.b16 %v2255
      %v3305 = vunpack.c.h.b16 %v2255
      %v3306 = vunpack.c.l.b16 %v2256
      %v3307 = vunpack.c.h.b16 %v2256
      %v3308 = vunpack.c.l.b16 %v2257
      %v3309 = vunpack.c.h.b16 %v2257
      %v3310 = vunpack.c.l.b16 %v2258
      %v3311 = vunpack.c.h.b16 %v2258
      %v3312 = vunpack.c.l.b16 %v2259
      %v3313 = vunpack.c.h.b16 %v2259
      %v3314 = vunpack.c.l.b16 %v2260
      %v3315 = vunpack.c.h.b16 %v2260
      %v3316 = vunpack.c.l.b16 %v2261
      %v3317 = vunpack.c.h.b16 %v2261
      %v3318 = vunpack.c.l.b16 %v2262
      %v3319 = vunpack.c.h.b16 %v2262
      %v3320 = vunpack.c.l.b16 %v2263
      %v3321 = vunpack.c.h.b16 %v2263
      %v3322 = vunpack.c.l.b16 %v2264
      %v3323 = vunpack.c.h.b16 %v2264
      %v3324 = vunpack.c.l.b16 %v2265
      %v3325 = vunpack.c.h.b16 %v2265
      %v3326 = vunpack.c.l.b16 %v2266
      %v3327 = vunpack.c.h.b16 %v2266
      %v3328 = vunpack.c.l.b16 %v2267
      %v3329 = vunpack.c.h.b16 %v2267
      %v3330 = vunpack.c.l.b16 %v2268
      %v3331 = vunpack.c.h.b16 %v2268
      %v3332 = vunpack.c.l.b16 %v2269
      %v3333 = vunpack.c.l.b16 %v2270
      %v3334 = vunpack.c.h.b16 %v2270
      %v3335 = vunpack.c.l.b16 %v2271
      %v3336 = vunpack.c.h.b16 %v2271
      %v3337 = vunpack.c.l.b16 %v2272
      %v3338 = vunpack.c.h.b16 %v2272
      %v3339 = vunpack.c.l.b16 %v2273
      %v3340 = vunpack.c.h.b16 %v2273
      %v3341 = vunpack.c.l.b16 %v2274
      %v3342 = vunpack.c.h.b16 %v2274
      %v3343 = vunpack.c.l.b16 %v2275
      %v3344 = vunpack.c.h.b16 %v2275
      %v3345 = vunpack.c.l.b16 %v2276
      %v3346 = vunpack.c.h.b16 %v2276
      %v3347 = vunpack.c.l.b16 %v2277
      %v3348 = vunpack.c.h.b16 %v2277
      %v3349 = vunpack.c.l.b16 %v2278
      %v3350 = vunpack.c.h.b16 %v2278
      %v3351 = vunpack.c.l.b16 %v2279
      %v3352 = vunpack.c.h.b16 %v2279
      %v3353 = vunpack.c.l.b16 %v2280
      %v3354 = vunpack.c.h.b16 %v2280
      %v3355 = vunpack.c.l.b16 %v2281
      %v3356 = vunpack.c.h.b16 %v2281
      %v3357 = vunpack.c.l.b16 %v2282
      %v3358 = vunpack.c.h.b16 %v2282
      %v3359 = vunpack.c.l.b16 %v2283
      %v3360 = vunpack.c.h.b16 %v2283
      %v3361 = vunpack.c.l.b16 %v2284
      %v3362 = vunpack.c.h.b16 %v2284
      %v3363 = vunpack.c.l.b16 %v2285
      %v3364 = vunpack.c.h.b16 %v2285
      %v3365 = vunpack.c.l.b16 %v2286
      %v3366 = vunpack.c.h.b16 %v2286
      %v3367 = vunpack.c.l.b16 %v2287
      %v3368 = vunpack.c.h.b16 %v2287
      %v3369 = vunpack.c.l.b16 %v2288
      %v3370 = vunpack.c.h.b16 %v2288
      %v3371 = vunpack.c.l.b16 %v2289
      %v3372 = vunpack.c.h.b16 %v2289
      %v3373 = vunpack.c.l.b16 %v2290
      %v3374 = vunpack.c.h.b16 %v2290
      %v3375 = vunpack.c.l.b16 %v2291
      %v3376 = vunpack.c.h.b16 %v2291
      %v3377 = vunpack.c.l.b16 %v2292
      %v3378 = vunpack.c.h.b16 %v2292
      %v3379 = vunpack.c.l.b16 %v2293
      %v3380 = vunpack.c.h.b16 %v2293
      %v3381 = vunpack.c.l.b16 %v2294
      %v3382 = vpack.c.b16 %v3235, %v3186
      %v3383 = vpack.c.b16 %v3236, %v3187
      %v3384 = vpack.c.b16 %v3237, %v3188
      %v3385 = vpack.c.b16 %v3238, %v3189
      %v3386 = vpack.c.b16 %v3239, %v3190
      %v3387 = vpack.c.b16 %v3240, %v3191
      %v3388 = vpack.c.b16 %v3241, %v3192
      %v3389 = vpack.c.b16 %v3242, %v3193
      %v3390 = vpack.c.b16 %v3243, %v3194
      %v3391 = vpack.c.b16 %v3244, %v3195
      %v3392 = vpack.c.b16 %v3245, %v3196
      %v3393 = vpack.c.b16 %v3246, %v3197
      %v3394 = vpack.c.b16 %v3247, %v3198
      %v3395 = vpack.c.b16 %v3248, %v3199
      %v3396 = vpack.c.b16 %v3249, %v3200
      %v3397 = vpack.c.b16 %v3250, %v3201
      %v3398 = vpack.c.b16 %v3251, %v3202
      %v3399 = vpack.c.b16 %v3252, %v3203
      %v3400 = vpack.c.b16 %v3253, %v3204
      %v3401 = vpack.c.b16 %v3254, %v3205
      %v3402 = vpack.c.b16 %v3255, %v3206
      %v3403 = vpack.c.b16 %v3256, %v3207
      %v3404 = vpack.c.b16 %v3257, %v3208
      %v3405 = vpack.c.b16 %v3258, %v3209
      %v3406 = vpack.c.b16 %v3259, %v3210
      %v3407 = vpack.c.b16 %v3260, %v3211
      %v3408 = vpack.c.b16 %v3261, %v3212
      %v3409 = vpack.c.b16 %v3262, %v3213
      %v3410 = vpack.c.b16 %v3263, %v3214
      %v3411 = vpack.c.b16 %v3264, %v3215
      %v3412 = vpack.c.b16 %v3265, %v3216
      %v3413 = vpack.c.b16 %v3266, %v3217
      %v3414 = vpack.c.b16 %v3267, %v3218
      %v3415 = vpack.c.b16 %v3268, %v3219
      %v3416 = vpack.c.b16 %v3269, %v3220
      %v3417 = vpack.c.b16 %v3270, %v3221
      %v3418 = vpack.c.b16 %v3271, %v3222
      %v3419 = vpack.c.b16 %v3272, %v3223
      %v3420 = vpack.c.b16 %v3273, %v3224
      %v3421 = vpack.c.b16 %v3274, %v3225
      %v3422 = vpack.c.b16 %v3275, %v3226
      %v3423 = vpack.c.b16 %v3276, %v3227
      %v3424 = vpack.c.b16 %v3277, %v3228
      %v3425 = vpack.c.b16 %v3278, %v3229
      %v3426 = vpack.c.b16 %v3279, %v3230
      %v3427 = vpack.c.b16 %v3280, %v3231
      %v3428 = vpack.c.b16 %v3281, %v3232
      %v3429 = vpack.c.b16 %v3282, %v3233
      %v3430 = vpack.c.b16 %v3283, %v3234
      %v3431 = vpack.c.b16 %v3333, %v3284
      %v3432 = vpack.c.b16 %v3334, %v3285
      %v3433 = vpack.c.b16 %v3335, %v3286
      %v3434 = vpack.c.b16 %v3336, %v3287
      %v3435 = vpack.c.b16 %v3337, %v3288
      %v3436 = vpack.c.b16 %v3338, %v3289
      %v3437 = vpack.c.b16 %v3339, %v3290
      %v3438 = vpack.c.b16 %v3340, %v3291
      %v3439 = vpack.c.b16 %v3341, %v3292
      %v3440 = vpack.c.b16 %v3342, %v3293
      %v3441 = vpack.c.b16 %v3343, %v3294
      %v3442 = vpack.c.b16 %v3344, %v3295
      %v3443 = vpack.c.b16 %v3345, %v3296
      %v3444 = vpack.c.b16 %v3346, %v3297
      %v3445 = vpack.c.b16 %v3347, %v3298
      %v3446 = vpack.c.b16 %v3348, %v3299
      %v3447 = vpack.c.b16 %v3349, %v3300
      %v3448 = vpack.c.b16 %v3350, %v3301
      %v3449 = vpack.c.b16 %v3351, %v3302
      %v3450 = vpack.c.b16 %v3352, %v3303
      %v3451 = vpack.c.b16 %v3353, %v3304
      %v3452 = vpack.c.b16 %v3354, %v3305
      %v3453 = vpack.c.b16 %v3355, %v3306
      %v3454 = vpack.c.b16 %v3356, %v3307
      %v3455 = vpack.c.b16 %v3357, %v3308
      %v3456 = vpack.c.b16 %v3358, %v3309
      %v3457 = vpack.c.b16 %v3359, %v3310
      %v3458 = vpack.c.b16 %v3360, %v3311
      %v3459 = vpack.c.b16 %v3361, %v3312
      %v3460 = vpack.c.b16 %v3362, %v3313
      %v3461 = vpack.c.b16 %v3363, %v3314
      %v3462 = vpack.c.b16 %v3364, %v3315
      %v3463 = vpack.c.b16 %v3365, %v3316
      %v3464 = vpack.c.b16 %v3366, %v3317
      %v3465 = vpack.c.b16 %v3367, %v3318
      %v3466 = vpack.c.b16 %v3368, %v3319
      %v3467 = vpack.c.b16 %v3369, %v3320
      %v3468 = vpack.c.b16 %v3370, %v3321
      %v3469 = vpack.c.b16 %v3371, %v3322
      %v3470 = vpack.c.b16 %v3372, %v3323
      %v3471 = vpack.c.b16 %v3373, %v3324
      %v3472 = vpack.c.b16 %v3374, %v3325
      %v3473 = vpack.c.b16 %v3375, %v3326
      %v3474 = vpack.c.b16 %v3376, %v3327
      %v3475 = vpack.c.b16 %v3377, %v3328
      %v3476 = vpack.c.b16 %v3378, %v3329
      %v3477 = vpack.c.b16 %v3379, %v3330
      %v3478 = vpack.c.b16 %v3380, %v3331
      %v3479 = vpack.c.b16 %v3381, %v3332
      %v4362 = vunpack.c.l.b16 %v2295
      %v4363 = vunpack.c.l.b16 %v2296
      %v4364 = vunpack.c.l.b16 %v2297
      %v4365 = vunpack.c.l.b16 %v2298
      %v4366 = vunpack.c.l.b16 %v2299
      %v4367 = vunpack.c.l.b16 %v2300
      %v4368 = vunpack.c.l.b16 %v2301
      %v4369 = vunpack.c.l.b16 %v2302
      %v4370 = vunpack.c.l.b16 %v2303
      %v4371 = vunpack.c.l.b16 %v2304
      %v4372 = vunpack.c.l.b16 %v2305
      %v4373 = vunpack.c.l.b16 %v2306
      %v4374 = vunpack.c.l.b16 %v2307
      %v4375 = vunpack.c.l.b16 %v2308
      %v4376 = vunpack.c.l.b16 %v2309
      %v4377 = vunpack.c.l.b16 %v2310
      %v4378 = vunpack.c.l.b16 %v2311
      %v4379 = vunpack.c.l.b16 %v2312
      %v4380 = vunpack.c.l.b16 %v2313
      %v4381 = vunpack.c.l.b16 %v2314
      %v4382 = vunpack.c.l.b16 %v2315
      %v4383 = vunpack.c.l.b16 %v2316
      %v4384 = vunpack.c.l.b16 %v2317
      %v4385 = vunpack.c.l.b16 %v2318
      %v4386 = vunpack.c.l.b16 %v2319
      %v4387 = vunpack.c.l.b16 %v2320
      %v4388 = vunpack.c.l.b16 %v2321
      %v4389 = vunpack.c.l.b16 %v2322
      %v4390 = vunpack.c.l.b16 %v2323
      %v4391 = vunpack.c.l.b16 %v2324
      %v4392 = vunpack.c.l.b16 %v2325
      %v4393 = vunpack.c.l.b16 %v2326
      %v4394 = vunpack.c.l.b16 %v2327
      %v4395 = vunpack.c.l.b16 %v2328
      %v4396 = vunpack.c.l.b16 %v2329
      %v4397 = vunpack.c.l.b16 %v2330
      %v4398 = vunpack.c.l.b16 %v2331
      %v4399 = vunpack.c.l.b16 %v2332
      %v4400 = vunpack.c.l.b16 %v2333
      %v4401 = vunpack.c.l.b16 %v2334
      %v4402 = vunpack.c.l.b16 %v2335
      %v4403 = vunpack.c.l.b16 %v2336
      %v4404 = vunpack.c.l.b16 %v2337
      %v4405 = vunpack.c.l.b16 %v2338
      %v4406 = vunpack.c.l.b16 %v2339
      %v4407 = vunpack.c.l.b16 %v2340
      %v4408 = vunpack.c.l.b16 %v2341
      %v4409 = vunpack.c.l.b16 %v2342
      %v4410 = vunpack.c.l.b16 %v2343
      %v4411 = vunpack.c.l.b16 %v2344
      %v4412 = vunpack.c.l.b16 %v2345
      %v4413 = vunpack.c.l.b16 %v2346
      %v4414 = vunpack.c.l.b16 %v2347
      %v4415 = vunpack.c.l.b16 %v2348
      %v4416 = vunpack.c.l.b16 %v2349
      %v4417 = vunpack.c.l.b16 %v2350
      %v4418 = vunpack.c.l.b16 %v2351
      %v4419 = vunpack.c.l.b16 %v2352
      %v4420 = vunpack.c.l.b16 %v2353
      %v4421 = vunpack.c.l.b16 %v2354
      %v4422 = vunpack.c.l.b16 %v2355
      %v4423 = vunpack.c.l.b16 %v2356
      %v4424 = vunpack.c.l.b16 %v2357
      %v4425 = vunpack.c.l.b16 %v2358
      %v4426 = vunpack.c.l.b16 %v2359
      %v4427 = vunpack.c.l.b16 %v2360
      %v4428 = vunpack.c.l.b16 %v2361
      %v4429 = vunpack.c.l.b16 %v2362
      %v4430 = vunpack.c.l.b16 %v2363
      %v4431 = vunpack.c.l.b16 %v2364
      %v4432 = vunpack.c.l.b16 %v2365
      %v4433 = vunpack.c.l.b16 %v2366
      %v4434 = vunpack.c.l.b16 %v2367
      %v4435 = vunpack.c.l.b16 %v2368
      %v4436 = vunpack.c.l.b16 %v2369
      %v4437 = vunpack.c.l.b16 %v2370
      %v4438 = vunpack.c.l.b16 %v2371
      %v4439 = vunpack.c.l.b16 %v2372
      %v4440 = vunpack.c.l.b16 %v2373
      %v4441 = vunpack.c.l.b16 %v2374
      %v4442 = vunpack.c.l.b16 %v2375
      %v4443 = vunpack.c.l.b16 %v2376
      %v4444 = vunpack.c.l.b16 %v2377
      %v4445 = vunpack.c.l.b16 %v2378
      %v4446 = vunpack.c.l.b16 %v2379
      %v4447 = vunpack.c.l.b16 %v2380
      %v4448 = vunpack.c.l.b16 %v2381
      %v4449 = vunpack.c.l.b16 %v2382
      %v4450 = vunpack.c.l.b16 %v2383
      %v4451 = vunpack.c.l.b16 %v2384
      %v4452 = vunpack.c.l.b16 %v2385
      %v4453 = vunpack.c.l.b16 %v2386
      %v4454 = vunpack.c.l.b16 %v2387
      %v4455 = vunpack.c.l.b16 %v2388
      %v4456 = vunpack.c.l.b16 %v2389
      %v4457 = vunpack.c.l.b16 %v2390
      %v4458 = vunpack.c.l.b16 %v2391
      %v4459 = vunpack.c.l.b16 %v2392
      %v4460 = vunpack.c.l.b16 %v2393
      %v4461 = vunpack.c.l.b16 %v2394
      %v4462 = vunpack.c.l.b16 %v2395
      %v4463 = vunpack.c.l.b16 %v2396
      %v4464 = vunpack.c.l.b16 %v2397
      %v4465 = vunpack.c.l.b16 %v2398
      %v4466 = vunpack.c.l.b16 %v2399
      %v4467 = vunpack.c.l.b16 %v2400
      %v4468 = vunpack.c.l.b16 %v2401
      %v4469 = vunpack.c.l.b16 %v2402
      %v4470 = vunpack.c.l.b16 %v2403
      %v4471 = vunpack.c.l.b16 %v2404
      %v4472 = vunpack.c.l.b16 %v2405
      %v4473 = vunpack.c.l.b16 %v2406
      %v4474 = vunpack.c.l.b16 %v2407
      %v4475 = vunpack.c.l.b16 %v2408
      %v4476 = vunpack.c.l.b16 %v2409
      %v4477 = vunpack.c.l.b16 %v2410
      %v4478 = vunpack.c.l.b16 %v2411
      %v4479 = vunpack.c.l.b16 %v2412
      %v4480 = vunpack.c.l.b16 %v2413
      %v4481 = vunpack.c.l.b16 %v2414
      %v4482 = vunpack.c.l.b16 %v2415
      %v4483 = vunpack.c.l.b16 %v2416
      %v4484 = vunpack.c.l.b16 %v2417
      %v4485 = vunpack.c.l.b16 %v2418
      %v4486 = vunpack.c.l.b16 %v2419
      %v4487 = vunpack.c.l.b16 %v2420
      %v4488 = vunpack.c.l.b16 %v2421
      %v4489 = vunpack.c.l.b16 %v2422
      %v4490 = vunpack.c.l.b16 %v2423
      %v4491 = vunpack.c.l.b16 %v2424
      %v4492 = vunpack.c.l.b16 %v2425
      %v4493 = vunpack.c.l.b16 %v2426
      %v4494 = vunpack.c.l.b16 %v2427
      %v4495 = vunpack.c.l.b16 %v2428
      %v4496 = vunpack.c.l.b16 %v2429
      %v4497 = vunpack.c.l.b16 %v2430
      %v4498 = vunpack.c.l.b16 %v2431
      %v4499 = vunpack.c.l.b16 %v2432
      %v4500 = vunpack.c.l.b16 %v2433
      %v4501 = vunpack.c.l.b16 %v2434
      %v4502 = vunpack.c.l.b16 %v2435
      %v4503 = vunpack.c.l.b16 %v2436
      %v4504 = vunpack.c.l.b16 %v2437
      %v4505 = vunpack.c.l.b16 %v2438
      %v4506 = vunpack.c.l.b16 %v2439
      %v4507 = vunpack.c.l.b16 %v2440
      %v4508 = vunpack.c.l.b16 %v2441
      %v4509 = vunpack.c.l.b16 %v2442
      %v4510 = vunpack.c.l.b16 %v2443
      %v4511 = vunpack.c.l.b16 %v2444
      %v4512 = vunpack.c.l.b16 %v2445
      %v4513 = vunpack.c.l.b16 %v2446
      %v4514 = vunpack.c.l.b16 %v2447
      %v4515 = vunpack.c.l.b16 %v2448
      %v4516 = vunpack.c.l.b16 %v2449
      %v4517 = vunpack.c.l.b16 %v2450
      %v4518 = vunpack.c.l.b16 %v2451
      %v4519 = vunpack.c.l.b16 %v2452
      %v4520 = vunpack.c.l.b16 %v2453
      %v4521 = vunpack.c.l.b16 %v2454
      %v4522 = vunpack.c.l.b16 %v2455
      %v4523 = vunpack.c.l.b16 %v2456
      %v4524 = vunpack.c.l.b16 %v2457
      %v4525 = vunpack.c.l.b16 %v2458
      %v4526 = vunpack.c.l.b16 %v2459
      %v4527 = vunpack.c.l.b16 %v2460
      %v4528 = vunpack.c.l.b16 %v2461
      %v4529 = vunpack.c.l.b16 %v2462
      %v4530 = vunpack.c.l.b16 %v2463
      %v4531 = vunpack.c.l.b16 %v2464
      %v4532 = vunpack.c.l.b16 %v2465
      %v4533 = vunpack.c.l.b16 %v2466
      %v4534 = vunpack.c.l.b16 %v2467
      %v4535 = vunpack.c.l.b16 %v2468
      %v4536 = vunpack.c.l.b16 %v2469
      %v4537 = vunpack.c.l.b16 %v2470
      %v4538 = vunpack.c.l.b16 %v2471
      %v4539 = vunpack.c.l.b16 %v2472
      %v4540 = vunpack.c.l.b16 %v2473
      %v4541 = vunpack.c.l.b16 %v2474
      %v4542 = vunpack.c.l.b16 %v2475
      %v4543 = vunpack.c.l.b16 %v2476
      %v4544 = vunpack.c.l.b16 %v2477
      %v4545 = vunpack.c.l.b16 %v2478
      %v4546 = vunpack.c.l.b16 %v2479
      %v4547 = vunpack.c.l.b16 %v2480
      %v4548 = vunpack.c.l.b16 %v2481
      %v4549 = vunpack.c.l.b16 %v2482
      %v4550 = vunpack.c.l.b16 %v2483
      %v4551 = vunpack.c.l.b16 %v2484
      %v4552 = vunpack.c.l.b16 %v2485
      %v4553 = vunpack.c.l.b16 %v2486
      %v4554 = vunpack.c.l.b16 %v2487
      %v4555 = vunpack.c.l.b16 %v2488
      %v4556 = vunpack.c.l.b16 %v2489
      %v4557 = vunpack.c.l.b16 %v2490
      %v4558 = vunpack.c.l.b16 %v2491
      %v4559 = vunpack.c.l.b16 %v2492
      %v4560 = vunpack.c.l.b16 %v2493
      %v4561 = vunpack.c.l.b16 %v2494
      %v4562 = vunpack.c.l.b16 %v2495
      %v4563 = vunpack.c.l.b16 %v2496
      %v4564 = vunpack.c.l.b16 %v2497
      %v4565 = vunpack.c.l.b16 %v2498
      %v4566 = vunpack.c.l.b16 %v2499
      %v4567 = vunpack.c.l.b16 %v2500
      %v4568 = vunpack.c.l.b16 %v2501
      %v4569 = vunpack.c.l.b16 %v2502
      %v4570 = vunpack.c.l.b16 %v2503
      %v4571 = vunpack.c.l.b16 %v2504
      %v4572 = vunpack.c.l.b16 %v2505
      %v4573 = vunpack.c.l.b16 %v2506
      %v4574 = vunpack.c.l.b16 %v2507
      %v4575 = vunpack.c.l.b16 %v2508
      %v4576 = vunpack.c.l.b16 %v2509
      %v4577 = vunpack.c.l.b16 %v2510
      %v4578 = vunpack.c.l.b16 %v2511
      %v4579 = vunpack.c.l.b16 %v2512
      %v4580 = vunpack.c.l.b16 %v2513
      %v4581 = vunpack.c.l.b16 %v2514
      %v4582 = vunpack.c.l.b16 %v2515
      %v4583 = vunpack.c.l.b16 %v2516
      %v4584 = vunpack.c.l.b16 %v2517
      %v4585 = vunpack.c.l.b16 %v2518
      %v4586 = vunpack.c.l.b16 %v2519
      %v4587 = vunpack.c.l.b16 %v2520
      %v4588 = vunpack.c.l.b16 %v2521
      %v4589 = vunpack.c.l.b16 %v2522
      %v4590 = vunpack.c.l.b16 %v2523
      %v4591 = vunpack.c.l.b16 %v2524
      %v4592 = vunpack.c.l.b16 %v2525
      %v4593 = vunpack.c.l.b16 %v2526
      %v4594 = vunpack.c.l.b16 %v2527
      %v4595 = vunpack.c.l.b16 %v2528
      %v4596 = vunpack.c.l.b16 %v2529
      %v4597 = vunpack.c.l.b16 %v2530
      %v4598 = vunpack.c.l.b16 %v2531
      %v4599 = vunpack.c.l.b16 %v2532
      %v4600 = vunpack.c.l.b16 %v2533
      %v4601 = vunpack.c.l.b16 %v2534
      %v4602 = vunpack.c.l.b16 %v2535
      %v4603 = vunpack.c.l.b16 %v2536
      %v4604 = vunpack.c.l.b16 %v2537
      %v4605 = vunpack.c.l.b16 %v2538
      %v4606 = vunpack.c.l.b16 %v2539
      %v4607 = vunpack.c.l.b16 %v2540
      %v4608 = vunpack.c.l.b16 %v2541
      %v4609 = vunpack.c.l.b16 %v2542
      %v4610 = vunpack.c.l.b16 %v2543
      %v4611 = vunpack.c.l.b16 %v2544
      %v4612 = vunpack.c.l.b16 %v2545
      %v4613 = vunpack.c.l.b16 %v2546
      %v4614 = vunpack.c.l.b16 %v2547
      %v4615 = vunpack.c.l.b16 %v2548
      %v4616 = vunpack.c.l.b16 %v2549
      %v4617 = vunpack.c.l.b16 %v2550
      %v4618 = vunpack.c.l.b16 %v2551
      %v4619 = vunpack.c.l.b16 %v2552
      %v4620 = vunpack.c.l.b16 %v2553
      %v4621 = vunpack.c.l.b16 %v2554
      %v4622 = vunpack.c.l.b16 %v2555
      %v4623 = vunpack.c.l.b16 %v2556
      %v4624 = vunpack.c.l.b16 %v2557
      %v4625 = vunpack.c.l.b16 %v2558
      %v4626 = vunpack.c.l.b16 %v2559
      %v4627 = vunpack.c.l.b16 %v2560
      %v4628 = vunpack.c.l.b16 %v2561
      %v4629 = vunpack.c.l.b16 %v2562
      %v4630 = vunpack.c.l.b16 %v2563
      %v4631 = vunpack.c.l.b16 %v2564
      %v4632 = vunpack.c.l.b16 %v2565
      %v4633 = vunpack.c.l.b16 %v2566
      %v4634 = vunpack.c.l.b16 %v2567
      %v4635 = vunpack.c.l.b16 %v2568
      %v4636 = vunpack.c.l.b16 %v2569
      %v4637 = vunpack.c.l.b16 %v2570
      %v4638 = vunpack.c.l.b16 %v2571
      %v4639 = vunpack.c.l.b16 %v2572
      %v4640 = vunpack.c.l.b16 %v2573
      %v4641 = vunpack.c.l.b16 %v2574
      %v4642 = vunpack.c.l.b16 %v2575
      %v4643 = vunpack.c.l.b16 %v2576
      %v4644 = vunpack.c.l.b16 %v2577
      %v4645 = vunpack.c.l.b16 %v2578
      %v4646 = vunpack.c.l.b16 %v2579
      %v4647 = vunpack.c.l.b16 %v2580
      %v4648 = vunpack.c.l.b16 %v2581
      %v4649 = vunpack.c.l.b16 %v2582
      %v4650 = vunpack.c.l.b16 %v2583
      %v4651 = vunpack.c.l.b16 %v2584
      %v4652 = vunpack.c.l.b16 %v2585
      %v4653 = vunpack.c.l.b16 %v2586
      %v4654 = vunpack.c.l.b16 %v2587
      %v4655 = vunpack.c.l.b16 %v2588
      %v4656 = vunpack.c.l.b16 %v2589
      %v4657 = vunpack.c.l.b16 %v2590
      %v4658 = vunpack.c.l.b16 %v2591
      %v4659 = vunpack.c.l.b16 %v2592
      %v4660 = vunpack.c.l.b16 %v2593
      %v4661 = vunpack.c.l.b16 %v2594
      %v4662 = vunpack.c.l.b16 %v2595
      %v4663 = vunpack.c.l.b16 %v2596
      %v4664 = vunpack.c.l.b16 %v2597
      %v4665 = vunpack.c.l.b16 %v2598
      %v4666 = vunpack.c.l.b16 %v2599
      %v4667 = vunpack.c.l.b16 %v2600
      %v4668 = vunpack.c.l.b16 %v2601
      %v4669 = vunpack.c.l.b16 %v2602
      %v4670 = vunpack.c.l.b16 %v2603
      %v4671 = vunpack.c.l.b16 %v2604
      %v4672 = vunpack.c.l.b16 %v2605
      %v4673 = vunpack.c.l.b16 %v2606
      %v4674 = vunpack.c.l.b16 %v2607
      %v4675 = vunpack.c.l.b16 %v2608
      %v4676 = vunpack.c.l.b16 %v2609
      %v4677 = vunpack.c.l.b16 %v2610
      %v4678 = vunpack.c.l.b16 %v2611
      %v4679 = vunpack.c.l.b16 %v2612
      %v4680 = vunpack.c.l.b16 %v2613
      %v4681 = vunpack.c.l.b16 %v2614
      %v4682 = vunpack.c.l.b16 %v2615
      %v4683 = vunpack.c.l.b16 %v2616
      %v4684 = vunpack.c.l.b16 %v2617
      %v4685 = vunpack.c.l.b16 %v2618
      %v4686 = vunpack.c.l.b16 %v2619
      %v4687 = vunpack.c.l.b16 %v2620
      %v4688 = vunpack.c.l.b16 %v2621
      %v4689 = vunpack.c.l.b16 %v2622
      %v4690 = vunpack.c.l.b16 %v2623
      %v4691 = vunpack.c.l.b16 %v2624
      %v4692 = vunpack.c.l.b16 %v2625
      %v4693 = vunpack.c.l.b16 %v2626
      %v4694 = vunpack.c.l.b16 %v2627
      %v4695 = vunpack.c.l.b16 %v2628
      %v4696 = vunpack.c.l.b16 %v2629
      %v4697 = vunpack.c.l.b16 %v2630
      %v4698 = vunpack.c.l.b16 %v2631
      %v4699 = vunpack.c.l.b16 %v2632
      %v4700 = vunpack.c.l.b16 %v2633
      %v4701 = vunpack.c.l.b16 %v2634
      %v4702 = vunpack.c.l.b16 %v2635
      %v4703 = vunpack.c.l.b16 %v2636
      %v4704 = vunpack.c.l.b16 %v2637
      %v4705 = vunpack.c.l.b16 %v2638
      %v4706 = vunpack.c.l.b16 %v2639
      %v4707 = vunpack.c.l.b16 %v2640
      %v4708 = vunpack.c.l.b16 %v2641
      %v4709 = vunpack.c.l.b16 %v2642
      %v4710 = vunpack.c.l.b16 %v2643
      %v4711 = vunpack.c.l.b16 %v2644
      %v4712 = vunpack.c.l.b16 %v2645
      %v4713 = vunpack.c.l.b16 %v2646
      %v4714 = vunpack.c.l.b16 %v2647
      %v4715 = vunpack.c.l.b16 %v2648
      %v4716 = vunpack.c.l.b16 %v2649
      %v4717 = vunpack.c.l.b16 %v2650
      %v4718 = vunpack.c.l.b16 %v2651
      %v4719 = vunpack.c.l.b16 %v2652
      %v4720 = vunpack.c.l.b16 %v2653
      %v4721 = vunpack.c.l.b16 %v2654
      %v4722 = vunpack.c.l.b16 %v2655
      %v4723 = vunpack.c.l.b16 %v2656
      %v4724 = vunpack.c.l.b16 %v2657
      %v4725 = vunpack.c.l.b16 %v2658
      %v4726 = vunpack.c.l.b16 %v2659
      %v4727 = vunpack.c.l.b16 %v2660
      %v4728 = vunpack.c.l.b16 %v2661
      %v4729 = vunpack.c.l.b16 %v2662
      %v4730 = vunpack.c.l.b16 %v2663
      %v4731 = vunpack.c.l.b16 %v2664
      %v4732 = vunpack.c.l.b16 %v2665
      %v4733 = vunpack.c.l.b16 %v2666
      %v4734 = vunpack.c.l.b16 %v2667
      %v4735 = vunpack.c.l.b16 %v2668
      %v4736 = vunpack.c.l.b16 %v2669
      %v4737 = vunpack.c.l.b16 %v2670
      %v4738 = vunpack.c.l.b16 %v2671
      %v4739 = vunpack.c.l.b16 %v2672
      %v4740 = vunpack.c.l.b16 %v2673
      %v4741 = vunpack.c.l.b16 %v2674
      %v4742 = vunpack.c.l.b16 %v2675
      %v4743 = vunpack.c.l.b16 %v2676
      %v4744 = vunpack.c.l.b16 %v2677
      %v4745 = vunpack.c.l.b16 %v2678
      %v4746 = vunpack.c.l.b16 %v2679
      %v4747 = vunpack.c.l.b16 %v2680
      %v4748 = vunpack.c.l.b16 %v2681
      %v4749 = vunpack.c.l.b16 %v2682
      %v4750 = vunpack.c.l.b16 %v2683
      %v4751 = vunpack.c.l.b16 %v2684
      %v4752 = vunpack.c.l.b16 %v2685
      %v4753 = vunpack.c.l.b16 %v2686
      %v4754 = vunpack.c.l.b16 %v2687
      %v4755 = vunpack.c.l.b16 %v2688
      %v4756 = vunpack.c.l.b16 %v2689
      %v4757 = vunpack.c.l.b16 %v2690
      %v4758 = vunpack.c.l.b16 %v2691
      %v4759 = vunpack.c.l.b16 %v2692
      %v4760 = vunpack.c.l.b16 %v2693
      %v4761 = vunpack.c.l.b16 %v2694
      %v4762 = vunpack.c.l.b16 %v2695
      %v4763 = vunpack.c.l.b16 %v2696
      %v4764 = vunpack.c.l.b16 %v2697
      %v4765 = vunpack.c.l.b16 %v2698
      %v4766 = vunpack.c.l.b16 %v2699
      %v4767 = vunpack.c.l.b16 %v2700
      %v4768 = vunpack.c.l.b16 %v2701
      %v4769 = vunpack.c.l.b16 %v2702
      %v4770 = vunpack.c.l.b16 %v2703
      %v4771 = vunpack.c.l.b16 %v2704
      %v4772 = vunpack.c.l.b16 %v2705
      %v4773 = vunpack.c.l.b16 %v2706
      %v4774 = vunpack.c.l.b16 %v2707
      %v4775 = vunpack.c.l.b16 %v2708
      %v4776 = vunpack.c.l.b16 %v2709
      %v4777 = vunpack.c.l.b16 %v2710
      %v4778 = vunpack.c.l.b16 %v2711
      %v4779 = vunpack.c.l.b16 %v2712
      %v4780 = vunpack.c.l.b16 %v2713
      %v4781 = vunpack.c.l.b16 %v2714
      %v4782 = vunpack.c.l.b16 %v2715
      %v4783 = vunpack.c.l.b16 %v2716
      %v4784 = vunpack.c.l.b16 %v2717
      %v4785 = vunpack.c.l.b16 %v2718
      %v4786 = vunpack.c.l.b16 %v2719
      %v4787 = vunpack.c.l.b16 %v2720
      %v4788 = vunpack.c.l.b16 %v2721
      %v4789 = vunpack.c.l.b16 %v2722
      %v4790 = vunpack.c.l.b16 %v2723
      %v4791 = vunpack.c.l.b16 %v2724
      %v4792 = vunpack.c.l.b16 %v2725
      %v4793 = vunpack.c.l.b16 %v2726
      %v4794 = vunpack.c.l.b16 %v2727
      %v4795 = vunpack.c.l.b16 %v2728
      %v4796 = vunpack.c.l.b16 %v2729
      %v4797 = vunpack.c.l.b16 %v2730
      %v4798 = vunpack.c.l.b16 %v2731
      %v4799 = vunpack.c.l.b16 %v2732
      %v4800 = vunpack.c.l.b16 %v2733
      %v4801 = vunpack.c.l.b16 %v2734
      %v4802 = vunpack.c.l.b16 %v2735
      %v4803 = vunpack.c.l.b16 %v2736
      %v4804 = vunpack.c.l.b16 %v2737
      %v4805 = vunpack.c.l.b16 %v2738
      %v4806 = vunpack.c.l.b16 %v2739
      %v4807 = vunpack.c.l.b16 %v2740
      %v4808 = vunpack.c.l.b16 %v2741
      %v4809 = vunpack.c.l.b16 %v2742
      %v4810 = vunpack.c.l.b16 %v2743
      %v4811 = vunpack.c.l.b16 %v2744
      %v4812 = vunpack.c.l.b16 %v2745
      %v4813 = vunpack.c.l.b16 %v2746
      %v4814 = vunpack.c.l.b16 %v2747
      %v4815 = vunpack.c.l.b16 %v2748
      %v4816 = vunpack.c.l.b16 %v2749
      %v4817 = vunpack.c.l.b16 %v2750
      %v4818 = vunpack.c.l.b16 %v2751
      %v4819 = vunpack.c.l.b16 %v2752
      %v4820 = vunpack.c.l.b16 %v2753
      %v4821 = vunpack.c.l.b16 %v2754
      %v4822 = vunpack.c.l.b16 %v2755
      %v4823 = vunpack.c.l.b16 %v2756
      %v4824 = vunpack.c.l.b16 %v2757
      %v4825 = vunpack.c.l.b16 %v2758
      %v4826 = vunpack.c.l.b16 %v2759
      %v4827 = vunpack.c.l.b16 %v2760
      %v4828 = vunpack.c.l.b16 %v2761
      %v4829 = vunpack.c.l.b16 %v2762
      %v4830 = vunpack.c.l.b16 %v2763
      %v4831 = vunpack.c.l.b16 %v2764
      %v4832 = vunpack.c.l.b16 %v2765
      %v4833 = vunpack.c.l.b16 %v2766
      %v4834 = vunpack.c.l.b16 %v2767
      %v4835 = vunpack.c.l.b16 %v2768
      %v4836 = vunpack.c.l.b16 %v2769
      %v4837 = vunpack.c.l.b16 %v2770
      %v4838 = vunpack.c.l.b16 %v2771
      %v4839 = vunpack.c.l.b16 %v2772
      %v4840 = vunpack.c.l.b16 %v2773
      %v4841 = vunpack.c.l.b16 %v2774
      %v4842 = vunpack.c.l.b16 %v2775
      %v4843 = vunpack.c.l.b16 %v2776
      %v4844 = vunpack.c.l.b16 %v2777
      %v4845 = vunpack.c.l.b16 %v2778
      %v4846 = vunpack.c.l.b16 %v2779
      %v4847 = vunpack.c.l.b16 %v2780
      %v4848 = vunpack.c.l.b16 %v2781
      %v4849 = vunpack.c.l.b16 %v2782
      %v4850 = vunpack.c.l.b16 %v2783
      %v4851 = vunpack.c.l.b16 %v2784
      %v4852 = vunpack.c.l.b16 %v2785
      %v4853 = vunpack.c.l.b16 %v2786
      %v4854 = vunpack.c.l.b16 %v2787
      %v4855 = vunpack.c.l.b16 %v2788
      %v4856 = vunpack.c.l.b16 %v2789
      %v4857 = vunpack.c.l.b16 %v2790
      %v4858 = vunpack.c.l.b16 %v2791
      %v4859 = vunpack.c.l.b16 %v2792
      %v4860 = vunpack.c.l.b16 %v2793
      %v4861 = vunpack.c.l.b16 %v2794
      %v4862 = vunpack.c.l.b16 %v2795
      %v4863 = vunpack.c.l.b16 %v2796
      %v4864 = vunpack.c.l.b16 %v2797
      %v4865 = vunpack.c.l.b16 %v2798
      %v4866 = vunpack.c.l.b16 %v2799
      %v4867 = vunpack.c.l.b16 %v2800
      %v4868 = vunpack.c.l.b16 %v2801
      %v4869 = vunpack.c.l.b16 %v2802
      %v4870 = vunpack.c.l.b16 %v2803
      %v4871 = vunpack.c.l.b16 %v2804
      %v4872 = vunpack.c.l.b16 %v2805
      %v4873 = vunpack.c.l.b16 %v2806
      %v4874 = vunpack.c.l.b16 %v2807
      %v4875 = vunpack.c.l.b16 %v2808
      %v4876 = vunpack.c.l.b16 %v2809
      %v4877 = vunpack.c.l.b16 %v2810
      %v4878 = vunpack.c.l.b16 %v2811
      %v4879 = vunpack.c.l.b16 %v2812
      %v4880 = vunpack.c.l.b16 %v2813
      %v4881 = vunpack.c.l.b16 %v2814
      %v4882 = vunpack.c.l.b16 %v2815
      %v4883 = vunpack.c.l.b16 %v2816
      %v4884 = vunpack.c.l.b16 %v2817
      %v4885 = vunpack.c.l.b16 %v2818
      %v4886 = vunpack.c.l.b16 %v2819
      %v4887 = vunpack.c.l.b16 %v2820
      %v4888 = vunpack.c.l.b16 %v2821
      %v4889 = vunpack.c.l.b16 %v2822
      %v4890 = vunpack.c.l.b16 %v2823
      %v4891 = vunpack.c.l.b16 %v2824
      %v4892 = vunpack.c.l.b16 %v2825
      %v4893 = vunpack.c.l.b16 %v2826
      %v4894 = vunpack.c.l.b16 %v2827
      %v4895 = vunpack.c.l.b16 %v2828
      %v4896 = vunpack.c.l.b16 %v2829
      %v4897 = vunpack.c.l.b16 %v2830
      %v4898 = vunpack.c.l.b16 %v2831
      %v4899 = vunpack.c.l.b16 %v2832
      %v4900 = vunpack.c.l.b16 %v2833
      %v4901 = vunpack.c.l.b16 %v2834
      %v4902 = vunpack.c.l.b16 %v2835
      %v4903 = vunpack.c.l.b16 %v2836
      %v4904 = vunpack.c.l.b16 %v2837
      %v4905 = vunpack.c.l.b16 %v2838
      %v4906 = vunpack.c.l.b16 %v2839
      %v4907 = vunpack.c.l.b16 %v2840
      %v4908 = vunpack.c.l.b16 %v2841
      %v4909 = vunpack.c.l.b16 %v2842
      %v4910 = vunpack.c.l.b16 %v2843
      %v4911 = vunpack.c.l.b16 %v2844
      %v4912 = vunpack.c.l.b16 %v2845
      %v4913 = vunpack.c.l.b16 %v2846
      %v4914 = vunpack.c.l.b16 %v2847
      %v4915 = vunpack.c.l.b16 %v2848
      %v4916 = vunpack.c.l.b16 %v2849
      %v4917 = vunpack.c.l.b16 %v2850
      %v4918 = vunpack.c.l.b16 %v2851
      %v4919 = vunpack.c.l.b16 %v2852
      %v4920 = vunpack.c.l.b16 %v2853
      %v4921 = vunpack.c.l.b16 %v2854
      %v4922 = vunpack.c.l.b16 %v2855
      %v4923 = vunpack.c.l.b16 %v2856
      %v4924 = vunpack.c.l.b16 %v2857
      %v4925 = vunpack.c.l.b16 %v2858
      %v4926 = vunpack.c.l.b16 %v2859
      %v4927 = vunpack.c.l.b16 %v2860
      %v4928 = vunpack.c.l.b16 %v2861
      %v4929 = vunpack.c.l.b16 %v2862
      %v4930 = vunpack.c.l.b16 %v2863
      %v4931 = vunpack.c.l.b16 %v2864
      %v4932 = vunpack.c.l.b16 %v2865
      %v4933 = vunpack.c.l.b16 %v2866
      %v4934 = vunpack.c.l.b16 %v2867
      %v4935 = vunpack.c.l.b16 %v2868
      %v4936 = vunpack.c.l.b16 %v2869
      %v4937 = vunpack.c.l.b16 %v2870
      %v4938 = vunpack.c.l.b16 %v2871
      %v4939 = vunpack.c.l.b16 %v2872
      %v4940 = vunpack.c.l.b16 %v2873
      %v4941 = vunpack.c.l.b16 %v2874
      %v4942 = vunpack.c.l.b16 %v2875
      %v4943 = vunpack.c.l.b16 %v2876
      %v4944 = vunpack.c.l.b16 %v2877
      %v4945 = vunpack.c.l.b16 %v2878
      %v4946 = vunpack.c.l.b16 %v2879
      %v4947 = vunpack.c.l.b16 %v2880
      %v4948 = vunpack.c.l.b16 %v2881
      %v4949 = vunpack.c.l.b16 %v2882
      %v4950 = vunpack.c.l.b16 %v2883
      %v4951 = vunpack.c.l.b16 %v2884
      %v4952 = vunpack.c.l.b16 %v2885
      %v4953 = vunpack.c.l.b16 %v2886
      %v4954 = vunpack.c.l.b16 %v2887
      %v4955 = vunpack.c.l.b16 %v2888
      %v4956 = vunpack.c.l.b16 %v2889
      %v4957 = vunpack.c.l.b16 %v2890
      %v4958 = vunpack.c.l.b16 %v2891
      %v4959 = vunpack.c.l.b16 %v2892
      %v4960 = vunpack.c.l.b16 %v2893
      %v4961 = vunpack.c.l.b16 %v2894
      %v4962 = vunpack.c.l.b16 %v2895
      %v4963 = vunpack.c.l.b16 %v2896
      %v4964 = vunpack.c.l.b16 %v2897
      %v4965 = vunpack.c.l.b16 %v2898
      %v4966 = vunpack.c.l.b16 %v2899
      %v4967 = vunpack.c.l.b16 %v2900
      %v4968 = vunpack.c.l.b16 %v2901
      %v4969 = vunpack.c.l.b16 %v2902
      %v4970 = vunpack.c.l.b16 %v2903
      %v4971 = vunpack.c.l.b16 %v2904
      %v4972 = vunpack.c.l.b16 %v2905
      %v4973 = vunpack.c.l.b16 %v2906
      %v4974 = vunpack.c.l.b16 %v2907
      %v4975 = vunpack.c.l.b16 %v2908
      %v4976 = vunpack.c.l.b16 %v2909
      %v4977 = vunpack.c.l.b16 %v2910
      %v4978 = vunpack.c.l.b16 %v2911
      %v4979 = vunpack.c.l.b16 %v2912
      %v4980 = vunpack.c.l.b16 %v2913
      %v4981 = vunpack.c.l.b16 %v2914
      %v4982 = vunpack.c.l.b16 %v2915
      %v4983 = vunpack.c.l.b16 %v2916
      %v4984 = vunpack.c.l.b16 %v2917
      %v4985 = vunpack.c.l.b16 %v2918
      %v4986 = vunpack.c.l.b16 %v2919
      %v4987 = vunpack.c.l.b16 %v2920
      %v4988 = vunpack.c.l.b16 %v2921
      %v4989 = vunpack.c.l.b16 %v2922
      %v4990 = vunpack.c.l.b16 %v2923
      %v4991 = vunpack.c.l.b16 %v2924
      %v4992 = vunpack.c.l.b16 %v2925
      %v4993 = vunpack.c.l.b16 %v2926
      %v4994 = vunpack.c.l.b16 %v2927
      %v4995 = vunpack.c.l.b16 %v2928
      %v4996 = vunpack.c.l.b16 %v2929
      %v4997 = vunpack.c.l.b16 %v2930
      %v4998 = vunpack.c.l.b16 %v2931
      %v4999 = vunpack.c.l.b16 %v2932
      %v5000 = vunpack.c.l.b16 %v2933
      %v5001 = vunpack.c.l.b16 %v2934
      %v5002 = vunpack.c.l.b16 %v2935
      %v5003 = vunpack.c.l.b16 %v2936
      %v5004 = vunpack.c.l.b16 %v2937
      %v5005 = vunpack.c.l.b16 %v2938
      %v5006 = vunpack.c.l.b16 %v2939
      %v5007 = vunpack.c.l.b16 %v2940
      %v5008 = vunpack.c.l.b16 %v2941
      %v5009 = vunpack.c.l.b16 %v2942
      %v5010 = vunpack.c.l.b16 %v2943
      %v5011 = vunpack.c.l.b16 %v2944
      %v5012 = vunpack.c.l.b16 %v2945
      %v5013 = vunpack.c.l.b16 %v2946
      %v5014 = vunpack.c.l.b16 %v2947
      %v5015 = vunpack.c.l.b16 %v2948
      %v5016 = vunpack.c.l.b16 %v2949
      %v5017 = vunpack.c.l.b16 %v2950
      %v5018 = vunpack.c.l.b16 %v2951
      %v5019 = vunpack.c.l.b16 %v2952
      %v5020 = vunpack.c.l.b16 %v2953
      %v5021 = vunpack.c.l.b16 %v2954
      %v5022 = vunpack.c.l.b16 %v2955
      %v5023 = vunpack.c.l.b16 %v2956
      %v5024 = vunpack.c.l.b16 %v2957
      %v5025 = vunpack.c.l.b16 %v2958
      %v5026 = vunpack.c.l.b16 %v2959
      %v5027 = vunpack.c.l.b16 %v2960
      %v5028 = vunpack.c.l.b16 %v2961
      %v5029 = vunpack.c.l.b16 %v2962
      %v5030 = vunpack.c.l.b16 %v2963
      %v5031 = vunpack.c.l.b16 %v2964
      %v5032 = vunpack.c.l.b16 %v2965
      %v5033 = vunpack.c.l.b16 %v2966
      %v5034 = vunpack.c.l.b16 %v2967
      %v5035 = vunpack.c.l.b16 %v2968
      %v5036 = vunpack.c.l.b16 %v2969
      %v5037 = vunpack.c.l.b16 %v2970
      %v5038 = vunpack.c.l.b16 %v2971
      %v5039 = vunpack.c.l.b16 %v2972
      %v5040 = vunpack.c.l.b16 %v2973
      %v5041 = vunpack.c.l.b16 %v2974
      %v5042 = vunpack.c.l.b16 %v2975
      %v5043 = vunpack.c.l.b16 %v2976
      %v5044 = vunpack.c.l.b16 %v2977
      %v5045 = vunpack.c.l.b16 %v2978
      %v5046 = vunpack.c.l.b16 %v2979
      %v5047 = vunpack.c.l.b16 %v2980
      %v5048 = vunpack.c.l.b16 %v2981
      %v5049 = vunpack.c.l.b16 %v2982
      %v5050 = vunpack.c.l.b16 %v2983
      %v5051 = vunpack.c.l.b16 %v2984
      %v5052 = vunpack.c.l.b16 %v2985
      %v5053 = vunpack.c.l.b16 %v2986
      %v5054 = vunpack.c.l.b16 %v2987
      %v5055 = vunpack.c.l.b16 %v2988
      %v5056 = vunpack.c.l.b16 %v2989
      %v5057 = vunpack.c.l.b16 %v2990
      %v5058 = vunpack.c.l.b16 %v2991
      %v5059 = vunpack.c.l.b16 %v2992
      %v5060 = vunpack.c.l.b16 %v2993
      %v5061 = vunpack.c.l.b16 %v2994
      %v5062 = vunpack.c.l.b16 %v2995
      %v5063 = vunpack.c.l.b16 %v2996
      %v5064 = vunpack.c.l.b16 %v2997
      %v5065 = vunpack.c.l.b16 %v2998
      %v5066 = vunpack.c.l.b16 %v2999
      %v5067 = vunpack.c.l.b16 %v3000
      %v5068 = vunpack.c.l.b16 %v3001
      %v5069 = vunpack.c.l.b16 %v3002
      %v5070 = vunpack.c.l.b16 %v3003
      %v5071 = vunpack.c.l.b16 %v3004
      %v5072 = vunpack.c.l.b16 %v3005
      %v5073 = vunpack.c.l.b16 %v3006
      %v5074 = vunpack.c.l.b16 %v3007
      %v5075 = vunpack.c.l.b16 %v3008
      %v5076 = vunpack.c.l.b16 %v3009
      %v5077 = vunpack.c.l.b16 %v3010
      %v5078 = vunpack.c.l.b16 %v3011
      %v5079 = vunpack.c.l.b16 %v3012
      %v5080 = vunpack.c.l.b16 %v3013
      %v5081 = vunpack.c.l.b16 %v3014
      %v5082 = vunpack.c.l.b16 %v3015
      %v5083 = vunpack.c.l.b16 %v3016
      %v5084 = vunpack.c.l.b16 %v3017
      %v5085 = vunpack.c.l.b16 %v3018
      %v5086 = vunpack.c.l.b16 %v3019
      %v5087 = vunpack.c.l.b16 %v3020
      %v5088 = vunpack.c.l.b16 %v3021
      %v5089 = vunpack.c.l.b16 %v3022
      %v5090 = vunpack.c.l.b16 %v3023
      %v5091 = vunpack.c.l.b16 %v3024
      %v5092 = vunpack.c.l.b16 %v3025
      %v5093 = vunpack.c.l.b16 %v3026
      %v5094 = vunpack.c.l.b16 %v3027
      %v5095 = vunpack.c.l.b16 %v3028
      %v5096 = vunpack.c.l.b16 %v3029
      %v5097 = vunpack.c.l.b16 %v3030
      %v5098 = vunpack.c.l.b16 %v3031
      %v5099 = vunpack.c.l.b16 %v3032
      %v5100 = vunpack.c.l.b16 %v3033
      %v5101 = vunpack.c.l.b16 %v3034
      %v5102 = vunpack.c.l.b16 %v3035
      %v5103 = vunpack.c.l.b16 %v3036
      %v5104 = vunpack.c.l.b16 %v3037
      %v5105 = vunpack.c.l.b16 %v3038
      %v5106 = vunpack.c.l.b16 %v3039
      %v5107 = vunpack.c.l.b16 %v3040
      %v5108 = vunpack.c.l.b16 %v3041
      %v5109 = vunpack.c.l.b16 %v3042
      %v5110 = vunpack.c.l.b16 %v3043
      %v5111 = vunpack.c.l.b16 %v3044
      %v5112 = vunpack.c.l.b16 %v3045
      %v5113 = vunpack.c.l.b16 %v3046
      %v5114 = vunpack.c.l.b16 %v3047
      %v5115 = vunpack.c.l.b16 %v3048
      %v5116 = vunpack.c.l.b16 %v3049
      %v5117 = vunpack.c.l.b16 %v3050
      %v5118 = vunpack.c.l.b16 %v3051
      %v5119 = vunpack.c.l.b16 %v3052
      %v5120 = vunpack.c.l.b16 %v3053
      %v5121 = vunpack.c.l.b16 %v3054
      %v5122 = vunpack.c.l.b16 %v3055
      %v5123 = vunpack.c.l.b16 %v3056
      %v5124 = vunpack.c.l.b16 %v3057
      %v5125 = vunpack.c.l.b16 %v3058
      %v5126 = vunpack.c.l.b16 %v3059
      %v5127 = vunpack.c.l.b16 %v3060
      %v5128 = vunpack.c.l.b16 %v3061
      %v5129 = vunpack.c.l.b16 %v3062
      %v5130 = vunpack.c.l.b16 %v3063
      %v5131 = vunpack.c.l.b16 %v3064
      %v5132 = vunpack.c.l.b16 %v3065
      %v5133 = vunpack.c.l.b16 %v3066
      %v5134 = vunpack.c.l.b16 %v3067
      %v5135 = vunpack.c.l.b16 %v3068
      %v5136 = vunpack.c.l.b16 %v3069
      %v5137 = vunpack.c.l.b16 %v3070
      %v5138 = vunpack.c.l.b16 %v3071
      %v5139 = vunpack.c.l.b16 %v3072
      %v5140 = vunpack.c.l.b16 %v3073
      %v5141 = vunpack.c.l.b16 %v3074
      %v5142 = vunpack.c.l.b16 %v3075
      %v5143 = vunpack.c.l.b16 %v3076
      %v5144 = vunpack.c.l.b16 %v3077
      %v5145 = vunpack.c.l.b16 %v3078
      %v5146 = vpack.c.b16 %v4363, %v4362
      %v5147 = vpack.c.b16 %v4365, %v4364
      %v5148 = vpack.c.b16 %v4367, %v4366
      %v5149 = vpack.c.b16 %v4369, %v4368
      %v5150 = vpack.c.b16 %v4371, %v4370
      %v5151 = vpack.c.b16 %v4373, %v4372
      %v5152 = vpack.c.b16 %v4375, %v4374
      %v5153 = vpack.c.b16 %v4377, %v4376
      %v5154 = vpack.c.b16 %v4379, %v4378
      %v5155 = vpack.c.b16 %v4381, %v4380
      %v5156 = vpack.c.b16 %v4383, %v4382
      %v5157 = vpack.c.b16 %v4385, %v4384
      %v5158 = vpack.c.b16 %v4387, %v4386
      %v5159 = vpack.c.b16 %v4389, %v4388
      %v5160 = vpack.c.b16 %v4391, %v4390
      %v5161 = vpack.c.b16 %v4393, %v4392
      %v5162 = vpack.c.b16 %v4395, %v4394
      %v5163 = vpack.c.b16 %v4397, %v4396
      %v5164 = vpack.c.b16 %v4399, %v4398
      %v5165 = vpack.c.b16 %v4401, %v4400
      %v5166 = vpack.c.b16 %v4403, %v4402
      %v5167 = vpack.c.b16 %v4405, %v4404
      %v5168 = vpack.c.b16 %v4407, %v4406
      %v5169 = vpack.c.b16 %v4409, %v4408
      %v5170 = vpack.c.b16 %v4411, %v4410
      %v5171 = vpack.c.b16 %v4413, %v4412
      %v5172 = vpack.c.b16 %v4415, %v4414
      %v5173 = vpack.c.b16 %v4417, %v4416
      %v5174 = vpack.c.b16 %v4419, %v4418
      %v5175 = vpack.c.b16 %v4421, %v4420
      %v5176 = vpack.c.b16 %v4423, %v4422
      %v5177 = vpack.c.b16 %v4425, %v4424
      %v5178 = vpack.c.b16 %v4427, %v4426
      %v5179 = vpack.c.b16 %v4429, %v4428
      %v5180 = vpack.c.b16 %v4431, %v4430
      %v5181 = vpack.c.b16 %v4433, %v4432
      %v5182 = vpack.c.b16 %v4435, %v4434
      %v5183 = vpack.c.b16 %v4437, %v4436
      %v5184 = vpack.c.b16 %v4439, %v4438
      %v5185 = vpack.c.b16 %v4441, %v4440
      %v5186 = vpack.c.b16 %v4443, %v4442
      %v5187 = vpack.c.b16 %v4445, %v4444
      %v5188 = vpack.c.b16 %v4447, %v4446
      %v5189 = vpack.c.b16 %v4449, %v4448
      %v5190 = vpack.c.b16 %v4451, %v4450
      %v5191 = vpack.c.b16 %v4453, %v4452
      %v5192 = vpack.c.b16 %v4455, %v4454
      %v5193 = vpack.c.b16 %v4457, %v4456
      %v5194 = vpack.c.b16 %v4459, %v4458
      %v5195 = vpack.c.b16 %v4461, %v4460
      %v5196 = vpack.c.b16 %v4463, %v4462
      %v5197 = vpack.c.b16 %v4465, %v4464
      %v5198 = vpack.c.b16 %v4467, %v4466
      %v5199 = vpack.c.b16 %v4469, %v4468
      %v5200 = vpack.c.b16 %v4471, %v4470
      %v5201 = vpack.c.b16 %v4473, %v4472
      %v5202 = vpack.c.b16 %v4475, %v4474
      %v5203 = vpack.c.b16 %v4477, %v4476
      %v5204 = vpack.c.b16 %v4479, %v4478
      %v5205 = vpack.c.b16 %v4481, %v4480
      %v5206 = vpack.c.b16 %v4483, %v4482
      %v5207 = vpack.c.b16 %v4485, %v4484
      %v5208 = vpack.c.b16 %v4487, %v4486
      %v5209 = vpack.c.b16 %v4489, %v4488
      %v5210 = vpack.c.b16 %v4491, %v4490
      %v5211 = vpack.c.b16 %v4493, %v4492
      %v5212 = vpack.c.b16 %v4495, %v4494
      %v5213 = vpack.c.b16 %v4497, %v4496
      %v5214 = vpack.c.b16 %v4499, %v4498
      %v5215 = vpack.c.b16 %v4501, %v4500
      %v5216 = vpack.c.b16 %v4503, %v4502
      %v5217 = vpack.c.b16 %v4505, %v4504
      %v5218 = vpack.c.b16 %v4507, %v4506
      %v5219 = vpack.c.b16 %v4509, %v4508
      %v5220 = vpack.c.b16 %v4511, %v4510
      %v5221 = vpack.c.b16 %v4513, %v4512
      %v5222 = vpack.c.b16 %v4515, %v4514
      %v5223 = vpack.c.b16 %v4517, %v4516
      %v5224 = vpack.c.b16 %v4519, %v4518
      %v5225 = vpack.c.b16 %v4521, %v4520
      %v5226 = vpack.c.b16 %v4523, %v4522
      %v5227 = vpack.c.b16 %v4525, %v4524
      %v5228 = vpack.c.b16 %v4527, %v4526
      %v5229 = vpack.c.b16 %v4529, %v4528
      %v5230 = vpack.c.b16 %v4531, %v4530
      %v5231 = vpack.c.b16 %v4533, %v4532
      %v5232 = vpack.c.b16 %v4535, %v4534
      %v5233 = vpack.c.b16 %v4537, %v4536
      %v5234 = vpack.c.b16 %v4539, %v4538
      %v5235 = vpack.c.b16 %v4541, %v4540
      %v5236 = vpack.c.b16 %v4543, %v4542
      %v5237 = vpack.c.b16 %v4545, %v4544
      %v5238 = vpack.c.b16 %v4547, %v4546
      %v5239 = vpack.c.b16 %v4549, %v4548
      %v5240 = vpack.c.b16 %v4551, %v4550
      %v5241 = vpack.c.b16 %v4553, %v4552
      %v5242 = vpack.c.b16 %v4555, %v4554
      %v5243 = vpack.c.b16 %v4557, %v4556
      %v5244 = vpack.c.b16 %v4559, %v4558
      %v5245 = vpack.c.b16 %v4561, %v4560
      %v5246 = vpack.c.b16 %v4563, %v4562
      %v5247 = vpack.c.b16 %v4565, %v4564
      %v5248 = vpack.c.b16 %v4567, %v4566
      %v5249 = vpack.c.b16 %v4569, %v4568
      %v5250 = vpack.c.b16 %v4571, %v4570
      %v5251 = vpack.c.b16 %v4573, %v4572
      %v5252 = vpack.c.b16 %v4575, %v4574
      %v5253 = vpack.c.b16 %v4577, %v4576
      %v5254 = vpack.c.b16 %v4579, %v4578
      %v5255 = vpack.c.b16 %v4581, %v4580
      %v5256 = vpack.c.b16 %v4583, %v4582
      %v5257 = vpack.c.b16 %v4585, %v4584
      %v5258 = vpack.c.b16 %v4587, %v4586
      %v5259 = vpack.c.b16 %v4589, %v4588
      %v5260 = vpack.c.b16 %v4591, %v4590
      %v5261 = vpack.c.b16 %v4593, %v4592
      %v5262 = vpack.c.b16 %v4595, %v4594
      %v5263 = vpack.c.b16 %v4597, %v4596
      %v5264 = vpack.c.b16 %v4599, %v4598
      %v5265 = vpack.c.b16 %v4601, %v4600
      %v5266 = vpack.c.b16 %v4603, %v4602
      %v5267 = vpack.c.b16 %v4605, %v4604
      %v5268 = vpack.c.b16 %v4607, %v4606
      %v5269 = vpack.c.b16 %v4609, %v4608
      %v5270 = vpack.c.b16 %v4611, %v4610
      %v5271 = vpack.c.b16 %v4613, %v4612
      %v5272 = vpack.c.b16 %v4615, %v4614
      %v5273 = vpack.c.b16 %v4617, %v4616
      %v5274 = vpack.c.b16 %v4619, %v4618
      %v5275 = vpack.c.b16 %v4621, %v4620
      %v5276 = vpack.c.b16 %v4623, %v4622
      %v5277 = vpack.c.b16 %v4625, %v4624
      %v5278 = vpack.c.b16 %v4627, %v4626
      %v5279 = vpack.c.b16 %v4629, %v4628
      %v5280 = vpack.c.b16 %v4631, %v4630
      %v5281 = vpack.c.b16 %v4633, %v4632
      %v5282 = vpack.c.b16 %v4635, %v4634
      %v5283 = vpack.c.b16 %v4637, %v4636
      %v5284 = vpack.c.b16 %v4639, %v4638
      %v5285 = vpack.c.b16 %v4641, %v4640
      %v5286 = vpack.c.b16 %v4643, %v4642
      %v5287 = vpack.c.b16 %v4645, %v4644
      %v5288 = vpack.c.b16 %v4647, %v4646
      %v5289 = vpack.c.b16 %v4649, %v4648
      %v5290 = vpack.c.b16 %v4651, %v4650
      %v5291 = vpack.c.b16 %v4653, %v4652
      %v5292 = vpack.c.b16 %v4655, %v4654
      %v5293 = vpack.c.b16 %v4657, %v4656
      %v5294 = vpack.c.b16 %v4659, %v4658
      %v5295 = vpack.c.b16 %v4661, %v4660
      %v5296 = vpack.c.b16 %v4663, %v4662
      %v5297 = vpack.c.b16 %v4665, %v4664
      %v5298 = vpack.c.b16 %v4667, %v4666
      %v5299 = vpack.c.b16 %v4669, %v4668
      %v5300 = vpack.c.b16 %v4671, %v4670
      %v5301 = vpack.c.b16 %v4673, %v4672
      %v5302 = vpack.c.b16 %v4675, %v4674
      %v5303 = vpack.c.b16 %v4677, %v4676
      %v5304 = vpack.c.b16 %v4679, %v4678
      %v5305 = vpack.c.b16 %v4681, %v4680
      %v5306 = vpack.c.b16 %v4683, %v4682
      %v5307 = vpack.c.b16 %v4685, %v4684
      %v5308 = vpack.c.b16 %v4687, %v4686
      %v5309 = vpack.c.b16 %v4689, %v4688
      %v5310 = vpack.c.b16 %v4691, %v4690
      %v5311 = vpack.c.b16 %v4693, %v4692
      %v5312 = vpack.c.b16 %v4695, %v4694
      %v5313 = vpack.c.b16 %v4697, %v4696
      %v5314 = vpack.c.b16 %v4699, %v4698
      %v5315 = vpack.c.b16 %v4701, %v4700
      %v5316 = vpack.c.b16 %v4703, %v4702
      %v5317 = vpack.c.b16 %v4705, %v4704
      %v5318 = vpack.c.b16 %v4707, %v4706
      %v5319 = vpack.c.b16 %v4709, %v4708
      %v5320 = vpack.c.b16 %v4711, %v4710
      %v5321 = vpack.c.b16 %v4713, %v4712
      %v5322 = vpack.c.b16 %v4715, %v4714
      %v5323 = vpack.c.b16 %v4717, %v4716
      %v5324 = vpack.c.b16 %v4719, %v4718
      %v5325 = vpack.c.b16 %v4721, %v4720
      %v5326 = vpack.c.b16 %v4723, %v4722
      %v5327 = vpack.c.b16 %v4725, %v4724
      %v5328 = vpack.c.b16 %v4727, %v4726
      %v5329 = vpack.c.b16 %v4729, %v4728
      %v5330 = vpack.c.b16 %v4731, %v4730
      %v5331 = vpack.c.b16 %v4733, %v4732
      %v5332 = vpack.c.b16 %v4735, %v4734
      %v5333 = vpack.c.b16 %v4737, %v4736
      %v5334 = vpack.c.b16 %v4739, %v4738
      %v5335 = vpack.c.b16 %v4741, %v4740
      %v5336 = vpack.c.b16 %v4743, %v4742
      %v5337 = vpack.c.b16 %v4745, %v4744
      %v5338 = vpack.c.b16 %v4747, %v4746
      %v5339 = vpack.c.b16 %v4749, %v4748
      %v5340 = vpack.c.b16 %v4751, %v4750
      %v5341 = vpack.c.b16 %v4753, %v4752
      %v5342 = vpack.c.b16 %v4755, %v4754
      %v5343 = vpack.c.b16 %v4757, %v4756
      %v5344 = vpack.c.b16 %v4759, %v4758
      %v5345 = vpack.c.b16 %v4761, %v4760
      %v5346 = vpack.c.b16 %v4763, %v4762
      %v5347 = vpack.c.b16 %v4765, %v4764
      %v5348 = vpack.c.b16 %v4767, %v4766
      %v5349 = vpack.c.b16 %v4769, %v4768
      %v5350 = vpack.c.b16 %v4771, %v4770
      %v5351 = vpack.c.b16 %v4773, %v4772
      %v5352 = vpack.c.b16 %v4775, %v4774
      %v5353 = vpack.c.b16 %v4777, %v4776
      %v5354 = vpack.c.b16 %v4779, %v4778
      %v5355 = vpack.c.b16 %v4781, %v4780
      %v5356 = vpack.c.b16 %v4783, %v4782
      %v5357 = vpack.c.b16 %v4785, %v4784
      %v5358 = vpack.c.b16 %v4787, %v4786
      %v5359 = vpack.c.b16 %v4789, %v4788
      %v5360 = vpack.c.b16 %v4791, %v4790
      %v5361 = vpack.c.b16 %v4793, %v4792
      %v5362 = vpack.c.b16 %v4795, %v4794
      %v5363 = vpack.c.b16 %v4797, %v4796
      %v5364 = vpack.c.b16 %v4799, %v4798
      %v5365 = vpack.c.b16 %v4801, %v4800
      %v5366 = vpack.c.b16 %v4803, %v4802
      %v5367 = vpack.c.b16 %v4805, %v4804
      %v5368 = vpack.c.b16 %v4807, %v4806
      %v5369 = vpack.c.b16 %v4809, %v4808
      %v5370 = vpack.c.b16 %v4811, %v4810
      %v5371 = vpack.c.b16 %v4813, %v4812
      %v5372 = vpack.c.b16 %v4815, %v4814
      %v5373 = vpack.c.b16 %v4817, %v4816
      %v5374 = vpack.c.b16 %v4819, %v4818
      %v5375 = vpack.c.b16 %v4821, %v4820
      %v5376 = vpack.c.b16 %v4823, %v4822
      %v5377 = vpack.c.b16 %v4825, %v4824
      %v5378 = vpack.c.b16 %v4827, %v4826
      %v5379 = vpack.c.b16 %v4829, %v4828
      %v5380 = vpack.c.b16 %v4831, %v4830
      %v5381 = vpack.c.b16 %v4833, %v4832
      %v5382 = vpack.c.b16 %v4835, %v4834
      %v5383 = vpack.c.b16 %v4837, %v4836
      %v5384 = vpack.c.b16 %v4839, %v4838
      %v5385 = vpack.c.b16 %v4841, %v4840
      %v5386 = vpack.c.b16 %v4843, %v4842
      %v5387 = vpack.c.b16 %v4845, %v4844
      %v5388 = vpack.c.b16 %v4847, %v4846
      %v5389 = vpack.c.b16 %v4849, %v4848
      %v5390 = vpack.c.b16 %v4851, %v4850
      %v5391 = vpack.c.b16 %v4853, %v4852
      %v5392 = vpack.c.b16 %v4855, %v4854
      %v5393 = vpack.c.b16 %v4857, %v4856
      %v5394 = vpack.c.b16 %v4859, %v4858
      %v5395 = vpack.c.b16 %v4861, %v4860
      %v5396 = vpack.c.b16 %v4863, %v4862
      %v5397 = vpack.c.b16 %v4865, %v4864
      %v5398 = vpack.c.b16 %v4867, %v4866
      %v5399 = vpack.c.b16 %v4869, %v4868
      %v5400 = vpack.c.b16 %v4871, %v4870
      %v5401 = vpack.c.b16 %v4873, %v4872
      %v5402 = vpack.c.b16 %v4875, %v4874
      %v5403 = vpack.c.b16 %v4877, %v4876
      %v5404 = vpack.c.b16 %v4879, %v4878
      %v5405 = vpack.c.b16 %v4881, %v4880
      %v5406 = vpack.c.b16 %v4883, %v4882
      %v5407 = vpack.c.b16 %v4885, %v4884
      %v5408 = vpack.c.b16 %v4887, %v4886
      %v5409 = vpack.c.b16 %v4889, %v4888
      %v5410 = vpack.c.b16 %v4891, %v4890
      %v5411 = vpack.c.b16 %v4893, %v4892
      %v5412 = vpack.c.b16 %v4895, %v4894
      %v5413 = vpack.c.b16 %v4897, %v4896
      %v5414 = vpack.c.b16 %v4899, %v4898
      %v5415 = vpack.c.b16 %v4901, %v4900
      %v5416 = vpack.c.b16 %v4903, %v4902
      %v5417 = vpack.c.b16 %v4905, %v4904
      %v5418 = vpack.c.b16 %v4907, %v4906
      %v5419 = vpack.c.b16 %v4909, %v4908
      %v5420 = vpack.c.b16 %v4911, %v4910
      %v5421 = vpack.c.b16 %v4913, %v4912
      %v5422 = vpack.c.b16 %v4915, %v4914
      %v5423 = vpack.c.b16 %v4917, %v4916
      %v5424 = vpack.c.b16 %v4919, %v4918
      %v5425 = vpack.c.b16 %v4921, %v4920
      %v5426 = vpack.c.b16 %v4923, %v4922
      %v5427 = vpack.c.b16 %v4925, %v4924
      %v5428 = vpack.c.b16 %v4927, %v4926
      %v5429 = vpack.c.b16 %v4929, %v4928
      %v5430 = vpack.c.b16 %v4931, %v4930
      %v5431 = vpack.c.b16 %v4933, %v4932
      %v5432 = vpack.c.b16 %v4935, %v4934
      %v5433 = vpack.c.b16 %v4937, %v4936
      %v5434 = vpack.c.b16 %v4939, %v4938
      %v5435 = vpack.c.b16 %v4941, %v4940
      %v5436 = vpack.c.b16 %v4943, %v4942
      %v5437 = vpack.c.b16 %v4945, %v4944
      %v5438 = vpack.c.b16 %v4947, %v4946
      %v5439 = vpack.c.b16 %v4949, %v4948
      %v5440 = vpack.c.b16 %v4951, %v4950
      %v5441 = vpack.c.b16 %v4953, %v4952
      %v5442 = vpack.c.b16 %v4955, %v4954
      %v5443 = vpack.c.b16 %v4957, %v4956
      %v5444 = vpack.c.b16 %v4959, %v4958
      %v5445 = vpack.c.b16 %v4961, %v4960
      %v5446 = vpack.c.b16 %v4963, %v4962
      %v5447 = vpack.c.b16 %v4965, %v4964
      %v5448 = vpack.c.b16 %v4967, %v4966
      %v5449 = vpack.c.b16 %v4969, %v4968
      %v5450 = vpack.c.b16 %v4971, %v4970
      %v5451 = vpack.c.b16 %v4973, %v4972
      %v5452 = vpack.c.b16 %v4975, %v4974
      %v5453 = vpack.c.b16 %v4977, %v4976
      %v5454 = vpack.c.b16 %v4979, %v4978
      %v5455 = vpack.c.b16 %v4981, %v4980
      %v5456 = vpack.c.b16 %v4983, %v4982
      %v5457 = vpack.c.b16 %v4985, %v4984
      %v5458 = vpack.c.b16 %v4987, %v4986
      %v5459 = vpack.c.b16 %v4989, %v4988
      %v5460 = vpack.c.b16 %v4991, %v4990
      %v5461 = vpack.c.b16 %v4993, %v4992
      %v5462 = vpack.c.b16 %v4995, %v4994
      %v5463 = vpack.c.b16 %v4997, %v4996
      %v5464 = vpack.c.b16 %v4999, %v4998
      %v5465 = vpack.c.b16 %v5001, %v5000
      %v5466 = vpack.c.b16 %v5003, %v5002
      %v5467 = vpack.c.b16 %v5005, %v5004
      %v5468 = vpack.c.b16 %v5007, %v5006
      %v5469 = vpack.c.b16 %v5009, %v5008
      %v5470 = vpack.c.b16 %v5011, %v5010
      %v5471 = vpack.c.b16 %v5013, %v5012
      %v5472 = vpack.c.b16 %v5015, %v5014
      %v5473 = vpack.c.b16 %v5017, %v5016
      %v5474 = vpack.c.b16 %v5019, %v5018
      %v5475 = vpack.c.b16 %v5021, %v5020
      %v5476 = vpack.c.b16 %v5023, %v5022
      %v5477 = vpack.c.b16 %v5025, %v5024
      %v5478 = vpack.c.b16 %v5027, %v5026
      %v5479 = vpack.c.b16 %v5029, %v5028
      %v5480 = vpack.c.b16 %v5031, %v5030
      %v5481 = vpack.c.b16 %v5033, %v5032
      %v5482 = vpack.c.b16 %v5035, %v5034
      %v5483 = vpack.c.b16 %v5037, %v5036
      %v5484 = vpack.c.b16 %v5039, %v5038
      %v5485 = vpack.c.b16 %v5041, %v5040
      %v5486 = vpack.c.b16 %v5043, %v5042
      %v5487 = vpack.c.b16 %v5045, %v5044
      %v5488 = vpack.c.b16 %v5047, %v5046
      %v5489 = vpack.c.b16 %v5049, %v5048
      %v5490 = vpack.c.b16 %v5051, %v5050
      %v5491 = vpack.c.b16 %v5053, %v5052
      %v5492 = vpack.c.b16 %v5055, %v5054
      %v5493 = vpack.c.b16 %v5057, %v5056
      %v5494 = vpack.c.b16 %v5059, %v5058
      %v5495 = vpack.c.b16 %v5061, %v5060
      %v5496 = vpack.c.b16 %v5063, %v5062
      %v5497 = vpack.c.b16 %v5065, %v5064
      %v5498 = vpack.c.b16 %v5067, %v5066
      %v5499 = vpack.c.b16 %v5069, %v5068
      %v5500 = vpack.c.b16 %v5071, %v5070
      %v5501 = vpack.c.b16 %v5073, %v5072
      %v5502 = vpack.c.b16 %v5075, %v5074
      %v5503 = vpack.c.b16 %v5077, %v5076
      %v5504 = vpack.c.b16 %v5079, %v5078
      %v5505 = vpack.c.b16 %v5081, %v5080
      %v5506 = vpack.c.b16 %v5083, %v5082
      %v5507 = vpack.c.b16 %v5085, %v5084
      %v5508 = vpack.c.b16 %v5087, %v5086
      %v5509 = vpack.c.b16 %v5089, %v5088
      %v5510 = vpack.c.b16 %v5091, %v5090
      %v5511 = vpack.c.b16 %v5093, %v5092
      %v5512 = vpack.c.b16 %v5095, %v5094
      %v5513 = vpack.c.b16 %v5097, %v5096
      %v5514 = vpack.c.b16 %v5099, %v5098
      %v5515 = vpack.c.b16 %v5101, %v5100
      %v5516 = vpack.c.b16 %v5103, %v5102
      %v5517 = vpack.c.b16 %v5105, %v5104
      %v5518 = vpack.c.b16 %v5107, %v5106
      %v5519 = vpack.c.b16 %v5109, %v5108
      %v5520 = vpack.c.b16 %v5111, %v5110
      %v5521 = vpack.c.b16 %v5113, %v5112
      %v5522 = vpack.c.b16 %v5115, %v5114
      %v5523 = vpack.c.b16 %v5117, %v5116
      %v5524 = vpack.c.b16 %v5119, %v5118
      %v5525 = vpack.c.b16 %v5121, %v5120
      %v5526 = vpack.c.b16 %v5123, %v5122
      %v5527 = vpack.c.b16 %v5125, %v5124
      %v5528 = vpack.c.b16 %v5127, %v5126
      %v5529 = vpack.c.b16 %v5129, %v5128
      %v5530 = vpack.c.b16 %v5131, %v5130
      %v5531 = vpack.c.b16 %v5133, %v5132
      %v5532 = vpack.c.b16 %v5135, %v5134
      %v5533 = vpack.c.b16 %v5137, %v5136
      %v5534 = vpack.c.b16 %v5139, %v5138
      %v5535 = vpack.c.b16 %v5141, %v5140
      %v5536 = vpack.c.b16 %v5143, %v5142
      %v5537 = vpack.c.b16 %v5145, %v5144
      %5930 = vmatprep.subr.bf16.mxu0 0
      %5931 = vmatpush1.bf16.msra.mxu0 %v5153
      %5932 = vmatprep.subr.bf16.mxu0 0
      %5933 = vmatpush1.bf16.msra.mxu0 %v5152
      %5934 = vmatprep.subr.bf16.mxu0 0
      %5935 = vmatpush1.bf16.msra.mxu0 %v5151
      %5936 = vmatprep.subr.bf16.mxu0 0
      %5937 = vmatpush1.bf16.msra.mxu0 %v5150
      %5938 = vmatprep.subr.bf16.mxu0 0
      %5939 = vmatpush1.bf16.msra.mxu0 %v5149
      %5940 = vmatprep.subr.bf16.mxu0 0
      %5941 = vmatpush1.bf16.msra.mxu0 %v5148
      %5942 = vmatprep.subr.bf16.mxu0 0
      %5943 = vmatpush1.bf16.msra.mxu0 %v5147
      %5944 = vmatprep.subr.bf16.mxu0 0
      %5945 = vmatpush1.bf16.msra.mxu0 %v5146
      %5946 = vmatprep.subr.bf16.mxu0 0
      %5947 = vmatpush2.bf16.msra.mxu0 %v5161
      %5948 = vmatprep.subr.bf16.mxu0 0
      %5949 = vmatpush2.bf16.msra.mxu0 %v5160
      %5950 = vmatprep.subr.bf16.mxu0 0
      %5951 = vmatpush2.bf16.msra.mxu0 %v5159
      %5952 = vmatprep.subr.bf16.mxu0 0
      %5953 = vmatpush2.bf16.msra.mxu0 %v5158
      %5954 = vmatprep.subr.bf16.mxu0 0
      %5955 = vmatpush2.bf16.msra.mxu0 %v5157
      %5956 = vmatprep.subr.bf16.mxu0 0
      %5957 = vmatpush2.bf16.msra.mxu0 %v5156
      %5958 = vmatprep.subr.bf16.mxu0 0
      %5959 = vmatpush2.bf16.msra.mxu0 %v5155
      %5960 = vmatprep.subr.bf16.mxu0 0
      %5961 = vmatpush2.bf16.msra.mxu0 %v5154
      %5962 = vmatprep.mubr.bf16.mxu0 %v3383
      %5963 = vmatmul.mubr.bf16.gmra.mxu0 %v3382
      %v5964 = vpop.f32.mrf.mxu0
      %v5965 = vadd.f32 %v3084, %v5964
      %v5966 = vpop.f32.mrf.mxu0
      %v5967 = vpop.f32.mrf.mxu0
      %v5968 = vadd.f32 %v3084, %v5967
      %v5969 = vpop.f32.mrf.mxu0
      %5970 = vmatprep.mubr.bf16.mxu0 %v3432
      %5971 = vmatmul.mubr.bf16.gmra.mxu0 %v3431
      %v5972 = vpop.f32.mrf.mxu0
      %v5973 = vadd.f32 %v3084, %v5972
      %v5974 = vpop.f32.mrf.mxu0
      %v5975 = vpop.f32.mrf.mxu0
      %v5976 = vadd.f32 %v3084, %v5975
      %v5977 = vpop.f32.mrf.mxu0
      %5978 = vdwg.mxu0
      %5979 = vmatprep.subr.bf16.mxu0 0
      %5980 = vmatpush1.bf16.msra.mxu0 %v5169
      %5981 = vmatprep.subr.bf16.mxu0 0
      %5982 = vmatpush1.bf16.msra.mxu0 %v5168
      %5983 = vmatprep.subr.bf16.mxu0 0
      %5984 = vmatpush1.bf16.msra.mxu0 %v5167
      %5985 = vmatprep.subr.bf16.mxu0 0
      %5986 = vmatpush1.bf16.msra.mxu0 %v5166
      %5987 = vmatprep.subr.bf16.mxu0 0
      %5988 = vmatpush1.bf16.msra.mxu0 %v5165
      %5989 = vmatprep.subr.bf16.mxu0 0
      %5990 = vmatpush1.bf16.msra.mxu0 %v5164
      %5991 = vmatprep.subr.bf16.mxu0 0
      %5992 = vmatpush1.bf16.msra.mxu0 %v5163
      %5993 = vmatprep.subr.bf16.mxu0 0
      %5994 = vmatpush1.bf16.msra.mxu0 %v5162
      %5995 = vmatprep.subr.bf16.mxu0 0
      %5996 = vmatpush2.bf16.msra.mxu0 %v5177
      %5997 = vmatprep.subr.bf16.mxu0 0
      %5998 = vmatpush2.bf16.msra.mxu0 %v5176
      %5999 = vmatprep.subr.bf16.mxu0 0
      %6000 = vmatpush2.bf16.msra.mxu0 %v5175
      %6001 = vmatprep.subr.bf16.mxu0 0
      %6002 = vmatpush2.bf16.msra.mxu0 %v5174
      %6003 = vmatprep.subr.bf16.mxu0 0
      %6004 = vmatpush2.bf16.msra.mxu0 %v5173
      %6005 = vmatprep.subr.bf16.mxu0 0
      %6006 = vmatpush2.bf16.msra.mxu0 %v5172
      %6007 = vmatprep.subr.bf16.mxu0 0
      %6008 = vmatpush2.bf16.msra.mxu0 %v5171
      %6009 = vmatprep.subr.bf16.mxu0 0
      %6010 = vmatpush2.bf16.msra.mxu0 %v5170
      %6011 = vmatprep.mubr.bf16.mxu0 %v3385
      %6012 = vmatmul.mubr.bf16.gmra.mxu0 %v3384
      %v6013 = vpop.f32.mrf.mxu0
      %v6014 = vadd.f32 %v5965, %v6013
      %v6015 = vpop.f32.mrf.mxu0
      %v6016 = vpop.f32.mrf.mxu0
      %v6017 = vadd.f32 %v5968, %v6016
      %v6018 = vpop.f32.mrf.mxu0
      %6019 = vmatprep.mubr.bf16.mxu0 %v3434
      %6020 = vmatmul.mubr.bf16.gmra.mxu0 %v3433
      %v6021 = vpop.f32.mrf.mxu0
      %v6022 = vadd.f32 %v5973, %v6021
      %v6023 = vpop.f32.mrf.mxu0
      %v6024 = vpop.f32.mrf.mxu0
      %v6025 = vadd.f32 %v5976, %v6024
      %v6026 = vpop.f32.mrf.mxu0
      %6027 = vdwg.mxu0
      %6028 = vmatprep.subr.bf16.mxu0 0
      %6029 = vmatpush1.bf16.msra.mxu0 %v5185
      %6030 = vmatprep.subr.bf16.mxu0 0
      %6031 = vmatpush1.bf16.msra.mxu0 %v5184
      %6032 = vmatprep.subr.bf16.mxu0 0
      %6033 = vmatpush1.bf16.msra.mxu0 %v5183
      %6034 = vmatprep.subr.bf16.mxu0 0
      %6035 = vmatpush1.bf16.msra.mxu0 %v5182
      %6036 = vmatprep.subr.bf16.mxu0 0
      %6037 = vmatpush1.bf16.msra.mxu0 %v5181
      %6038 = vmatprep.subr.bf16.mxu0 0
      %6039 = vmatpush1.bf16.msra.mxu0 %v5180
      %6040 = vmatprep.subr.bf16.mxu0 0
      %6041 = vmatpush1.bf16.msra.mxu0 %v5179
      %6042 = vmatprep.subr.bf16.mxu0 0
      %6043 = vmatpush1.bf16.msra.mxu0 %v5178
      %6044 = vmatprep.subr.bf16.mxu0 0
      %6045 = vmatpush2.bf16.msra.mxu0 %v5193
      %6046 = vmatprep.subr.bf16.mxu0 0
      %6047 = vmatpush2.bf16.msra.mxu0 %v5192
      %6048 = vmatprep.subr.bf16.mxu0 0
      %6049 = vmatpush2.bf16.msra.mxu0 %v5191
      %6050 = vmatprep.subr.bf16.mxu0 0
      %6051 = vmatpush2.bf16.msra.mxu0 %v5190
      %6052 = vmatprep.subr.bf16.mxu0 0
      %6053 = vmatpush2.bf16.msra.mxu0 %v5189
      %6054 = vmatprep.subr.bf16.mxu0 0
      %6055 = vmatpush2.bf16.msra.mxu0 %v5188
      %6056 = vmatprep.subr.bf16.mxu0 0
      %6057 = vmatpush2.bf16.msra.mxu0 %v5187
      %6058 = vmatprep.subr.bf16.mxu0 0
      %6059 = vmatpush2.bf16.msra.mxu0 %v5186
      %6060 = vmatprep.mubr.bf16.mxu0 %v3387
      %6061 = vmatmul.mubr.bf16.gmra.mxu0 %v3386
      %v6062 = vpop.f32.mrf.mxu0
      %v6063 = vadd.f32 %v6014, %v6062
      %v6064 = vpop.f32.mrf.mxu0
      %v6065 = vpop.f32.mrf.mxu0
      %v6066 = vadd.f32 %v6017, %v6065
      %v6067 = vpop.f32.mrf.mxu0
      %6068 = vmatprep.mubr.bf16.mxu0 %v3436
      %6069 = vmatmul.mubr.bf16.gmra.mxu0 %v3435
      %v6070 = vpop.f32.mrf.mxu0
      %v6071 = vadd.f32 %v6022, %v6070
      %v6072 = vpop.f32.mrf.mxu0
      %v6073 = vpop.f32.mrf.mxu0
      %v6074 = vadd.f32 %v6025, %v6073
      %v6075 = vpop.f32.mrf.mxu0
      %6076 = vdwg.mxu0
      %6077 = vmatprep.subr.bf16.mxu0 0
      %6078 = vmatpush1.bf16.msra.mxu0 %v5201
      %6079 = vmatprep.subr.bf16.mxu0 0
      %6080 = vmatpush1.bf16.msra.mxu0 %v5200
      %6081 = vmatprep.subr.bf16.mxu0 0
      %6082 = vmatpush1.bf16.msra.mxu0 %v5199
      %6083 = vmatprep.subr.bf16.mxu0 0
      %6084 = vmatpush1.bf16.msra.mxu0 %v5198
      %6085 = vmatprep.subr.bf16.mxu0 0
      %6086 = vmatpush1.bf16.msra.mxu0 %v5197
      %6087 = vmatprep.subr.bf16.mxu0 0
      %6088 = vmatpush1.bf16.msra.mxu0 %v5196
      %6089 = vmatprep.subr.bf16.mxu0 0
      %6090 = vmatpush1.bf16.msra.mxu0 %v5195
      %6091 = vmatprep.subr.bf16.mxu0 0
      %6092 = vmatpush1.bf16.msra.mxu0 %v5194
      %6093 = vmatprep.subr.bf16.mxu0 0
      %6094 = vmatpush2.bf16.msra.mxu0 %v5209
      %6095 = vmatprep.subr.bf16.mxu0 0
      %6096 = vmatpush2.bf16.msra.mxu0 %v5208
      %6097 = vmatprep.subr.bf16.mxu0 0
      %6098 = vmatpush2.bf16.msra.mxu0 %v5207
      %6099 = vmatprep.subr.bf16.mxu0 0
      %6100 = vmatpush2.bf16.msra.mxu0 %v5206
      %6101 = vmatprep.subr.bf16.mxu0 0
      %6102 = vmatpush2.bf16.msra.mxu0 %v5205
      %6103 = vmatprep.subr.bf16.mxu0 0
      %6104 = vmatpush2.bf16.msra.mxu0 %v5204
      %6105 = vmatprep.subr.bf16.mxu0 0
      %6106 = vmatpush2.bf16.msra.mxu0 %v5203
      %6107 = vmatprep.subr.bf16.mxu0 0
      %6108 = vmatpush2.bf16.msra.mxu0 %v5202
      %6109 = vmatprep.mubr.bf16.mxu0 %v3389
      %6110 = vmatmul.mubr.bf16.gmra.mxu0 %v3388
      %v6111 = vpop.f32.mrf.mxu0
      %v6112 = vadd.f32 %v6063, %v6111
      %v6113 = vpop.f32.mrf.mxu0
      %v6114 = vpop.f32.mrf.mxu0
      %v6115 = vadd.f32 %v6066, %v6114
      %v6116 = vpop.f32.mrf.mxu0
      %6117 = vmatprep.mubr.bf16.mxu0 %v3438
      %6118 = vmatmul.mubr.bf16.gmra.mxu0 %v3437
      %v6119 = vpop.f32.mrf.mxu0
      %v6120 = vadd.f32 %v6071, %v6119
      %v6121 = vpop.f32.mrf.mxu0
      %v6122 = vpop.f32.mrf.mxu0
      %v6123 = vadd.f32 %v6074, %v6122
      %v6124 = vpop.f32.mrf.mxu0
      %6125 = vdwg.mxu0
      %6126 = vmatprep.subr.bf16.mxu0 0
      %6127 = vmatpush1.bf16.msra.mxu0 %v5217
      %6128 = vmatprep.subr.bf16.mxu0 0
      %6129 = vmatpush1.bf16.msra.mxu0 %v5216
      %6130 = vmatprep.subr.bf16.mxu0 0
      %6131 = vmatpush1.bf16.msra.mxu0 %v5215
      %6132 = vmatprep.subr.bf16.mxu0 0
      %6133 = vmatpush1.bf16.msra.mxu0 %v5214
      %6134 = vmatprep.subr.bf16.mxu0 0
      %6135 = vmatpush1.bf16.msra.mxu0 %v5213
      %6136 = vmatprep.subr.bf16.mxu0 0
      %6137 = vmatpush1.bf16.msra.mxu0 %v5212
      %6138 = vmatprep.subr.bf16.mxu0 0
      %6139 = vmatpush1.bf16.msra.mxu0 %v5211
      %6140 = vmatprep.subr.bf16.mxu0 0
      %6141 = vmatpush1.bf16.msra.mxu0 %v5210
      %6142 = vmatprep.subr.bf16.mxu0 0
      %6143 = vmatpush2.bf16.msra.mxu0 %v5225
      %6144 = vmatprep.subr.bf16.mxu0 0
      %6145 = vmatpush2.bf16.msra.mxu0 %v5224
      %6146 = vmatprep.subr.bf16.mxu0 0
      %6147 = vmatpush2.bf16.msra.mxu0 %v5223
      %6148 = vmatprep.subr.bf16.mxu0 0
      %6149 = vmatpush2.bf16.msra.mxu0 %v5222
      %6150 = vmatprep.subr.bf16.mxu0 0
      %6151 = vmatpush2.bf16.msra.mxu0 %v5221
      %6152 = vmatprep.subr.bf16.mxu0 0
      %6153 = vmatpush2.bf16.msra.mxu0 %v5220
      %6154 = vmatprep.subr.bf16.mxu0 0
      %6155 = vmatpush2.bf16.msra.mxu0 %v5219
      %6156 = vmatprep.subr.bf16.mxu0 0
      %6157 = vmatpush2.bf16.msra.mxu0 %v5218
      %6158 = vmatprep.mubr.bf16.mxu0 %v3391
      %6159 = vmatmul.mubr.bf16.gmra.mxu0 %v3390
      %v6160 = vpop.f32.mrf.mxu0
      %v6161 = vadd.f32 %v6112, %v6160
      %v6162 = vpop.f32.mrf.mxu0
      %v6163 = vpop.f32.mrf.mxu0
      %v6164 = vadd.f32 %v6115, %v6163
      %v6165 = vpop.f32.mrf.mxu0
      %6166 = vmatprep.mubr.bf16.mxu0 %v3440
      %6167 = vmatmul.mubr.bf16.gmra.mxu0 %v3439
      %v6168 = vpop.f32.mrf.mxu0
      %v6169 = vadd.f32 %v6120, %v6168
      %v6170 = vpop.f32.mrf.mxu0
      %v6171 = vpop.f32.mrf.mxu0
      %v6172 = vadd.f32 %v6123, %v6171
      %v6173 = vpop.f32.mrf.mxu0
      %6174 = vdwg.mxu0
      %6175 = vmatprep.subr.bf16.mxu0 0
      %6176 = vmatpush1.bf16.msra.mxu0 %v5233
      %6177 = vmatprep.subr.bf16.mxu0 0
      %6178 = vmatpush1.bf16.msra.mxu0 %v5232
      %6179 = vmatprep.subr.bf16.mxu0 0
      %6180 = vmatpush1.bf16.msra.mxu0 %v5231
      %6181 = vmatprep.subr.bf16.mxu0 0
      %6182 = vmatpush1.bf16.msra.mxu0 %v5230
      %6183 = vmatprep.subr.bf16.mxu0 0
      %6184 = vmatpush1.bf16.msra.mxu0 %v5229
      %6185 = vmatprep.subr.bf16.mxu0 0
      %6186 = vmatpush1.bf16.msra.mxu0 %v5228
      %6187 = vmatprep.subr.bf16.mxu0 0
      %6188 = vmatpush1.bf16.msra.mxu0 %v5227
      %6189 = vmatprep.subr.bf16.mxu0 0
      %6190 = vmatpush1.bf16.msra.mxu0 %v5226
      %6191 = vmatprep.subr.bf16.mxu0 0
      %6192 = vmatpush2.bf16.msra.mxu0 %v5241
      %6193 = vmatprep.subr.bf16.mxu0 0
      %6194 = vmatpush2.bf16.msra.mxu0 %v5240
      %6195 = vmatprep.subr.bf16.mxu0 0
      %6196 = vmatpush2.bf16.msra.mxu0 %v5239
      %6197 = vmatprep.subr.bf16.mxu0 0
      %6198 = vmatpush2.bf16.msra.mxu0 %v5238
      %6199 = vmatprep.subr.bf16.mxu0 0
      %6200 = vmatpush2.bf16.msra.mxu0 %v5237
      %6201 = vmatprep.subr.bf16.mxu0 0
      %6202 = vmatpush2.bf16.msra.mxu0 %v5236
      %6203 = vmatprep.subr.bf16.mxu0 0
      %6204 = vmatpush2.bf16.msra.mxu0 %v5235
      %6205 = vmatprep.subr.bf16.mxu0 0
      %6206 = vmatpush2.bf16.msra.mxu0 %v5234
      %6207 = vmatprep.mubr.bf16.mxu0 %v3393
      %6208 = vmatmul.mubr.bf16.gmra.mxu0 %v3392
      %v6209 = vpop.f32.mrf.mxu0
      %v6210 = vadd.f32 %v6161, %v6209
      %v6211 = vpop.f32.mrf.mxu0
      %v6212 = vpop.f32.mrf.mxu0
      %v6213 = vadd.f32 %v6164, %v6212
      %v6214 = vpop.f32.mrf.mxu0
      %6215 = vmatprep.mubr.bf16.mxu0 %v3442
      %6216 = vmatmul.mubr.bf16.gmra.mxu0 %v3441
      %v6217 = vpop.f32.mrf.mxu0
      %v6218 = vadd.f32 %v6169, %v6217
      %v6219 = vpop.f32.mrf.mxu0
      %v6220 = vpop.f32.mrf.mxu0
      %v6221 = vadd.f32 %v6172, %v6220
      %v6222 = vpop.f32.mrf.mxu0
      %6223 = vdwg.mxu0
      %6224 = vmatprep.subr.bf16.mxu0 0
      %6225 = vmatpush1.bf16.msra.mxu0 %v5249
      %6226 = vmatprep.subr.bf16.mxu0 0
      %6227 = vmatpush1.bf16.msra.mxu0 %v5248
      %6228 = vmatprep.subr.bf16.mxu0 0
      %6229 = vmatpush1.bf16.msra.mxu0 %v5247
      %6230 = vmatprep.subr.bf16.mxu0 0
      %6231 = vmatpush1.bf16.msra.mxu0 %v5246
      %6232 = vmatprep.subr.bf16.mxu0 0
      %6233 = vmatpush1.bf16.msra.mxu0 %v5245
      %6234 = vmatprep.subr.bf16.mxu0 0
      %6235 = vmatpush1.bf16.msra.mxu0 %v5244
      %6236 = vmatprep.subr.bf16.mxu0 0
      %6237 = vmatpush1.bf16.msra.mxu0 %v5243
      %6238 = vmatprep.subr.bf16.mxu0 0
      %6239 = vmatpush1.bf16.msra.mxu0 %v5242
      %6240 = vmatprep.subr.bf16.mxu0 0
      %6241 = vmatpush2.bf16.msra.mxu0 %v5257
      %6242 = vmatprep.subr.bf16.mxu0 0
      %6243 = vmatpush2.bf16.msra.mxu0 %v5256
      %6244 = vmatprep.subr.bf16.mxu0 0
      %6245 = vmatpush2.bf16.msra.mxu0 %v5255
      %6246 = vmatprep.subr.bf16.mxu0 0
      %6247 = vmatpush2.bf16.msra.mxu0 %v5254
      %6248 = vmatprep.subr.bf16.mxu0 0
      %6249 = vmatpush2.bf16.msra.mxu0 %v5253
      %6250 = vmatprep.subr.bf16.mxu0 0
      %6251 = vmatpush2.bf16.msra.mxu0 %v5252
      %6252 = vmatprep.subr.bf16.mxu0 0
      %6253 = vmatpush2.bf16.msra.mxu0 %v5251
      %6254 = vmatprep.subr.bf16.mxu0 0
      %6255 = vmatpush2.bf16.msra.mxu0 %v5250
      %6256 = vmatprep.mubr.bf16.mxu0 %v3395
      %6257 = vmatmul.mubr.bf16.gmra.mxu0 %v3394
      %v6258 = vpop.f32.mrf.mxu0
      %v6259 = vadd.f32 %v6210, %v6258
      %v6260 = vpop.f32.mrf.mxu0
      %v6261 = vpop.f32.mrf.mxu0
      %v6262 = vadd.f32 %v6213, %v6261
      %v6263 = vpop.f32.mrf.mxu0
      %6264 = vmatprep.mubr.bf16.mxu0 %v3444
      %6265 = vmatmul.mubr.bf16.gmra.mxu0 %v3443
      %v6266 = vpop.f32.mrf.mxu0
      %v6267 = vadd.f32 %v6218, %v6266
      %v6268 = vpop.f32.mrf.mxu0
      %v6269 = vpop.f32.mrf.mxu0
      %v6270 = vadd.f32 %v6221, %v6269
      %v6271 = vpop.f32.mrf.mxu0
      %6272 = vdwg.mxu0
      %6273 = vmatprep.subr.bf16.mxu0 0
      %6274 = vmatpush1.bf16.msra.mxu0 %v5265
      %6275 = vmatprep.subr.bf16.mxu0 0
      %6276 = vmatpush1.bf16.msra.mxu0 %v5264
      %6277 = vmatprep.subr.bf16.mxu0 0
      %6278 = vmatpush1.bf16.msra.mxu0 %v5263
      %6279 = vmatprep.subr.bf16.mxu0 0
      %6280 = vmatpush1.bf16.msra.mxu0 %v5262
      %6281 = vmatprep.subr.bf16.mxu0 0
      %6282 = vmatpush1.bf16.msra.mxu0 %v5261
      %6283 = vmatprep.subr.bf16.mxu0 0
      %6284 = vmatpush1.bf16.msra.mxu0 %v5260
      %6285 = vmatprep.subr.bf16.mxu0 0
      %6286 = vmatpush1.bf16.msra.mxu0 %v5259
      %6287 = vmatprep.subr.bf16.mxu0 0
      %6288 = vmatpush1.bf16.msra.mxu0 %v5258
      %6289 = vmatprep.subr.bf16.mxu0 0
      %6290 = vmatpush2.bf16.msra.mxu0 %v5273
      %6291 = vmatprep.subr.bf16.mxu0 0
      %6292 = vmatpush2.bf16.msra.mxu0 %v5272
      %6293 = vmatprep.subr.bf16.mxu0 0
      %6294 = vmatpush2.bf16.msra.mxu0 %v5271
      %6295 = vmatprep.subr.bf16.mxu0 0
      %6296 = vmatpush2.bf16.msra.mxu0 %v5270
      %6297 = vmatprep.subr.bf16.mxu0 0
      %6298 = vmatpush2.bf16.msra.mxu0 %v5269
      %6299 = vmatprep.subr.bf16.mxu0 0
      %6300 = vmatpush2.bf16.msra.mxu0 %v5268
      %6301 = vmatprep.subr.bf16.mxu0 0
      %6302 = vmatpush2.bf16.msra.mxu0 %v5267
      %6303 = vmatprep.subr.bf16.mxu0 0
      %6304 = vmatpush2.bf16.msra.mxu0 %v5266
      %6305 = vmatprep.mubr.bf16.mxu0 %v3397
      %6306 = vmatmul.mubr.bf16.gmra.mxu0 %v3396
      %v6307 = vpop.f32.mrf.mxu0
      %v6308 = vadd.f32 %v6259, %v6307
      %v6309 = vpop.f32.mrf.mxu0
      %v6310 = vpop.f32.mrf.mxu0
      %v6311 = vadd.f32 %v6262, %v6310
      %v6312 = vpop.f32.mrf.mxu0
      %6313 = vmatprep.mubr.bf16.mxu0 %v3446
      %6314 = vmatmul.mubr.bf16.gmra.mxu0 %v3445
      %v6315 = vpop.f32.mrf.mxu0
      %v6316 = vadd.f32 %v6267, %v6315
      %v6317 = vpop.f32.mrf.mxu0
      %v6318 = vpop.f32.mrf.mxu0
      %v6319 = vadd.f32 %v6270, %v6318
      %v6320 = vpop.f32.mrf.mxu0
      %6321 = vdwg.mxu0
      %6322 = vmatprep.subr.bf16.mxu0 0
      %6323 = vmatpush1.bf16.msra.mxu0 %v5281
      %6324 = vmatprep.subr.bf16.mxu0 0
      %6325 = vmatpush1.bf16.msra.mxu0 %v5280
      %6326 = vmatprep.subr.bf16.mxu0 0
      %6327 = vmatpush1.bf16.msra.mxu0 %v5279
      %6328 = vmatprep.subr.bf16.mxu0 0
      %6329 = vmatpush1.bf16.msra.mxu0 %v5278
      %6330 = vmatprep.subr.bf16.mxu0 0
      %6331 = vmatpush1.bf16.msra.mxu0 %v5277
      %6332 = vmatprep.subr.bf16.mxu0 0
      %6333 = vmatpush1.bf16.msra.mxu0 %v5276
      %6334 = vmatprep.subr.bf16.mxu0 0
      %6335 = vmatpush1.bf16.msra.mxu0 %v5275
      %6336 = vmatprep.subr.bf16.mxu0 0
      %6337 = vmatpush1.bf16.msra.mxu0 %v5274
      %6338 = vmatprep.subr.bf16.mxu0 0
      %6339 = vmatpush2.bf16.msra.mxu0 %v5289
      %6340 = vmatprep.subr.bf16.mxu0 0
      %6341 = vmatpush2.bf16.msra.mxu0 %v5288
      %6342 = vmatprep.subr.bf16.mxu0 0
      %6343 = vmatpush2.bf16.msra.mxu0 %v5287
      %6344 = vmatprep.subr.bf16.mxu0 0
      %6345 = vmatpush2.bf16.msra.mxu0 %v5286
      %6346 = vmatprep.subr.bf16.mxu0 0
      %6347 = vmatpush2.bf16.msra.mxu0 %v5285
      %6348 = vmatprep.subr.bf16.mxu0 0
      %6349 = vmatpush2.bf16.msra.mxu0 %v5284
      %6350 = vmatprep.subr.bf16.mxu0 0
      %6351 = vmatpush2.bf16.msra.mxu0 %v5283
      %6352 = vmatprep.subr.bf16.mxu0 0
      %6353 = vmatpush2.bf16.msra.mxu0 %v5282
      %6354 = vmatprep.mubr.bf16.mxu0 %v3399
      %6355 = vmatmul.mubr.bf16.gmra.mxu0 %v3398
      %v6356 = vpop.f32.mrf.mxu0
      %v6357 = vadd.f32 %v6308, %v6356
      %v6358 = vpop.f32.mrf.mxu0
      %v6359 = vpop.f32.mrf.mxu0
      %v6360 = vadd.f32 %v6311, %v6359
      %v6361 = vpop.f32.mrf.mxu0
      %6362 = vmatprep.mubr.bf16.mxu0 %v3448
      %6363 = vmatmul.mubr.bf16.gmra.mxu0 %v3447
      %v6364 = vpop.f32.mrf.mxu0
      %v6365 = vadd.f32 %v6316, %v6364
      %v6366 = vpop.f32.mrf.mxu0
      %v6367 = vpop.f32.mrf.mxu0
      %v6368 = vadd.f32 %v6319, %v6367
      %v6369 = vpop.f32.mrf.mxu0
      %6370 = vdwg.mxu0
      %6371 = vmatprep.subr.bf16.mxu0 0
      %6372 = vmatpush1.bf16.msra.mxu0 %v5297
      %6373 = vmatprep.subr.bf16.mxu0 0
      %6374 = vmatpush1.bf16.msra.mxu0 %v5296
      %6375 = vmatprep.subr.bf16.mxu0 0
      %6376 = vmatpush1.bf16.msra.mxu0 %v5295
      %6377 = vmatprep.subr.bf16.mxu0 0
      %6378 = vmatpush1.bf16.msra.mxu0 %v5294
      %6379 = vmatprep.subr.bf16.mxu0 0
      %6380 = vmatpush1.bf16.msra.mxu0 %v5293
      %6381 = vmatprep.subr.bf16.mxu0 0
      %6382 = vmatpush1.bf16.msra.mxu0 %v5292
      %6383 = vmatprep.subr.bf16.mxu0 0
      %6384 = vmatpush1.bf16.msra.mxu0 %v5291
      %6385 = vmatprep.subr.bf16.mxu0 0
      %6386 = vmatpush1.bf16.msra.mxu0 %v5290
      %6387 = vmatprep.subr.bf16.mxu0 0
      %6388 = vmatpush2.bf16.msra.mxu0 %v5305
      %6389 = vmatprep.subr.bf16.mxu0 0
      %6390 = vmatpush2.bf16.msra.mxu0 %v5304
      %6391 = vmatprep.subr.bf16.mxu0 0
      %6392 = vmatpush2.bf16.msra.mxu0 %v5303
      %6393 = vmatprep.subr.bf16.mxu0 0
      %6394 = vmatpush2.bf16.msra.mxu0 %v5302
      %6395 = vmatprep.subr.bf16.mxu0 0
      %6396 = vmatpush2.bf16.msra.mxu0 %v5301
      %6397 = vmatprep.subr.bf16.mxu0 0
      %6398 = vmatpush2.bf16.msra.mxu0 %v5300
      %6399 = vmatprep.subr.bf16.mxu0 0
      %6400 = vmatpush2.bf16.msra.mxu0 %v5299
      %6401 = vmatprep.subr.bf16.mxu0 0
      %6402 = vmatpush2.bf16.msra.mxu0 %v5298
      %6403 = vmatprep.mubr.bf16.mxu0 %v3401
      %6404 = vmatmul.mubr.bf16.gmra.mxu0 %v3400
      %v6405 = vpop.f32.mrf.mxu0
      %v6406 = vadd.f32 %v6357, %v6405
      %v6407 = vpop.f32.mrf.mxu0
      %v6408 = vpop.f32.mrf.mxu0
      %v6409 = vadd.f32 %v6360, %v6408
      %v6410 = vpop.f32.mrf.mxu0
      %6411 = vmatprep.mubr.bf16.mxu0 %v3450
      %6412 = vmatmul.mubr.bf16.gmra.mxu0 %v3449
      %v6413 = vpop.f32.mrf.mxu0
      %v6414 = vadd.f32 %v6365, %v6413
      %v6415 = vpop.f32.mrf.mxu0
      %v6416 = vpop.f32.mrf.mxu0
      %v6417 = vadd.f32 %v6368, %v6416
      %v6418 = vpop.f32.mrf.mxu0
      %6419 = vdwg.mxu0
      %6420 = vmatprep.subr.bf16.mxu0 0
      %6421 = vmatpush1.bf16.msra.mxu0 %v5313
      %6422 = vmatprep.subr.bf16.mxu0 0
      %6423 = vmatpush1.bf16.msra.mxu0 %v5312
      %6424 = vmatprep.subr.bf16.mxu0 0
      %6425 = vmatpush1.bf16.msra.mxu0 %v5311
      %6426 = vmatprep.subr.bf16.mxu0 0
      %6427 = vmatpush1.bf16.msra.mxu0 %v5310
      %6428 = vmatprep.subr.bf16.mxu0 0
      %6429 = vmatpush1.bf16.msra.mxu0 %v5309
      %6430 = vmatprep.subr.bf16.mxu0 0
      %6431 = vmatpush1.bf16.msra.mxu0 %v5308
      %6432 = vmatprep.subr.bf16.mxu0 0
      %6433 = vmatpush1.bf16.msra.mxu0 %v5307
      %6434 = vmatprep.subr.bf16.mxu0 0
      %6435 = vmatpush1.bf16.msra.mxu0 %v5306
      %6436 = vmatprep.subr.bf16.mxu0 0
      %6437 = vmatpush2.bf16.msra.mxu0 %v5321
      %6438 = vmatprep.subr.bf16.mxu0 0
      %6439 = vmatpush2.bf16.msra.mxu0 %v5320
      %6440 = vmatprep.subr.bf16.mxu0 0
      %6441 = vmatpush2.bf16.msra.mxu0 %v5319
      %6442 = vmatprep.subr.bf16.mxu0 0
      %6443 = vmatpush2.bf16.msra.mxu0 %v5318
      %6444 = vmatprep.subr.bf16.mxu0 0
      %6445 = vmatpush2.bf16.msra.mxu0 %v5317
      %6446 = vmatprep.subr.bf16.mxu0 0
      %6447 = vmatpush2.bf16.msra.mxu0 %v5316
      %6448 = vmatprep.subr.bf16.mxu0 0
      %6449 = vmatpush2.bf16.msra.mxu0 %v5315
      %6450 = vmatprep.subr.bf16.mxu0 0
      %6451 = vmatpush2.bf16.msra.mxu0 %v5314
      %6452 = vmatprep.mubr.bf16.mxu0 %v3403
      %6453 = vmatmul.mubr.bf16.gmra.mxu0 %v3402
      %v6454 = vpop.f32.mrf.mxu0
      %v6455 = vadd.f32 %v6406, %v6454
      %v6456 = vpop.f32.mrf.mxu0
      %v6457 = vpop.f32.mrf.mxu0
      %v6458 = vadd.f32 %v6409, %v6457
      %v6459 = vpop.f32.mrf.mxu0
      %6460 = vmatprep.mubr.bf16.mxu0 %v3452
      %6461 = vmatmul.mubr.bf16.gmra.mxu0 %v3451
      %v6462 = vpop.f32.mrf.mxu0
      %v6463 = vadd.f32 %v6414, %v6462
      %v6464 = vpop.f32.mrf.mxu0
      %v6465 = vpop.f32.mrf.mxu0
      %v6466 = vadd.f32 %v6417, %v6465
      %v6467 = vpop.f32.mrf.mxu0
      %6468 = vdwg.mxu0
      %6469 = vmatprep.subr.bf16.mxu0 0
      %6470 = vmatpush1.bf16.msra.mxu0 %v5329
      %6471 = vmatprep.subr.bf16.mxu0 0
      %6472 = vmatpush1.bf16.msra.mxu0 %v5328
      %6473 = vmatprep.subr.bf16.mxu0 0
      %6474 = vmatpush1.bf16.msra.mxu0 %v5327
      %6475 = vmatprep.subr.bf16.mxu0 0
      %6476 = vmatpush1.bf16.msra.mxu0 %v5326
      %6477 = vmatprep.subr.bf16.mxu0 0
      %6478 = vmatpush1.bf16.msra.mxu0 %v5325
      %6479 = vmatprep.subr.bf16.mxu0 0
      %6480 = vmatpush1.bf16.msra.mxu0 %v5324
      %6481 = vmatprep.subr.bf16.mxu0 0
      %6482 = vmatpush1.bf16.msra.mxu0 %v5323
      %6483 = vmatprep.subr.bf16.mxu0 0
      %6484 = vmatpush1.bf16.msra.mxu0 %v5322
      %6485 = vmatprep.subr.bf16.mxu0 0
      %6486 = vmatpush2.bf16.msra.mxu0 %v5337
      %6487 = vmatprep.subr.bf16.mxu0 0
      %6488 = vmatpush2.bf16.msra.mxu0 %v5336
      %6489 = vmatprep.subr.bf16.mxu0 0
      %6490 = vmatpush2.bf16.msra.mxu0 %v5335
      %6491 = vmatprep.subr.bf16.mxu0 0
      %6492 = vmatpush2.bf16.msra.mxu0 %v5334
      %6493 = vmatprep.subr.bf16.mxu0 0
      %6494 = vmatpush2.bf16.msra.mxu0 %v5333
      %6495 = vmatprep.subr.bf16.mxu0 0
      %6496 = vmatpush2.bf16.msra.mxu0 %v5332
      %6497 = vmatprep.subr.bf16.mxu0 0
      %6498 = vmatpush2.bf16.msra.mxu0 %v5331
      %6499 = vmatprep.subr.bf16.mxu0 0
      %6500 = vmatpush2.bf16.msra.mxu0 %v5330
      %6501 = vmatprep.mubr.bf16.mxu0 %v3405
      %6502 = vmatmul.mubr.bf16.gmra.mxu0 %v3404
      %v6503 = vpop.f32.mrf.mxu0
      %v6504 = vadd.f32 %v6455, %v6503
      %v6505 = vpop.f32.mrf.mxu0
      %v6506 = vpop.f32.mrf.mxu0
      %v6507 = vadd.f32 %v6458, %v6506
      %v6508 = vpop.f32.mrf.mxu0
      %6509 = vmatprep.mubr.bf16.mxu0 %v3454
      %6510 = vmatmul.mubr.bf16.gmra.mxu0 %v3453
      %v6511 = vpop.f32.mrf.mxu0
      %v6512 = vadd.f32 %v6463, %v6511
      %v6513 = vpop.f32.mrf.mxu0
      %v6514 = vpop.f32.mrf.mxu0
      %v6515 = vadd.f32 %v6466, %v6514
      %v6516 = vpop.f32.mrf.mxu0
      %6517 = vdwg.mxu0
      %6518 = vmatprep.subr.bf16.mxu0 0
      %6519 = vmatpush1.bf16.msra.mxu0 %v5345
      %6520 = vmatprep.subr.bf16.mxu0 0
      %6521 = vmatpush1.bf16.msra.mxu0 %v5344
      %6522 = vmatprep.subr.bf16.mxu0 0
      %6523 = vmatpush1.bf16.msra.mxu0 %v5343
      %6524 = vmatprep.subr.bf16.mxu0 0
      %6525 = vmatpush1.bf16.msra.mxu0 %v5342
      %6526 = vmatprep.subr.bf16.mxu0 0
      %6527 = vmatpush1.bf16.msra.mxu0 %v5341
      %6528 = vmatprep.subr.bf16.mxu0 0
      %6529 = vmatpush1.bf16.msra.mxu0 %v5340
      %6530 = vmatprep.subr.bf16.mxu0 0
      %6531 = vmatpush1.bf16.msra.mxu0 %v5339
      %6532 = vmatprep.subr.bf16.mxu0 0
      %6533 = vmatpush1.bf16.msra.mxu0 %v5338
      %6534 = vmatprep.subr.bf16.mxu0 0
      %6535 = vmatpush2.bf16.msra.mxu0 %v5353
      %6536 = vmatprep.subr.bf16.mxu0 0
      %6537 = vmatpush2.bf16.msra.mxu0 %v5352
      %6538 = vmatprep.subr.bf16.mxu0 0
      %6539 = vmatpush2.bf16.msra.mxu0 %v5351
      %6540 = vmatprep.subr.bf16.mxu0 0
      %6541 = vmatpush2.bf16.msra.mxu0 %v5350
      %6542 = vmatprep.subr.bf16.mxu0 0
      %6543 = vmatpush2.bf16.msra.mxu0 %v5349
      %6544 = vmatprep.subr.bf16.mxu0 0
      %6545 = vmatpush2.bf16.msra.mxu0 %v5348
      %6546 = vmatprep.subr.bf16.mxu0 0
      %6547 = vmatpush2.bf16.msra.mxu0 %v5347
      %6548 = vmatprep.subr.bf16.mxu0 0
      %6549 = vmatpush2.bf16.msra.mxu0 %v5346
      %6550 = vmatprep.mubr.bf16.mxu0 %v3407
      %6551 = vmatmul.mubr.bf16.gmra.mxu0 %v3406
      %v6552 = vpop.f32.mrf.mxu0
      %v6553 = vadd.f32 %v6504, %v6552
      %v6554 = vpop.f32.mrf.mxu0
      %v6555 = vpop.f32.mrf.mxu0
      %v6556 = vadd.f32 %v6507, %v6555
      %v6557 = vpop.f32.mrf.mxu0
      %6558 = vmatprep.mubr.bf16.mxu0 %v3456
      %6559 = vmatmul.mubr.bf16.gmra.mxu0 %v3455
      %v6560 = vpop.f32.mrf.mxu0
      %v6561 = vadd.f32 %v6512, %v6560
      %v6562 = vpop.f32.mrf.mxu0
      %v6563 = vpop.f32.mrf.mxu0
      %v6564 = vadd.f32 %v6515, %v6563
      %v6565 = vpop.f32.mrf.mxu0
      %6566 = vdwg.mxu0
      %6567 = vmatprep.subr.bf16.mxu0 0
      %6568 = vmatpush1.bf16.msra.mxu0 %v5361
      %6569 = vmatprep.subr.bf16.mxu0 0
      %6570 = vmatpush1.bf16.msra.mxu0 %v5360
      %6571 = vmatprep.subr.bf16.mxu0 0
      %6572 = vmatpush1.bf16.msra.mxu0 %v5359
      %6573 = vmatprep.subr.bf16.mxu0 0
      %6574 = vmatpush1.bf16.msra.mxu0 %v5358
      %6575 = vmatprep.subr.bf16.mxu0 0
      %6576 = vmatpush1.bf16.msra.mxu0 %v5357
      %6577 = vmatprep.subr.bf16.mxu0 0
      %6578 = vmatpush1.bf16.msra.mxu0 %v5356
      %6579 = vmatprep.subr.bf16.mxu0 0
      %6580 = vmatpush1.bf16.msra.mxu0 %v5355
      %6581 = vmatprep.subr.bf16.mxu0 0
      %6582 = vmatpush1.bf16.msra.mxu0 %v5354
      %6583 = vmatprep.subr.bf16.mxu0 0
      %6584 = vmatpush2.bf16.msra.mxu0 %v5369
      %6585 = vmatprep.subr.bf16.mxu0 0
      %6586 = vmatpush2.bf16.msra.mxu0 %v5368
      %6587 = vmatprep.subr.bf16.mxu0 0
      %6588 = vmatpush2.bf16.msra.mxu0 %v5367
      %6589 = vmatprep.subr.bf16.mxu0 0
      %6590 = vmatpush2.bf16.msra.mxu0 %v5366
      %6591 = vmatprep.subr.bf16.mxu0 0
      %6592 = vmatpush2.bf16.msra.mxu0 %v5365
      %6593 = vmatprep.subr.bf16.mxu0 0
      %6594 = vmatpush2.bf16.msra.mxu0 %v5364
      %6595 = vmatprep.subr.bf16.mxu0 0
      %6596 = vmatpush2.bf16.msra.mxu0 %v5363
      %6597 = vmatprep.subr.bf16.mxu0 0
      %6598 = vmatpush2.bf16.msra.mxu0 %v5362
      %6599 = vmatprep.mubr.bf16.mxu0 %v3409
      %6600 = vmatmul.mubr.bf16.gmra.mxu0 %v3408
      %v6601 = vpop.f32.mrf.mxu0
      %v6602 = vadd.f32 %v6553, %v6601
      %v6603 = vpop.f32.mrf.mxu0
      %v6604 = vpop.f32.mrf.mxu0
      %v6605 = vadd.f32 %v6556, %v6604
      %v6606 = vpop.f32.mrf.mxu0
      %6607 = vmatprep.mubr.bf16.mxu0 %v3458
      %6608 = vmatmul.mubr.bf16.gmra.mxu0 %v3457
      %v6609 = vpop.f32.mrf.mxu0
      %v6610 = vadd.f32 %v6561, %v6609
      %v6611 = vpop.f32.mrf.mxu0
      %v6612 = vpop.f32.mrf.mxu0
      %v6613 = vadd.f32 %v6564, %v6612
      %v6614 = vpop.f32.mrf.mxu0
      %6615 = vdwg.mxu0
      %6616 = vmatprep.subr.bf16.mxu0 0
      %6617 = vmatpush1.bf16.msra.mxu0 %v5377
      %6618 = vmatprep.subr.bf16.mxu0 0
      %6619 = vmatpush1.bf16.msra.mxu0 %v5376
      %6620 = vmatprep.subr.bf16.mxu0 0
      %6621 = vmatpush1.bf16.msra.mxu0 %v5375
      %6622 = vmatprep.subr.bf16.mxu0 0
      %6623 = vmatpush1.bf16.msra.mxu0 %v5374
      %6624 = vmatprep.subr.bf16.mxu0 0
      %6625 = vmatpush1.bf16.msra.mxu0 %v5373
      %6626 = vmatprep.subr.bf16.mxu0 0
      %6627 = vmatpush1.bf16.msra.mxu0 %v5372
      %6628 = vmatprep.subr.bf16.mxu0 0
      %6629 = vmatpush1.bf16.msra.mxu0 %v5371
      %6630 = vmatprep.subr.bf16.mxu0 0
      %6631 = vmatpush1.bf16.msra.mxu0 %v5370
      %6632 = vmatprep.subr.bf16.mxu0 0
      %6633 = vmatpush2.bf16.msra.mxu0 %v5385
      %6634 = vmatprep.subr.bf16.mxu0 0
      %6635 = vmatpush2.bf16.msra.mxu0 %v5384
      %6636 = vmatprep.subr.bf16.mxu0 0
      %6637 = vmatpush2.bf16.msra.mxu0 %v5383
      %6638 = vmatprep.subr.bf16.mxu0 0
      %6639 = vmatpush2.bf16.msra.mxu0 %v5382
      %6640 = vmatprep.subr.bf16.mxu0 0
      %6641 = vmatpush2.bf16.msra.mxu0 %v5381
      %6642 = vmatprep.subr.bf16.mxu0 0
      %6643 = vmatpush2.bf16.msra.mxu0 %v5380
      %6644 = vmatprep.subr.bf16.mxu0 0
      %6645 = vmatpush2.bf16.msra.mxu0 %v5379
      %6646 = vmatprep.subr.bf16.mxu0 0
      %6647 = vmatpush2.bf16.msra.mxu0 %v5378
      %6648 = vmatprep.mubr.bf16.mxu0 %v3411
      %6649 = vmatmul.mubr.bf16.gmra.mxu0 %v3410
      %v6650 = vpop.f32.mrf.mxu0
      %v6651 = vadd.f32 %v6602, %v6650
      %v6652 = vpop.f32.mrf.mxu0
      %v6653 = vpop.f32.mrf.mxu0
      %v6654 = vadd.f32 %v6605, %v6653
      %v6655 = vpop.f32.mrf.mxu0
      %6656 = vmatprep.mubr.bf16.mxu0 %v3460
      %6657 = vmatmul.mubr.bf16.gmra.mxu0 %v3459
      %v6658 = vpop.f32.mrf.mxu0
      %v6659 = vadd.f32 %v6610, %v6658
      %v6660 = vpop.f32.mrf.mxu0
      %v6661 = vpop.f32.mrf.mxu0
      %v6662 = vadd.f32 %v6613, %v6661
      %v6663 = vpop.f32.mrf.mxu0
      %6664 = vdwg.mxu0
      %6665 = vmatprep.subr.bf16.mxu0 0
      %6666 = vmatpush1.bf16.msra.mxu0 %v5393
      %6667 = vmatprep.subr.bf16.mxu0 0
      %6668 = vmatpush1.bf16.msra.mxu0 %v5392
      %6669 = vmatprep.subr.bf16.mxu0 0
      %6670 = vmatpush1.bf16.msra.mxu0 %v5391
      %6671 = vmatprep.subr.bf16.mxu0 0
      %6672 = vmatpush1.bf16.msra.mxu0 %v5390
      %6673 = vmatprep.subr.bf16.mxu0 0
      %6674 = vmatpush1.bf16.msra.mxu0 %v5389
      %6675 = vmatprep.subr.bf16.mxu0 0
      %6676 = vmatpush1.bf16.msra.mxu0 %v5388
      %6677 = vmatprep.subr.bf16.mxu0 0
      %6678 = vmatpush1.bf16.msra.mxu0 %v5387
      %6679 = vmatprep.subr.bf16.mxu0 0
      %6680 = vmatpush1.bf16.msra.mxu0 %v5386
      %6681 = vmatprep.subr.bf16.mxu0 0
      %6682 = vmatpush2.bf16.msra.mxu0 %v5401
      %6683 = vmatprep.subr.bf16.mxu0 0
      %6684 = vmatpush2.bf16.msra.mxu0 %v5400
      %6685 = vmatprep.subr.bf16.mxu0 0
      %6686 = vmatpush2.bf16.msra.mxu0 %v5399
      %6687 = vmatprep.subr.bf16.mxu0 0
      %6688 = vmatpush2.bf16.msra.mxu0 %v5398
      %6689 = vmatprep.subr.bf16.mxu0 0
      %6690 = vmatpush2.bf16.msra.mxu0 %v5397
      %6691 = vmatprep.subr.bf16.mxu0 0
      %6692 = vmatpush2.bf16.msra.mxu0 %v5396
      %6693 = vmatprep.subr.bf16.mxu0 0
      %6694 = vmatpush2.bf16.msra.mxu0 %v5395
      %6695 = vmatprep.subr.bf16.mxu0 0
      %6696 = vmatpush2.bf16.msra.mxu0 %v5394
      %6697 = vmatprep.mubr.bf16.mxu0 %v3413
      %6698 = vmatmul.mubr.bf16.gmra.mxu0 %v3412
      %v6699 = vpop.f32.mrf.mxu0
      %v6700 = vadd.f32 %v6651, %v6699
      %v6701 = vpop.f32.mrf.mxu0
      %v6702 = vpop.f32.mrf.mxu0
      %v6703 = vadd.f32 %v6654, %v6702
      %v6704 = vpop.f32.mrf.mxu0
      %6705 = vmatprep.mubr.bf16.mxu0 %v3462
      %6706 = vmatmul.mubr.bf16.gmra.mxu0 %v3461
      %v6707 = vpop.f32.mrf.mxu0
      %v6708 = vadd.f32 %v6659, %v6707
      %v6709 = vpop.f32.mrf.mxu0
      %v6710 = vpop.f32.mrf.mxu0
      %v6711 = vadd.f32 %v6662, %v6710
      %v6712 = vpop.f32.mrf.mxu0
      %6713 = vdwg.mxu0
      %6714 = vmatprep.subr.bf16.mxu0 0
      %6715 = vmatpush1.bf16.msra.mxu0 %v5409
      %6716 = vmatprep.subr.bf16.mxu0 0
      %6717 = vmatpush1.bf16.msra.mxu0 %v5408
      %6718 = vmatprep.subr.bf16.mxu0 0
      %6719 = vmatpush1.bf16.msra.mxu0 %v5407
      %6720 = vmatprep.subr.bf16.mxu0 0
      %6721 = vmatpush1.bf16.msra.mxu0 %v5406
      %6722 = vmatprep.subr.bf16.mxu0 0
      %6723 = vmatpush1.bf16.msra.mxu0 %v5405
      %6724 = vmatprep.subr.bf16.mxu0 0
      %6725 = vmatpush1.bf16.msra.mxu0 %v5404
      %6726 = vmatprep.subr.bf16.mxu0 0
      %6727 = vmatpush1.bf16.msra.mxu0 %v5403
      %6728 = vmatprep.subr.bf16.mxu0 0
      %6729 = vmatpush1.bf16.msra.mxu0 %v5402
      %6730 = vmatprep.subr.bf16.mxu0 0
      %6731 = vmatpush2.bf16.msra.mxu0 %v5417
      %6732 = vmatprep.subr.bf16.mxu0 0
      %6733 = vmatpush2.bf16.msra.mxu0 %v5416
      %6734 = vmatprep.subr.bf16.mxu0 0
      %6735 = vmatpush2.bf16.msra.mxu0 %v5415
      %6736 = vmatprep.subr.bf16.mxu0 0
      %6737 = vmatpush2.bf16.msra.mxu0 %v5414
      %6738 = vmatprep.subr.bf16.mxu0 0
      %6739 = vmatpush2.bf16.msra.mxu0 %v5413
      %6740 = vmatprep.subr.bf16.mxu0 0
      %6741 = vmatpush2.bf16.msra.mxu0 %v5412
      %6742 = vmatprep.subr.bf16.mxu0 0
      %6743 = vmatpush2.bf16.msra.mxu0 %v5411
      %6744 = vmatprep.subr.bf16.mxu0 0
      %6745 = vmatpush2.bf16.msra.mxu0 %v5410
      %6746 = vmatprep.mubr.bf16.mxu0 %v3415
      %6747 = vmatmul.mubr.bf16.gmra.mxu0 %v3414
      %v6748 = vpop.f32.mrf.mxu0
      %v6749 = vadd.f32 %v6700, %v6748
      %v6750 = vpop.f32.mrf.mxu0
      %v6751 = vpop.f32.mrf.mxu0
      %v6752 = vadd.f32 %v6703, %v6751
      %v6753 = vpop.f32.mrf.mxu0
      %6754 = vmatprep.mubr.bf16.mxu0 %v3464
      %6755 = vmatmul.mubr.bf16.gmra.mxu0 %v3463
      %v6756 = vpop.f32.mrf.mxu0
      %v6757 = vadd.f32 %v6708, %v6756
      %v6758 = vpop.f32.mrf.mxu0
      %v6759 = vpop.f32.mrf.mxu0
      %v6760 = vadd.f32 %v6711, %v6759
      %v6761 = vpop.f32.mrf.mxu0
      %6762 = vdwg.mxu0
      %6763 = vmatprep.subr.bf16.mxu0 0
      %6764 = vmatpush1.bf16.msra.mxu0 %v5425
      %6765 = vmatprep.subr.bf16.mxu0 0
      %6766 = vmatpush1.bf16.msra.mxu0 %v5424
      %6767 = vmatprep.subr.bf16.mxu0 0
      %6768 = vmatpush1.bf16.msra.mxu0 %v5423
      %6769 = vmatprep.subr.bf16.mxu0 0
      %6770 = vmatpush1.bf16.msra.mxu0 %v5422
      %6771 = vmatprep.subr.bf16.mxu0 0
      %6772 = vmatpush1.bf16.msra.mxu0 %v5421
      %6773 = vmatprep.subr.bf16.mxu0 0
      %6774 = vmatpush1.bf16.msra.mxu0 %v5420
      %6775 = vmatprep.subr.bf16.mxu0 0
      %6776 = vmatpush1.bf16.msra.mxu0 %v5419
      %6777 = vmatprep.subr.bf16.mxu0 0
      %6778 = vmatpush1.bf16.msra.mxu0 %v5418
      %6779 = vmatprep.subr.bf16.mxu0 0
      %6780 = vmatpush2.bf16.msra.mxu0 %v5433
      %6781 = vmatprep.subr.bf16.mxu0 0
      %6782 = vmatpush2.bf16.msra.mxu0 %v5432
      %6783 = vmatprep.subr.bf16.mxu0 0
      %6784 = vmatpush2.bf16.msra.mxu0 %v5431
      %6785 = vmatprep.subr.bf16.mxu0 0
      %6786 = vmatpush2.bf16.msra.mxu0 %v5430
      %6787 = vmatprep.subr.bf16.mxu0 0
      %6788 = vmatpush2.bf16.msra.mxu0 %v5429
      %6789 = vmatprep.subr.bf16.mxu0 0
      %6790 = vmatpush2.bf16.msra.mxu0 %v5428
      %6791 = vmatprep.subr.bf16.mxu0 0
      %6792 = vmatpush2.bf16.msra.mxu0 %v5427
      %6793 = vmatprep.subr.bf16.mxu0 0
      %6794 = vmatpush2.bf16.msra.mxu0 %v5426
      %6795 = vmatprep.mubr.bf16.mxu0 %v3417
      %6796 = vmatmul.mubr.bf16.gmra.mxu0 %v3416
      %v6797 = vpop.f32.mrf.mxu0
      %v6798 = vadd.f32 %v6749, %v6797
      %v6799 = vpop.f32.mrf.mxu0
      %v6800 = vpop.f32.mrf.mxu0
      %v6801 = vadd.f32 %v6752, %v6800
      %v6802 = vpop.f32.mrf.mxu0
      %6803 = vmatprep.mubr.bf16.mxu0 %v3466
      %6804 = vmatmul.mubr.bf16.gmra.mxu0 %v3465
      %v6805 = vpop.f32.mrf.mxu0
      %v6806 = vadd.f32 %v6757, %v6805
      %v6807 = vpop.f32.mrf.mxu0
      %v6808 = vpop.f32.mrf.mxu0
      %v6809 = vadd.f32 %v6760, %v6808
      %v6810 = vpop.f32.mrf.mxu0
      %6811 = vdwg.mxu0
      %6812 = vmatprep.subr.bf16.mxu0 0
      %6813 = vmatpush1.bf16.msra.mxu0 %v5441
      %6814 = vmatprep.subr.bf16.mxu0 0
      %6815 = vmatpush1.bf16.msra.mxu0 %v5440
      %6816 = vmatprep.subr.bf16.mxu0 0
      %6817 = vmatpush1.bf16.msra.mxu0 %v5439
      %6818 = vmatprep.subr.bf16.mxu0 0
      %6819 = vmatpush1.bf16.msra.mxu0 %v5438
      %6820 = vmatprep.subr.bf16.mxu0 0
      %6821 = vmatpush1.bf16.msra.mxu0 %v5437
      %6822 = vmatprep.subr.bf16.mxu0 0
      %6823 = vmatpush1.bf16.msra.mxu0 %v5436
      %6824 = vmatprep.subr.bf16.mxu0 0
      %6825 = vmatpush1.bf16.msra.mxu0 %v5435
      %6826 = vmatprep.subr.bf16.mxu0 0
      %6827 = vmatpush1.bf16.msra.mxu0 %v5434
      %6828 = vmatprep.subr.bf16.mxu0 0
      %6829 = vmatpush2.bf16.msra.mxu0 %v5449
      %6830 = vmatprep.subr.bf16.mxu0 0
      %6831 = vmatpush2.bf16.msra.mxu0 %v5448
      %6832 = vmatprep.subr.bf16.mxu0 0
      %6833 = vmatpush2.bf16.msra.mxu0 %v5447
      %6834 = vmatprep.subr.bf16.mxu0 0
      %6835 = vmatpush2.bf16.msra.mxu0 %v5446
      %6836 = vmatprep.subr.bf16.mxu0 0
      %6837 = vmatpush2.bf16.msra.mxu0 %v5445
      %6838 = vmatprep.subr.bf16.mxu0 0
      %6839 = vmatpush2.bf16.msra.mxu0 %v5444
      %6840 = vmatprep.subr.bf16.mxu0 0
      %6841 = vmatpush2.bf16.msra.mxu0 %v5443
      %6842 = vmatprep.subr.bf16.mxu0 0
      %6843 = vmatpush2.bf16.msra.mxu0 %v5442
      %6844 = vmatprep.mubr.bf16.mxu0 %v3419
      %6845 = vmatmul.mubr.bf16.gmra.mxu0 %v3418
      %v6846 = vpop.f32.mrf.mxu0
      %v6847 = vadd.f32 %v6798, %v6846
      %v6848 = vpop.f32.mrf.mxu0
      %v6849 = vpop.f32.mrf.mxu0
      %v6850 = vadd.f32 %v6801, %v6849
      %v6851 = vpop.f32.mrf.mxu0
      %6852 = vmatprep.mubr.bf16.mxu0 %v3468
      %6853 = vmatmul.mubr.bf16.gmra.mxu0 %v3467
      %v6854 = vpop.f32.mrf.mxu0
      %v6855 = vadd.f32 %v6806, %v6854
      %v6856 = vpop.f32.mrf.mxu0
      %v6857 = vpop.f32.mrf.mxu0
      %v6858 = vadd.f32 %v6809, %v6857
      %v6859 = vpop.f32.mrf.mxu0
      %6860 = vdwg.mxu0
      %6861 = vmatprep.subr.bf16.mxu0 0
      %6862 = vmatpush1.bf16.msra.mxu0 %v5457
      %6863 = vmatprep.subr.bf16.mxu0 0
      %6864 = vmatpush1.bf16.msra.mxu0 %v5456
      %6865 = vmatprep.subr.bf16.mxu0 0
      %6866 = vmatpush1.bf16.msra.mxu0 %v5455
      %6867 = vmatprep.subr.bf16.mxu0 0
      %6868 = vmatpush1.bf16.msra.mxu0 %v5454
      %6869 = vmatprep.subr.bf16.mxu0 0
      %6870 = vmatpush1.bf16.msra.mxu0 %v5453
      %6871 = vmatprep.subr.bf16.mxu0 0
      %6872 = vmatpush1.bf16.msra.mxu0 %v5452
      %6873 = vmatprep.subr.bf16.mxu0 0
      %6874 = vmatpush1.bf16.msra.mxu0 %v5451
      %6875 = vmatprep.subr.bf16.mxu0 0
      %6876 = vmatpush1.bf16.msra.mxu0 %v5450
      %6877 = vmatprep.subr.bf16.mxu0 0
      %6878 = vmatpush2.bf16.msra.mxu0 %v5465
      %6879 = vmatprep.subr.bf16.mxu0 0
      %6880 = vmatpush2.bf16.msra.mxu0 %v5464
      %6881 = vmatprep.subr.bf16.mxu0 0
      %6882 = vmatpush2.bf16.msra.mxu0 %v5463
      %6883 = vmatprep.subr.bf16.mxu0 0
      %6884 = vmatpush2.bf16.msra.mxu0 %v5462
      %6885 = vmatprep.subr.bf16.mxu0 0
      %6886 = vmatpush2.bf16.msra.mxu0 %v5461
      %6887 = vmatprep.subr.bf16.mxu0 0
      %6888 = vmatpush2.bf16.msra.mxu0 %v5460
      %6889 = vmatprep.subr.bf16.mxu0 0
      %6890 = vmatpush2.bf16.msra.mxu0 %v5459
      %6891 = vmatprep.subr.bf16.mxu0 0
      %6892 = vmatpush2.bf16.msra.mxu0 %v5458
      %6893 = vmatprep.mubr.bf16.mxu0 %v3421
      %6894 = vmatmul.mubr.bf16.gmra.mxu0 %v3420
      %v6895 = vpop.f32.mrf.mxu0
      %v6896 = vadd.f32 %v6847, %v6895
      %v6897 = vpop.f32.mrf.mxu0
      %v6898 = vpop.f32.mrf.mxu0
      %v6899 = vadd.f32 %v6850, %v6898
      %v6900 = vpop.f32.mrf.mxu0
      %6901 = vmatprep.mubr.bf16.mxu0 %v3470
      %6902 = vmatmul.mubr.bf16.gmra.mxu0 %v3469
      %v6903 = vpop.f32.mrf.mxu0
      %v6904 = vadd.f32 %v6855, %v6903
      %v6905 = vpop.f32.mrf.mxu0
      %v6906 = vpop.f32.mrf.mxu0
      %v6907 = vadd.f32 %v6858, %v6906
      %v6908 = vpop.f32.mrf.mxu0
      %6909 = vdwg.mxu0
      %6910 = vmatprep.subr.bf16.mxu0 0
      %6911 = vmatpush1.bf16.msra.mxu0 %v5473
      %6912 = vmatprep.subr.bf16.mxu0 0
      %6913 = vmatpush1.bf16.msra.mxu0 %v5472
      %6914 = vmatprep.subr.bf16.mxu0 0
      %6915 = vmatpush1.bf16.msra.mxu0 %v5471
      %6916 = vmatprep.subr.bf16.mxu0 0
      %6917 = vmatpush1.bf16.msra.mxu0 %v5470
      %6918 = vmatprep.subr.bf16.mxu0 0
      %6919 = vmatpush1.bf16.msra.mxu0 %v5469
      %6920 = vmatprep.subr.bf16.mxu0 0
      %6921 = vmatpush1.bf16.msra.mxu0 %v5468
      %6922 = vmatprep.subr.bf16.mxu0 0
      %6923 = vmatpush1.bf16.msra.mxu0 %v5467
      %6924 = vmatprep.subr.bf16.mxu0 0
      %6925 = vmatpush1.bf16.msra.mxu0 %v5466
      %6926 = vmatprep.subr.bf16.mxu0 0
      %6927 = vmatpush2.bf16.msra.mxu0 %v5481
      %6928 = vmatprep.subr.bf16.mxu0 0
      %6929 = vmatpush2.bf16.msra.mxu0 %v5480
      %6930 = vmatprep.subr.bf16.mxu0 0
      %6931 = vmatpush2.bf16.msra.mxu0 %v5479
      %6932 = vmatprep.subr.bf16.mxu0 0
      %6933 = vmatpush2.bf16.msra.mxu0 %v5478
      %6934 = vmatprep.subr.bf16.mxu0 0
      %6935 = vmatpush2.bf16.msra.mxu0 %v5477
      %6936 = vmatprep.subr.bf16.mxu0 0
      %6937 = vmatpush2.bf16.msra.mxu0 %v5476
      %6938 = vmatprep.subr.bf16.mxu0 0
      %6939 = vmatpush2.bf16.msra.mxu0 %v5475
      %6940 = vmatprep.subr.bf16.mxu0 0
      %6941 = vmatpush2.bf16.msra.mxu0 %v5474
      %6942 = vmatprep.mubr.bf16.mxu0 %v3423
      %6943 = vmatmul.mubr.bf16.gmra.mxu0 %v3422
      %v6944 = vpop.f32.mrf.mxu0
      %v6945 = vadd.f32 %v6896, %v6944
      %v6946 = vpop.f32.mrf.mxu0
      %v6947 = vpop.f32.mrf.mxu0
      %v6948 = vadd.f32 %v6899, %v6947
      %v6949 = vpop.f32.mrf.mxu0
      %6950 = vmatprep.mubr.bf16.mxu0 %v3472
      %6951 = vmatmul.mubr.bf16.gmra.mxu0 %v3471
      %v6952 = vpop.f32.mrf.mxu0
      %v6953 = vadd.f32 %v6904, %v6952
      %v6954 = vpop.f32.mrf.mxu0
      %v6955 = vpop.f32.mrf.mxu0
      %v6956 = vadd.f32 %v6907, %v6955
      %v6957 = vpop.f32.mrf.mxu0
      %6958 = vdwg.mxu0
      %6959 = vmatprep.subr.bf16.mxu0 0
      %6960 = vmatpush1.bf16.msra.mxu0 %v5489
      %6961 = vmatprep.subr.bf16.mxu0 0
      %6962 = vmatpush1.bf16.msra.mxu0 %v5488
      %6963 = vmatprep.subr.bf16.mxu0 0
      %6964 = vmatpush1.bf16.msra.mxu0 %v5487
      %6965 = vmatprep.subr.bf16.mxu0 0
      %6966 = vmatpush1.bf16.msra.mxu0 %v5486
      %6967 = vmatprep.subr.bf16.mxu0 0
      %6968 = vmatpush1.bf16.msra.mxu0 %v5485
      %6969 = vmatprep.subr.bf16.mxu0 0
      %6970 = vmatpush1.bf16.msra.mxu0 %v5484
      %6971 = vmatprep.subr.bf16.mxu0 0
      %6972 = vmatpush1.bf16.msra.mxu0 %v5483
      %6973 = vmatprep.subr.bf16.mxu0 0
      %6974 = vmatpush1.bf16.msra.mxu0 %v5482
      %6975 = vmatprep.subr.bf16.mxu0 0
      %6976 = vmatpush2.bf16.msra.mxu0 %v5497
      %6977 = vmatprep.subr.bf16.mxu0 0
      %6978 = vmatpush2.bf16.msra.mxu0 %v5496
      %6979 = vmatprep.subr.bf16.mxu0 0
      %6980 = vmatpush2.bf16.msra.mxu0 %v5495
      %6981 = vmatprep.subr.bf16.mxu0 0
      %6982 = vmatpush2.bf16.msra.mxu0 %v5494
      %6983 = vmatprep.subr.bf16.mxu0 0
      %6984 = vmatpush2.bf16.msra.mxu0 %v5493
      %6985 = vmatprep.subr.bf16.mxu0 0
      %6986 = vmatpush2.bf16.msra.mxu0 %v5492
      %6987 = vmatprep.subr.bf16.mxu0 0
      %6988 = vmatpush2.bf16.msra.mxu0 %v5491
      %6989 = vmatprep.subr.bf16.mxu0 0
      %6990 = vmatpush2.bf16.msra.mxu0 %v5490
      %6991 = vmatprep.mubr.bf16.mxu0 %v3425
      %6992 = vmatmul.mubr.bf16.gmra.mxu0 %v3424
      %v6993 = vpop.f32.mrf.mxu0
      %v6994 = vadd.f32 %v6945, %v6993
      %v6995 = vpop.f32.mrf.mxu0
      %v6996 = vpop.f32.mrf.mxu0
      %v6997 = vadd.f32 %v6948, %v6996
      %v6998 = vpop.f32.mrf.mxu0
      %6999 = vmatprep.mubr.bf16.mxu0 %v3474
      %7000 = vmatmul.mubr.bf16.gmra.mxu0 %v3473
      %v7001 = vpop.f32.mrf.mxu0
      %v7002 = vadd.f32 %v6953, %v7001
      %v7003 = vpop.f32.mrf.mxu0
      %v7004 = vpop.f32.mrf.mxu0
      %v7005 = vadd.f32 %v6956, %v7004
      %v7006 = vpop.f32.mrf.mxu0
      %7007 = vdwg.mxu0
      %7008 = vmatprep.subr.bf16.mxu0 0
      %7009 = vmatpush1.bf16.msra.mxu0 %v5505
      %7010 = vmatprep.subr.bf16.mxu0 0
      %7011 = vmatpush1.bf16.msra.mxu0 %v5504
      %7012 = vmatprep.subr.bf16.mxu0 0
      %7013 = vmatpush1.bf16.msra.mxu0 %v5503
      %7014 = vmatprep.subr.bf16.mxu0 0
      %7015 = vmatpush1.bf16.msra.mxu0 %v5502
      %7016 = vmatprep.subr.bf16.mxu0 0
      %7017 = vmatpush1.bf16.msra.mxu0 %v5501
      %7018 = vmatprep.subr.bf16.mxu0 0
      %7019 = vmatpush1.bf16.msra.mxu0 %v5500
      %7020 = vmatprep.subr.bf16.mxu0 0
      %7021 = vmatpush1.bf16.msra.mxu0 %v5499
      %7022 = vmatprep.subr.bf16.mxu0 0
      %7023 = vmatpush1.bf16.msra.mxu0 %v5498
      %7024 = vmatprep.subr.bf16.mxu0 0
      %7025 = vmatpush2.bf16.msra.mxu0 %v5513
      %7026 = vmatprep.subr.bf16.mxu0 0
      %7027 = vmatpush2.bf16.msra.mxu0 %v5512
      %7028 = vmatprep.subr.bf16.mxu0 0
      %7029 = vmatpush2.bf16.msra.mxu0 %v5511
      %7030 = vmatprep.subr.bf16.mxu0 0
      %7031 = vmatpush2.bf16.msra.mxu0 %v5510
      %7032 = vmatprep.subr.bf16.mxu0 0
      %7033 = vmatpush2.bf16.msra.mxu0 %v5509
      %7034 = vmatprep.subr.bf16.mxu0 0
      %7035 = vmatpush2.bf16.msra.mxu0 %v5508
      %7036 = vmatprep.subr.bf16.mxu0 0
      %7037 = vmatpush2.bf16.msra.mxu0 %v5507
      %7038 = vmatprep.subr.bf16.mxu0 0
      %7039 = vmatpush2.bf16.msra.mxu0 %v5506
      %7040 = vmatprep.mubr.bf16.mxu0 %v3427
      %7041 = vmatmul.mubr.bf16.gmra.mxu0 %v3426
      %v7042 = vpop.f32.mrf.mxu0
      %v7043 = vadd.f32 %v6994, %v7042
      %v7044 = vpop.f32.mrf.mxu0
      %v7045 = vpop.f32.mrf.mxu0
      %v7046 = vadd.f32 %v6997, %v7045
      %v7047 = vpop.f32.mrf.mxu0
      %7048 = vmatprep.mubr.bf16.mxu0 %v3476
      %7049 = vmatmul.mubr.bf16.gmra.mxu0 %v3475
      %v7050 = vpop.f32.mrf.mxu0
      %v7051 = vadd.f32 %v7002, %v7050
      %v7052 = vpop.f32.mrf.mxu0
      %v7053 = vpop.f32.mrf.mxu0
      %v7054 = vadd.f32 %v7005, %v7053
      %v7055 = vpop.f32.mrf.mxu0
      %7056 = vdwg.mxu0
      %7057 = vmatprep.subr.bf16.mxu0 0
      %7058 = vmatpush1.bf16.msra.mxu0 %v5521
      %7059 = vmatprep.subr.bf16.mxu0 0
      %7060 = vmatpush1.bf16.msra.mxu0 %v5520
      %7061 = vmatprep.subr.bf16.mxu0 0
      %7062 = vmatpush1.bf16.msra.mxu0 %v5519
      %7063 = vmatprep.subr.bf16.mxu0 0
      %7064 = vmatpush1.bf16.msra.mxu0 %v5518
      %7065 = vmatprep.subr.bf16.mxu0 0
      %7066 = vmatpush1.bf16.msra.mxu0 %v5517
      %7067 = vmatprep.subr.bf16.mxu0 0
      %7068 = vmatpush1.bf16.msra.mxu0 %v5516
      %7069 = vmatprep.subr.bf16.mxu0 0
      %7070 = vmatpush1.bf16.msra.mxu0 %v5515
      %7071 = vmatprep.subr.bf16.mxu0 0
      %7072 = vmatpush1.bf16.msra.mxu0 %v5514
      %7073 = vmatprep.subr.bf16.mxu0 0
      %7074 = vmatpush2.bf16.msra.mxu0 %v5529
      %7075 = vmatprep.subr.bf16.mxu0 0
      %7076 = vmatpush2.bf16.msra.mxu0 %v5528
      %7077 = vmatprep.subr.bf16.mxu0 0
      %7078 = vmatpush2.bf16.msra.mxu0 %v5527
      %7079 = vmatprep.subr.bf16.mxu0 0
      %7080 = vmatpush2.bf16.msra.mxu0 %v5526
      %7081 = vmatprep.subr.bf16.mxu0 0
      %7082 = vmatpush2.bf16.msra.mxu0 %v5525
      %7083 = vmatprep.subr.bf16.mxu0 0
      %7084 = vmatpush2.bf16.msra.mxu0 %v5524
      %7085 = vmatprep.subr.bf16.mxu0 0
      %7086 = vmatpush2.bf16.msra.mxu0 %v5523
      %7087 = vmatprep.subr.bf16.mxu0 0
      %7088 = vmatpush2.bf16.msra.mxu0 %v5522
      %7089 = vmatprep.mubr.bf16.mxu0 %v3429
      %7090 = vmatmul.mubr.bf16.gmra.mxu0 %v3428
      %v7091 = vpop.f32.mrf.mxu0
      %v7092 = vadd.f32 %v7043, %v7091
      %v7093 = vpop.f32.mrf.mxu0
      %v7094 = vpop.f32.mrf.mxu0
      %v7095 = vadd.f32 %v7046, %v7094
      %v7096 = vpop.f32.mrf.mxu0
      %7097 = vmatprep.mubr.bf16.mxu0 %v3478
      %7098 = vmatmul.mubr.bf16.gmra.mxu0 %v3477
      %v7099 = vpop.f32.mrf.mxu0
      %v7100 = vadd.f32 %v7051, %v7099
      %v7101 = vpop.f32.mrf.mxu0
      %v7102 = vpop.f32.mrf.mxu0
      %v7103 = vadd.f32 %v7054, %v7102
      %v7104 = vpop.f32.mrf.mxu0
      %7105 = vdwg.mxu0
      %7106 = vmatprep.subr.bf16.mxu0 0
      %7107 = vmatpush1.bf16.msra.mxu0 %v5537
      %7108 = vmatprep.subr.bf16.mxu0 0
      %7109 = vmatpush1.bf16.msra.mxu0 %v5536
      %7110 = vmatprep.subr.bf16.mxu0 0
      %7111 = vmatpush1.bf16.msra.mxu0 %v5535
      %7112 = vmatprep.subr.bf16.mxu0 0
      %7113 = vmatpush1.bf16.msra.mxu0 %v5534
      %7114 = vmatprep.subr.bf16.mxu0 0
      %7115 = vmatpush1.bf16.msra.mxu0 %v5533
      %7116 = vmatprep.subr.bf16.mxu0 0
      %7117 = vmatpush1.bf16.msra.mxu0 %v5532
      %7118 = vmatprep.subr.bf16.mxu0 0
      %7119 = vmatpush1.bf16.msra.mxu0 %v5531
      %7120 = vmatprep.subr.bf16.mxu0 0
      %7121 = vmatpush1.bf16.msra.mxu0 %v5530
      %7122 = vmatprep.subr.bf16.mxu0 0
      %7123 = vmatpush2.bf16.msra.mxu0 0
      %7124 = vmatprep.subr.bf16.mxu0 0
      %7125 = vmatpush2.bf16.msra.mxu0 0
      %7126 = vmatprep.subr.bf16.mxu0 0
      %7127 = vmatpush2.bf16.msra.mxu0 0
      %7128 = vmatprep.subr.bf16.mxu0 0
      %7129 = vmatpush2.bf16.msra.mxu0 0
      %7130 = vmatprep.subr.bf16.mxu0 0
      %7131 = vmatpush2.bf16.msra.mxu0 0
      %7132 = vmatprep.subr.bf16.mxu0 0
      %7133 = vmatpush2.bf16.msra.mxu0 0
      %7134 = vmatprep.subr.bf16.mxu0 0
      %7135 = vmatpush2.bf16.msra.mxu0 0
      %7136 = vmatprep.subr.bf16.mxu0 0
      %7137 = vmatpush2.bf16.msra.mxu0 0
      %7138 = vmatprep.mubr.bf16.mxu0 0
      %7139 = vmatmul.mubr.bf16.gmra.mxu0 %v3430
      %v7140 = vpop.f32.mrf.mxu0
      %v7141 = vadd.f32 %v7092, %v7140
      %v7142 = vpop.f32.mrf.mxu0
      %v7143 = vpop.f32.mrf.mxu0
      %v7144 = vadd.f32 %v7095, %v7143
      %v7145 = vpop.f32.mrf.mxu0
      %7146 = vmatprep.mubr.bf16.mxu0 0
      %7147 = vmatmul.mubr.bf16.gmra.mxu0 %v3479
      %v7148 = vpop.f32.mrf.mxu0
      %v7149 = vadd.f32 %v7100, %v7148
      %v7150 = vpop.f32.mrf.mxu0
      %v7151 = vpop.f32.mrf.mxu0
      %v7152 = vadd.f32 %v7103, %v7151
      %v7153 = vpop.f32.mrf.mxu0
      %7154 = vdwg.mxu0
      %v7155 = vpack.c.bf16 %v7144, %v7141
      %v7156 = vpack.c.bf16 %v7152, %v7149
      %v7159 = vunpack.c.l.b16 %v7155
      %v7160 = vunpack.c.h.b16 %v7155
      %v7161 = vunpack.c.l.b16 %v7156
      %v7162 = vunpack.c.h.b16 %v7156
      %v7163 = vpack.c.b16 %v7159, %v7159
      %v7164 = vpack.c.b16 %v7160, %v7160
      %v7165 = vpack.c.b16 %v7161, %v7161
      %v7166 = vpack.c.b16 %v7162, %v7162
      %vm7171 = vcmask 257024
      %7172 = vst.msk [vmem:[%s206] sm:$0xf] %vm7171, %v7163
      %7173 = vst.msk [vmem:[%s206 + $0x4] sm:$0xf] %vm7171, %v7164
      %7174 = vst.msk [vmem:[%s206 + $0x8] sm:$0xf] %vm7171, %v7165
      %7175 = vst.msk [vmem:[%s206 + $0xc] sm:$0xf] %vm7171, %v7166
      %s7176 = smul.u32 4, %s19
      %p7177 = scmp.lt.s32.totalorder %s18, 3
      %s7178 = scalar_select %p7177, %s18, 3
      %p7179 = scmp.lt.s32.totalorder %s7176, 7
      %s7180 = scalar_select %p7179, %s7176, 7
      %s7181 = smul.addr %s7178, 8
      %s7182 = sadd.s32 %s7180, %s7181
      %s7183 = smul.addr %s7182, 4
      %s7184 = scalar_lea.vmem %s3, %s7183
      // Predicated region
      $region33: #{_lambda_.1} parent=31 // pred_check
        %p7185 = pneg %p116
      $region34: #{_lambda_.1} parent=31 // pred_check_branch
        %7187 = sbr.rel (%p7185) target = $region36
      $region35: #{_lambda_.1} parent=31 // pred_region
        %s7188 = smul.u32 4, %s19
      $region36: #{_lambda_.1} parent=31 // pred_fallthru
        _
    $region32: #{_lambda_.1} parent=5 // pred_fallthru
      _
    %p7189 = scmp.le.s32.totalorder 2, %s9
    // Predicated region
    $region37: #{_lambda_.1} parent=5 // pred_check
      %p7190 = pneg %p7189
    $region38: #{_lambda_.1} parent=5 // pred_check_branch
      %7192 = sbr.rel (%p7190) target = $region40
    $region39: #{_lambda_.1} parent=5 // pred_region
      %s7193 = ssub.s32 %s9, 2
      // Predicated region
      $region41: #{_lambda_.1} parent=39 // pred_check
        %p7194 = pneg %p122
      $region42: #{_lambda_.1} parent=39 // pred_check_branch
        %7196 = sbr.rel (%p7194) target = $region44
      $region43: #{_lambda_.1} parent=39 // pred_region
        %s7197 = smul.u32 4, %s21
        %p7198 = scmp.lt.s32.totalorder %s20, 3
        %s7199 = scalar_select %p7198, %s20, 3
        %p7200 = scmp.lt.s32.totalorder %s7197, 7
        %s7201 = scalar_select %p7200, %s7197, 7
        %s7202 = smul.addr %s7199, 8
        %s7203 = sadd.s32 %s7201, %s7202
        %s7204 = smul.addr %s7203, 4
        %s7205 = scalar_lea.vmem %s3, %s7204
      $region44: #{_lambda_.1} parent=39 // pred_fallthru
        _
    $region40: #{_lambda_.1} parent=5 // pred_fallthru
      _
  $region6: #{_lambda_.1} parent=0 // loop_footer
    %s13 = sadd.s32 1, %s9
  $region7: #{_lambda_.1} parent=0 // loop_footer_branch
    %8 = sbr.rel target = $region3
  $region8: #{_lambda_.1} parent=0 // loop_exit
    _

</llo_original>
